<compile_context>
chip_gen: v7x
topology: tpu7x:2x2x1
jax: 0.10.0
libtpu: 0.0.40
codegen_flags: <defaults>
</compile_context>

<pallas_src>
import numpy as np

import jax
import jax.numpy as jnp
from jax.experimental import pallas as pl
from jax.experimental.pallas import tpu as pltpu

# ----------------------------- model sizes ---------------------------------
B = 2                         # batch
C, IMG, P = 3, 16, 4          # image channels / spatial / patch size
NP = (IMG // P) ** 2          # 16 image patches
PATCH_DIM = C * P * P         # 48
D = 32                        # transformer hidden dim
HEADS, DH = 4, 8              # heads / head dim
MLP = 4 * D                   # 128
E = 32                        # CLIP projection (embed) dim
VOCAB, T = 64, 8              # text vocab / seq len
OUT = 16                      # trajectory head output dim
D32_W = 32                    # lane width of the main packed slab


# ------------------------- packed-slab row layouts ---------------------------
def _build_layout(segs):
    """Row-stacked layout; every segment starts at a multiple-of-8 row."""
    off_map, off = {}, 0
    for name, rows in segs:
        off_map[name] = (off, rows)
        off += -(-rows // 8) * 8
    return off_map, off


_D32_SEGS = [
    # vision tower
    ("patch_w", PATCH_DIM), ("patch_b", 1), ("vis_pos", B * NP),
    ("v_ln1_g", 1), ("v_ln1_b", 1),
    ("v_wo", D), ("v_bo", 1),
    ("v_ln2_g", 1), ("v_ln2_b", 1),
    ("v_w2", MLP), ("v_b2", 1),
    ("vis_ln_g", 1), ("vis_ln_b", 1),
    ("vis_proj", D),
    ("vis_mask", B * NP), ("vis_pool", B),
    # text tower
    ("tok_emb", VOCAB), ("txt_pos", B * T),
    ("t_ln1_g", 1), ("t_ln1_b", 1),
    ("t_wo", D), ("t_bo", 1),
    ("t_ln2_g", 1), ("t_ln2_b", 1),
    ("t_w2", MLP), ("t_b2", 1),
    ("txt_ln_g", 1), ("txt_ln_b", 1),
    ("txt_proj", D),
    ("txt_mask", B * T), ("txt_pool", B),
    # trajectory head
    ("traj_wt", E), ("traj_wi", E), ("traj_b", 1),
]
_D32_OFF, D32_ROWS = _build_layout(_D32_SEGS)

_WIDE_SEGS = [("v_w1", D), ("v_b1", 1), ("t_w1", D), ("t_b1", 1)]
_WIDE_OFF, WIDE_ROWS = _build_layout(_WIDE_SEGS)


# ----------------------- in-kernel helper functions -------------------------
def _ln(x, g, b):
    mu = jnp.mean(x, axis=-1, keepdims=True)
    var = jnp.mean((x - mu) ** 2, axis=-1, keepdims=True)
    return (x - mu) * jax.lax.rsqrt(var + 1e-5) * g + b


def _l2norm(x):
    return x * jax.lax.rsqrt(jnp.sum(x * x, axis=-1, keepdims=True) + 1e-12)


def _quick_gelu(x):
    return x * jax.nn.sigmoid(1.702 * x)


# ----------------------------- fused kernel ---------------------------------
def _clip_vln_kernel(patches_ref, ids_ref, d32_ref, wide_ref, qkv_ref, out_ref):
    def seg(name, ncols=D):
        off, rows = _D32_OFF[name]
        return d32_ref[off:off + rows, 0:ncols]

    def wseg(name):
        off, rows = _WIDE_OFF[name]
        return wide_ref[off:off + rows, :]

    def block(x, prefix, tower_idx, mask):
        """Pre-LN transformer block; batched-over-B attention per head."""
        h = _ln(x, seg(prefix + "_ln1_g"), seg(prefix + "_ln1_b"))
        y = x + seg(prefix + "_bo")                      # residual + attn bias
        scale = 1.0 / (DH ** 0.5)
        wo_off, _ = _D32_OFF[prefix + "_wo"]
        for hd in range(HEADS):                          # static, unrolled
            def proj(kind):
                slab = qkv_ref[tower_idx * 3 * HEADS + kind * HEADS + hd]
                return (jnp.dot(h, slab[0:D, :],
                                preferred_element_type=jnp.float32)
                        + slab[D:D + 1, :])
            qh, kh, vh = proj(0), proj(1), proj(2)       # (B*S, DH) each
            s = jax.lax.dot_general(qh, kh, (((1,), (1,)), ((), ())),
                                    preferred_element_type=jnp.float32) * scale
            s = s + mask                                 # block-diag (+causal)
            m = jnp.max(s, axis=-1, keepdims=True)
            p = jnp.exp(s - m)
            p = p * pl.reciprocal(jnp.sum(p, axis=-1, keepdims=True),
                                  approx=True)
            oh = jnp.dot(p, vh, preferred_element_type=jnp.float32)
            wo_h = d32_ref[wo_off + hd * DH:wo_off + (hd + 1) * DH, 0:D]
            y = y + jnp.dot(oh, wo_h, preferred_element_type=jnp.float32)
        h2 = _ln(y, seg(prefix + "_ln2_g"), seg(prefix + "_ln2_b"))
        hm = _quick_gelu(jnp.dot(h2, wseg(prefix + "_w1"),
                                 preferred_element_type=jnp.float32)
                         + wseg(prefix + "_b1"))
        return (y + jnp.dot(hm, seg(prefix + "_w2"),
                            preferred_element_type=jnp.float32)
                + seg(prefix + "_b2"))

    # ------------------------------ vision tower -----------------------------
    x = (jnp.dot(patches_ref[...], seg("patch_w"),
                 preferred_element_type=jnp.float32)
         + seg("patch_b") + seg("vis_pos"))                      # (B*NP, D)
    x = block(x, "v", 0, seg("vis_mask", B * NP))                # bidirectional
    x = _ln(x, seg("vis_ln_g"), seg("vis_ln_b"))
    pooled = jnp.dot(seg("vis_pool", B * NP), x,
                     preferred_element_type=jnp.float32)         # (B, D)
    img = _l2norm(jnp.dot(pooled, seg("vis_proj"),
                          preferred_element_type=jnp.float32))   # image_embeds

    # ------------------------------- text tower ------------------------------
    vocab_iota = jax.lax.broadcasted_iota(jnp.int32, (B * T, VOCAB), 1)
    onehot = (ids_ref[...] == vocab_iota).astype(jnp.float32)    # (B*T, VOCAB)
    x = (jnp.dot(onehot, seg("tok_emb"),
                 preferred_element_type=jnp.float32)
         + seg("txt_pos"))                                       # (B*T, D)
    x = block(x, "t", 1, seg("txt_mask", B * T))                 # causal
    x = _ln(x, seg("txt_ln_g"), seg("txt_ln_b"))
    pooled = jnp.dot(seg("txt_pool", B * T), x,
                     preferred_element_type=jnp.float32)         # (B, D)
    txt = _l2norm(jnp.dot(pooled, seg("txt_proj"),
                          preferred_element_type=jnp.float32))   # text_embeds

    # -------- trajectory head on cat([text, image], dim=1), fused ----------
    out_ref[...] = (
        jnp.dot(txt, seg("traj_wt", OUT), preferred_element_type=jnp.float32)
        + jnp.dot(img, seg("traj_wi", OUT), preferred_element_type=jnp.float32)
        + seg("traj_b", OUT))


# ----------------------------- parameters -----------------------------------
def _dense(key, shape):
    return jax.random.normal(key, shape, jnp.float32) * 0.02


def _init_block(key):
    ks = jax.random.split(key, 6)
    return dict(
        ln1_g=jnp.ones((1, D), jnp.float32), ln1_b=jnp.zeros((1, D), jnp.float32),
        wq=_dense(ks[0], (HEADS, D, DH)), bq=jnp.zeros((HEADS, DH), jnp.float32),
        wk=_dense(ks[1], (HEADS, D, DH)), bk=jnp.zeros((HEADS, DH), jnp.float32),
        wv=_dense(ks[2], (HEADS, D, DH)), bv=jnp.zeros((HEADS, DH), jnp.float32),
        wo=_dense(ks[3], (D, D)), bo=jnp.zeros((1, D), jnp.float32),
        ln2_g=jnp.ones((1, D), jnp.float32), ln2_b=jnp.zeros((1, D), jnp.float32),
        w1=_dense(ks[4], (D, MLP)), b1=jnp.zeros((1, MLP), jnp.float32),
        w2=_dense(ks[5], (MLP, D)), b2=jnp.zeros((1, D), jnp.float32),
    )


def init_params(key):
    ks = jax.random.split(key, 10)
    return dict(
        patch_w=_dense(ks[0], (PATCH_DIM, D)),
        patch_b=jnp.zeros((1, D), jnp.float32),
        vis_pos=_dense(ks[1], (NP, D)),
        vis_block=_init_block(ks[2]),
        vis_ln_g=jnp.ones((1, D), jnp.float32),
        vis_ln_b=jnp.zeros((1, D), jnp.float32),
        vis_proj=_dense(ks[3], (D, E)),
        tok_emb=_dense(ks[4], (VOCAB, D)),
        txt_pos=_dense(ks[5], (T, D)),
        txt_block=_init_block(ks[6]),
        txt_ln_g=jnp.ones((1, D), jnp.float32),
        txt_ln_b=jnp.zeros((1, D), jnp.float32),
        txt_proj=_dense(ks[7], (D, E)),
        traj_w=_dense(ks[8], (2 * E, OUT)),
        traj_b=jnp.zeros((1, OUT), jnp.float32),
    )


def pack_params(params):
    """One-time packing of params + constants into 3 VMEM slabs (run once,
    outside jit) so the kernel prologue issues only a handful of DMAs."""
    d32 = np.zeros((D32_ROWS, D32_W), np.float32)

    def put(name, arr):
        arr = np.asarray(arr, np.float32)
        off, rows = _D32_OFF[name]
        assert arr.shape[0] == rows
        d32[off:off + rows, :arr.shape[1]] = arr

    vb, tb = params["vis_block"], params["txt_block"]

    # constant masks / pooling matrices
    vis_mask = np.full((B * NP, B * NP), -1e9, np.float32)
    txt_mask = np.full((B * T, B * T), -1e9, np.float32)
    vis_pool = np.zeros((B, B * NP), np.float32)
    txt_pool = np.zeros((B, B * T), np.float32)
    causal = np.full((T, T), -1e9, np.float32)
    causal[np.tril_indices(T)] = 0.0
    for b in range(B):
        vis_mask[b * NP:(b + 1) * NP, b * NP:(b + 1) * NP] = 0.0
        txt_mask[b * T:(b + 1) * T, b * T:(b + 1) * T] = causal
        vis_pool[b, b * NP:(b + 1) * NP] = 1.0 / NP
        txt_pool[b, b * T + T - 1] = 1.0

    put("patch_w", params["patch_w"])
    put("patch_b", params["patch_b"])
    put("vis_pos", np.tile(np.asarray(params["vis_pos"]), (B, 1)))
    put("v_ln1_g", vb["ln1_g"]); put("v_ln1_b", vb["ln1_b"])
    put("v_wo", vb["wo"]); put("v_bo", vb["bo"])
    put("v_ln2_g", vb["ln2_g"]); put("v_ln2_b", vb["ln2_b"])
    put("v_w2", vb["w2"]); put("v_b2", vb["b2"])
    put("vis_ln_g", params["vis_ln_g"]); put("vis_ln_b", params["vis_ln_b"])
    put("vis_proj", params["vis_proj"])
    put("vis_mask", vis_mask); put("vis_pool", vis_pool)
    put("tok_emb", params["tok_emb"])
    put("txt_pos", np.tile(np.asarray(params["txt_pos"]), (B, 1)))
    put("t_ln1_g", tb["ln1_g"]); put("t_ln1_b", tb["ln1_b"])
    put("t_wo", tb["wo"]); put("t_bo", tb["bo"])
    put("t_ln2_g", tb["ln2_g"]); put("t_ln2_b", tb["ln2_b"])
    put("t_w2", tb["w2"]); put("t_b2", tb["b2"])
    put("txt_ln_g", params["txt_ln_g"]); put("txt_ln_b", params["txt_ln_b"])
    put("txt_proj", params["txt_proj"])
    put("txt_mask", txt_mask); put("txt_pool", txt_pool)
    put("traj_wt", params["traj_w"][:E, :])
    put("traj_wi", params["traj_w"][E:, :])
    put("traj_b", params["traj_b"])

    wide = np.zeros((WIDE_ROWS, MLP), np.float32)

    def putw(name, arr):
        arr = np.asarray(arr, np.float32)
        off, rows = _WIDE_OFF[name]
        assert arr.shape[0] == rows
        wide[off:off + rows, :arr.shape[1]] = arr

    putw("v_w1", vb["w1"]); putw("v_b1", vb["b1"])
    putw("t_w1", tb["w1"]); putw("t_b1", tb["b1"])

    # per-head QKV weight + bias stacks: index = tower*3*HEADS + kind*HEADS + h
    qkv = np.zeros((2 * 3 * HEADS, D + 8, DH), np.float32)
    for ti, blk in enumerate((vb, tb)):
        for ki, (wn, bn) in enumerate((("wq", "bq"), ("wk", "bk"), ("wv", "bv"))):
            for h in range(HEADS):
                idx = ti * 3 * HEADS + ki * HEADS + h
                qkv[idx, 0:D, :] = np.asarray(blk[wn][h])
                qkv[idx, D, :] = np.asarray(blk[bn][h])

    return dict(d32=jnp.asarray(d32), wide=jnp.asarray(wide),
                qkv=jnp.asarray(qkv))


# ----------------------------- forward ---------------------------------------
@jax.jit
def clip_vln_forward(packed, images, token_ids):
    # Input prep (layout only): NCHW -> (B*NP, C*P*P) patches; ids as column.
    nh = IMG // P
    patches = (images.reshape(B, C, nh, P, nh, P)
                     .transpose(0, 2, 4, 1, 3, 5)
                     .reshape(B * NP, PATCH_DIM))
    ids = token_ids.reshape(B * T, 1).astype(jnp.int32)

    return pl.pallas_call(
        _clip_vln_kernel,
        out_shape=jax.ShapeDtypeStruct((B, OUT), jnp.float32),
        in_specs=[pl.BlockSpec(memory_space=pltpu.MemorySpace.VMEM)] * 5,
        out_specs=pl.BlockSpec(memory_space=pltpu.MemorySpace.VMEM),
    )(patches, ids, packed["d32"], packed["wide"], packed["qkv"])


# ----------------------------- main ------------------------------------------
if __name__ == "__main__":
    key = jax.random.PRNGKey(0)
    k_img, k_txt, k_par = jax.random.split(key, 3)

    images = jax.random.normal(k_img, (B, C, IMG, IMG), jnp.float32)   # NCHW
    token_ids = jax.random.randint(k_txt, (B, T), 0, VOCAB, jnp.int32)
    params = init_params(k_par)
    packed = pack_params(params)        # one-time packing, outside jit

    out = clip_vln_forward(packed, images, token_ids)
    jax.block_until_ready(out)
    assert out.shape == (B, OUT) and out.dtype == jnp.float32
    assert bool(jnp.all(jnp.isfinite(out)))
    print("KERNEL_OK")
</pallas_src>

<mosaic_0001>
module attributes {stable_mosaic.version = 11 : i64} {
  func.func @_clip_vln_kernel(%arg0: memref<32x48xf32, #tpu.memory_space<vmem>>, %arg1: memref<16x1xi32, #tpu.memory_space<vmem>>, %arg2: memref<816x32xf32, #tpu.memory_space<vmem>>, %arg3: memref<80x128xf32, #tpu.memory_space<vmem>>, %arg4: memref<24x40x8xf32, #tpu.memory_space<vmem>>, %arg5: memref<2x16xf32, #tpu.memory_space<vmem>>) attributes {dimension_semantics = [], scalar_prefetch = 0 : i64, scratch_operands = 0 : i64, tpu.core_type = #tpu.core_type<tc>} {
    %c0 = arith.constant 0 : index
    %c0_0 = arith.constant 0 : index
    %0 = vector.load %arg0[%c0, %c0_0] : memref<32x48xf32, #tpu.memory_space<vmem>>, vector<32x48xf32>
    %c0_1 = arith.constant 0 : index
    %c0_2 = arith.constant 0 : index
    %1 = vector.load %arg2[%c0_1, %c0_2] : memref<816x32xf32, #tpu.memory_space<vmem>>, vector<48x32xf32>
    %cst = arith.constant dense<0.000000e+00> : vector<32x32xf32>
    %2 = tpu.matmul %0, %1, %cst {dimension_numbers = #tpu.dot_dimension_numbers<[1], [0], [0], [1], [0, 0, 1, 1], [], []>} : vector<32x48xf32>, vector<48x32xf32>, vector<32x32xf32> -> vector<32x32xf32>
    %c48 = arith.constant 48 : index
    %c0_3 = arith.constant 0 : index
    %3 = vector.load %arg2[%c48, %c0_3] : memref<816x32xf32, #tpu.memory_space<vmem>>, vector<1x32xf32>
    %4 = vector.broadcast %3 : vector<1x32xf32> to vector<32x32xf32>
    %5 = arith.addf %2, %4 : vector<32x32xf32>
    %c56 = arith.constant 56 : index
    %c0_4 = arith.constant 0 : index
    %6 = vector.load %arg2[%c56, %c0_4] : memref<816x32xf32, #tpu.memory_space<vmem>>, vector<32x32xf32>
    %7 = arith.addf %5, %6 : vector<32x32xf32>
    %c344 = arith.constant 344 : index
    %c0_5 = arith.constant 0 : index
    %8 = vector.load %arg2[%c344, %c0_5] : memref<816x32xf32, #tpu.memory_space<vmem>>, vector<32x32xf32>
    %c88 = arith.constant 88 : index
    %c0_6 = arith.constant 0 : index
    %9 = vector.load %arg2[%c88, %c0_6] : memref<816x32xf32, #tpu.memory_space<vmem>>, vector<1x32xf32>
    %c96 = arith.constant 96 : index
    %c0_7 = arith.constant 0 : index
    %10 = vector.load %arg2[%c96, %c0_7] : memref<816x32xf32, #tpu.memory_space<vmem>>, vector<1x32xf32>
    %cst_8 = arith.constant dense<0.000000e+00> : vector<32xf32>
    %11 = vector.multi_reduction <add>, %7, %cst_8 [1] : vector<32x32xf32> to vector<32xf32>
    %12 = vector.shape_cast %11 : vector<32xf32> to vector<32x1xf32>
    %cst_9 = arith.constant 3.200000e+01 : f32
    %13 = vector.broadcast %cst_9 : f32 to vector<32x1xf32>
    %14 = arith.divf %12, %13 : vector<32x1xf32>
    %15 = vector.broadcast %14 : vector<32x1xf32> to vector<32x32xf32>
    %16 = arith.subf %7, %15 : vector<32x32xf32>
    %17 = arith.mulf %16, %16 : vector<32x32xf32>
    %cst_10 = arith.constant dense<0.000000e+00> : vector<32xf32>
    %18 = vector.multi_reduction <add>, %17, %cst_10 [1] : vector<32x32xf32> to vector<32xf32>
    %19 = vector.shape_cast %18 : vector<32xf32> to vector<32x1xf32>
    %cst_11 = arith.constant 3.200000e+01 : f32
    %20 = vector.broadcast %cst_11 : f32 to vector<32x1xf32>
    %21 = arith.divf %19, %20 : vector<32x1xf32>
    %22 = vector.broadcast %14 : vector<32x1xf32> to vector<32x32xf32>
    %23 = arith.subf %7, %22 : vector<32x32xf32>
    %cst_12 = arith.constant 9.99999974E-6 : f32
    %24 = vector.broadcast %cst_12 : f32 to vector<32x1xf32>
    %25 = arith.addf %21, %24 : vector<32x1xf32>
    %26 = math.rsqrt %25 : vector<32x1xf32>
    %27 = vector.broadcast %26 : vector<32x1xf32> to vector<32x32xf32>
    %28 = arith.mulf %23, %27 : vector<32x32xf32>
    %29 = vector.broadcast %9 : vector<1x32xf32> to vector<32x32xf32>
    %30 = arith.mulf %28, %29 : vector<32x32xf32>
    %31 = vector.broadcast %10 : vector<1x32xf32> to vector<32x32xf32>
    %32 = arith.addf %30, %31 : vector<32x32xf32>
    %c136 = arith.constant 136 : index
    %c0_13 = arith.constant 0 : index
    %33 = vector.load %arg2[%c136, %c0_13] : memref<816x32xf32, #tpu.memory_space<vmem>>, vector<1x32xf32>
    %34 = vector.broadcast %33 : vector<1x32xf32> to vector<32x32xf32>
    %35 = arith.addf %7, %34 : vector<32x32xf32>
    %c0_14 = arith.constant 0 : index
    %c0_15 = arith.constant 0 : index
    %c0_16 = arith.constant 0 : index
    %36 = vector.load %arg4[%c0_14, %c0_15, %c0_16] : memref<24x40x8xf32, #tpu.memory_space<vmem>>, vector<1x40x8xf32>
    %37 = vector.shape_cast %36 : vector<1x40x8xf32> to vector<40x8xf32>
    %38 = vector.extract_strided_slice %37 {offsets = [0, 0], sizes = [32, 8], strides = [1, 1]} : vector<40x8xf32> to vector<32x8xf32>
    %cst_17 = arith.constant dense<0.000000e+00> : vector<32x8xf32>
    %39 = tpu.matmul %32, %38, %cst_17 {dimension_numbers = #tpu.dot_dimension_numbers<[1], [0], [0], [1], [0, 0, 1, 1], [], []>} : vector<32x32xf32>, vector<32x8xf32>, vector<32x8xf32> -> vector<32x8xf32>
    %40 = vector.extract_strided_slice %37 {offsets = [32, 0], sizes = [1, 8], strides = [1, 1]} : vector<40x8xf32> to vector<1x8xf32>
    %41 = vector.broadcast %40 : vector<1x8xf32> to vector<32x8xf32>
    %42 = arith.addf %39, %41 : vector<32x8xf32>
    %c4 = arith.constant 4 : index
    %c0_18 = arith.constant 0 : index
    %c0_19 = arith.constant 0 : index
    %43 = vector.load %arg4[%c4, %c0_18, %c0_19] : memref<24x40x8xf32, #tpu.memory_space<vmem>>, vector<1x40x8xf32>
    %44 = vector.shape_cast %43 : vector<1x40x8xf32> to vector<40x8xf32>
    %45 = vector.extract_strided_slice %44 {offsets = [0, 0], sizes = [32, 8], strides = [1, 1]} : vector<40x8xf32> to vector<32x8xf32>
    %cst_20 = arith.constant dense<0.000000e+00> : vector<32x8xf32>
    %46 = tpu.matmul %32, %45, %cst_20 {dimension_numbers = #tpu.dot_dimension_numbers<[1], [0], [0], [1], [0, 0, 1, 1], [], []>} : vector<32x32xf32>, vector<32x8xf32>, vector<32x8xf32> -> vector<32x8xf32>
    %47 = vector.extract_strided_slice %44 {offsets = [32, 0], sizes = [1, 8], strides = [1, 1]} : vector<40x8xf32> to vector<1x8xf32>
    %48 = vector.broadcast %47 : vector<1x8xf32> to vector<32x8xf32>
    %49 = arith.addf %46, %48 : vector<32x8xf32>
    %c8 = arith.constant 8 : index
    %c0_21 = arith.constant 0 : index
    %c0_22 = arith.constant 0 : index
    %50 = vector.load %arg4[%c8, %c0_21, %c0_22] : memref<24x40x8xf32, #tpu.memory_space<vmem>>, vector<1x40x8xf32>
    %51 = vector.shape_cast %50 : vector<1x40x8xf32> to vector<40x8xf32>
    %52 = vector.extract_strided_slice %51 {offsets = [0, 0], sizes = [32, 8], strides = [1, 1]} : vector<40x8xf32> to vector<32x8xf32>
    %cst_23 = arith.constant dense<0.000000e+00> : vector<32x8xf32>
    %53 = tpu.matmul %32, %52, %cst_23 {dimension_numbers = #tpu.dot_dimension_numbers<[1], [0], [0], [1], [0, 0, 1, 1], [], []>} : vector<32x32xf32>, vector<32x8xf32>, vector<32x8xf32> -> vector<32x8xf32>
    %54 = vector.extract_strided_slice %51 {offsets = [32, 0], sizes = [1, 8], strides = [1, 1]} : vector<40x8xf32> to vector<1x8xf32>
    %55 = vector.broadcast %54 : vector<1x8xf32> to vector<32x8xf32>
    %56 = arith.addf %53, %55 : vector<32x8xf32>
    %cst_24 = arith.constant dense<0.000000e+00> : vector<32x32xf32>
    %57 = tpu.matmul %42, %49, %cst_24 {dimension_numbers = #tpu.dot_dimension_numbers<[1], [1], [0], [0], [0, 0, 1, 0], [], []>} : vector<32x8xf32>, vector<32x8xf32>, vector<32x32xf32> -> vector<32x32xf32>
    %cst_25 = arith.constant 0.353553385 : f32
    %58 = vector.broadcast %cst_25 : f32 to vector<32x32xf32>
    %59 = arith.mulf %57, %58 : vector<32x32xf32>
    %60 = arith.addf %59, %8 : vector<32x32xf32>
    %cst_26 = arith.constant dense<0xFF800000> : vector<32xf32>
    %61 = vector.multi_reduction <maximumf>, %60, %cst_26 [1] : vector<32x32xf32> to vector<32xf32>
    %62 = vector.shape_cast %61 : vector<32xf32> to vector<32x1xf32>
    %63 = vector.broadcast %62 : vector<32x1xf32> to vector<32x32xf32>
    %64 = arith.subf %60, %63 : vector<32x32xf32>
    %65 = math.exp %64 : vector<32x32xf32>
    %cst_27 = arith.constant dense<0.000000e+00> : vector<32xf32>
    %66 = vector.multi_reduction <add>, %65, %cst_27 [1] : vector<32x32xf32> to vector<32xf32>
    %67 = vector.shape_cast %66 : vector<32xf32> to vector<32x1xf32>
    %68 = tpu.reciprocal %67 {approx = true} : vector<32x1xf32> -> vector<32x1xf32>
    %69 = vector.broadcast %68 : vector<32x1xf32> to vector<32x32xf32>
    %70 = arith.mulf %65, %69 : vector<32x32xf32>
    %cst_28 = arith.constant dense<0.000000e+00> : vector<32x8xf32>
    %71 = tpu.matmul %70, %56, %cst_28 {dimension_numbers = #tpu.dot_dimension_numbers<[1], [0], [0], [1], [0, 0, 1, 1], [], []>} : vector<32x32xf32>, vector<32x8xf32>, vector<32x8xf32> -> vector<32x8xf32>
    %c104 = arith.constant 104 : index
    %c0_29 = arith.constant 0 : index
    %72 = vector.load %arg2[%c104, %c0_29] : memref<816x32xf32, #tpu.memory_space<vmem>>, vector<8x32xf32>
    %cst_30 = arith.constant dense<0.000000e+00> : vector<32x32xf32>
    %73 = tpu.matmul %71, %72, %cst_30 {dimension_numbers = #tpu.dot_dimension_numbers<[1], [0], [0], [1], [0, 0, 1, 1], [], []>} : vector<32x8xf32>, vector<8x32xf32>, vector<32x32xf32> -> vector<32x32xf32>
    %74 = arith.addf %35, %73 : vector<32x32xf32>
    %c1 = arith.constant 1 : index
    %c0_31 = arith.constant 0 : index
    %c0_32 = arith.constant 0 : index
    %75 = vector.load %arg4[%c1, %c0_31, %c0_32] : memref<24x40x8xf32, #tpu.memory_space<vmem>>, vector<1x40x8xf32>
    %76 = vector.shape_cast %75 : vector<1x40x8xf32> to vector<40x8xf32>
    %77 = vector.extract_strided_slice %76 {offsets = [0, 0], sizes = [32, 8], strides = [1, 1]} : vector<40x8xf32> to vector<32x8xf32>
    %cst_33 = arith.constant dense<0.000000e+00> : vector<32x8xf32>
    %78 = tpu.matmul %32, %77, %cst_33 {dimension_numbers = #tpu.dot_dimension_numbers<[1], [0], [0], [1], [0, 0, 1, 1], [], []>} : vector<32x32xf32>, vector<32x8xf32>, vector<32x8xf32> -> vector<32x8xf32>
    %79 = vector.extract_strided_slice %76 {offsets = [32, 0], sizes = [1, 8], strides = [1, 1]} : vector<40x8xf32> to vector<1x8xf32>
    %80 = vector.broadcast %79 : vector<1x8xf32> to vector<32x8xf32>
    %81 = arith.addf %78, %80 : vector<32x8xf32>
    %c5 = arith.constant 5 : index
    %c0_34 = arith.constant 0 : index
    %c0_35 = arith.constant 0 : index
    %82 = vector.load %arg4[%c5, %c0_34, %c0_35] : memref<24x40x8xf32, #tpu.memory_space<vmem>>, vector<1x40x8xf32>
    %83 = vector.shape_cast %82 : vector<1x40x8xf32> to vector<40x8xf32>
    %84 = vector.extract_strided_slice %83 {offsets = [0, 0], sizes = [32, 8], strides = [1, 1]} : vector<40x8xf32> to vector<32x8xf32>
    %cst_36 = arith.constant dense<0.000000e+00> : vector<32x8xf32>
    %85 = tpu.matmul %32, %84, %cst_36 {dimension_numbers = #tpu.dot_dimension_numbers<[1], [0], [0], [1], [0, 0, 1, 1], [], []>} : vector<32x32xf32>, vector<32x8xf32>, vector<32x8xf32> -> vector<32x8xf32>
    %86 = vector.extract_strided_slice %83 {offsets = [32, 0], sizes = [1, 8], strides = [1, 1]} : vector<40x8xf32> to vector<1x8xf32>
    %87 = vector.broadcast %86 : vector<1x8xf32> to vector<32x8xf32>
    %88 = arith.addf %85, %87 : vector<32x8xf32>
    %c9 = arith.constant 9 : index
    %c0_37 = arith.constant 0 : index
    %c0_38 = arith.constant 0 : index
    %89 = vector.load %arg4[%c9, %c0_37, %c0_38] : memref<24x40x8xf32, #tpu.memory_space<vmem>>, vector<1x40x8xf32>
    %90 = vector.shape_cast %89 : vector<1x40x8xf32> to vector<40x8xf32>
    %91 = vector.extract_strided_slice %90 {offsets = [0, 0], sizes = [32, 8], strides = [1, 1]} : vector<40x8xf32> to vector<32x8xf32>
    %cst_39 = arith.constant dense<0.000000e+00> : vector<32x8xf32>
    %92 = tpu.matmul %32, %91, %cst_39 {dimension_numbers = #tpu.dot_dimension_numbers<[1], [0], [0], [1], [0, 0, 1, 1], [], []>} : vector<32x32xf32>, vector<32x8xf32>, vector<32x8xf32> -> vector<32x8xf32>
    %93 = vector.extract_strided_slice %90 {offsets = [32, 0], sizes = [1, 8], strides = [1, 1]} : vector<40x8xf32> to vector<1x8xf32>
    %94 = vector.broadcast %93 : vector<1x8xf32> to vector<32x8xf32>
    %95 = arith.addf %92, %94 : vector<32x8xf32>
    %cst_40 = arith.constant dense<0.000000e+00> : vector<32x32xf32>
    %96 = tpu.matmul %81, %88, %cst_40 {dimension_numbers = #tpu.dot_dimension_numbers<[1], [1], [0], [0], [0, 0, 1, 0], [], []>} : vector<32x8xf32>, vector<32x8xf32>, vector<32x32xf32> -> vector<32x32xf32>
    %cst_41 = arith.constant 0.353553385 : f32
    %97 = vector.broadcast %cst_41 : f32 to vector<32x32xf32>
    %98 = arith.mulf %96, %97 : vector<32x32xf32>
    %99 = arith.addf %98, %8 : vector<32x32xf32>
    %cst_42 = arith.constant dense<0xFF800000> : vector<32xf32>
    %100 = vector.multi_reduction <maximumf>, %99, %cst_42 [1] : vector<32x32xf32> to vector<32xf32>
    %101 = vector.shape_cast %100 : vector<32xf32> to vector<32x1xf32>
    %102 = vector.broadcast %101 : vector<32x1xf32> to vector<32x32xf32>
    %103 = arith.subf %99, %102 : vector<32x32xf32>
    %104 = math.exp %103 : vector<32x32xf32>
    %cst_43 = arith.constant dense<0.000000e+00> : vector<32xf32>
    %105 = vector.multi_reduction <add>, %104, %cst_43 [1] : vector<32x32xf32> to vector<32xf32>
    %106 = vector.shape_cast %105 : vector<32xf32> to vector<32x1xf32>
    %107 = tpu.reciprocal %106 {approx = true} : vector<32x1xf32> -> vector<32x1xf32>
    %108 = vector.broadcast %107 : vector<32x1xf32> to vector<32x32xf32>
    %109 = arith.mulf %104, %108 : vector<32x32xf32>
    %cst_44 = arith.constant dense<0.000000e+00> : vector<32x8xf32>
    %110 = tpu.matmul %109, %95, %cst_44 {dimension_numbers = #tpu.dot_dimension_numbers<[1], [0], [0], [1], [0, 0, 1, 1], [], []>} : vector<32x32xf32>, vector<32x8xf32>, vector<32x8xf32> -> vector<32x8xf32>
    %c112 = arith.constant 112 : index
    %c0_45 = arith.constant 0 : index
    %111 = vector.load %arg2[%c112, %c0_45] : memref<816x32xf32, #tpu.memory_space<vmem>>, vector<8x32xf32>
    %cst_46 = arith.constant dense<0.000000e+00> : vector<32x32xf32>
    %112 = tpu.matmul %110, %111, %cst_46 {dimension_numbers = #tpu.dot_dimension_numbers<[1], [0], [0], [1], [0, 0, 1, 1], [], []>} : vector<32x8xf32>, vector<8x32xf32>, vector<32x32xf32> -> vector<32x32xf32>
    %113 = arith.addf %74, %112 : vector<32x32xf32>
    %c2 = arith.constant 2 : index
    %c0_47 = arith.constant 0 : index
    %c0_48 = arith.constant 0 : index
    %114 = vector.load %arg4[%c2, %c0_47, %c0_48] : memref<24x40x8xf32, #tpu.memory_space<vmem>>, vector<1x40x8xf32>
    %115 = vector.shape_cast %114 : vector<1x40x8xf32> to vector<40x8xf32>
    %116 = vector.extract_strided_slice %115 {offsets = [0, 0], sizes = [32, 8], strides = [1, 1]} : vector<40x8xf32> to vector<32x8xf32>
    %cst_49 = arith.constant dense<0.000000e+00> : vector<32x8xf32>
    %117 = tpu.matmul %32, %116, %cst_49 {dimension_numbers = #tpu.dot_dimension_numbers<[1], [0], [0], [1], [0, 0, 1, 1], [], []>} : vector<32x32xf32>, vector<32x8xf32>, vector<32x8xf32> -> vector<32x8xf32>
    %118 = vector.extract_strided_slice %115 {offsets = [32, 0], sizes = [1, 8], strides = [1, 1]} : vector<40x8xf32> to vector<1x8xf32>
    %119 = vector.broadcast %118 : vector<1x8xf32> to vector<32x8xf32>
    %120 = arith.addf %117, %119 : vector<32x8xf32>
    %c6 = arith.constant 6 : index
    %c0_50 = arith.constant 0 : index
    %c0_51 = arith.constant 0 : index
    %121 = vector.load %arg4[%c6, %c0_50, %c0_51] : memref<24x40x8xf32, #tpu.memory_space<vmem>>, vector<1x40x8xf32>
    %122 = vector.shape_cast %121 : vector<1x40x8xf32> to vector<40x8xf32>
    %123 = vector.extract_strided_slice %122 {offsets = [0, 0], sizes = [32, 8], strides = [1, 1]} : vector<40x8xf32> to vector<32x8xf32>
    %cst_52 = arith.constant dense<0.000000e+00> : vector<32x8xf32>
    %124 = tpu.matmul %32, %123, %cst_52 {dimension_numbers = #tpu.dot_dimension_numbers<[1], [0], [0], [1], [0, 0, 1, 1], [], []>} : vector<32x32xf32>, vector<32x8xf32>, vector<32x8xf32> -> vector<32x8xf32>
    %125 = vector.extract_strided_slice %122 {offsets = [32, 0], sizes = [1, 8], strides = [1, 1]} : vector<40x8xf32> to vector<1x8xf32>
    %126 = vector.broadcast %125 : vector<1x8xf32> to vector<32x8xf32>
    %127 = arith.addf %124, %126 : vector<32x8xf32>
    %c10 = arith.constant 10 : index
    %c0_53 = arith.constant 0 : index
    %c0_54 = arith.constant 0 : index
    %128 = vector.load %arg4[%c10, %c0_53, %c0_54] : memref<24x40x8xf32, #tpu.memory_space<vmem>>, vector<1x40x8xf32>
    %129 = vector.shape_cast %128 : vector<1x40x8xf32> to vector<40x8xf32>
    %130 = vector.extract_strided_slice %129 {offsets = [0, 0], sizes = [32, 8], strides = [1, 1]} : vector<40x8xf32> to vector<32x8xf32>
    %cst_55 = arith.constant dense<0.000000e+00> : vector<32x8xf32>
    %131 = tpu.matmul %32, %130, %cst_55 {dimension_numbers = #tpu.dot_dimension_numbers<[1], [0], [0], [1], [0, 0, 1, 1], [], []>} : vector<32x32xf32>, vector<32x8xf32>, vector<32x8xf32> -> vector<32x8xf32>
    %132 = vector.extract_strided_slice %129 {offsets = [32, 0], sizes = [1, 8], strides = [1, 1]} : vector<40x8xf32> to vector<1x8xf32>
    %133 = vector.broadcast %132 : vector<1x8xf32> to vector<32x8xf32>
    %134 = arith.addf %131, %133 : vector<32x8xf32>
    %cst_56 = arith.constant dense<0.000000e+00> : vector<32x32xf32>
    %135 = tpu.matmul %120, %127, %cst_56 {dimension_numbers = #tpu.dot_dimension_numbers<[1], [1], [0], [0], [0, 0, 1, 0], [], []>} : vector<32x8xf32>, vector<32x8xf32>, vector<32x32xf32> -> vector<32x32xf32>
    %cst_57 = arith.constant 0.353553385 : f32
    %136 = vector.broadcast %cst_57 : f32 to vector<32x32xf32>
    %137 = arith.mulf %135, %136 : vector<32x32xf32>
    %138 = arith.addf %137, %8 : vector<32x32xf32>
    %cst_58 = arith.constant dense<0xFF800000> : vector<32xf32>
    %139 = vector.multi_reduction <maximumf>, %138, %cst_58 [1] : vector<32x32xf32> to vector<32xf32>
    %140 = vector.shape_cast %139 : vector<32xf32> to vector<32x1xf32>
    %141 = vector.broadcast %140 : vector<32x1xf32> to vector<32x32xf32>
    %142 = arith.subf %138, %141 : vector<32x32xf32>
    %143 = math.exp %142 : vector<32x32xf32>
    %cst_59 = arith.constant dense<0.000000e+00> : vector<32xf32>
    %144 = vector.multi_reduction <add>, %143, %cst_59 [1] : vector<32x32xf32> to vector<32xf32>
    %145 = vector.shape_cast %144 : vector<32xf32> to vector<32x1xf32>
    %146 = tpu.reciprocal %145 {approx = true} : vector<32x1xf32> -> vector<32x1xf32>
    %147 = vector.broadcast %146 : vector<32x1xf32> to vector<32x32xf32>
    %148 = arith.mulf %143, %147 : vector<32x32xf32>
    %cst_60 = arith.constant dense<0.000000e+00> : vector<32x8xf32>
    %149 = tpu.matmul %148, %134, %cst_60 {dimension_numbers = #tpu.dot_dimension_numbers<[1], [0], [0], [1], [0, 0, 1, 1], [], []>} : vector<32x32xf32>, vector<32x8xf32>, vector<32x8xf32> -> vector<32x8xf32>
    %c120 = arith.constant 120 : index
    %c0_61 = arith.constant 0 : index
    %150 = vector.load %arg2[%c120, %c0_61] : memref<816x32xf32, #tpu.memory_space<vmem>>, vector<8x32xf32>
    %cst_62 = arith.constant dense<0.000000e+00> : vector<32x32xf32>
    %151 = tpu.matmul %149, %150, %cst_62 {dimension_numbers = #tpu.dot_dimension_numbers<[1], [0], [0], [1], [0, 0, 1, 1], [], []>} : vector<32x8xf32>, vector<8x32xf32>, vector<32x32xf32> -> vector<32x32xf32>
    %152 = arith.addf %113, %151 : vector<32x32xf32>
    %c3 = arith.constant 3 : index
    %c0_63 = arith.constant 0 : index
    %c0_64 = arith.constant 0 : index
    %153 = vector.load %arg4[%c3, %c0_63, %c0_64] : memref<24x40x8xf32, #tpu.memory_space<vmem>>, vector<1x40x8xf32>
    %154 = vector.shape_cast %153 : vector<1x40x8xf32> to vector<40x8xf32>
    %155 = vector.extract_strided_slice %154 {offsets = [0, 0], sizes = [32, 8], strides = [1, 1]} : vector<40x8xf32> to vector<32x8xf32>
    %cst_65 = arith.constant dense<0.000000e+00> : vector<32x8xf32>
    %156 = tpu.matmul %32, %155, %cst_65 {dimension_numbers = #tpu.dot_dimension_numbers<[1], [0], [0], [1], [0, 0, 1, 1], [], []>} : vector<32x32xf32>, vector<32x8xf32>, vector<32x8xf32> -> vector<32x8xf32>
    %157 = vector.extract_strided_slice %154 {offsets = [32, 0], sizes = [1, 8], strides = [1, 1]} : vector<40x8xf32> to vector<1x8xf32>
    %158 = vector.broadcast %157 : vector<1x8xf32> to vector<32x8xf32>
    %159 = arith.addf %156, %158 : vector<32x8xf32>
    %c7 = arith.constant 7 : index
    %c0_66 = arith.constant 0 : index
    %c0_67 = arith.constant 0 : index
    %160 = vector.load %arg4[%c7, %c0_66, %c0_67] : memref<24x40x8xf32, #tpu.memory_space<vmem>>, vector<1x40x8xf32>
    %161 = vector.shape_cast %160 : vector<1x40x8xf32> to vector<40x8xf32>
    %162 = vector.extract_strided_slice %161 {offsets = [0, 0], sizes = [32, 8], strides = [1, 1]} : vector<40x8xf32> to vector<32x8xf32>
    %cst_68 = arith.constant dense<0.000000e+00> : vector<32x8xf32>
    %163 = tpu.matmul %32, %162, %cst_68 {dimension_numbers = #tpu.dot_dimension_numbers<[1], [0], [0], [1], [0, 0, 1, 1], [], []>} : vector<32x32xf32>, vector<32x8xf32>, vector<32x8xf32> -> vector<32x8xf32>
    %164 = vector.extract_strided_slice %161 {offsets = [32, 0], sizes = [1, 8], strides = [1, 1]} : vector<40x8xf32> to vector<1x8xf32>
    %165 = vector.broadcast %164 : vector<1x8xf32> to vector<32x8xf32>
    %166 = arith.addf %163, %165 : vector<32x8xf32>
    %c11 = arith.constant 11 : index
    %c0_69 = arith.constant 0 : index
    %c0_70 = arith.constant 0 : index
    %167 = vector.load %arg4[%c11, %c0_69, %c0_70] : memref<24x40x8xf32, #tpu.memory_space<vmem>>, vector<1x40x8xf32>
    %168 = vector.shape_cast %167 : vector<1x40x8xf32> to vector<40x8xf32>
    %169 = vector.extract_strided_slice %168 {offsets = [0, 0], sizes = [32, 8], strides = [1, 1]} : vector<40x8xf32> to vector<32x8xf32>
    %cst_71 = arith.constant dense<0.000000e+00> : vector<32x8xf32>
    %170 = tpu.matmul %32, %169, %cst_71 {dimension_numbers = #tpu.dot_dimension_numbers<[1], [0], [0], [1], [0, 0, 1, 1], [], []>} : vector<32x32xf32>, vector<32x8xf32>, vector<32x8xf32> -> vector<32x8xf32>
    %171 = vector.extract_strided_slice %168 {offsets = [32, 0], sizes = [1, 8], strides = [1, 1]} : vector<40x8xf32> to vector<1x8xf32>
    %172 = vector.broadcast %171 : vector<1x8xf32> to vector<32x8xf32>
    %173 = arith.addf %170, %172 : vector<32x8xf32>
    %cst_72 = arith.constant dense<0.000000e+00> : vector<32x32xf32>
    %174 = tpu.matmul %159, %166, %cst_72 {dimension_numbers = #tpu.dot_dimension_numbers<[1], [1], [0], [0], [0, 0, 1, 0], [], []>} : vector<32x8xf32>, vector<32x8xf32>, vector<32x32xf32> -> vector<32x32xf32>
    %cst_73 = arith.constant 0.353553385 : f32
    %175 = vector.broadcast %cst_73 : f32 to vector<32x32xf32>
    %176 = arith.mulf %174, %175 : vector<32x32xf32>
    %177 = arith.addf %176, %8 : vector<32x32xf32>
    %cst_74 = arith.constant dense<0xFF800000> : vector<32xf32>
    %178 = vector.multi_reduction <maximumf>, %177, %cst_74 [1] : vector<32x32xf32> to vector<32xf32>
    %179 = vector.shape_cast %178 : vector<32xf32> to vector<32x1xf32>
    %180 = vector.broadcast %179 : vector<32x1xf32> to vector<32x32xf32>
    %181 = arith.subf %177, %180 : vector<32x32xf32>
    %182 = math.exp %181 : vector<32x32xf32>
    %cst_75 = arith.constant dense<0.000000e+00> : vector<32xf32>
    %183 = vector.multi_reduction <add>, %182, %cst_75 [1] : vector<32x32xf32> to vector<32xf32>
    %184 = vector.shape_cast %183 : vector<32xf32> to vector<32x1xf32>
    %185 = tpu.reciprocal %184 {approx = true} : vector<32x1xf32> -> vector<32x1xf32>
    %186 = vector.broadcast %185 : vector<32x1xf32> to vector<32x32xf32>
    %187 = arith.mulf %182, %186 : vector<32x32xf32>
    %cst_76 = arith.constant dense<0.000000e+00> : vector<32x8xf32>
    %188 = tpu.matmul %187, %173, %cst_76 {dimension_numbers = #tpu.dot_dimension_numbers<[1], [0], [0], [1], [0, 0, 1, 1], [], []>} : vector<32x32xf32>, vector<32x8xf32>, vector<32x8xf32> -> vector<32x8xf32>
    %c128 = arith.constant 128 : index
    %c0_77 = arith.constant 0 : index
    %189 = vector.load %arg2[%c128, %c0_77] : memref<816x32xf32, #tpu.memory_space<vmem>>, vector<8x32xf32>
    %cst_78 = arith.constant dense<0.000000e+00> : vector<32x32xf32>
    %190 = tpu.matmul %188, %189, %cst_78 {dimension_numbers = #tpu.dot_dimension_numbers<[1], [0], [0], [1], [0, 0, 1, 1], [], []>} : vector<32x8xf32>, vector<8x32xf32>, vector<32x32xf32> -> vector<32x32xf32>
    %191 = arith.addf %152, %190 : vector<32x32xf32>
    %c144 = arith.constant 144 : index
    %c0_79 = arith.constant 0 : index
    %192 = vector.load %arg2[%c144, %c0_79] : memref<816x32xf32, #tpu.memory_space<vmem>>, vector<1x32xf32>
    %c152 = arith.constant 152 : index
    %c0_80 = arith.constant 0 : index
    %193 = vector.load %arg2[%c152, %c0_80] : memref<816x32xf32, #tpu.memory_space<vmem>>, vector<1x32xf32>
    %cst_81 = arith.constant dense<0.000000e+00> : vector<32xf32>
    %194 = vector.multi_reduction <add>, %191, %cst_81 [1] : vector<32x32xf32> to vector<32xf32>
    %195 = vector.shape_cast %194 : vector<32xf32> to vector<32x1xf32>
    %cst_82 = arith.constant 3.200000e+01 : f32
    %196 = vector.broadcast %cst_82 : f32 to vector<32x1xf32>
    %197 = arith.divf %195, %196 : vector<32x1xf32>
    %198 = vector.broadcast %197 : vector<32x1xf32> to vector<32x32xf32>
    %199 = arith.subf %191, %198 : vector<32x32xf32>
    %200 = arith.mulf %199, %199 : vector<32x32xf32>
    %cst_83 = arith.constant dense<0.000000e+00> : vector<32xf32>
    %201 = vector.multi_reduction <add>, %200, %cst_83 [1] : vector<32x32xf32> to vector<32xf32>
    %202 = vector.shape_cast %201 : vector<32xf32> to vector<32x1xf32>
    %cst_84 = arith.constant 3.200000e+01 : f32
    %203 = vector.broadcast %cst_84 : f32 to vector<32x1xf32>
    %204 = arith.divf %202, %203 : vector<32x1xf32>
    %205 = vector.broadcast %197 : vector<32x1xf32> to vector<32x32xf32>
    %206 = arith.subf %191, %205 : vector<32x32xf32>
    %cst_85 = arith.constant 9.99999974E-6 : f32
    %207 = vector.broadcast %cst_85 : f32 to vector<32x1xf32>
    %208 = arith.addf %204, %207 : vector<32x1xf32>
    %209 = math.rsqrt %208 : vector<32x1xf32>
    %210 = vector.broadcast %209 : vector<32x1xf32> to vector<32x32xf32>
    %211 = arith.mulf %206, %210 : vector<32x32xf32>
    %212 = vector.broadcast %192 : vector<1x32xf32> to vector<32x32xf32>
    %213 = arith.mulf %211, %212 : vector<32x32xf32>
    %214 = vector.broadcast %193 : vector<1x32xf32> to vector<32x32xf32>
    %215 = arith.addf %213, %214 : vector<32x32xf32>
    %c0_86 = arith.constant 0 : index
    %c0_87 = arith.constant 0 : index
    %216 = vector.load %arg3[%c0_86, %c0_87] : memref<80x128xf32, #tpu.memory_space<vmem>>, vector<32x128xf32>
    %cst_88 = arith.constant dense<0.000000e+00> : vector<32x128xf32>
    %217 = tpu.matmul %215, %216, %cst_88 {dimension_numbers = #tpu.dot_dimension_numbers<[1], [0], [0], [1], [0, 0, 1, 1], [], []>} : vector<32x32xf32>, vector<32x128xf32>, vector<32x128xf32> -> vector<32x128xf32>
    %c32 = arith.constant 32 : index
    %c0_89 = arith.constant 0 : index
    %218 = vector.load %arg3[%c32, %c0_89] : memref<80x128xf32, #tpu.memory_space<vmem>>, vector<1x128xf32>
    %219 = vector.broadcast %218 : vector<1x128xf32> to vector<32x128xf32>
    %220 = arith.addf %217, %219 : vector<32x128xf32>
    %cst_90 = arith.constant 1.702000e+00 : f32
    %221 = vector.broadcast %cst_90 : f32 to vector<32x128xf32>
    %222 = arith.mulf %221, %220 : vector<32x128xf32>
    %223 = arith.negf %222 : vector<32x128xf32>
    %224 = math.exp %223 : vector<32x128xf32>
    %cst_91 = arith.constant 1.000000e+00 : f32
    %225 = vector.broadcast %cst_91 : f32 to vector<32x128xf32>
    %226 = arith.addf %225, %224 : vector<32x128xf32>
    %227 = arith.divf %225, %226 : vector<32x128xf32>
    %228 = arith.mulf %220, %227 : vector<32x128xf32>
    %c160 = arith.constant 160 : index
    %c0_92 = arith.constant 0 : index
    %229 = vector.load %arg2[%c160, %c0_92] : memref<816x32xf32, #tpu.memory_space<vmem>>, vector<128x32xf32>
    %cst_93 = arith.constant dense<0.000000e+00> : vector<32x32xf32>
    %230 = tpu.matmul %228, %229, %cst_93 {dimension_numbers = #tpu.dot_dimension_numbers<[1], [0], [0], [1], [0, 0, 1, 1], [], []>} : vector<32x128xf32>, vector<128x32xf32>, vector<32x32xf32> -> vector<32x32xf32>
    %231 = arith.addf %191, %230 : vector<32x32xf32>
    %c288 = arith.constant 288 : index
    %c0_94 = arith.constant 0 : index
    %232 = vector.load %arg2[%c288, %c0_94] : memref<816x32xf32, #tpu.memory_space<vmem>>, vector<1x32xf32>
    %233 = vector.broadcast %232 : vector<1x32xf32> to vector<32x32xf32>
    %234 = arith.addf %231, %233 : vector<32x32xf32>
    %c296 = arith.constant 296 : index
    %c0_95 = arith.constant 0 : index
    %235 = vector.load %arg2[%c296, %c0_95] : memref<816x32xf32, #tpu.memory_space<vmem>>, vector<1x32xf32>
    %c304 = arith.constant 304 : index
    %c0_96 = arith.constant 0 : index
    %236 = vector.load %arg2[%c304, %c0_96] : memref<816x32xf32, #tpu.memory_space<vmem>>, vector<1x32xf32>
    %cst_97 = arith.constant dense<0.000000e+00> : vector<32xf32>
    %237 = vector.multi_reduction <add>, %234, %cst_97 [1] : vector<32x32xf32> to vector<32xf32>
    %238 = vector.shape_cast %237 : vector<32xf32> to vector<32x1xf32>
    %cst_98 = arith.constant 3.200000e+01 : f32
    %239 = vector.broadcast %cst_98 : f32 to vector<32x1xf32>
    %240 = arith.divf %238, %239 : vector<32x1xf32>
    %241 = vector.broadcast %240 : vector<32x1xf32> to vector<32x32xf32>
    %242 = arith.subf %234, %241 : vector<32x32xf32>
    %243 = arith.mulf %242, %242 : vector<32x32xf32>
    %cst_99 = arith.constant dense<0.000000e+00> : vector<32xf32>
    %244 = vector.multi_reduction <add>, %243, %cst_99 [1] : vector<32x32xf32> to vector<32xf32>
    %245 = vector.shape_cast %244 : vector<32xf32> to vector<32x1xf32>
    %cst_100 = arith.constant 3.200000e+01 : f32
    %246 = vector.broadcast %cst_100 : f32 to vector<32x1xf32>
    %247 = arith.divf %245, %246 : vector<32x1xf32>
    %248 = vector.broadcast %240 : vector<32x1xf32> to vector<32x32xf32>
    %249 = arith.subf %234, %248 : vector<32x32xf32>
    %cst_101 = arith.constant 9.99999974E-6 : f32
    %250 = vector.broadcast %cst_101 : f32 to vector<32x1xf32>
    %251 = arith.addf %247, %250 : vector<32x1xf32>
    %252 = math.rsqrt %251 : vector<32x1xf32>
    %253 = vector.broadcast %252 : vector<32x1xf32> to vector<32x32xf32>
    %254 = arith.mulf %249, %253 : vector<32x32xf32>
    %255 = vector.broadcast %235 : vector<1x32xf32> to vector<32x32xf32>
    %256 = arith.mulf %254, %255 : vector<32x32xf32>
    %257 = vector.broadcast %236 : vector<1x32xf32> to vector<32x32xf32>
    %258 = arith.addf %256, %257 : vector<32x32xf32>
    %c376 = arith.constant 376 : index
    %c0_102 = arith.constant 0 : index
    %259 = vector.load %arg2[%c376, %c0_102] : memref<816x32xf32, #tpu.memory_space<vmem>>, vector<2x32xf32>
    %cst_103 = arith.constant dense<0.000000e+00> : vector<2x32xf32>
    %260 = tpu.matmul %259, %258, %cst_103 {dimension_numbers = #tpu.dot_dimension_numbers<[1], [0], [0], [1], [0, 0, 1, 1], [], []>} : vector<2x32xf32>, vector<32x32xf32>, vector<2x32xf32> -> vector<2x32xf32>
    %c312 = arith.constant 312 : index
    %c0_104 = arith.constant 0 : index
    %261 = vector.load %arg2[%c312, %c0_104] : memref<816x32xf32, #tpu.memory_space<vmem>>, vector<32x32xf32>
    %cst_105 = arith.constant dense<0.000000e+00> : vector<2x32xf32>
    %262 = tpu.matmul %260, %261, %cst_105 {dimension_numbers = #tpu.dot_dimension_numbers<[1], [0], [0], [1], [0, 0, 1, 1], [], []>} : vector<2x32xf32>, vector<32x32xf32>, vector<2x32xf32> -> vector<2x32xf32>
    %263 = arith.mulf %262, %262 : vector<2x32xf32>
    %cst_106 = arith.constant dense<0.000000e+00> : vector<2xf32>
    %264 = vector.multi_reduction <add>, %263, %cst_106 [1] : vector<2x32xf32> to vector<2xf32>
    %265 = vector.shape_cast %264 : vector<2xf32> to vector<2x1xf32>
    %cst_107 = arith.constant 9.99999996E-13 : f32
    %266 = vector.broadcast %cst_107 : f32 to vector<2x1xf32>
    %267 = arith.addf %265, %266 : vector<2x1xf32>
    %268 = math.rsqrt %267 : vector<2x1xf32>
    %269 = vector.broadcast %268 : vector<2x1xf32> to vector<2x32xf32>
    %270 = arith.mulf %262, %269 : vector<2x32xf32>
    %271 = tpu.iota {dimensions = array<i32: 1>} : vector<16x64xi32>
    %c0_108 = arith.constant 0 : index
    %c0_109 = arith.constant 0 : index
    %272 = vector.load %arg1[%c0_108, %c0_109] : memref<16x1xi32, #tpu.memory_space<vmem>>, vector<16x1xi32>
    %273 = vector.broadcast %272 : vector<16x1xi32> to vector<16x64xi32>
    %274 = arith.cmpi eq, %273, %271 : vector<16x64xi32>
    %275 = arith.extui %274 : vector<16x64xi1> to vector<16x64xi32>
    %276 = arith.sitofp %275 : vector<16x64xi32> to vector<16x64xf32>
    %c384 = arith.constant 384 : index
    %c0_110 = arith.constant 0 : index
    %277 = vector.load %arg2[%c384, %c0_110] : memref<816x32xf32, #tpu.memory_space<vmem>>, vector<64x32xf32>
    %cst_111 = arith.constant dense<0.000000e+00> : vector<16x32xf32>
    %278 = tpu.matmul %276, %277, %cst_111 {dimension_numbers = #tpu.dot_dimension_numbers<[1], [0], [0], [1], [0, 0, 1, 1], [], []>} : vector<16x64xf32>, vector<64x32xf32>, vector<16x32xf32> -> vector<16x32xf32>
    %c448 = arith.constant 448 : index
    %c0_112 = arith.constant 0 : index
    %279 = vector.load %arg2[%c448, %c0_112] : memref<816x32xf32, #tpu.memory_space<vmem>>, vector<16x32xf32>
    %280 = arith.addf %278, %279 : vector<16x32xf32>
    %c720 = arith.constant 720 : index
    %c0_113 = arith.constant 0 : index
    %281 = vector.load %arg2[%c720, %c0_113] : memref<816x32xf32, #tpu.memory_space<vmem>>, vector<16x16xf32>
    %c464 = arith.constant 464 : index
    %c0_114 = arith.constant 0 : index
    %282 = vector.load %arg2[%c464, %c0_114] : memref<816x32xf32, #tpu.memory_space<vmem>>, vector<1x32xf32>
    %c472 = arith.constant 472 : index
    %c0_115 = arith.constant 0 : index
    %283 = vector.load %arg2[%c472, %c0_115] : memref<816x32xf32, #tpu.memory_space<vmem>>, vector<1x32xf32>
    %cst_116 = arith.constant dense<0.000000e+00> : vector<16xf32>
    %284 = vector.multi_reduction <add>, %280, %cst_116 [1] : vector<16x32xf32> to vector<16xf32>
    %285 = vector.shape_cast %284 : vector<16xf32> to vector<16x1xf32>
    %cst_117 = arith.constant 3.200000e+01 : f32
    %286 = vector.broadcast %cst_117 : f32 to vector<16x1xf32>
    %287 = arith.divf %285, %286 : vector<16x1xf32>
    %288 = vector.broadcast %287 : vector<16x1xf32> to vector<16x32xf32>
    %289 = arith.subf %280, %288 : vector<16x32xf32>
    %290 = arith.mulf %289, %289 : vector<16x32xf32>
    %cst_118 = arith.constant dense<0.000000e+00> : vector<16xf32>
    %291 = vector.multi_reduction <add>, %290, %cst_118 [1] : vector<16x32xf32> to vector<16xf32>
    %292 = vector.shape_cast %291 : vector<16xf32> to vector<16x1xf32>
    %cst_119 = arith.constant 3.200000e+01 : f32
    %293 = vector.broadcast %cst_119 : f32 to vector<16x1xf32>
    %294 = arith.divf %292, %293 : vector<16x1xf32>
    %295 = vector.broadcast %287 : vector<16x1xf32> to vector<16x32xf32>
    %296 = arith.subf %280, %295 : vector<16x32xf32>
    %cst_120 = arith.constant 9.99999974E-6 : f32
    %297 = vector.broadcast %cst_120 : f32 to vector<16x1xf32>
    %298 = arith.addf %294, %297 : vector<16x1xf32>
    %299 = math.rsqrt %298 : vector<16x1xf32>
    %300 = vector.broadcast %299 : vector<16x1xf32> to vector<16x32xf32>
    %301 = arith.mulf %296, %300 : vector<16x32xf32>
    %302 = vector.broadcast %282 : vector<1x32xf32> to vector<16x32xf32>
    %303 = arith.mulf %301, %302 : vector<16x32xf32>
    %304 = vector.broadcast %283 : vector<1x32xf32> to vector<16x32xf32>
    %305 = arith.addf %303, %304 : vector<16x32xf32>
    %c512 = arith.constant 512 : index
    %c0_121 = arith.constant 0 : index
    %306 = vector.load %arg2[%c512, %c0_121] : memref<816x32xf32, #tpu.memory_space<vmem>>, vector<1x32xf32>
    %307 = vector.broadcast %306 : vector<1x32xf32> to vector<16x32xf32>
    %308 = arith.addf %280, %307 : vector<16x32xf32>
    %c12 = arith.constant 12 : index
    %c0_122 = arith.constant 0 : index
    %c0_123 = arith.constant 0 : index
    %309 = vector.load %arg4[%c12, %c0_122, %c0_123] : memref<24x40x8xf32, #tpu.memory_space<vmem>>, vector<1x40x8xf32>
    %310 = vector.shape_cast %309 : vector<1x40x8xf32> to vector<40x8xf32>
    %311 = vector.extract_strided_slice %310 {offsets = [0, 0], sizes = [32, 8], strides = [1, 1]} : vector<40x8xf32> to vector<32x8xf32>
    %cst_124 = arith.constant dense<0.000000e+00> : vector<16x8xf32>
    %312 = tpu.matmul %305, %311, %cst_124 {dimension_numbers = #tpu.dot_dimension_numbers<[1], [0], [0], [1], [0, 0, 1, 1], [], []>} : vector<16x32xf32>, vector<32x8xf32>, vector<16x8xf32> -> vector<16x8xf32>
    %313 = vector.extract_strided_slice %310 {offsets = [32, 0], sizes = [1, 8], strides = [1, 1]} : vector<40x8xf32> to vector<1x8xf32>
    %314 = vector.broadcast %313 : vector<1x8xf32> to vector<16x8xf32>
    %315 = arith.addf %312, %314 : vector<16x8xf32>
    %c16 = arith.constant 16 : index
    %c0_125 = arith.constant 0 : index
    %c0_126 = arith.constant 0 : index
    %316 = vector.load %arg4[%c16, %c0_125, %c0_126] : memref<24x40x8xf32, #tpu.memory_space<vmem>>, vector<1x40x8xf32>
    %317 = vector.shape_cast %316 : vector<1x40x8xf32> to vector<40x8xf32>
    %318 = vector.extract_strided_slice %317 {offsets = [0, 0], sizes = [32, 8], strides = [1, 1]} : vector<40x8xf32> to vector<32x8xf32>
    %cst_127 = arith.constant dense<0.000000e+00> : vector<16x8xf32>
    %319 = tpu.matmul %305, %318, %cst_127 {dimension_numbers = #tpu.dot_dimension_numbers<[1], [0], [0], [1], [0, 0, 1, 1], [], []>} : vector<16x32xf32>, vector<32x8xf32>, vector<16x8xf32> -> vector<16x8xf32>
    %320 = vector.extract_strided_slice %317 {offsets = [32, 0], sizes = [1, 8], strides = [1, 1]} : vector<40x8xf32> to vector<1x8xf32>
    %321 = vector.broadcast %320 : vector<1x8xf32> to vector<16x8xf32>
    %322 = arith.addf %319, %321 : vector<16x8xf32>
    %c20 = arith.constant 20 : index
    %c0_128 = arith.constant 0 : index
    %c0_129 = arith.constant 0 : index
    %323 = vector.load %arg4[%c20, %c0_128, %c0_129] : memref<24x40x8xf32, #tpu.memory_space<vmem>>, vector<1x40x8xf32>
    %324 = vector.shape_cast %323 : vector<1x40x8xf32> to vector<40x8xf32>
    %325 = vector.extract_strided_slice %324 {offsets = [0, 0], sizes = [32, 8], strides = [1, 1]} : vector<40x8xf32> to vector<32x8xf32>
    %cst_130 = arith.constant dense<0.000000e+00> : vector<16x8xf32>
    %326 = tpu.matmul %305, %325, %cst_130 {dimension_numbers = #tpu.dot_dimension_numbers<[1], [0], [0], [1], [0, 0, 1, 1], [], []>} : vector<16x32xf32>, vector<32x8xf32>, vector<16x8xf32> -> vector<16x8xf32>
    %327 = vector.extract_strided_slice %324 {offsets = [32, 0], sizes = [1, 8], strides = [1, 1]} : vector<40x8xf32> to vector<1x8xf32>
    %328 = vector.broadcast %327 : vector<1x8xf32> to vector<16x8xf32>
    %329 = arith.addf %326, %328 : vector<16x8xf32>
    %cst_131 = arith.constant dense<0.000000e+00> : vector<16x16xf32>
    %330 = tpu.matmul %315, %322, %cst_131 {dimension_numbers = #tpu.dot_dimension_numbers<[1], [1], [0], [0], [0, 0, 1, 0], [], []>} : vector<16x8xf32>, vector<16x8xf32>, vector<16x16xf32> -> vector<16x16xf32>
    %cst_132 = arith.constant 0.353553385 : f32
    %331 = vector.broadcast %cst_132 : f32 to vector<16x16xf32>
    %332 = arith.mulf %330, %331 : vector<16x16xf32>
    %333 = arith.addf %332, %281 : vector<16x16xf32>
    %cst_133 = arith.constant dense<0xFF800000> : vector<16xf32>
    %334 = vector.multi_reduction <maximumf>, %333, %cst_133 [1] : vector<16x16xf32> to vector<16xf32>
    %335 = vector.shape_cast %334 : vector<16xf32> to vector<16x1xf32>
    %336 = vector.broadcast %335 : vector<16x1xf32> to vector<16x16xf32>
    %337 = arith.subf %333, %336 : vector<16x16xf32>
    %338 = math.exp %337 : vector<16x16xf32>
    %cst_134 = arith.constant dense<0.000000e+00> : vector<16xf32>
    %339 = vector.multi_reduction <add>, %338, %cst_134 [1] : vector<16x16xf32> to vector<16xf32>
    %340 = vector.shape_cast %339 : vector<16xf32> to vector<16x1xf32>
    %341 = tpu.reciprocal %340 {approx = true} : vector<16x1xf32> -> vector<16x1xf32>
    %342 = vector.broadcast %341 : vector<16x1xf32> to vector<16x16xf32>
    %343 = arith.mulf %338, %342 : vector<16x16xf32>
    %cst_135 = arith.constant dense<0.000000e+00> : vector<16x8xf32>
    %344 = tpu.matmul %343, %329, %cst_135 {dimension_numbers = #tpu.dot_dimension_numbers<[1], [0], [0], [1], [0, 0, 1, 1], [], []>} : vector<16x16xf32>, vector<16x8xf32>, vector<16x8xf32> -> vector<16x8xf32>
    %c480 = arith.constant 480 : index
    %c0_136 = arith.constant 0 : index
    %345 = vector.load %arg2[%c480, %c0_136] : memref<816x32xf32, #tpu.memory_space<vmem>>, vector<8x32xf32>
    %cst_137 = arith.constant dense<0.000000e+00> : vector<16x32xf32>
    %346 = tpu.matmul %344, %345, %cst_137 {dimension_numbers = #tpu.dot_dimension_numbers<[1], [0], [0], [1], [0, 0, 1, 1], [], []>} : vector<16x8xf32>, vector<8x32xf32>, vector<16x32xf32> -> vector<16x32xf32>
    %347 = arith.addf %308, %346 : vector<16x32xf32>
    %c13 = arith.constant 13 : index
    %c0_138 = arith.constant 0 : index
    %c0_139 = arith.constant 0 : index
    %348 = vector.load %arg4[%c13, %c0_138, %c0_139] : memref<24x40x8xf32, #tpu.memory_space<vmem>>, vector<1x40x8xf32>
    %349 = vector.shape_cast %348 : vector<1x40x8xf32> to vector<40x8xf32>
    %350 = vector.extract_strided_slice %349 {offsets = [0, 0], sizes = [32, 8], strides = [1, 1]} : vector<40x8xf32> to vector<32x8xf32>
    %cst_140 = arith.constant dense<0.000000e+00> : vector<16x8xf32>
    %351 = tpu.matmul %305, %350, %cst_140 {dimension_numbers = #tpu.dot_dimension_numbers<[1], [0], [0], [1], [0, 0, 1, 1], [], []>} : vector<16x32xf32>, vector<32x8xf32>, vector<16x8xf32> -> vector<16x8xf32>
    %352 = vector.extract_strided_slice %349 {offsets = [32, 0], sizes = [1, 8], strides = [1, 1]} : vector<40x8xf32> to vector<1x8xf32>
    %353 = vector.broadcast %352 : vector<1x8xf32> to vector<16x8xf32>
    %354 = arith.addf %351, %353 : vector<16x8xf32>
    %c17 = arith.constant 17 : index
    %c0_141 = arith.constant 0 : index
    %c0_142 = arith.constant 0 : index
    %355 = vector.load %arg4[%c17, %c0_141, %c0_142] : memref<24x40x8xf32, #tpu.memory_space<vmem>>, vector<1x40x8xf32>
    %356 = vector.shape_cast %355 : vector<1x40x8xf32> to vector<40x8xf32>
    %357 = vector.extract_strided_slice %356 {offsets = [0, 0], sizes = [32, 8], strides = [1, 1]} : vector<40x8xf32> to vector<32x8xf32>
    %cst_143 = arith.constant dense<0.000000e+00> : vector<16x8xf32>
    %358 = tpu.matmul %305, %357, %cst_143 {dimension_numbers = #tpu.dot_dimension_numbers<[1], [0], [0], [1], [0, 0, 1, 1], [], []>} : vector<16x32xf32>, vector<32x8xf32>, vector<16x8xf32> -> vector<16x8xf32>
    %359 = vector.extract_strided_slice %356 {offsets = [32, 0], sizes = [1, 8], strides = [1, 1]} : vector<40x8xf32> to vector<1x8xf32>
    %360 = vector.broadcast %359 : vector<1x8xf32> to vector<16x8xf32>
    %361 = arith.addf %358, %360 : vector<16x8xf32>
    %c21 = arith.constant 21 : index
    %c0_144 = arith.constant 0 : index
    %c0_145 = arith.constant 0 : index
    %362 = vector.load %arg4[%c21, %c0_144, %c0_145] : memref<24x40x8xf32, #tpu.memory_space<vmem>>, vector<1x40x8xf32>
    %363 = vector.shape_cast %362 : vector<1x40x8xf32> to vector<40x8xf32>
    %364 = vector.extract_strided_slice %363 {offsets = [0, 0], sizes = [32, 8], strides = [1, 1]} : vector<40x8xf32> to vector<32x8xf32>
    %cst_146 = arith.constant dense<0.000000e+00> : vector<16x8xf32>
    %365 = tpu.matmul %305, %364, %cst_146 {dimension_numbers = #tpu.dot_dimension_numbers<[1], [0], [0], [1], [0, 0, 1, 1], [], []>} : vector<16x32xf32>, vector<32x8xf32>, vector<16x8xf32> -> vector<16x8xf32>
    %366 = vector.extract_strided_slice %363 {offsets = [32, 0], sizes = [1, 8], strides = [1, 1]} : vector<40x8xf32> to vector<1x8xf32>
    %367 = vector.broadcast %366 : vector<1x8xf32> to vector<16x8xf32>
    %368 = arith.addf %365, %367 : vector<16x8xf32>
    %cst_147 = arith.constant dense<0.000000e+00> : vector<16x16xf32>
    %369 = tpu.matmul %354, %361, %cst_147 {dimension_numbers = #tpu.dot_dimension_numbers<[1], [1], [0], [0], [0, 0, 1, 0], [], []>} : vector<16x8xf32>, vector<16x8xf32>, vector<16x16xf32> -> vector<16x16xf32>
    %cst_148 = arith.constant 0.353553385 : f32
    %370 = vector.broadcast %cst_148 : f32 to vector<16x16xf32>
    %371 = arith.mulf %369, %370 : vector<16x16xf32>
    %372 = arith.addf %371, %281 : vector<16x16xf32>
    %cst_149 = arith.constant dense<0xFF800000> : vector<16xf32>
    %373 = vector.multi_reduction <maximumf>, %372, %cst_149 [1] : vector<16x16xf32> to vector<16xf32>
    %374 = vector.shape_cast %373 : vector<16xf32> to vector<16x1xf32>
    %375 = vector.broadcast %374 : vector<16x1xf32> to vector<16x16xf32>
    %376 = arith.subf %372, %375 : vector<16x16xf32>
    %377 = math.exp %376 : vector<16x16xf32>
    %cst_150 = arith.constant dense<0.000000e+00> : vector<16xf32>
    %378 = vector.multi_reduction <add>, %377, %cst_150 [1] : vector<16x16xf32> to vector<16xf32>
    %379 = vector.shape_cast %378 : vector<16xf32> to vector<16x1xf32>
    %380 = tpu.reciprocal %379 {approx = true} : vector<16x1xf32> -> vector<16x1xf32>
    %381 = vector.broadcast %380 : vector<16x1xf32> to vector<16x16xf32>
    %382 = arith.mulf %377, %381 : vector<16x16xf32>
    %cst_151 = arith.constant dense<0.000000e+00> : vector<16x8xf32>
    %383 = tpu.matmul %382, %368, %cst_151 {dimension_numbers = #tpu.dot_dimension_numbers<[1], [0], [0], [1], [0, 0, 1, 1], [], []>} : vector<16x16xf32>, vector<16x8xf32>, vector<16x8xf32> -> vector<16x8xf32>
    %c488 = arith.constant 488 : index
    %c0_152 = arith.constant 0 : index
    %384 = vector.load %arg2[%c488, %c0_152] : memref<816x32xf32, #tpu.memory_space<vmem>>, vector<8x32xf32>
    %cst_153 = arith.constant dense<0.000000e+00> : vector<16x32xf32>
    %385 = tpu.matmul %383, %384, %cst_153 {dimension_numbers = #tpu.dot_dimension_numbers<[1], [0], [0], [1], [0, 0, 1, 1], [], []>} : vector<16x8xf32>, vector<8x32xf32>, vector<16x32xf32> -> vector<16x32xf32>
    %386 = arith.addf %347, %385 : vector<16x32xf32>
    %c14 = arith.constant 14 : index
    %c0_154 = arith.constant 0 : index
    %c0_155 = arith.constant 0 : index
    %387 = vector.load %arg4[%c14, %c0_154, %c0_155] : memref<24x40x8xf32, #tpu.memory_space<vmem>>, vector<1x40x8xf32>
    %388 = vector.shape_cast %387 : vector<1x40x8xf32> to vector<40x8xf32>
    %389 = vector.extract_strided_slice %388 {offsets = [0, 0], sizes = [32, 8], strides = [1, 1]} : vector<40x8xf32> to vector<32x8xf32>
    %cst_156 = arith.constant dense<0.000000e+00> : vector<16x8xf32>
    %390 = tpu.matmul %305, %389, %cst_156 {dimension_numbers = #tpu.dot_dimension_numbers<[1], [0], [0], [1], [0, 0, 1, 1], [], []>} : vector<16x32xf32>, vector<32x8xf32>, vector<16x8xf32> -> vector<16x8xf32>
    %391 = vector.extract_strided_slice %388 {offsets = [32, 0], sizes = [1, 8], strides = [1, 1]} : vector<40x8xf32> to vector<1x8xf32>
    %392 = vector.broadcast %391 : vector<1x8xf32> to vector<16x8xf32>
    %393 = arith.addf %390, %392 : vector<16x8xf32>
    %c18 = arith.constant 18 : index
    %c0_157 = arith.constant 0 : index
    %c0_158 = arith.constant 0 : index
    %394 = vector.load %arg4[%c18, %c0_157, %c0_158] : memref<24x40x8xf32, #tpu.memory_space<vmem>>, vector<1x40x8xf32>
    %395 = vector.shape_cast %394 : vector<1x40x8xf32> to vector<40x8xf32>
    %396 = vector.extract_strided_slice %395 {offsets = [0, 0], sizes = [32, 8], strides = [1, 1]} : vector<40x8xf32> to vector<32x8xf32>
    %cst_159 = arith.constant dense<0.000000e+00> : vector<16x8xf32>
    %397 = tpu.matmul %305, %396, %cst_159 {dimension_numbers = #tpu.dot_dimension_numbers<[1], [0], [0], [1], [0, 0, 1, 1], [], []>} : vector<16x32xf32>, vector<32x8xf32>, vector<16x8xf32> -> vector<16x8xf32>
    %398 = vector.extract_strided_slice %395 {offsets = [32, 0], sizes = [1, 8], strides = [1, 1]} : vector<40x8xf32> to vector<1x8xf32>
    %399 = vector.broadcast %398 : vector<1x8xf32> to vector<16x8xf32>
    %400 = arith.addf %397, %399 : vector<16x8xf32>
    %c22 = arith.constant 22 : index
    %c0_160 = arith.constant 0 : index
    %c0_161 = arith.constant 0 : index
    %401 = vector.load %arg4[%c22, %c0_160, %c0_161] : memref<24x40x8xf32, #tpu.memory_space<vmem>>, vector<1x40x8xf32>
    %402 = vector.shape_cast %401 : vector<1x40x8xf32> to vector<40x8xf32>
    %403 = vector.extract_strided_slice %402 {offsets = [0, 0], sizes = [32, 8], strides = [1, 1]} : vector<40x8xf32> to vector<32x8xf32>
    %cst_162 = arith.constant dense<0.000000e+00> : vector<16x8xf32>
    %404 = tpu.matmul %305, %403, %cst_162 {dimension_numbers = #tpu.dot_dimension_numbers<[1], [0], [0], [1], [0, 0, 1, 1], [], []>} : vector<16x32xf32>, vector<32x8xf32>, vector<16x8xf32> -> vector<16x8xf32>
    %405 = vector.extract_strided_slice %402 {offsets = [32, 0], sizes = [1, 8], strides = [1, 1]} : vector<40x8xf32> to vector<1x8xf32>
    %406 = vector.broadcast %405 : vector<1x8xf32> to vector<16x8xf32>
    %407 = arith.addf %404, %406 : vector<16x8xf32>
    %cst_163 = arith.constant dense<0.000000e+00> : vector<16x16xf32>
    %408 = tpu.matmul %393, %400, %cst_163 {dimension_numbers = #tpu.dot_dimension_numbers<[1], [1], [0], [0], [0, 0, 1, 0], [], []>} : vector<16x8xf32>, vector<16x8xf32>, vector<16x16xf32> -> vector<16x16xf32>
    %cst_164 = arith.constant 0.353553385 : f32
    %409 = vector.broadcast %cst_164 : f32 to vector<16x16xf32>
    %410 = arith.mulf %408, %409 : vector<16x16xf32>
    %411 = arith.addf %410, %281 : vector<16x16xf32>
    %cst_165 = arith.constant dense<0xFF800000> : vector<16xf32>
    %412 = vector.multi_reduction <maximumf>, %411, %cst_165 [1] : vector<16x16xf32> to vector<16xf32>
    %413 = vector.shape_cast %412 : vector<16xf32> to vector<16x1xf32>
    %414 = vector.broadcast %413 : vector<16x1xf32> to vector<16x16xf32>
    %415 = arith.subf %411, %414 : vector<16x16xf32>
    %416 = math.exp %415 : vector<16x16xf32>
    %cst_166 = arith.constant dense<0.000000e+00> : vector<16xf32>
    %417 = vector.multi_reduction <add>, %416, %cst_166 [1] : vector<16x16xf32> to vector<16xf32>
    %418 = vector.shape_cast %417 : vector<16xf32> to vector<16x1xf32>
    %419 = tpu.reciprocal %418 {approx = true} : vector<16x1xf32> -> vector<16x1xf32>
    %420 = vector.broadcast %419 : vector<16x1xf32> to vector<16x16xf32>
    %421 = arith.mulf %416, %420 : vector<16x16xf32>
    %cst_167 = arith.constant dense<0.000000e+00> : vector<16x8xf32>
    %422 = tpu.matmul %421, %407, %cst_167 {dimension_numbers = #tpu.dot_dimension_numbers<[1], [0], [0], [1], [0, 0, 1, 1], [], []>} : vector<16x16xf32>, vector<16x8xf32>, vector<16x8xf32> -> vector<16x8xf32>
    %c496 = arith.constant 496 : index
    %c0_168 = arith.constant 0 : index
    %423 = vector.load %arg2[%c496, %c0_168] : memref<816x32xf32, #tpu.memory_space<vmem>>, vector<8x32xf32>
    %cst_169 = arith.constant dense<0.000000e+00> : vector<16x32xf32>
    %424 = tpu.matmul %422, %423, %cst_169 {dimension_numbers = #tpu.dot_dimension_numbers<[1], [0], [0], [1], [0, 0, 1, 1], [], []>} : vector<16x8xf32>, vector<8x32xf32>, vector<16x32xf32> -> vector<16x32xf32>
    %425 = arith.addf %386, %424 : vector<16x32xf32>
    %c15 = arith.constant 15 : index
    %c0_170 = arith.constant 0 : index
    %c0_171 = arith.constant 0 : index
    %426 = vector.load %arg4[%c15, %c0_170, %c0_171] : memref<24x40x8xf32, #tpu.memory_space<vmem>>, vector<1x40x8xf32>
    %427 = vector.shape_cast %426 : vector<1x40x8xf32> to vector<40x8xf32>
    %428 = vector.extract_strided_slice %427 {offsets = [0, 0], sizes = [32, 8], strides = [1, 1]} : vector<40x8xf32> to vector<32x8xf32>
    %cst_172 = arith.constant dense<0.000000e+00> : vector<16x8xf32>
    %429 = tpu.matmul %305, %428, %cst_172 {dimension_numbers = #tpu.dot_dimension_numbers<[1], [0], [0], [1], [0, 0, 1, 1], [], []>} : vector<16x32xf32>, vector<32x8xf32>, vector<16x8xf32> -> vector<16x8xf32>
    %430 = vector.extract_strided_slice %427 {offsets = [32, 0], sizes = [1, 8], strides = [1, 1]} : vector<40x8xf32> to vector<1x8xf32>
    %431 = vector.broadcast %430 : vector<1x8xf32> to vector<16x8xf32>
    %432 = arith.addf %429, %431 : vector<16x8xf32>
    %c19 = arith.constant 19 : index
    %c0_173 = arith.constant 0 : index
    %c0_174 = arith.constant 0 : index
    %433 = vector.load %arg4[%c19, %c0_173, %c0_174] : memref<24x40x8xf32, #tpu.memory_space<vmem>>, vector<1x40x8xf32>
    %434 = vector.shape_cast %433 : vector<1x40x8xf32> to vector<40x8xf32>
    %435 = vector.extract_strided_slice %434 {offsets = [0, 0], sizes = [32, 8], strides = [1, 1]} : vector<40x8xf32> to vector<32x8xf32>
    %cst_175 = arith.constant dense<0.000000e+00> : vector<16x8xf32>
    %436 = tpu.matmul %305, %435, %cst_175 {dimension_numbers = #tpu.dot_dimension_numbers<[1], [0], [0], [1], [0, 0, 1, 1], [], []>} : vector<16x32xf32>, vector<32x8xf32>, vector<16x8xf32> -> vector<16x8xf32>
    %437 = vector.extract_strided_slice %434 {offsets = [32, 0], sizes = [1, 8], strides = [1, 1]} : vector<40x8xf32> to vector<1x8xf32>
    %438 = vector.broadcast %437 : vector<1x8xf32> to vector<16x8xf32>
    %439 = arith.addf %436, %438 : vector<16x8xf32>
    %c23 = arith.constant 23 : index
    %c0_176 = arith.constant 0 : index
    %c0_177 = arith.constant 0 : index
    %440 = vector.load %arg4[%c23, %c0_176, %c0_177] : memref<24x40x8xf32, #tpu.memory_space<vmem>>, vector<1x40x8xf32>
    %441 = vector.shape_cast %440 : vector<1x40x8xf32> to vector<40x8xf32>
    %442 = vector.extract_strided_slice %441 {offsets = [0, 0], sizes = [32, 8], strides = [1, 1]} : vector<40x8xf32> to vector<32x8xf32>
    %cst_178 = arith.constant dense<0.000000e+00> : vector<16x8xf32>
    %443 = tpu.matmul %305, %442, %cst_178 {dimension_numbers = #tpu.dot_dimension_numbers<[1], [0], [0], [1], [0, 0, 1, 1], [], []>} : vector<16x32xf32>, vector<32x8xf32>, vector<16x8xf32> -> vector<16x8xf32>
    %444 = vector.extract_strided_slice %441 {offsets = [32, 0], sizes = [1, 8], strides = [1, 1]} : vector<40x8xf32> to vector<1x8xf32>
    %445 = vector.broadcast %444 : vector<1x8xf32> to vector<16x8xf32>
    %446 = arith.addf %443, %445 : vector<16x8xf32>
    %cst_179 = arith.constant dense<0.000000e+00> : vector<16x16xf32>
    %447 = tpu.matmul %432, %439, %cst_179 {dimension_numbers = #tpu.dot_dimension_numbers<[1], [1], [0], [0], [0, 0, 1, 0], [], []>} : vector<16x8xf32>, vector<16x8xf32>, vector<16x16xf32> -> vector<16x16xf32>
    %cst_180 = arith.constant 0.353553385 : f32
    %448 = vector.broadcast %cst_180 : f32 to vector<16x16xf32>
    %449 = arith.mulf %447, %448 : vector<16x16xf32>
    %450 = arith.addf %449, %281 : vector<16x16xf32>
    %cst_181 = arith.constant dense<0xFF800000> : vector<16xf32>
    %451 = vector.multi_reduction <maximumf>, %450, %cst_181 [1] : vector<16x16xf32> to vector<16xf32>
    %452 = vector.shape_cast %451 : vector<16xf32> to vector<16x1xf32>
    %453 = vector.broadcast %452 : vector<16x1xf32> to vector<16x16xf32>
    %454 = arith.subf %450, %453 : vector<16x16xf32>
    %455 = math.exp %454 : vector<16x16xf32>
    %cst_182 = arith.constant dense<0.000000e+00> : vector<16xf32>
    %456 = vector.multi_reduction <add>, %455, %cst_182 [1] : vector<16x16xf32> to vector<16xf32>
    %457 = vector.shape_cast %456 : vector<16xf32> to vector<16x1xf32>
    %458 = tpu.reciprocal %457 {approx = true} : vector<16x1xf32> -> vector<16x1xf32>
    %459 = vector.broadcast %458 : vector<16x1xf32> to vector<16x16xf32>
    %460 = arith.mulf %455, %459 : vector<16x16xf32>
    %cst_183 = arith.constant dense<0.000000e+00> : vector<16x8xf32>
    %461 = tpu.matmul %460, %446, %cst_183 {dimension_numbers = #tpu.dot_dimension_numbers<[1], [0], [0], [1], [0, 0, 1, 1], [], []>} : vector<16x16xf32>, vector<16x8xf32>, vector<16x8xf32> -> vector<16x8xf32>
    %c504 = arith.constant 504 : index
    %c0_184 = arith.constant 0 : index
    %462 = vector.load %arg2[%c504, %c0_184] : memref<816x32xf32, #tpu.memory_space<vmem>>, vector<8x32xf32>
    %cst_185 = arith.constant dense<0.000000e+00> : vector<16x32xf32>
    %463 = tpu.matmul %461, %462, %cst_185 {dimension_numbers = #tpu.dot_dimension_numbers<[1], [0], [0], [1], [0, 0, 1, 1], [], []>} : vector<16x8xf32>, vector<8x32xf32>, vector<16x32xf32> -> vector<16x32xf32>
    %464 = arith.addf %425, %463 : vector<16x32xf32>
    %c520 = arith.constant 520 : index
    %c0_186 = arith.constant 0 : index
    %465 = vector.load %arg2[%c520, %c0_186] : memref<816x32xf32, #tpu.memory_space<vmem>>, vector<1x32xf32>
    %c528 = arith.constant 528 : index
    %c0_187 = arith.constant 0 : index
    %466 = vector.load %arg2[%c528, %c0_187] : memref<816x32xf32, #tpu.memory_space<vmem>>, vector<1x32xf32>
    %cst_188 = arith.constant dense<0.000000e+00> : vector<16xf32>
    %467 = vector.multi_reduction <add>, %464, %cst_188 [1] : vector<16x32xf32> to vector<16xf32>
    %468 = vector.shape_cast %467 : vector<16xf32> to vector<16x1xf32>
    %cst_189 = arith.constant 3.200000e+01 : f32
    %469 = vector.broadcast %cst_189 : f32 to vector<16x1xf32>
    %470 = arith.divf %468, %469 : vector<16x1xf32>
    %471 = vector.broadcast %470 : vector<16x1xf32> to vector<16x32xf32>
    %472 = arith.subf %464, %471 : vector<16x32xf32>
    %473 = arith.mulf %472, %472 : vector<16x32xf32>
    %cst_190 = arith.constant dense<0.000000e+00> : vector<16xf32>
    %474 = vector.multi_reduction <add>, %473, %cst_190 [1] : vector<16x32xf32> to vector<16xf32>
    %475 = vector.shape_cast %474 : vector<16xf32> to vector<16x1xf32>
    %cst_191 = arith.constant 3.200000e+01 : f32
    %476 = vector.broadcast %cst_191 : f32 to vector<16x1xf32>
    %477 = arith.divf %475, %476 : vector<16x1xf32>
    %478 = vector.broadcast %470 : vector<16x1xf32> to vector<16x32xf32>
    %479 = arith.subf %464, %478 : vector<16x32xf32>
    %cst_192 = arith.constant 9.99999974E-6 : f32
    %480 = vector.broadcast %cst_192 : f32 to vector<16x1xf32>
    %481 = arith.addf %477, %480 : vector<16x1xf32>
    %482 = math.rsqrt %481 : vector<16x1xf32>
    %483 = vector.broadcast %482 : vector<16x1xf32> to vector<16x32xf32>
    %484 = arith.mulf %479, %483 : vector<16x32xf32>
    %485 = vector.broadcast %465 : vector<1x32xf32> to vector<16x32xf32>
    %486 = arith.mulf %484, %485 : vector<16x32xf32>
    %487 = vector.broadcast %466 : vector<1x32xf32> to vector<16x32xf32>
    %488 = arith.addf %486, %487 : vector<16x32xf32>
    %c40 = arith.constant 40 : index
    %c0_193 = arith.constant 0 : index
    %489 = vector.load %arg3[%c40, %c0_193] : memref<80x128xf32, #tpu.memory_space<vmem>>, vector<32x128xf32>
    %cst_194 = arith.constant dense<0.000000e+00> : vector<16x128xf32>
    %490 = tpu.matmul %488, %489, %cst_194 {dimension_numbers = #tpu.dot_dimension_numbers<[1], [0], [0], [1], [0, 0, 1, 1], [], []>} : vector<16x32xf32>, vector<32x128xf32>, vector<16x128xf32> -> vector<16x128xf32>
    %c72 = arith.constant 72 : index
    %c0_195 = arith.constant 0 : index
    %491 = vector.load %arg3[%c72, %c0_195] : memref<80x128xf32, #tpu.memory_space<vmem>>, vector<1x128xf32>
    %492 = vector.broadcast %491 : vector<1x128xf32> to vector<16x128xf32>
    %493 = arith.addf %490, %492 : vector<16x128xf32>
    %cst_196 = arith.constant 1.702000e+00 : f32
    %494 = vector.broadcast %cst_196 : f32 to vector<16x128xf32>
    %495 = arith.mulf %494, %493 : vector<16x128xf32>
    %496 = arith.negf %495 : vector<16x128xf32>
    %497 = math.exp %496 : vector<16x128xf32>
    %cst_197 = arith.constant 1.000000e+00 : f32
    %498 = vector.broadcast %cst_197 : f32 to vector<16x128xf32>
    %499 = arith.addf %498, %497 : vector<16x128xf32>
    %500 = arith.divf %498, %499 : vector<16x128xf32>
    %501 = arith.mulf %493, %500 : vector<16x128xf32>
    %c536 = arith.constant 536 : index
    %c0_198 = arith.constant 0 : index
    %502 = vector.load %arg2[%c536, %c0_198] : memref<816x32xf32, #tpu.memory_space<vmem>>, vector<128x32xf32>
    %cst_199 = arith.constant dense<0.000000e+00> : vector<16x32xf32>
    %503 = tpu.matmul %501, %502, %cst_199 {dimension_numbers = #tpu.dot_dimension_numbers<[1], [0], [0], [1], [0, 0, 1, 1], [], []>} : vector<16x128xf32>, vector<128x32xf32>, vector<16x32xf32> -> vector<16x32xf32>
    %504 = arith.addf %464, %503 : vector<16x32xf32>
    %c664 = arith.constant 664 : index
    %c0_200 = arith.constant 0 : index
    %505 = vector.load %arg2[%c664, %c0_200] : memref<816x32xf32, #tpu.memory_space<vmem>>, vector<1x32xf32>
    %506 = vector.broadcast %505 : vector<1x32xf32> to vector<16x32xf32>
    %507 = arith.addf %504, %506 : vector<16x32xf32>
    %c672 = arith.constant 672 : index
    %c0_201 = arith.constant 0 : index
    %508 = vector.load %arg2[%c672, %c0_201] : memref<816x32xf32, #tpu.memory_space<vmem>>, vector<1x32xf32>
    %c680 = arith.constant 680 : index
    %c0_202 = arith.constant 0 : index
    %509 = vector.load %arg2[%c680, %c0_202] : memref<816x32xf32, #tpu.memory_space<vmem>>, vector<1x32xf32>
    %cst_203 = arith.constant dense<0.000000e+00> : vector<16xf32>
    %510 = vector.multi_reduction <add>, %507, %cst_203 [1] : vector<16x32xf32> to vector<16xf32>
    %511 = vector.shape_cast %510 : vector<16xf32> to vector<16x1xf32>
    %cst_204 = arith.constant 3.200000e+01 : f32
    %512 = vector.broadcast %cst_204 : f32 to vector<16x1xf32>
    %513 = arith.divf %511, %512 : vector<16x1xf32>
    %514 = vector.broadcast %513 : vector<16x1xf32> to vector<16x32xf32>
    %515 = arith.subf %507, %514 : vector<16x32xf32>
    %516 = arith.mulf %515, %515 : vector<16x32xf32>
    %cst_205 = arith.constant dense<0.000000e+00> : vector<16xf32>
    %517 = vector.multi_reduction <add>, %516, %cst_205 [1] : vector<16x32xf32> to vector<16xf32>
    %518 = vector.shape_cast %517 : vector<16xf32> to vector<16x1xf32>
    %cst_206 = arith.constant 3.200000e+01 : f32
    %519 = vector.broadcast %cst_206 : f32 to vector<16x1xf32>
    %520 = arith.divf %518, %519 : vector<16x1xf32>
    %521 = vector.broadcast %513 : vector<16x1xf32> to vector<16x32xf32>
    %522 = arith.subf %507, %521 : vector<16x32xf32>
    %cst_207 = arith.constant 9.99999974E-6 : f32
    %523 = vector.broadcast %cst_207 : f32 to vector<16x1xf32>
    %524 = arith.addf %520, %523 : vector<16x1xf32>
    %525 = math.rsqrt %524 : vector<16x1xf32>
    %526 = vector.broadcast %525 : vector<16x1xf32> to vector<16x32xf32>
    %527 = arith.mulf %522, %526 : vector<16x32xf32>
    %528 = vector.broadcast %508 : vector<1x32xf32> to vector<16x32xf32>
    %529 = arith.mulf %527, %528 : vector<16x32xf32>
    %530 = vector.broadcast %509 : vector<1x32xf32> to vector<16x32xf32>
    %531 = arith.addf %529, %530 : vector<16x32xf32>
    %c736 = arith.constant 736 : index
    %c0_208 = arith.constant 0 : index
    %532 = vector.load %arg2[%c736, %c0_208] : memref<816x32xf32, #tpu.memory_space<vmem>>, vector<2x16xf32>
    %cst_209 = arith.constant dense<0.000000e+00> : vector<2x32xf32>
    %533 = tpu.matmul %532, %531, %cst_209 {dimension_numbers = #tpu.dot_dimension_numbers<[1], [0], [0], [1], [0, 0, 1, 1], [], []>} : vector<2x16xf32>, vector<16x32xf32>, vector<2x32xf32> -> vector<2x32xf32>
    %c688 = arith.constant 688 : index
    %c0_210 = arith.constant 0 : index
    %534 = vector.load %arg2[%c688, %c0_210] : memref<816x32xf32, #tpu.memory_space<vmem>>, vector<32x32xf32>
    %cst_211 = arith.constant dense<0.000000e+00> : vector<2x32xf32>
    %535 = tpu.matmul %533, %534, %cst_211 {dimension_numbers = #tpu.dot_dimension_numbers<[1], [0], [0], [1], [0, 0, 1, 1], [], []>} : vector<2x32xf32>, vector<32x32xf32>, vector<2x32xf32> -> vector<2x32xf32>
    %536 = arith.mulf %535, %535 : vector<2x32xf32>
    %cst_212 = arith.constant dense<0.000000e+00> : vector<2xf32>
    %537 = vector.multi_reduction <add>, %536, %cst_212 [1] : vector<2x32xf32> to vector<2xf32>
    %538 = vector.shape_cast %537 : vector<2xf32> to vector<2x1xf32>
    %cst_213 = arith.constant 9.99999996E-13 : f32
    %539 = vector.broadcast %cst_213 : f32 to vector<2x1xf32>
    %540 = arith.addf %538, %539 : vector<2x1xf32>
    %541 = math.rsqrt %540 : vector<2x1xf32>
    %542 = vector.broadcast %541 : vector<2x1xf32> to vector<2x32xf32>
    %543 = arith.mulf %535, %542 : vector<2x32xf32>
    %c744 = arith.constant 744 : index
    %c0_214 = arith.constant 0 : index
    %544 = vector.load %arg2[%c744, %c0_214] : memref<816x32xf32, #tpu.memory_space<vmem>>, vector<32x16xf32>
    %cst_215 = arith.constant dense<0.000000e+00> : vector<2x16xf32>
    %545 = tpu.matmul %543, %544, %cst_215 {dimension_numbers = #tpu.dot_dimension_numbers<[1], [0], [0], [1], [0, 0, 1, 1], [], []>} : vector<2x32xf32>, vector<32x16xf32>, vector<2x16xf32> -> vector<2x16xf32>
    %c776 = arith.constant 776 : index
    %c0_216 = arith.constant 0 : index
    %546 = vector.load %arg2[%c776, %c0_216] : memref<816x32xf32, #tpu.memory_space<vmem>>, vector<32x16xf32>
    %cst_217 = arith.constant dense<0.000000e+00> : vector<2x16xf32>
    %547 = tpu.matmul %270, %546, %cst_217 {dimension_numbers = #tpu.dot_dimension_numbers<[1], [0], [0], [1], [0, 0, 1, 1], [], []>} : vector<2x32xf32>, vector<32x16xf32>, vector<2x16xf32> -> vector<2x16xf32>
    %548 = arith.addf %545, %547 : vector<2x16xf32>
    %c808 = arith.constant 808 : index
    %c0_218 = arith.constant 0 : index
    %549 = vector.load %arg2[%c808, %c0_218] : memref<816x32xf32, #tpu.memory_space<vmem>>, vector<1x16xf32>
    %550 = vector.broadcast %549 : vector<1x16xf32> to vector<2x16xf32>
    %551 = arith.addf %548, %550 : vector<2x16xf32>
    %c0_219 = arith.constant 0 : index
    %c0_220 = arith.constant 0 : index
    %552 = vector.load %arg5[%c0_219, %c0_220] : memref<2x16xf32, #tpu.memory_space<vmem>>, vector<2x16xf32>
    tpu.vector_store %arg5[%c0_219, %c0_220], %551 {strides = array<i32>} : memref<2x16xf32, #tpu.memory_space<vmem>>, vector<2x16xf32>,
    return
  }
}

</mosaic_0001>

<llo_original>
// kernel: clip_vln_forward.1
$region0: #{clip_vln_forward.1}
  #allocation0 [shape = 'u32[]', space=smem, size = 0x4, offset = 0x4, fixed_abs, tag = 'smem constant byte address 0x4 - core index']
  #allocation1 [shape = 'u32[144,128]{1,0:T(1,128)}', space=vmem, size = 0x12000, scoped, tag = 'internal scratch']
  %s0 = inlined_call_operand.vmem [shape: f32[32,48], index: 0, kind: input, shape index: {}]
  %s1 = inlined_call_operand.vmem [shape: s32[16,1], index: 1, kind: input, shape index: {}]
  %s2 = inlined_call_operand.vmem [shape: f32[816,32], index: 2, kind: input, shape index: {}]
  %s3 = inlined_call_operand.vmem [shape: f32[80,128], index: 3, kind: input, shape index: {}]
  %s4 = inlined_call_operand.vmem [shape: f32[24,40,8], index: 4, kind: input, shape index: {}]
  %s5 = inlined_call_operand.hbm [shape: f32[2,16], index: 5, kind: output, shape index: {}]
  %s6 = sld [smem:[#allocation0]]
  $region30: #{clip_vln_forward.1} parent=0
    _
  %s8 = ssub.s32 1, %s6
  %s9 = scalar_select 0, %s8, %s6
  $region1: #{clip_vln_forward.1} parent=0
    #allocation2 [shape = 'u8[1024]{0}', space=vmem, size = 0x400, scoped, tag = 'output window, operand 0, single buffered']
    #allocation3 [shape = 's32[1]{0}', space=sflag, size = 0x4, scoped, tag = 'scoped memory for clip_vln_forward.1']
    %10 = vsyncpa [#allocation3], 0
    // Predicated region
    $region2: #{clip_vln_forward.1} parent=1 // pred_check
      _
    $region3: #{clip_vln_forward.1} parent=1 // pred_check_branch
      %12 = sbr.rel (0) target = $region5
    $region4: #{clip_vln_forward.1} parent=1 // pred_region
      _
    $region5: #{clip_vln_forward.1} parent=1 // pred_fallthru
      _
    // Predicated region
    $region6: #{clip_vln_forward.1} parent=1 // pred_check
      _
    $region7: #{clip_vln_forward.1} parent=1 // pred_check_branch
      %14 = sbr.rel (0) target = $region9
    $region8: #{clip_vln_forward.1} parent=1 // pred_region
      _
    $region9: #{clip_vln_forward.1} parent=1 // pred_fallthru
      _
    // Predicated region
    $region10: #{clip_vln_forward.1} parent=1 // pred_check
      _
    $region11: #{clip_vln_forward.1} parent=1 // pred_check_branch
      %16 = sbr.rel (0) target = $region13
    $region12: #{clip_vln_forward.1} parent=1 // pred_region
      _
    $region13: #{clip_vln_forward.1} parent=1 // pred_fallthru
      _
    // Predicated region
    $region14: #{clip_vln_forward.1} parent=1 // pred_check
      _
    $region15: #{clip_vln_forward.1} parent=1 // pred_check_branch
      %18 = sbr.rel (0) target = $region17
    $region16: #{clip_vln_forward.1} parent=1 // pred_region
      _
    $region17: #{clip_vln_forward.1} parent=1 // pred_fallthru
      _
    // Predicated region
    $region18: #{clip_vln_forward.1} parent=1 // pred_check
      _
    $region19: #{clip_vln_forward.1} parent=1 // pred_check_branch
      %20 = sbr.rel (0) target = $region21
    $region20: #{clip_vln_forward.1} parent=1 // pred_region
      _
    $region21: #{clip_vln_forward.1} parent=1 // pred_fallthru
      _
    %v21 = vld [vmem:[%s0] sm:$0xff]
    %v22 = vld [vmem:[%s0 + $0x8] sm:$0xff]
    %v23 = vld [vmem:[%s0 + $0x10] sm:$0xff]
    %v24 = vld [vmem:[%s0 + $0x18] sm:$0xff]
    %v25 = vld [vmem:[%s2] sm:$0xff]
    %v26 = vld [vmem:[%s2 + $0x8] sm:$0xff]
    %v27 = vld [vmem:[%s2 + $0x10] sm:$0xff]
    %v28 = vld [vmem:[%s2 + $0x18] sm:$0xff]
    %v29 = vld [vmem:[%s2 + $0x20] sm:$0xff]
    %v30 = vld [vmem:[%s2 + $0x28] sm:$0xff]
    %v31 = vld [vmem:[%s2 + $0x30] sm:$0x1]
    %v32 = vlaneseq
    %v33 = vshrl.u32 %v32, 7
    %v34 = vsub.s32 0, %v33
    %v35 = vrot.slane %v31, %v34
    %vm36 = vcmask 392192
    %v38 = vsel %vm36, %v21, 0
    %v41 = vsel %vm36, %v22, 0
    %v44 = vsel %vm36, %v23, 0
    %v47 = vsel %vm36, %v24, 0
    %49 = vmatprep.subr.mxu0 0.0
    %50 = vmatpush1.msra.mxu0 %v25
    %51 = vmatprep.subr.mxu0 0.0
    %52 = vmatpush1.msra.mxu0 %v26
    %53 = vmatprep.subr.mxu0 0.0
    %54 = vmatpush1.msra.mxu0 %v27
    %55 = vmatprep.subr.mxu0 0.0
    %56 = vmatpush1.msra.mxu0 %v28
    %57 = vmatprep.subr.mxu0 0.0
    %58 = vmatpush1.msra.mxu0 %v29
    %59 = vmatprep.subr.mxu0 0.0
    %60 = vmatpush1.msra.mxu0 %v30
    %61 = vmatprep.subr.mxu0 0.0
    %62 = vmatpush1.msra.mxu0 0.0
    %63 = vmatprep.subr.mxu0 0.0
    %64 = vmatpush1.msra.mxu0 0.0
    %65 = vmatprep.subr.mxu0 0.0
    %66 = vmatpush1.msra.mxu0 0.0
    %67 = vmatprep.subr.mxu0 0.0
    %68 = vmatpush1.msra.mxu0 0.0
    %69 = vmatprep.subr.mxu0 0.0
    %70 = vmatpush1.msra.mxu0 0.0
    %71 = vmatprep.subr.mxu0 0.0
    %72 = vmatpush1.msra.mxu0 0.0
    %73 = vmatprep.subr.mxu0 0.0
    %74 = vmatpush1.msra.mxu0 0.0
    %75 = vmatprep.subr.mxu0 0.0
    %76 = vmatpush1.msra.mxu0 0.0
    %77 = vmatprep.subr.mxu0 0.0
    %78 = vmatpush1.msra.mxu0 0.0
    %79 = vmatprep.subr.mxu0 0.0
    %80 = vmatpush1.msra.mxu0 0.0
    %81 = vmatprep.subr.mxu0 0.0
    %82 = vmatpush1.msra.mxu0 0.0
    %83 = vmatprep.subr.mxu0 0.0
    %84 = vmatpush1.msra.mxu0 0.0
    %85 = vmatprep.subr.mxu0 0.0
    %86 = vmatpush1.msra.mxu0 0.0
    %87 = vmatprep.subr.mxu0 0.0
    %88 = vmatpush1.msra.mxu0 0.0
    %89 = vmatprep.subr.mxu0 0.0
    %90 = vmatpush1.msra.mxu0 0.0
    %91 = vmatprep.subr.mxu0 0.0
    %92 = vmatpush1.msra.mxu0 0.0
    %93 = vmatprep.subr.mxu0 0.0
    %94 = vmatpush1.msra.mxu0 0.0
    %95 = vmatprep.subr.mxu0 0.0
    %96 = vmatpush1.msra.mxu0 0.0
    %97 = vmatprep.subr.mxu0 0.0
    %98 = vmatpush1.msra.mxu0 0.0
    %99 = vmatprep.subr.mxu0 0.0
    %100 = vmatpush1.msra.mxu0 0.0
    %101 = vmatprep.subr.mxu0 0.0
    %102 = vmatpush1.msra.mxu0 0.0
    %103 = vmatprep.subr.mxu0 0.0
    %104 = vmatpush1.msra.mxu0 0.0
    %105 = vmatprep.subr.mxu0 0.0
    %106 = vmatpush1.msra.mxu0 0.0
    %107 = vmatprep.subr.mxu0 0.0
    %108 = vmatpush1.msra.mxu0 0.0
    %109 = vmatprep.subr.mxu0 0.0
    %110 = vmatpush1.msra.mxu0 0.0
    %111 = vmatprep.subr.mxu0 0.0
    %112 = vmatpush1.msra.mxu0 0.0
    %113 = vmatprep.mubr.f32.mxu0 0.0
    %114 = vmatmul.mubr.f32.gmra.mrb[0].mxu0 %v38
    %v115 = vpop.f32.mrb[0].mxu0
    %v116 = vadd.f32 %v35, %v115
    %v117 = vpop.f32.mrb[0].mxu0
    %118 = vmatprep.mubr.f32.mxu0 0.0
    %119 = vmatmul.mubr.f32.gmra.mrb[0].mxu0 %v41
    %v120 = vpop.f32.mrb[0].mxu0
    %v121 = vadd.f32 %v35, %v120
    %v122 = vpop.f32.mrb[0].mxu0
    %123 = vmatprep.mubr.f32.mxu0 0.0
    %124 = vmatmul.mubr.f32.gmra.mrb[0].mxu0 %v44
    %v125 = vpop.f32.mrb[0].mxu0
    %v126 = vadd.f32 %v35, %v125
    %v127 = vpop.f32.mrb[0].mxu0
    %128 = vmatprep.mubr.f32.mxu0 0.0
    %129 = vmatmul.mubr.f32.gmra.mrb[0].mxu0 %v47
    %v130 = vpop.f32.mrb[0].mxu0
    %v131 = vadd.f32 %v35, %v130
    %v132 = vpop.f32.mrb[0].mxu0
    %133 = vdwg.mxu0
    %v134 = vld [vmem:[%s2 + $0x38] sm:$0xff]
    %v135 = vld [vmem:[%s2 + $0x40] sm:$0xff]
    %v136 = vld [vmem:[%s2 + $0x48] sm:$0xff]
    %v137 = vld [vmem:[%s2 + $0x50] sm:$0xff]
    %v138 = vadd.f32 %v116, %v134
    %v139 = vadd.f32 %v121, %v135
    %v140 = vadd.f32 %v126, %v136
    %v141 = vadd.f32 %v131, %v137
    %v142 = vld [vmem:[%s2 + $0x158] sm:$0xff]
    %v143 = vld [vmem:[%s2 + $0x160] sm:$0xff]
    %v144 = vld [vmem:[%s2 + $0x168] sm:$0xff]
    %v145 = vld [vmem:[%s2 + $0x170] sm:$0xff]
    %v146 = vld [vmem:[%s2 + $0x58] sm:$0x1]
    %v147 = vld [vmem:[%s2 + $0x60] sm:$0x1]
    %vm148 = vcmask 261120
    %v149 = vsel %vm148, %v138, 0.0
    %150 = vadd.xlane.f32.xlu0 %v149
    %v151 = vpop.xlane.xlu0 %150
    %v152 = vsel %vm148, %v139, 0.0
    %153 = vadd.xlane.f32.xlu0 %v152
    %v154 = vpop.xlane.xlu0 %153
    %v155 = vsel %vm148, %v140, 0.0
    %156 = vadd.xlane.f32.xlu0 %v155
    %v157 = vpop.xlane.xlu0 %156
    %v158 = vsel %vm148, %v141, 0.0
    %159 = vadd.xlane.f32.xlu0 %v158
    %v160 = vpop.xlane.xlu0 %159
    %v161 = vrcp.pop 32.0
    %v162 = vmul.f32 %v151, %v161
    %v163 = vmul.f32 %v154, %v161
    %v164 = vmul.f32 %v157, %v161
    %v165 = vmul.f32 %v160, %v161
    %v166 = vsub.f32 %v138, %v162
    %v167 = vsub.f32 %v139, %v163
    %v168 = vsub.f32 %v140, %v164
    %v169 = vsub.f32 %v141, %v165
    %v170 = vmul.f32 %v166, %v166
    %v171 = vmul.f32 %v167, %v167
    %v172 = vmul.f32 %v168, %v168
    %v173 = vmul.f32 %v169, %v169
    %v174 = vsel %vm148, %v170, 0.0
    %175 = vadd.xlane.f32.xlu0 %v174
    %v176 = vpop.xlane.xlu0 %175
    %v177 = vsel %vm148, %v171, 0.0
    %178 = vadd.xlane.f32.xlu0 %v177
    %v179 = vpop.xlane.xlu0 %178
    %v180 = vsel %vm148, %v172, 0.0
    %181 = vadd.xlane.f32.xlu0 %v180
    %v182 = vpop.xlane.xlu0 %181
    %v183 = vsel %vm148, %v173, 0.0
    %184 = vadd.xlane.f32.xlu0 %v183
    %v185 = vpop.xlane.xlu0 %184
    %v186 = vmul.f32 %v176, %v161
    %v187 = vmul.f32 %v179, %v161
    %v188 = vmul.f32 %v182, %v161
    %v189 = vmul.f32 %v185, %v161
    %v190 = vadd.f32 %v186, 1e-05
    %v191 = vadd.f32 %v187, 1e-05
    %v192 = vadd.f32 %v188, 1e-05
    %v193 = vadd.f32 %v189, 1e-05
    %v194 = vrsqrt.pop %v190
    %v195 = vrsqrt.pop %v191
    %v196 = vrsqrt.pop %v192
    %v197 = vrsqrt.pop %v193
    %v198 = vmul.f32 %v166, %v194
    %v199 = vmul.f32 %v167, %v195
    %v200 = vmul.f32 %v168, %v196
    %v201 = vmul.f32 %v169, %v197
    %v202 = vlaneseq
    %v203 = vshrl.u32 %v202, 7
    %v204 = vsub.s32 0, %v203
    %v205 = vrot.slane %v146, %v204
    %v206 = vmul.f32 %v198, %v205
    %v207 = vmul.f32 %v199, %v205
    %v208 = vmul.f32 %v200, %v205
    %v209 = vmul.f32 %v201, %v205
    %v210 = vlaneseq
    %v211 = vshrl.u32 %v210, 7
    %v212 = vsub.s32 0, %v211
    %v213 = vrot.slane %v147, %v212
    %v214 = vadd.f32 %v206, %v213
    %v215 = vadd.f32 %v207, %v213
    %v216 = vadd.f32 %v208, %v213
    %v217 = vadd.f32 %v209, %v213
    %v218 = vld [vmem:[%s2 + $0x88] sm:$0x1]
    %v219 = vlaneseq
    %v220 = vshrl.u32 %v219, 7
    %v221 = vsub.s32 0, %v220
    %v222 = vrot.slane %v218, %v221
    %v223 = vadd.f32 %v138, %v222
    %v224 = vadd.f32 %v139, %v222
    %v225 = vadd.f32 %v140, %v222
    %v226 = vadd.f32 %v141, %v222
    %v227 = vld [vmem:[%s4] sm:$0xff]
    %v228 = vld [vmem:[%s4 + $0x8] sm:$0xff]
    %v229 = vld [vmem:[%s4 + $0x10] sm:$0xff]
    %v230 = vld [vmem:[%s4 + $0x18] sm:$0xff]
    %v231 = vld [vmem:[%s4 + $0x20] sm:$0xff]
    %v232 = vlaneseq
    %v233 = vshrl.u32 %v232, 7
    %v234 = vsub.s32 0, %v233
    %v235 = vrot.slane %v231, %v234
    %v237 = vsel %vm148, %v214, 0
    %v240 = vsel %vm148, %v215, 0
    %v243 = vsel %vm148, %v216, 0
    %v246 = vsel %vm148, %v217, 0
    %248 = vmatprep.subr.mxu0 0.0
    %249 = vmatpush1.msra.mxu0 %v227
    %250 = vmatprep.subr.mxu0 0.0
    %251 = vmatpush1.msra.mxu0 %v228
    %252 = vmatprep.subr.mxu0 0.0
    %253 = vmatpush1.msra.mxu0 %v229
    %254 = vmatprep.subr.mxu0 0.0
    %255 = vmatpush1.msra.mxu0 %v230
    %256 = vmatprep.subr.mxu0 0.0
    %257 = vmatpush1.msra.mxu0 0.0
    %258 = vmatprep.subr.mxu0 0.0
    %259 = vmatpush1.msra.mxu0 0.0
    %260 = vmatprep.subr.mxu0 0.0
    %261 = vmatpush1.msra.mxu0 0.0
    %262 = vmatprep.subr.mxu0 0.0
    %263 = vmatpush1.msra.mxu0 0.0
    %264 = vmatprep.subr.mxu0 0.0
    %265 = vmatpush1.msra.mxu0 0.0
    %266 = vmatprep.subr.mxu0 0.0
    %267 = vmatpush1.msra.mxu0 0.0
    %268 = vmatprep.subr.mxu0 0.0
    %269 = vmatpush1.msra.mxu0 0.0
    %270 = vmatprep.subr.mxu0 0.0
    %271 = vmatpush1.msra.mxu0 0.0
    %272 = vmatprep.subr.mxu0 0.0
    %273 = vmatpush1.msra.mxu0 0.0
    %274 = vmatprep.subr.mxu0 0.0
    %275 = vmatpush1.msra.mxu0 0.0
    %276 = vmatprep.subr.mxu0 0.0
    %277 = vmatpush1.msra.mxu0 0.0
    %278 = vmatprep.subr.mxu0 0.0
    %279 = vmatpush1.msra.mxu0 0.0
    %280 = vmatprep.subr.mxu0 0.0
    %281 = vmatpush1.msra.mxu0 0.0
    %282 = vmatprep.subr.mxu0 0.0
    %283 = vmatpush1.msra.mxu0 0.0
    %284 = vmatprep.subr.mxu0 0.0
    %285 = vmatpush1.msra.mxu0 0.0
    %286 = vmatprep.subr.mxu0 0.0
    %287 = vmatpush1.msra.mxu0 0.0
    %288 = vmatprep.subr.mxu0 0.0
    %289 = vmatpush1.msra.mxu0 0.0
    %290 = vmatprep.subr.mxu0 0.0
    %291 = vmatpush1.msra.mxu0 0.0
    %292 = vmatprep.subr.mxu0 0.0
    %293 = vmatpush1.msra.mxu0 0.0
    %294 = vmatprep.subr.mxu0 0.0
    %295 = vmatpush1.msra.mxu0 0.0
    %296 = vmatprep.subr.mxu0 0.0
    %297 = vmatpush1.msra.mxu0 0.0
    %298 = vmatprep.subr.mxu0 0.0
    %299 = vmatpush1.msra.mxu0 0.0
    %300 = vmatprep.subr.mxu0 0.0
    %301 = vmatpush1.msra.mxu0 0.0
    %302 = vmatprep.subr.mxu0 0.0
    %303 = vmatpush1.msra.mxu0 0.0
    %304 = vmatprep.subr.mxu0 0.0
    %305 = vmatpush1.msra.mxu0 0.0
    %306 = vmatprep.subr.mxu0 0.0
    %307 = vmatpush1.msra.mxu0 0.0
    %308 = vmatprep.subr.mxu0 0.0
    %309 = vmatpush1.msra.mxu0 0.0
    %310 = vmatprep.subr.mxu0 0.0
    %311 = vmatpush1.msra.mxu0 0.0
    %312 = vmatprep.mubr.f32.mxu0 0.0
    %313 = vmatmul.mubr.f32.gmra.mrb[0].mxu0 %v237
    %v314 = vpop.f32.mrb[0].mxu0
    %v315 = vadd.f32 %v235, %v314
    %v316 = vpop.f32.mrb[0].mxu0
    %317 = vmatprep.mubr.f32.mxu0 0.0
    %318 = vmatmul.mubr.f32.gmra.mrb[0].mxu0 %v240
    %v319 = vpop.f32.mrb[0].mxu0
    %v320 = vadd.f32 %v235, %v319
    %v321 = vpop.f32.mrb[0].mxu0
    %322 = vmatprep.mubr.f32.mxu0 0.0
    %323 = vmatmul.mubr.f32.gmra.mrb[0].mxu0 %v243
    %v324 = vpop.f32.mrb[0].mxu0
    %v325 = vadd.f32 %v235, %v324
    %v326 = vpop.f32.mrb[0].mxu0
    %327 = vmatprep.mubr.f32.mxu0 0.0
    %328 = vmatmul.mubr.f32.gmra.mrb[0].mxu0 %v246
    %v329 = vpop.f32.mrb[0].mxu0
    %v330 = vadd.f32 %v235, %v329
    %v331 = vpop.f32.mrb[0].mxu0
    %332 = vdwg.mxu0
    %s333 = scalar_lea.vmem %s4, 160
    %v334 = vld [vmem:[%s333] sm:$0xff]
    %v335 = vld [vmem:[%s333 + $0x8] sm:$0xff]
    %v336 = vld [vmem:[%s333 + $0x10] sm:$0xff]
    %v337 = vld [vmem:[%s333 + $0x18] sm:$0xff]
    %v338 = vld [vmem:[%s333 + $0x20] sm:$0xff]
    %v339 = vlaneseq
    %v340 = vshrl.u32 %v339, 7
    %v341 = vsub.s32 0, %v340
    %v342 = vrot.slane %v338, %v341
    %343 = vmatprep.subr.mxu0 0.0
    %344 = vmatpush1.msra.mxu0 %v334
    %345 = vmatprep.subr.mxu0 0.0
    %346 = vmatpush1.msra.mxu0 %v335
    %347 = vmatprep.subr.mxu0 0.0
    %348 = vmatpush1.msra.mxu0 %v336
    %349 = vmatprep.subr.mxu0 0.0
    %350 = vmatpush1.msra.mxu0 %v337
    %351 = vmatprep.subr.mxu0 0.0
    %352 = vmatpush1.msra.mxu0 0.0
    %353 = vmatprep.subr.mxu0 0.0
    %354 = vmatpush1.msra.mxu0 0.0
    %355 = vmatprep.subr.mxu0 0.0
    %356 = vmatpush1.msra.mxu0 0.0
    %357 = vmatprep.subr.mxu0 0.0
    %358 = vmatpush1.msra.mxu0 0.0
    %359 = vmatprep.subr.mxu0 0.0
    %360 = vmatpush1.msra.mxu0 0.0
    %361 = vmatprep.subr.mxu0 0.0
    %362 = vmatpush1.msra.mxu0 0.0
    %363 = vmatprep.subr.mxu0 0.0
    %364 = vmatpush1.msra.mxu0 0.0
    %365 = vmatprep.subr.mxu0 0.0
    %366 = vmatpush1.msra.mxu0 0.0
    %367 = vmatprep.subr.mxu0 0.0
    %368 = vmatpush1.msra.mxu0 0.0
    %369 = vmatprep.subr.mxu0 0.0
    %370 = vmatpush1.msra.mxu0 0.0
    %371 = vmatprep.subr.mxu0 0.0
    %372 = vmatpush1.msra.mxu0 0.0
    %373 = vmatprep.subr.mxu0 0.0
    %374 = vmatpush1.msra.mxu0 0.0
    %375 = vmatprep.subr.mxu0 0.0
    %376 = vmatpush1.msra.mxu0 0.0
    %377 = vmatprep.subr.mxu0 0.0
    %378 = vmatpush1.msra.mxu0 0.0
    %379 = vmatprep.subr.mxu0 0.0
    %380 = vmatpush1.msra.mxu0 0.0
    %381 = vmatprep.subr.mxu0 0.0
    %382 = vmatpush1.msra.mxu0 0.0
    %383 = vmatprep.subr.mxu0 0.0
    %384 = vmatpush1.msra.mxu0 0.0
    %385 = vmatprep.subr.mxu0 0.0
    %386 = vmatpush1.msra.mxu0 0.0
    %387 = vmatprep.subr.mxu0 0.0
    %388 = vmatpush1.msra.mxu0 0.0
    %389 = vmatprep.subr.mxu0 0.0
    %390 = vmatpush1.msra.mxu0 0.0
    %391 = vmatprep.subr.mxu0 0.0
    %392 = vmatpush1.msra.mxu0 0.0
    %393 = vmatprep.subr.mxu0 0.0
    %394 = vmatpush1.msra.mxu0 0.0
    %395 = vmatprep.subr.mxu0 0.0
    %396 = vmatpush1.msra.mxu0 0.0
    %397 = vmatprep.subr.mxu0 0.0
    %398 = vmatpush1.msra.mxu0 0.0
    %399 = vmatprep.subr.mxu0 0.0
    %400 = vmatpush1.msra.mxu0 0.0
    %401 = vmatprep.subr.mxu0 0.0
    %402 = vmatpush1.msra.mxu0 0.0
    %403 = vmatprep.subr.mxu0 0.0
    %404 = vmatpush1.msra.mxu0 0.0
    %405 = vmatprep.subr.mxu0 0.0
    %406 = vmatpush1.msra.mxu0 0.0
    %407 = vmatprep.mubr.f32.mxu0 0.0
    %408 = vmatmul.mubr.f32.gmra.mrb[0].mxu0 %v237
    %v409 = vpop.f32.mrb[0].mxu0
    %v410 = vadd.f32 %v342, %v409
    %v411 = vpop.f32.mrb[0].mxu0
    %412 = vmatprep.mubr.f32.mxu0 0.0
    %413 = vmatmul.mubr.f32.gmra.mrb[0].mxu0 %v240
    %v414 = vpop.f32.mrb[0].mxu0
    %v415 = vadd.f32 %v342, %v414
    %v416 = vpop.f32.mrb[0].mxu0
    %417 = vmatprep.mubr.f32.mxu0 0.0
    %418 = vmatmul.mubr.f32.gmra.mrb[0].mxu0 %v243
    %v419 = vpop.f32.mrb[0].mxu0
    %v420 = vadd.f32 %v342, %v419
    %v421 = vpop.f32.mrb[0].mxu0
    %422 = vmatprep.mubr.f32.mxu0 0.0
    %423 = vmatmul.mubr.f32.gmra.mrb[0].mxu0 %v246
    %v424 = vpop.f32.mrb[0].mxu0
    %v425 = vadd.f32 %v342, %v424
    %v426 = vpop.f32.mrb[0].mxu0
    %427 = vdwg.mxu0
    %s428 = scalar_lea.vmem %s4, 320
    %v429 = vld [vmem:[%s428] sm:$0xff]
    %v430 = vld [vmem:[%s428 + $0x8] sm:$0xff]
    %v431 = vld [vmem:[%s428 + $0x10] sm:$0xff]
    %v432 = vld [vmem:[%s428 + $0x18] sm:$0xff]
    %v433 = vld [vmem:[%s428 + $0x20] sm:$0xff]
    %v434 = vlaneseq
    %v435 = vshrl.u32 %v434, 7
    %v436 = vsub.s32 0, %v435
    %v437 = vrot.slane %v433, %v436
    %438 = vmatprep.subr.mxu0 0.0
    %439 = vmatpush1.msra.mxu0 %v429
    %440 = vmatprep.subr.mxu0 0.0
    %441 = vmatpush1.msra.mxu0 %v430
    %442 = vmatprep.subr.mxu0 0.0
    %443 = vmatpush1.msra.mxu0 %v431
    %444 = vmatprep.subr.mxu0 0.0
    %445 = vmatpush1.msra.mxu0 %v432
    %446 = vmatprep.subr.mxu0 0.0
    %447 = vmatpush1.msra.mxu0 0.0
    %448 = vmatprep.subr.mxu0 0.0
    %449 = vmatpush1.msra.mxu0 0.0
    %450 = vmatprep.subr.mxu0 0.0
    %451 = vmatpush1.msra.mxu0 0.0
    %452 = vmatprep.subr.mxu0 0.0
    %453 = vmatpush1.msra.mxu0 0.0
    %454 = vmatprep.subr.mxu0 0.0
    %455 = vmatpush1.msra.mxu0 0.0
    %456 = vmatprep.subr.mxu0 0.0
    %457 = vmatpush1.msra.mxu0 0.0
    %458 = vmatprep.subr.mxu0 0.0
    %459 = vmatpush1.msra.mxu0 0.0
    %460 = vmatprep.subr.mxu0 0.0
    %461 = vmatpush1.msra.mxu0 0.0
    %462 = vmatprep.subr.mxu0 0.0
    %463 = vmatpush1.msra.mxu0 0.0
    %464 = vmatprep.subr.mxu0 0.0
    %465 = vmatpush1.msra.mxu0 0.0
    %466 = vmatprep.subr.mxu0 0.0
    %467 = vmatpush1.msra.mxu0 0.0
    %468 = vmatprep.subr.mxu0 0.0
    %469 = vmatpush1.msra.mxu0 0.0
    %470 = vmatprep.subr.mxu0 0.0
    %471 = vmatpush1.msra.mxu0 0.0
    %472 = vmatprep.subr.mxu0 0.0
    %473 = vmatpush1.msra.mxu0 0.0
    %474 = vmatprep.subr.mxu0 0.0
    %475 = vmatpush1.msra.mxu0 0.0
    %476 = vmatprep.subr.mxu0 0.0
    %477 = vmatpush1.msra.mxu0 0.0
    %478 = vmatprep.subr.mxu0 0.0
    %479 = vmatpush1.msra.mxu0 0.0
    %480 = vmatprep.subr.mxu0 0.0
    %481 = vmatpush1.msra.mxu0 0.0
    %482 = vmatprep.subr.mxu0 0.0
    %483 = vmatpush1.msra.mxu0 0.0
    %484 = vmatprep.subr.mxu0 0.0
    %485 = vmatpush1.msra.mxu0 0.0
    %486 = vmatprep.subr.mxu0 0.0
    %487 = vmatpush1.msra.mxu0 0.0
    %488 = vmatprep.subr.mxu0 0.0
    %489 = vmatpush1.msra.mxu0 0.0
    %490 = vmatprep.subr.mxu0 0.0
    %491 = vmatpush1.msra.mxu0 0.0
    %492 = vmatprep.subr.mxu0 0.0
    %493 = vmatpush1.msra.mxu0 0.0
    %494 = vmatprep.subr.mxu0 0.0
    %495 = vmatpush1.msra.mxu0 0.0
    %496 = vmatprep.subr.mxu0 0.0
    %497 = vmatpush1.msra.mxu0 0.0
    %498 = vmatprep.subr.mxu0 0.0
    %499 = vmatpush1.msra.mxu0 0.0
    %500 = vmatprep.subr.mxu0 0.0
    %501 = vmatpush1.msra.mxu0 0.0
    %502 = vmatprep.mubr.f32.mxu0 0.0
    %503 = vmatmul.mubr.f32.gmra.mrb[0].mxu0 %v237
    %v504 = vpop.f32.mrb[0].mxu0
    %v505 = vadd.f32 %v437, %v504
    %v506 = vpop.f32.mrb[0].mxu0
    %507 = vmatprep.mubr.f32.mxu0 0.0
    %508 = vmatmul.mubr.f32.gmra.mrb[0].mxu0 %v240
    %v509 = vpop.f32.mrb[0].mxu0
    %v510 = vadd.f32 %v437, %v509
    %v511 = vpop.f32.mrb[0].mxu0
    %512 = vmatprep.mubr.f32.mxu0 0.0
    %513 = vmatmul.mubr.f32.gmra.mrb[0].mxu0 %v243
    %v514 = vpop.f32.mrb[0].mxu0
    %v515 = vadd.f32 %v437, %v514
    %v516 = vpop.f32.mrb[0].mxu0
    %517 = vmatprep.mubr.f32.mxu0 0.0
    %518 = vmatmul.mubr.f32.gmra.mrb[0].mxu0 %v246
    %v519 = vpop.f32.mrb[0].mxu0
    %v520 = vadd.f32 %v437, %v519
    %v521 = vpop.f32.mrb[0].mxu0
    %522 = vdwg.mxu0
    %vm523 = vcmask 64512
    %v525 = vsel %vm523, %v315, 0
    %v528 = vsel %vm523, %v320, 0
    %v531 = vsel %vm523, %v325, 0
    %v534 = vsel %vm523, %v330, 0
    %v537 = vsel %vm523, %v410, 0
    %v540 = vsel %vm523, %v415, 0
    %v543 = vsel %vm523, %v420, 0
    %v546 = vsel %vm523, %v425, 0
    %548 = vmatprep.subr.mxu0 0.0
    %549 = vmatpush1.xpose.msra.mxu0 %v537
    %550 = vmatprep.subr.mxu0 0.0
    %551 = vmatpush1.xpose.msra.mxu0 %v540
    %552 = vmatprep.subr.mxu0 0.0
    %553 = vmatpush1.xpose.msra.mxu0 %v543
    %554 = vmatprep.subr.mxu0 0.0
    %555 = vmatpush1.xpose.msra.mxu0 %v546
    %556 = vmatprep.subr.mxu0 0.0
    %557 = vmatpush1.xpose.msra.mxu0 0.0
    %558 = vmatprep.subr.mxu0 0.0
    %559 = vmatpush1.xpose.msra.mxu0 0.0
    %560 = vmatprep.subr.mxu0 0.0
    %561 = vmatpush1.xpose.msra.mxu0 0.0
    %562 = vmatprep.subr.mxu0 0.0
    %563 = vmatpush1.xpose.msra.mxu0 0.0
    %564 = vmatprep.subr.mxu0 0.0
    %565 = vmatpush1.xpose.msra.mxu0 0.0
    %566 = vmatprep.subr.mxu0 0.0
    %567 = vmatpush1.xpose.msra.mxu0 0.0
    %568 = vmatprep.subr.mxu0 0.0
    %569 = vmatpush1.xpose.msra.mxu0 0.0
    %570 = vmatprep.subr.mxu0 0.0
    %571 = vmatpush1.xpose.msra.mxu0 0.0
    %572 = vmatprep.subr.mxu0 0.0
    %573 = vmatpush1.xpose.msra.mxu0 0.0
    %574 = vmatprep.subr.mxu0 0.0
    %575 = vmatpush1.xpose.msra.mxu0 0.0
    %576 = vmatprep.subr.mxu0 0.0
    %577 = vmatpush1.xpose.msra.mxu0 0.0
    %578 = vmatprep.subr.mxu0 0.0
    %579 = vmatpush1.xpose.msra.mxu0 0.0
    %580 = vmatprep.subr.mxu0 0.0
    %581 = vmatpush1.xpose.msra.mxu0 0.0
    %582 = vmatprep.subr.mxu0 0.0
    %583 = vmatpush1.xpose.msra.mxu0 0.0
    %584 = vmatprep.subr.mxu0 0.0
    %585 = vmatpush1.xpose.msra.mxu0 0.0
    %586 = vmatprep.subr.mxu0 0.0
    %587 = vmatpush1.xpose.msra.mxu0 0.0
    %588 = vmatprep.subr.mxu0 0.0
    %589 = vmatpush1.xpose.msra.mxu0 0.0
    %590 = vmatprep.subr.mxu0 0.0
    %591 = vmatpush1.xpose.msra.mxu0 0.0
    %592 = vmatprep.subr.mxu0 0.0
    %593 = vmatpush1.xpose.msra.mxu0 0.0
    %594 = vmatprep.subr.mxu0 0.0
    %595 = vmatpush1.xpose.msra.mxu0 0.0
    %596 = vmatprep.subr.mxu0 0.0
    %597 = vmatpush1.xpose.msra.mxu0 0.0
    %598 = vmatprep.subr.mxu0 0.0
    %599 = vmatpush1.xpose.msra.mxu0 0.0
    %600 = vmatprep.subr.mxu0 0.0
    %601 = vmatpush1.xpose.msra.mxu0 0.0
    %602 = vmatprep.subr.mxu0 0.0
    %603 = vmatpush1.xpose.msra.mxu0 0.0
    %604 = vmatprep.subr.mxu0 0.0
    %605 = vmatpush1.xpose.msra.mxu0 0.0
    %606 = vmatprep.subr.mxu0 0.0
    %607 = vmatpush1.xpose.msra.mxu0 0.0
    %608 = vmatprep.subr.mxu0 0.0
    %609 = vmatpush1.xpose.msra.mxu0 0.0
    %610 = vmatprep.subr.mxu0 0.0
    %611 = vmatpush1.xpose.msra.mxu0 0.0
    %612 = vmatprep.mubr.f32.mxu0 0.0
    %613 = vmatmul.mubr.f32.gmra.mrb[0].mxu0 %v525
    %v614 = vpop.f32.mrb[0].mxu0
    %v615 = vadd.f32 0.0, %v614
    %v616 = vpop.f32.mrb[0].mxu0
    %617 = vmatprep.mubr.f32.mxu0 0.0
    %618 = vmatmul.mubr.f32.gmra.mrb[0].mxu0 %v528
    %v619 = vpop.f32.mrb[0].mxu0
    %v620 = vadd.f32 0.0, %v619
    %v621 = vpop.f32.mrb[0].mxu0
    %622 = vmatprep.mubr.f32.mxu0 0.0
    %623 = vmatmul.mubr.f32.gmra.mrb[0].mxu0 %v531
    %v624 = vpop.f32.mrb[0].mxu0
    %v625 = vadd.f32 0.0, %v624
    %v626 = vpop.f32.mrb[0].mxu0
    %627 = vmatprep.mubr.f32.mxu0 0.0
    %628 = vmatmul.mubr.f32.gmra.mrb[0].mxu0 %v534
    %v629 = vpop.f32.mrb[0].mxu0
    %v630 = vadd.f32 0.0, %v629
    %v631 = vpop.f32.mrb[0].mxu0
    %632 = vdwg.mxu0
    %v633 = vmul.f32 %v615, 0.35355338
    %v634 = vmul.f32 %v620, 0.35355338
    %v635 = vmul.f32 %v625, 0.35355338
    %v636 = vmul.f32 %v630, 0.35355338
    %v637 = vadd.f32 %v633, %v142
    %v638 = vadd.f32 %v634, %v143
    %v639 = vadd.f32 %v635, %v144
    %v640 = vadd.f32 %v636, %v145
    %v641 = vsel %vm148, %v637, -inf
    %642 = vmax.xlane.f32.xlu0 %v641
    %v643 = vpop.xlane.xlu0 %642
    %v644 = vsel %vm148, %v638, -inf
    %645 = vmax.xlane.f32.xlu0 %v644
    %v646 = vpop.xlane.xlu0 %645
    %v647 = vsel %vm148, %v639, -inf
    %648 = vmax.xlane.f32.xlu0 %v647
    %v649 = vpop.xlane.xlu0 %648
    %v650 = vsel %vm148, %v640, -inf
    %651 = vmax.xlane.f32.xlu0 %v650
    %v652 = vpop.xlane.xlu0 %651
    %v653 = vsub.f32 %v637, %v643
    %v654 = vsub.f32 %v638, %v646
    %v655 = vsub.f32 %v639, %v649
    %v656 = vsub.f32 %v640, %v652
    %v657 = vmul.f32 %v653, 1.442695
    %v658 = vpow.pop %v657
    %v659 = vmul.f32 %v654, 1.442695
    %v660 = vpow.pop %v659
    %v661 = vmul.f32 %v655, 1.442695
    %v662 = vpow.pop %v661
    %v663 = vmul.f32 %v656, 1.442695
    %v664 = vpow.pop %v663
    %v665 = vsel %vm148, %v658, 0.0
    %666 = vadd.xlane.f32.xlu0 %v665
    %v667 = vpop.xlane.xlu0 %666
    %v668 = vsel %vm148, %v660, 0.0
    %669 = vadd.xlane.f32.xlu0 %v668
    %v670 = vpop.xlane.xlu0 %669
    %v671 = vsel %vm148, %v662, 0.0
    %672 = vadd.xlane.f32.xlu0 %v671
    %v673 = vpop.xlane.xlu0 %672
    %v674 = vsel %vm148, %v664, 0.0
    %675 = vadd.xlane.f32.xlu0 %v674
    %v676 = vpop.xlane.xlu0 %675
    %v677 = vrcp.pop %v667
    %v678 = vrcp.pop %v670
    %v679 = vrcp.pop %v673
    %v680 = vrcp.pop %v676
    %v681 = vmul.f32 %v658, %v677
    %v682 = vmul.f32 %v660, %v678
    %v683 = vmul.f32 %v662, %v679
    %v684 = vmul.f32 %v664, %v680
    %v686 = vsel %vm148, %v681, 0
    %v689 = vsel %vm148, %v682, 0
    %v692 = vsel %vm148, %v683, 0
    %v695 = vsel %vm148, %v684, 0
    %697 = vmatprep.subr.mxu0 0.0
    %698 = vmatpush1.msra.mxu0 %v505
    %699 = vmatprep.subr.mxu0 0.0
    %700 = vmatpush1.msra.mxu0 %v510
    %701 = vmatprep.subr.mxu0 0.0
    %702 = vmatpush1.msra.mxu0 %v515
    %703 = vmatprep.subr.mxu0 0.0
    %704 = vmatpush1.msra.mxu0 %v520
    %705 = vmatprep.subr.mxu0 0.0
    %706 = vmatpush1.msra.mxu0 0.0
    %707 = vmatprep.subr.mxu0 0.0
    %708 = vmatpush1.msra.mxu0 0.0
    %709 = vmatprep.subr.mxu0 0.0
    %710 = vmatpush1.msra.mxu0 0.0
    %711 = vmatprep.subr.mxu0 0.0
    %712 = vmatpush1.msra.mxu0 0.0
    %713 = vmatprep.subr.mxu0 0.0
    %714 = vmatpush1.msra.mxu0 0.0
    %715 = vmatprep.subr.mxu0 0.0
    %716 = vmatpush1.msra.mxu0 0.0
    %717 = vmatprep.subr.mxu0 0.0
    %718 = vmatpush1.msra.mxu0 0.0
    %719 = vmatprep.subr.mxu0 0.0
    %720 = vmatpush1.msra.mxu0 0.0
    %721 = vmatprep.subr.mxu0 0.0
    %722 = vmatpush1.msra.mxu0 0.0
    %723 = vmatprep.subr.mxu0 0.0
    %724 = vmatpush1.msra.mxu0 0.0
    %725 = vmatprep.subr.mxu0 0.0
    %726 = vmatpush1.msra.mxu0 0.0
    %727 = vmatprep.subr.mxu0 0.0
    %728 = vmatpush1.msra.mxu0 0.0
    %729 = vmatprep.subr.mxu0 0.0
    %730 = vmatpush1.msra.mxu0 0.0
    %731 = vmatprep.subr.mxu0 0.0
    %732 = vmatpush1.msra.mxu0 0.0
    %733 = vmatprep.subr.mxu0 0.0
    %734 = vmatpush1.msra.mxu0 0.0
    %735 = vmatprep.subr.mxu0 0.0
    %736 = vmatpush1.msra.mxu0 0.0
    %737 = vmatprep.subr.mxu0 0.0
    %738 = vmatpush1.msra.mxu0 0.0
    %739 = vmatprep.subr.mxu0 0.0
    %740 = vmatpush1.msra.mxu0 0.0
    %741 = vmatprep.subr.mxu0 0.0
    %742 = vmatpush1.msra.mxu0 0.0
    %743 = vmatprep.subr.mxu0 0.0
    %744 = vmatpush1.msra.mxu0 0.0
    %745 = vmatprep.subr.mxu0 0.0
    %746 = vmatpush1.msra.mxu0 0.0
    %747 = vmatprep.subr.mxu0 0.0
    %748 = vmatpush1.msra.mxu0 0.0
    %749 = vmatprep.subr.mxu0 0.0
    %750 = vmatpush1.msra.mxu0 0.0
    %751 = vmatprep.subr.mxu0 0.0
    %752 = vmatpush1.msra.mxu0 0.0
    %753 = vmatprep.subr.mxu0 0.0
    %754 = vmatpush1.msra.mxu0 0.0
    %755 = vmatprep.subr.mxu0 0.0
    %756 = vmatpush1.msra.mxu0 0.0
    %757 = vmatprep.subr.mxu0 0.0
    %758 = vmatpush1.msra.mxu0 0.0
    %759 = vmatprep.subr.mxu0 0.0
    %760 = vmatpush1.msra.mxu0 0.0
    %761 = vmatprep.mubr.f32.mxu0 0.0
    %762 = vmatmul.mubr.f32.gmra.mrb[0].mxu0 %v686
    %v763 = vpop.f32.mrb[0].mxu0
    %v764 = vadd.f32 0.0, %v763
    %v765 = vpop.f32.mrb[0].mxu0
    %766 = vmatprep.mubr.f32.mxu0 0.0
    %767 = vmatmul.mubr.f32.gmra.mrb[0].mxu0 %v689
    %v768 = vpop.f32.mrb[0].mxu0
    %v769 = vadd.f32 0.0, %v768
    %v770 = vpop.f32.mrb[0].mxu0
    %771 = vmatprep.mubr.f32.mxu0 0.0
    %772 = vmatmul.mubr.f32.gmra.mrb[0].mxu0 %v692
    %v773 = vpop.f32.mrb[0].mxu0
    %v774 = vadd.f32 0.0, %v773
    %v775 = vpop.f32.mrb[0].mxu0
    %776 = vmatprep.mubr.f32.mxu0 0.0
    %777 = vmatmul.mubr.f32.gmra.mrb[0].mxu0 %v695
    %v778 = vpop.f32.mrb[0].mxu0
    %v779 = vadd.f32 0.0, %v778
    %v780 = vpop.f32.mrb[0].mxu0
    %781 = vdwg.mxu0
    %v782 = vld [vmem:[%s2 + $0x68] sm:$0xff]
    %v784 = vsel %vm523, %v764, 0
    %v787 = vsel %vm523, %v769, 0
    %v790 = vsel %vm523, %v774, 0
    %v793 = vsel %vm523, %v779, 0
    %795 = vmatprep.subr.mxu0 0.0
    %796 = vmatpush1.msra.mxu0 %v782
    %797 = vmatprep.subr.mxu0 0.0
    %798 = vmatpush1.msra.mxu0 0.0
    %799 = vmatprep.subr.mxu0 0.0
    %800 = vmatpush1.msra.mxu0 0.0
    %801 = vmatprep.subr.mxu0 0.0
    %802 = vmatpush1.msra.mxu0 0.0
    %803 = vmatprep.subr.mxu0 0.0
    %804 = vmatpush1.msra.mxu0 0.0
    %805 = vmatprep.subr.mxu0 0.0
    %806 = vmatpush1.msra.mxu0 0.0
    %807 = vmatprep.subr.mxu0 0.0
    %808 = vmatpush1.msra.mxu0 0.0
    %809 = vmatprep.subr.mxu0 0.0
    %810 = vmatpush1.msra.mxu0 0.0
    %811 = vmatprep.subr.mxu0 0.0
    %812 = vmatpush1.msra.mxu0 0.0
    %813 = vmatprep.subr.mxu0 0.0
    %814 = vmatpush1.msra.mxu0 0.0
    %815 = vmatprep.subr.mxu0 0.0
    %816 = vmatpush1.msra.mxu0 0.0
    %817 = vmatprep.subr.mxu0 0.0
    %818 = vmatpush1.msra.mxu0 0.0
    %819 = vmatprep.subr.mxu0 0.0
    %820 = vmatpush1.msra.mxu0 0.0
    %821 = vmatprep.subr.mxu0 0.0
    %822 = vmatpush1.msra.mxu0 0.0
    %823 = vmatprep.subr.mxu0 0.0
    %824 = vmatpush1.msra.mxu0 0.0
    %825 = vmatprep.subr.mxu0 0.0
    %826 = vmatpush1.msra.mxu0 0.0
    %827 = vmatprep.subr.mxu0 0.0
    %828 = vmatpush1.msra.mxu0 0.0
    %829 = vmatprep.subr.mxu0 0.0
    %830 = vmatpush1.msra.mxu0 0.0
    %831 = vmatprep.subr.mxu0 0.0
    %832 = vmatpush1.msra.mxu0 0.0
    %833 = vmatprep.subr.mxu0 0.0
    %834 = vmatpush1.msra.mxu0 0.0
    %835 = vmatprep.subr.mxu0 0.0
    %836 = vmatpush1.msra.mxu0 0.0
    %837 = vmatprep.subr.mxu0 0.0
    %838 = vmatpush1.msra.mxu0 0.0
    %839 = vmatprep.subr.mxu0 0.0
    %840 = vmatpush1.msra.mxu0 0.0
    %841 = vmatprep.subr.mxu0 0.0
    %842 = vmatpush1.msra.mxu0 0.0
    %843 = vmatprep.subr.mxu0 0.0
    %844 = vmatpush1.msra.mxu0 0.0
    %845 = vmatprep.subr.mxu0 0.0
    %846 = vmatpush1.msra.mxu0 0.0
    %847 = vmatprep.subr.mxu0 0.0
    %848 = vmatpush1.msra.mxu0 0.0
    %849 = vmatprep.subr.mxu0 0.0
    %850 = vmatpush1.msra.mxu0 0.0
    %851 = vmatprep.subr.mxu0 0.0
    %852 = vmatpush1.msra.mxu0 0.0
    %853 = vmatprep.subr.mxu0 0.0
    %854 = vmatpush1.msra.mxu0 0.0
    %855 = vmatprep.subr.mxu0 0.0
    %856 = vmatpush1.msra.mxu0 0.0
    %857 = vmatprep.subr.mxu0 0.0
    %858 = vmatpush1.msra.mxu0 0.0
    %859 = vmatprep.mubr.f32.mxu0 0.0
    %860 = vmatmul.mubr.f32.gmra.mrb[0].mxu0 %v784
    %v861 = vpop.f32.mrb[0].mxu0
    %v862 = vadd.f32 0.0, %v861
    %v863 = vpop.f32.mrb[0].mxu0
    %864 = vmatprep.mubr.f32.mxu0 0.0
    %865 = vmatmul.mubr.f32.gmra.mrb[0].mxu0 %v787
    %v866 = vpop.f32.mrb[0].mxu0
    %v867 = vadd.f32 0.0, %v866
    %v868 = vpop.f32.mrb[0].mxu0
    %869 = vmatprep.mubr.f32.mxu0 0.0
    %870 = vmatmul.mubr.f32.gmra.mrb[0].mxu0 %v790
    %v871 = vpop.f32.mrb[0].mxu0
    %v872 = vadd.f32 0.0, %v871
    %v873 = vpop.f32.mrb[0].mxu0
    %874 = vmatprep.mubr.f32.mxu0 0.0
    %875 = vmatmul.mubr.f32.gmra.mrb[0].mxu0 %v793
    %v876 = vpop.f32.mrb[0].mxu0
    %v877 = vadd.f32 0.0, %v876
    %v878 = vpop.f32.mrb[0].mxu0
    %879 = vdwg.mxu0
    %v880 = vadd.f32 %v223, %v862
    %v881 = vadd.f32 %v224, %v867
    %v882 = vadd.f32 %v225, %v872
    %v883 = vadd.f32 %v226, %v877
    %s884 = scalar_lea.vmem %s4, 40
    %v885 = vld [vmem:[%s884] sm:$0xff]
    %v886 = vld [vmem:[%s884 + $0x8] sm:$0xff]
    %v887 = vld [vmem:[%s884 + $0x10] sm:$0xff]
    %v888 = vld [vmem:[%s884 + $0x18] sm:$0xff]
    %v889 = vld [vmem:[%s884 + $0x20] sm:$0xff]
    %v890 = vlaneseq
    %v891 = vshrl.u32 %v890, 7
    %v892 = vsub.s32 0, %v891
    %v893 = vrot.slane %v889, %v892
    %894 = vmatprep.subr.mxu0 0.0
    %895 = vmatpush1.msra.mxu0 %v885
    %896 = vmatprep.subr.mxu0 0.0
    %897 = vmatpush1.msra.mxu0 %v886
    %898 = vmatprep.subr.mxu0 0.0
    %899 = vmatpush1.msra.mxu0 %v887
    %900 = vmatprep.subr.mxu0 0.0
    %901 = vmatpush1.msra.mxu0 %v888
    %902 = vmatprep.subr.mxu0 0.0
    %903 = vmatpush1.msra.mxu0 0.0
    %904 = vmatprep.subr.mxu0 0.0
    %905 = vmatpush1.msra.mxu0 0.0
    %906 = vmatprep.subr.mxu0 0.0
    %907 = vmatpush1.msra.mxu0 0.0
    %908 = vmatprep.subr.mxu0 0.0
    %909 = vmatpush1.msra.mxu0 0.0
    %910 = vmatprep.subr.mxu0 0.0
    %911 = vmatpush1.msra.mxu0 0.0
    %912 = vmatprep.subr.mxu0 0.0
    %913 = vmatpush1.msra.mxu0 0.0
    %914 = vmatprep.subr.mxu0 0.0
    %915 = vmatpush1.msra.mxu0 0.0
    %916 = vmatprep.subr.mxu0 0.0
    %917 = vmatpush1.msra.mxu0 0.0
    %918 = vmatprep.subr.mxu0 0.0
    %919 = vmatpush1.msra.mxu0 0.0
    %920 = vmatprep.subr.mxu0 0.0
    %921 = vmatpush1.msra.mxu0 0.0
    %922 = vmatprep.subr.mxu0 0.0
    %923 = vmatpush1.msra.mxu0 0.0
    %924 = vmatprep.subr.mxu0 0.0
    %925 = vmatpush1.msra.mxu0 0.0
    %926 = vmatprep.subr.mxu0 0.0
    %927 = vmatpush1.msra.mxu0 0.0
    %928 = vmatprep.subr.mxu0 0.0
    %929 = vmatpush1.msra.mxu0 0.0
    %930 = vmatprep.subr.mxu0 0.0
    %931 = vmatpush1.msra.mxu0 0.0
    %932 = vmatprep.subr.mxu0 0.0
    %933 = vmatpush1.msra.mxu0 0.0
    %934 = vmatprep.subr.mxu0 0.0
    %935 = vmatpush1.msra.mxu0 0.0
    %936 = vmatprep.subr.mxu0 0.0
    %937 = vmatpush1.msra.mxu0 0.0
    %938 = vmatprep.subr.mxu0 0.0
    %939 = vmatpush1.msra.mxu0 0.0
    %940 = vmatprep.subr.mxu0 0.0
    %941 = vmatpush1.msra.mxu0 0.0
    %942 = vmatprep.subr.mxu0 0.0
    %943 = vmatpush1.msra.mxu0 0.0
    %944 = vmatprep.subr.mxu0 0.0
    %945 = vmatpush1.msra.mxu0 0.0
    %946 = vmatprep.subr.mxu0 0.0
    %947 = vmatpush1.msra.mxu0 0.0
    %948 = vmatprep.subr.mxu0 0.0
    %949 = vmatpush1.msra.mxu0 0.0
    %950 = vmatprep.subr.mxu0 0.0
    %951 = vmatpush1.msra.mxu0 0.0
    %952 = vmatprep.subr.mxu0 0.0
    %953 = vmatpush1.msra.mxu0 0.0
    %954 = vmatprep.subr.mxu0 0.0
    %955 = vmatpush1.msra.mxu0 0.0
    %956 = vmatprep.subr.mxu0 0.0
    %957 = vmatpush1.msra.mxu0 0.0
    %958 = vmatprep.mubr.f32.mxu0 0.0
    %959 = vmatmul.mubr.f32.gmra.mrb[0].mxu0 %v237
    %v960 = vpop.f32.mrb[0].mxu0
    %v961 = vadd.f32 %v893, %v960
    %v962 = vpop.f32.mrb[0].mxu0
    %963 = vmatprep.mubr.f32.mxu0 0.0
    %964 = vmatmul.mubr.f32.gmra.mrb[0].mxu0 %v240
    %v965 = vpop.f32.mrb[0].mxu0
    %v966 = vadd.f32 %v893, %v965
    %v967 = vpop.f32.mrb[0].mxu0
    %968 = vmatprep.mubr.f32.mxu0 0.0
    %969 = vmatmul.mubr.f32.gmra.mrb[0].mxu0 %v243
    %v970 = vpop.f32.mrb[0].mxu0
    %v971 = vadd.f32 %v893, %v970
    %v972 = vpop.f32.mrb[0].mxu0
    %973 = vmatprep.mubr.f32.mxu0 0.0
    %974 = vmatmul.mubr.f32.gmra.mrb[0].mxu0 %v246
    %v975 = vpop.f32.mrb[0].mxu0
    %v976 = vadd.f32 %v893, %v975
    %v977 = vpop.f32.mrb[0].mxu0
    %978 = vdwg.mxu0
    %s979 = scalar_lea.vmem %s4, 200
    %v980 = vld [vmem:[%s979] sm:$0xff]
    %v981 = vld [vmem:[%s979 + $0x8] sm:$0xff]
    %v982 = vld [vmem:[%s979 + $0x10] sm:$0xff]
    %v983 = vld [vmem:[%s979 + $0x18] sm:$0xff]
    %v984 = vld [vmem:[%s979 + $0x20] sm:$0xff]
    %v985 = vlaneseq
    %v986 = vshrl.u32 %v985, 7
    %v987 = vsub.s32 0, %v986
    %v988 = vrot.slane %v984, %v987
    %989 = vmatprep.subr.mxu0 0.0
    %990 = vmatpush1.msra.mxu0 %v980
    %991 = vmatprep.subr.mxu0 0.0
    %992 = vmatpush1.msra.mxu0 %v981
    %993 = vmatprep.subr.mxu0 0.0
    %994 = vmatpush1.msra.mxu0 %v982
    %995 = vmatprep.subr.mxu0 0.0
    %996 = vmatpush1.msra.mxu0 %v983
    %997 = vmatprep.subr.mxu0 0.0
    %998 = vmatpush1.msra.mxu0 0.0
    %999 = vmatprep.subr.mxu0 0.0
    %1000 = vmatpush1.msra.mxu0 0.0
    %1001 = vmatprep.subr.mxu0 0.0
    %1002 = vmatpush1.msra.mxu0 0.0
    %1003 = vmatprep.subr.mxu0 0.0
    %1004 = vmatpush1.msra.mxu0 0.0
    %1005 = vmatprep.subr.mxu0 0.0
    %1006 = vmatpush1.msra.mxu0 0.0
    %1007 = vmatprep.subr.mxu0 0.0
    %1008 = vmatpush1.msra.mxu0 0.0
    %1009 = vmatprep.subr.mxu0 0.0
    %1010 = vmatpush1.msra.mxu0 0.0
    %1011 = vmatprep.subr.mxu0 0.0
    %1012 = vmatpush1.msra.mxu0 0.0
    %1013 = vmatprep.subr.mxu0 0.0
    %1014 = vmatpush1.msra.mxu0 0.0
    %1015 = vmatprep.subr.mxu0 0.0
    %1016 = vmatpush1.msra.mxu0 0.0
    %1017 = vmatprep.subr.mxu0 0.0
    %1018 = vmatpush1.msra.mxu0 0.0
    %1019 = vmatprep.subr.mxu0 0.0
    %1020 = vmatpush1.msra.mxu0 0.0
    %1021 = vmatprep.subr.mxu0 0.0
    %1022 = vmatpush1.msra.mxu0 0.0
    %1023 = vmatprep.subr.mxu0 0.0
    %1024 = vmatpush1.msra.mxu0 0.0
    %1025 = vmatprep.subr.mxu0 0.0
    %1026 = vmatpush1.msra.mxu0 0.0
    %1027 = vmatprep.subr.mxu0 0.0
    %1028 = vmatpush1.msra.mxu0 0.0
    %1029 = vmatprep.subr.mxu0 0.0
    %1030 = vmatpush1.msra.mxu0 0.0
    %1031 = vmatprep.subr.mxu0 0.0
    %1032 = vmatpush1.msra.mxu0 0.0
    %1033 = vmatprep.subr.mxu0 0.0
    %1034 = vmatpush1.msra.mxu0 0.0
    %1035 = vmatprep.subr.mxu0 0.0
    %1036 = vmatpush1.msra.mxu0 0.0
    %1037 = vmatprep.subr.mxu0 0.0
    %1038 = vmatpush1.msra.mxu0 0.0
    %1039 = vmatprep.subr.mxu0 0.0
    %1040 = vmatpush1.msra.mxu0 0.0
    %1041 = vmatprep.subr.mxu0 0.0
    %1042 = vmatpush1.msra.mxu0 0.0
    %1043 = vmatprep.subr.mxu0 0.0
    %1044 = vmatpush1.msra.mxu0 0.0
    %1045 = vmatprep.subr.mxu0 0.0
    %1046 = vmatpush1.msra.mxu0 0.0
    %1047 = vmatprep.subr.mxu0 0.0
    %1048 = vmatpush1.msra.mxu0 0.0
    %1049 = vmatprep.subr.mxu0 0.0
    %1050 = vmatpush1.msra.mxu0 0.0
    %1051 = vmatprep.subr.mxu0 0.0
    %1052 = vmatpush1.msra.mxu0 0.0
    %1053 = vmatprep.mubr.f32.mxu0 0.0
    %1054 = vmatmul.mubr.f32.gmra.mrb[0].mxu0 %v237
    %v1055 = vpop.f32.mrb[0].mxu0
    %v1056 = vadd.f32 %v988, %v1055
    %v1057 = vpop.f32.mrb[0].mxu0
    %1058 = vmatprep.mubr.f32.mxu0 0.0
    %1059 = vmatmul.mubr.f32.gmra.mrb[0].mxu0 %v240
    %v1060 = vpop.f32.mrb[0].mxu0
    %v1061 = vadd.f32 %v988, %v1060
    %v1062 = vpop.f32.mrb[0].mxu0
    %1063 = vmatprep.mubr.f32.mxu0 0.0
    %1064 = vmatmul.mubr.f32.gmra.mrb[0].mxu0 %v243
    %v1065 = vpop.f32.mrb[0].mxu0
    %v1066 = vadd.f32 %v988, %v1065
    %v1067 = vpop.f32.mrb[0].mxu0
    %1068 = vmatprep.mubr.f32.mxu0 0.0
    %1069 = vmatmul.mubr.f32.gmra.mrb[0].mxu0 %v246
    %v1070 = vpop.f32.mrb[0].mxu0
    %v1071 = vadd.f32 %v988, %v1070
    %v1072 = vpop.f32.mrb[0].mxu0
    %1073 = vdwg.mxu0
    %s1074 = scalar_lea.vmem %s4, 360
    %v1075 = vld [vmem:[%s1074] sm:$0xff]
    %v1076 = vld [vmem:[%s1074 + $0x8] sm:$0xff]
    %v1077 = vld [vmem:[%s1074 + $0x10] sm:$0xff]
    %v1078 = vld [vmem:[%s1074 + $0x18] sm:$0xff]
    %v1079 = vld [vmem:[%s1074 + $0x20] sm:$0xff]
    %v1080 = vlaneseq
    %v1081 = vshrl.u32 %v1080, 7
    %v1082 = vsub.s32 0, %v1081
    %v1083 = vrot.slane %v1079, %v1082
    %1084 = vmatprep.subr.mxu0 0.0
    %1085 = vmatpush1.msra.mxu0 %v1075
    %1086 = vmatprep.subr.mxu0 0.0
    %1087 = vmatpush1.msra.mxu0 %v1076
    %1088 = vmatprep.subr.mxu0 0.0
    %1089 = vmatpush1.msra.mxu0 %v1077
    %1090 = vmatprep.subr.mxu0 0.0
    %1091 = vmatpush1.msra.mxu0 %v1078
    %1092 = vmatprep.subr.mxu0 0.0
    %1093 = vmatpush1.msra.mxu0 0.0
    %1094 = vmatprep.subr.mxu0 0.0
    %1095 = vmatpush1.msra.mxu0 0.0
    %1096 = vmatprep.subr.mxu0 0.0
    %1097 = vmatpush1.msra.mxu0 0.0
    %1098 = vmatprep.subr.mxu0 0.0
    %1099 = vmatpush1.msra.mxu0 0.0
    %1100 = vmatprep.subr.mxu0 0.0
    %1101 = vmatpush1.msra.mxu0 0.0
    %1102 = vmatprep.subr.mxu0 0.0
    %1103 = vmatpush1.msra.mxu0 0.0
    %1104 = vmatprep.subr.mxu0 0.0
    %1105 = vmatpush1.msra.mxu0 0.0
    %1106 = vmatprep.subr.mxu0 0.0
    %1107 = vmatpush1.msra.mxu0 0.0
    %1108 = vmatprep.subr.mxu0 0.0
    %1109 = vmatpush1.msra.mxu0 0.0
    %1110 = vmatprep.subr.mxu0 0.0
    %1111 = vmatpush1.msra.mxu0 0.0
    %1112 = vmatprep.subr.mxu0 0.0
    %1113 = vmatpush1.msra.mxu0 0.0
    %1114 = vmatprep.subr.mxu0 0.0
    %1115 = vmatpush1.msra.mxu0 0.0
    %1116 = vmatprep.subr.mxu0 0.0
    %1117 = vmatpush1.msra.mxu0 0.0
    %1118 = vmatprep.subr.mxu0 0.0
    %1119 = vmatpush1.msra.mxu0 0.0
    %1120 = vmatprep.subr.mxu0 0.0
    %1121 = vmatpush1.msra.mxu0 0.0
    %1122 = vmatprep.subr.mxu0 0.0
    %1123 = vmatpush1.msra.mxu0 0.0
    %1124 = vmatprep.subr.mxu0 0.0
    %1125 = vmatpush1.msra.mxu0 0.0
    %1126 = vmatprep.subr.mxu0 0.0
    %1127 = vmatpush1.msra.mxu0 0.0
    %1128 = vmatprep.subr.mxu0 0.0
    %1129 = vmatpush1.msra.mxu0 0.0
    %1130 = vmatprep.subr.mxu0 0.0
    %1131 = vmatpush1.msra.mxu0 0.0
    %1132 = vmatprep.subr.mxu0 0.0
    %1133 = vmatpush1.msra.mxu0 0.0
    %1134 = vmatprep.subr.mxu0 0.0
    %1135 = vmatpush1.msra.mxu0 0.0
    %1136 = vmatprep.subr.mxu0 0.0
    %1137 = vmatpush1.msra.mxu0 0.0
    %1138 = vmatprep.subr.mxu0 0.0
    %1139 = vmatpush1.msra.mxu0 0.0
    %1140 = vmatprep.subr.mxu0 0.0
    %1141 = vmatpush1.msra.mxu0 0.0
    %1142 = vmatprep.subr.mxu0 0.0
    %1143 = vmatpush1.msra.mxu0 0.0
    %1144 = vmatprep.subr.mxu0 0.0
    %1145 = vmatpush1.msra.mxu0 0.0
    %1146 = vmatprep.subr.mxu0 0.0
    %1147 = vmatpush1.msra.mxu0 0.0
    %1148 = vmatprep.mubr.f32.mxu0 0.0
    %1149 = vmatmul.mubr.f32.gmra.mrb[0].mxu0 %v237
    %v1150 = vpop.f32.mrb[0].mxu0
    %v1151 = vadd.f32 %v1083, %v1150
    %v1152 = vpop.f32.mrb[0].mxu0
    %1153 = vmatprep.mubr.f32.mxu0 0.0
    %1154 = vmatmul.mubr.f32.gmra.mrb[0].mxu0 %v240
    %v1155 = vpop.f32.mrb[0].mxu0
    %v1156 = vadd.f32 %v1083, %v1155
    %v1157 = vpop.f32.mrb[0].mxu0
    %1158 = vmatprep.mubr.f32.mxu0 0.0
    %1159 = vmatmul.mubr.f32.gmra.mrb[0].mxu0 %v243
    %v1160 = vpop.f32.mrb[0].mxu0
    %v1161 = vadd.f32 %v1083, %v1160
    %v1162 = vpop.f32.mrb[0].mxu0
    %1163 = vmatprep.mubr.f32.mxu0 0.0
    %1164 = vmatmul.mubr.f32.gmra.mrb[0].mxu0 %v246
    %v1165 = vpop.f32.mrb[0].mxu0
    %v1166 = vadd.f32 %v1083, %v1165
    %v1167 = vpop.f32.mrb[0].mxu0
    %1168 = vdwg.mxu0
    %v1170 = vsel %vm523, %v961, 0
    %v1173 = vsel %vm523, %v966, 0
    %v1176 = vsel %vm523, %v971, 0
    %v1179 = vsel %vm523, %v976, 0
    %v1182 = vsel %vm523, %v1056, 0
    %v1185 = vsel %vm523, %v1061, 0
    %v1188 = vsel %vm523, %v1066, 0
    %v1191 = vsel %vm523, %v1071, 0
    %1193 = vmatprep.subr.mxu0 0.0
    %1194 = vmatpush1.xpose.msra.mxu0 %v1182
    %1195 = vmatprep.subr.mxu0 0.0
    %1196 = vmatpush1.xpose.msra.mxu0 %v1185
    %1197 = vmatprep.subr.mxu0 0.0
    %1198 = vmatpush1.xpose.msra.mxu0 %v1188
    %1199 = vmatprep.subr.mxu0 0.0
    %1200 = vmatpush1.xpose.msra.mxu0 %v1191
    %1201 = vmatprep.subr.mxu0 0.0
    %1202 = vmatpush1.xpose.msra.mxu0 0.0
    %1203 = vmatprep.subr.mxu0 0.0
    %1204 = vmatpush1.xpose.msra.mxu0 0.0
    %1205 = vmatprep.subr.mxu0 0.0
    %1206 = vmatpush1.xpose.msra.mxu0 0.0
    %1207 = vmatprep.subr.mxu0 0.0
    %1208 = vmatpush1.xpose.msra.mxu0 0.0
    %1209 = vmatprep.subr.mxu0 0.0
    %1210 = vmatpush1.xpose.msra.mxu0 0.0
    %1211 = vmatprep.subr.mxu0 0.0
    %1212 = vmatpush1.xpose.msra.mxu0 0.0
    %1213 = vmatprep.subr.mxu0 0.0
    %1214 = vmatpush1.xpose.msra.mxu0 0.0
    %1215 = vmatprep.subr.mxu0 0.0
    %1216 = vmatpush1.xpose.msra.mxu0 0.0
    %1217 = vmatprep.subr.mxu0 0.0
    %1218 = vmatpush1.xpose.msra.mxu0 0.0
    %1219 = vmatprep.subr.mxu0 0.0
    %1220 = vmatpush1.xpose.msra.mxu0 0.0
    %1221 = vmatprep.subr.mxu0 0.0
    %1222 = vmatpush1.xpose.msra.mxu0 0.0
    %1223 = vmatprep.subr.mxu0 0.0
    %1224 = vmatpush1.xpose.msra.mxu0 0.0
    %1225 = vmatprep.subr.mxu0 0.0
    %1226 = vmatpush1.xpose.msra.mxu0 0.0
    %1227 = vmatprep.subr.mxu0 0.0
    %1228 = vmatpush1.xpose.msra.mxu0 0.0
    %1229 = vmatprep.subr.mxu0 0.0
    %1230 = vmatpush1.xpose.msra.mxu0 0.0
    %1231 = vmatprep.subr.mxu0 0.0
    %1232 = vmatpush1.xpose.msra.mxu0 0.0
    %1233 = vmatprep.subr.mxu0 0.0
    %1234 = vmatpush1.xpose.msra.mxu0 0.0
    %1235 = vmatprep.subr.mxu0 0.0
    %1236 = vmatpush1.xpose.msra.mxu0 0.0
    %1237 = vmatprep.subr.mxu0 0.0
    %1238 = vmatpush1.xpose.msra.mxu0 0.0
    %1239 = vmatprep.subr.mxu0 0.0
    %1240 = vmatpush1.xpose.msra.mxu0 0.0
    %1241 = vmatprep.subr.mxu0 0.0
    %1242 = vmatpush1.xpose.msra.mxu0 0.0
    %1243 = vmatprep.subr.mxu0 0.0
    %1244 = vmatpush1.xpose.msra.mxu0 0.0
    %1245 = vmatprep.subr.mxu0 0.0
    %1246 = vmatpush1.xpose.msra.mxu0 0.0
    %1247 = vmatprep.subr.mxu0 0.0
    %1248 = vmatpush1.xpose.msra.mxu0 0.0
    %1249 = vmatprep.subr.mxu0 0.0
    %1250 = vmatpush1.xpose.msra.mxu0 0.0
    %1251 = vmatprep.subr.mxu0 0.0
    %1252 = vmatpush1.xpose.msra.mxu0 0.0
    %1253 = vmatprep.subr.mxu0 0.0
    %1254 = vmatpush1.xpose.msra.mxu0 0.0
    %1255 = vmatprep.subr.mxu0 0.0
    %1256 = vmatpush1.xpose.msra.mxu0 0.0
    %1257 = vmatprep.mubr.f32.mxu0 0.0
    %1258 = vmatmul.mubr.f32.gmra.mrb[0].mxu0 %v1170
    %v1259 = vpop.f32.mrb[0].mxu0
    %v1260 = vadd.f32 0.0, %v1259
    %v1261 = vpop.f32.mrb[0].mxu0
    %1262 = vmatprep.mubr.f32.mxu0 0.0
    %1263 = vmatmul.mubr.f32.gmra.mrb[0].mxu0 %v1173
    %v1264 = vpop.f32.mrb[0].mxu0
    %v1265 = vadd.f32 0.0, %v1264
    %v1266 = vpop.f32.mrb[0].mxu0
    %1267 = vmatprep.mubr.f32.mxu0 0.0
    %1268 = vmatmul.mubr.f32.gmra.mrb[0].mxu0 %v1176
    %v1269 = vpop.f32.mrb[0].mxu0
    %v1270 = vadd.f32 0.0, %v1269
    %v1271 = vpop.f32.mrb[0].mxu0
    %1272 = vmatprep.mubr.f32.mxu0 0.0
    %1273 = vmatmul.mubr.f32.gmra.mrb[0].mxu0 %v1179
    %v1274 = vpop.f32.mrb[0].mxu0
    %v1275 = vadd.f32 0.0, %v1274
    %v1276 = vpop.f32.mrb[0].mxu0
    %1277 = vdwg.mxu0
    %v1278 = vmul.f32 %v1260, 0.35355338
    %v1279 = vmul.f32 %v1265, 0.35355338
    %v1280 = vmul.f32 %v1270, 0.35355338
    %v1281 = vmul.f32 %v1275, 0.35355338
    %v1282 = vadd.f32 %v1278, %v142
    %v1283 = vadd.f32 %v1279, %v143
    %v1284 = vadd.f32 %v1280, %v144
    %v1285 = vadd.f32 %v1281, %v145
    %v1286 = vsel %vm148, %v1282, -inf
    %1287 = vmax.xlane.f32.xlu0 %v1286
    %v1288 = vpop.xlane.xlu0 %1287
    %v1289 = vsel %vm148, %v1283, -inf
    %1290 = vmax.xlane.f32.xlu0 %v1289
    %v1291 = vpop.xlane.xlu0 %1290
    %v1292 = vsel %vm148, %v1284, -inf
    %1293 = vmax.xlane.f32.xlu0 %v1292
    %v1294 = vpop.xlane.xlu0 %1293
    %v1295 = vsel %vm148, %v1285, -inf
    %1296 = vmax.xlane.f32.xlu0 %v1295
    %v1297 = vpop.xlane.xlu0 %1296
    %v1298 = vsub.f32 %v1282, %v1288
    %v1299 = vsub.f32 %v1283, %v1291
    %v1300 = vsub.f32 %v1284, %v1294
    %v1301 = vsub.f32 %v1285, %v1297
    %v1302 = vmul.f32 %v1298, 1.442695
    %v1303 = vpow.pop %v1302
    %v1304 = vmul.f32 %v1299, 1.442695
    %v1305 = vpow.pop %v1304
    %v1306 = vmul.f32 %v1300, 1.442695
    %v1307 = vpow.pop %v1306
    %v1308 = vmul.f32 %v1301, 1.442695
    %v1309 = vpow.pop %v1308
    %v1310 = vsel %vm148, %v1303, 0.0
    %1311 = vadd.xlane.f32.xlu0 %v1310
    %v1312 = vpop.xlane.xlu0 %1311
    %v1313 = vsel %vm148, %v1305, 0.0
    %1314 = vadd.xlane.f32.xlu0 %v1313
    %v1315 = vpop.xlane.xlu0 %1314
    %v1316 = vsel %vm148, %v1307, 0.0
    %1317 = vadd.xlane.f32.xlu0 %v1316
    %v1318 = vpop.xlane.xlu0 %1317
    %v1319 = vsel %vm148, %v1309, 0.0
    %1320 = vadd.xlane.f32.xlu0 %v1319
    %v1321 = vpop.xlane.xlu0 %1320
    %v1322 = vrcp.pop %v1312
    %v1323 = vrcp.pop %v1315
    %v1324 = vrcp.pop %v1318
    %v1325 = vrcp.pop %v1321
    %v1326 = vmul.f32 %v1303, %v1322
    %v1327 = vmul.f32 %v1305, %v1323
    %v1328 = vmul.f32 %v1307, %v1324
    %v1329 = vmul.f32 %v1309, %v1325
    %v1331 = vsel %vm148, %v1326, 0
    %v1334 = vsel %vm148, %v1327, 0
    %v1337 = vsel %vm148, %v1328, 0
    %v1340 = vsel %vm148, %v1329, 0
    %1342 = vmatprep.subr.mxu0 0.0
    %1343 = vmatpush1.msra.mxu0 %v1151
    %1344 = vmatprep.subr.mxu0 0.0
    %1345 = vmatpush1.msra.mxu0 %v1156
    %1346 = vmatprep.subr.mxu0 0.0
    %1347 = vmatpush1.msra.mxu0 %v1161
    %1348 = vmatprep.subr.mxu0 0.0
    %1349 = vmatpush1.msra.mxu0 %v1166
    %1350 = vmatprep.subr.mxu0 0.0
    %1351 = vmatpush1.msra.mxu0 0.0
    %1352 = vmatprep.subr.mxu0 0.0
    %1353 = vmatpush1.msra.mxu0 0.0
    %1354 = vmatprep.subr.mxu0 0.0
    %1355 = vmatpush1.msra.mxu0 0.0
    %1356 = vmatprep.subr.mxu0 0.0
    %1357 = vmatpush1.msra.mxu0 0.0
    %1358 = vmatprep.subr.mxu0 0.0
    %1359 = vmatpush1.msra.mxu0 0.0
    %1360 = vmatprep.subr.mxu0 0.0
    %1361 = vmatpush1.msra.mxu0 0.0
    %1362 = vmatprep.subr.mxu0 0.0
    %1363 = vmatpush1.msra.mxu0 0.0
    %1364 = vmatprep.subr.mxu0 0.0
    %1365 = vmatpush1.msra.mxu0 0.0
    %1366 = vmatprep.subr.mxu0 0.0
    %1367 = vmatpush1.msra.mxu0 0.0
    %1368 = vmatprep.subr.mxu0 0.0
    %1369 = vmatpush1.msra.mxu0 0.0
    %1370 = vmatprep.subr.mxu0 0.0
    %1371 = vmatpush1.msra.mxu0 0.0
    %1372 = vmatprep.subr.mxu0 0.0
    %1373 = vmatpush1.msra.mxu0 0.0
    %1374 = vmatprep.subr.mxu0 0.0
    %1375 = vmatpush1.msra.mxu0 0.0
    %1376 = vmatprep.subr.mxu0 0.0
    %1377 = vmatpush1.msra.mxu0 0.0
    %1378 = vmatprep.subr.mxu0 0.0
    %1379 = vmatpush1.msra.mxu0 0.0
    %1380 = vmatprep.subr.mxu0 0.0
    %1381 = vmatpush1.msra.mxu0 0.0
    %1382 = vmatprep.subr.mxu0 0.0
    %1383 = vmatpush1.msra.mxu0 0.0
    %1384 = vmatprep.subr.mxu0 0.0
    %1385 = vmatpush1.msra.mxu0 0.0
    %1386 = vmatprep.subr.mxu0 0.0
    %1387 = vmatpush1.msra.mxu0 0.0
    %1388 = vmatprep.subr.mxu0 0.0
    %1389 = vmatpush1.msra.mxu0 0.0
    %1390 = vmatprep.subr.mxu0 0.0
    %1391 = vmatpush1.msra.mxu0 0.0
    %1392 = vmatprep.subr.mxu0 0.0
    %1393 = vmatpush1.msra.mxu0 0.0
    %1394 = vmatprep.subr.mxu0 0.0
    %1395 = vmatpush1.msra.mxu0 0.0
    %1396 = vmatprep.subr.mxu0 0.0
    %1397 = vmatpush1.msra.mxu0 0.0
    %1398 = vmatprep.subr.mxu0 0.0
    %1399 = vmatpush1.msra.mxu0 0.0
    %1400 = vmatprep.subr.mxu0 0.0
    %1401 = vmatpush1.msra.mxu0 0.0
    %1402 = vmatprep.subr.mxu0 0.0
    %1403 = vmatpush1.msra.mxu0 0.0
    %1404 = vmatprep.subr.mxu0 0.0
    %1405 = vmatpush1.msra.mxu0 0.0
    %1406 = vmatprep.mubr.f32.mxu0 0.0
    %1407 = vmatmul.mubr.f32.gmra.mrb[0].mxu0 %v1331
    %v1408 = vpop.f32.mrb[0].mxu0
    %v1409 = vadd.f32 0.0, %v1408
    %v1410 = vpop.f32.mrb[0].mxu0
    %1411 = vmatprep.mubr.f32.mxu0 0.0
    %1412 = vmatmul.mubr.f32.gmra.mrb[0].mxu0 %v1334
    %v1413 = vpop.f32.mrb[0].mxu0
    %v1414 = vadd.f32 0.0, %v1413
    %v1415 = vpop.f32.mrb[0].mxu0
    %1416 = vmatprep.mubr.f32.mxu0 0.0
    %1417 = vmatmul.mubr.f32.gmra.mrb[0].mxu0 %v1337
    %v1418 = vpop.f32.mrb[0].mxu0
    %v1419 = vadd.f32 0.0, %v1418
    %v1420 = vpop.f32.mrb[0].mxu0
    %1421 = vmatprep.mubr.f32.mxu0 0.0
    %1422 = vmatmul.mubr.f32.gmra.mrb[0].mxu0 %v1340
    %v1423 = vpop.f32.mrb[0].mxu0
    %v1424 = vadd.f32 0.0, %v1423
    %v1425 = vpop.f32.mrb[0].mxu0
    %1426 = vdwg.mxu0
    %v1427 = vld [vmem:[%s2 + $0x70] sm:$0xff]
    %v1429 = vsel %vm523, %v1409, 0
    %v1432 = vsel %vm523, %v1414, 0
    %v1435 = vsel %vm523, %v1419, 0
    %v1438 = vsel %vm523, %v1424, 0
    %1440 = vmatprep.subr.mxu0 0.0
    %1441 = vmatpush1.msra.mxu0 %v1427
    %1442 = vmatprep.subr.mxu0 0.0
    %1443 = vmatpush1.msra.mxu0 0.0
    %1444 = vmatprep.subr.mxu0 0.0
    %1445 = vmatpush1.msra.mxu0 0.0
    %1446 = vmatprep.subr.mxu0 0.0
    %1447 = vmatpush1.msra.mxu0 0.0
    %1448 = vmatprep.subr.mxu0 0.0
    %1449 = vmatpush1.msra.mxu0 0.0
    %1450 = vmatprep.subr.mxu0 0.0
    %1451 = vmatpush1.msra.mxu0 0.0
    %1452 = vmatprep.subr.mxu0 0.0
    %1453 = vmatpush1.msra.mxu0 0.0
    %1454 = vmatprep.subr.mxu0 0.0
    %1455 = vmatpush1.msra.mxu0 0.0
    %1456 = vmatprep.subr.mxu0 0.0
    %1457 = vmatpush1.msra.mxu0 0.0
    %1458 = vmatprep.subr.mxu0 0.0
    %1459 = vmatpush1.msra.mxu0 0.0
    %1460 = vmatprep.subr.mxu0 0.0
    %1461 = vmatpush1.msra.mxu0 0.0
    %1462 = vmatprep.subr.mxu0 0.0
    %1463 = vmatpush1.msra.mxu0 0.0
    %1464 = vmatprep.subr.mxu0 0.0
    %1465 = vmatpush1.msra.mxu0 0.0
    %1466 = vmatprep.subr.mxu0 0.0
    %1467 = vmatpush1.msra.mxu0 0.0
    %1468 = vmatprep.subr.mxu0 0.0
    %1469 = vmatpush1.msra.mxu0 0.0
    %1470 = vmatprep.subr.mxu0 0.0
    %1471 = vmatpush1.msra.mxu0 0.0
    %1472 = vmatprep.subr.mxu0 0.0
    %1473 = vmatpush1.msra.mxu0 0.0
    %1474 = vmatprep.subr.mxu0 0.0
    %1475 = vmatpush1.msra.mxu0 0.0
    %1476 = vmatprep.subr.mxu0 0.0
    %1477 = vmatpush1.msra.mxu0 0.0
    %1478 = vmatprep.subr.mxu0 0.0
    %1479 = vmatpush1.msra.mxu0 0.0
    %1480 = vmatprep.subr.mxu0 0.0
    %1481 = vmatpush1.msra.mxu0 0.0
    %1482 = vmatprep.subr.mxu0 0.0
    %1483 = vmatpush1.msra.mxu0 0.0
    %1484 = vmatprep.subr.mxu0 0.0
    %1485 = vmatpush1.msra.mxu0 0.0
    %1486 = vmatprep.subr.mxu0 0.0
    %1487 = vmatpush1.msra.mxu0 0.0
    %1488 = vmatprep.subr.mxu0 0.0
    %1489 = vmatpush1.msra.mxu0 0.0
    %1490 = vmatprep.subr.mxu0 0.0
    %1491 = vmatpush1.msra.mxu0 0.0
    %1492 = vmatprep.subr.mxu0 0.0
    %1493 = vmatpush1.msra.mxu0 0.0
    %1494 = vmatprep.subr.mxu0 0.0
    %1495 = vmatpush1.msra.mxu0 0.0
    %1496 = vmatprep.subr.mxu0 0.0
    %1497 = vmatpush1.msra.mxu0 0.0
    %1498 = vmatprep.subr.mxu0 0.0
    %1499 = vmatpush1.msra.mxu0 0.0
    %1500 = vmatprep.subr.mxu0 0.0
    %1501 = vmatpush1.msra.mxu0 0.0
    %1502 = vmatprep.subr.mxu0 0.0
    %1503 = vmatpush1.msra.mxu0 0.0
    %1504 = vmatprep.mubr.f32.mxu0 0.0
    %1505 = vmatmul.mubr.f32.gmra.mrb[0].mxu0 %v1429
    %v1506 = vpop.f32.mrb[0].mxu0
    %v1507 = vadd.f32 0.0, %v1506
    %v1508 = vpop.f32.mrb[0].mxu0
    %1509 = vmatprep.mubr.f32.mxu0 0.0
    %1510 = vmatmul.mubr.f32.gmra.mrb[0].mxu0 %v1432
    %v1511 = vpop.f32.mrb[0].mxu0
    %v1512 = vadd.f32 0.0, %v1511
    %v1513 = vpop.f32.mrb[0].mxu0
    %1514 = vmatprep.mubr.f32.mxu0 0.0
    %1515 = vmatmul.mubr.f32.gmra.mrb[0].mxu0 %v1435
    %v1516 = vpop.f32.mrb[0].mxu0
    %v1517 = vadd.f32 0.0, %v1516
    %v1518 = vpop.f32.mrb[0].mxu0
    %1519 = vmatprep.mubr.f32.mxu0 0.0
    %1520 = vmatmul.mubr.f32.gmra.mrb[0].mxu0 %v1438
    %v1521 = vpop.f32.mrb[0].mxu0
    %v1522 = vadd.f32 0.0, %v1521
    %v1523 = vpop.f32.mrb[0].mxu0
    %1524 = vdwg.mxu0
    %v1525 = vadd.f32 %v880, %v1507
    %v1526 = vadd.f32 %v881, %v1512
    %v1527 = vadd.f32 %v882, %v1517
    %v1528 = vadd.f32 %v883, %v1522
    %s1529 = scalar_lea.vmem %s4, 80
    %v1530 = vld [vmem:[%s1529] sm:$0xff]
    %v1531 = vld [vmem:[%s1529 + $0x8] sm:$0xff]
    %v1532 = vld [vmem:[%s1529 + $0x10] sm:$0xff]
    %v1533 = vld [vmem:[%s1529 + $0x18] sm:$0xff]
    %v1534 = vld [vmem:[%s1529 + $0x20] sm:$0xff]
    %v1535 = vlaneseq
    %v1536 = vshrl.u32 %v1535, 7
    %v1537 = vsub.s32 0, %v1536
    %v1538 = vrot.slane %v1534, %v1537
    %1539 = vmatprep.subr.mxu0 0.0
    %1540 = vmatpush1.msra.mxu0 %v1530
    %1541 = vmatprep.subr.mxu0 0.0
    %1542 = vmatpush1.msra.mxu0 %v1531
    %1543 = vmatprep.subr.mxu0 0.0
    %1544 = vmatpush1.msra.mxu0 %v1532
    %1545 = vmatprep.subr.mxu0 0.0
    %1546 = vmatpush1.msra.mxu0 %v1533
    %1547 = vmatprep.subr.mxu0 0.0
    %1548 = vmatpush1.msra.mxu0 0.0
    %1549 = vmatprep.subr.mxu0 0.0
    %1550 = vmatpush1.msra.mxu0 0.0
    %1551 = vmatprep.subr.mxu0 0.0
    %1552 = vmatpush1.msra.mxu0 0.0
    %1553 = vmatprep.subr.mxu0 0.0
    %1554 = vmatpush1.msra.mxu0 0.0
    %1555 = vmatprep.subr.mxu0 0.0
    %1556 = vmatpush1.msra.mxu0 0.0
    %1557 = vmatprep.subr.mxu0 0.0
    %1558 = vmatpush1.msra.mxu0 0.0
    %1559 = vmatprep.subr.mxu0 0.0
    %1560 = vmatpush1.msra.mxu0 0.0
    %1561 = vmatprep.subr.mxu0 0.0
    %1562 = vmatpush1.msra.mxu0 0.0
    %1563 = vmatprep.subr.mxu0 0.0
    %1564 = vmatpush1.msra.mxu0 0.0
    %1565 = vmatprep.subr.mxu0 0.0
    %1566 = vmatpush1.msra.mxu0 0.0
    %1567 = vmatprep.subr.mxu0 0.0
    %1568 = vmatpush1.msra.mxu0 0.0
    %1569 = vmatprep.subr.mxu0 0.0
    %1570 = vmatpush1.msra.mxu0 0.0
    %1571 = vmatprep.subr.mxu0 0.0
    %1572 = vmatpush1.msra.mxu0 0.0
    %1573 = vmatprep.subr.mxu0 0.0
    %1574 = vmatpush1.msra.mxu0 0.0
    %1575 = vmatprep.subr.mxu0 0.0
    %1576 = vmatpush1.msra.mxu0 0.0
    %1577 = vmatprep.subr.mxu0 0.0
    %1578 = vmatpush1.msra.mxu0 0.0
    %1579 = vmatprep.subr.mxu0 0.0
    %1580 = vmatpush1.msra.mxu0 0.0
    %1581 = vmatprep.subr.mxu0 0.0
    %1582 = vmatpush1.msra.mxu0 0.0
    %1583 = vmatprep.subr.mxu0 0.0
    %1584 = vmatpush1.msra.mxu0 0.0
    %1585 = vmatprep.subr.mxu0 0.0
    %1586 = vmatpush1.msra.mxu0 0.0
    %1587 = vmatprep.subr.mxu0 0.0
    %1588 = vmatpush1.msra.mxu0 0.0
    %1589 = vmatprep.subr.mxu0 0.0
    %1590 = vmatpush1.msra.mxu0 0.0
    %1591 = vmatprep.subr.mxu0 0.0
    %1592 = vmatpush1.msra.mxu0 0.0
    %1593 = vmatprep.subr.mxu0 0.0
    %1594 = vmatpush1.msra.mxu0 0.0
    %1595 = vmatprep.subr.mxu0 0.0
    %1596 = vmatpush1.msra.mxu0 0.0
    %1597 = vmatprep.subr.mxu0 0.0
    %1598 = vmatpush1.msra.mxu0 0.0
    %1599 = vmatprep.subr.mxu0 0.0
    %1600 = vmatpush1.msra.mxu0 0.0
    %1601 = vmatprep.subr.mxu0 0.0
    %1602 = vmatpush1.msra.mxu0 0.0
    %1603 = vmatprep.mubr.f32.mxu0 0.0
    %1604 = vmatmul.mubr.f32.gmra.mrb[0].mxu0 %v237
    %v1605 = vpop.f32.mrb[0].mxu0
    %v1606 = vadd.f32 %v1538, %v1605
    %v1607 = vpop.f32.mrb[0].mxu0
    %1608 = vmatprep.mubr.f32.mxu0 0.0
    %1609 = vmatmul.mubr.f32.gmra.mrb[0].mxu0 %v240
    %v1610 = vpop.f32.mrb[0].mxu0
    %v1611 = vadd.f32 %v1538, %v1610
    %v1612 = vpop.f32.mrb[0].mxu0
    %1613 = vmatprep.mubr.f32.mxu0 0.0
    %1614 = vmatmul.mubr.f32.gmra.mrb[0].mxu0 %v243
    %v1615 = vpop.f32.mrb[0].mxu0
    %v1616 = vadd.f32 %v1538, %v1615
    %v1617 = vpop.f32.mrb[0].mxu0
    %1618 = vmatprep.mubr.f32.mxu0 0.0
    %1619 = vmatmul.mubr.f32.gmra.mrb[0].mxu0 %v246
    %v1620 = vpop.f32.mrb[0].mxu0
    %v1621 = vadd.f32 %v1538, %v1620
    %v1622 = vpop.f32.mrb[0].mxu0
    %1623 = vdwg.mxu0
    %s1624 = scalar_lea.vmem %s4, 240
    %v1625 = vld [vmem:[%s1624] sm:$0xff]
    %v1626 = vld [vmem:[%s1624 + $0x8] sm:$0xff]
    %v1627 = vld [vmem:[%s1624 + $0x10] sm:$0xff]
    %v1628 = vld [vmem:[%s1624 + $0x18] sm:$0xff]
    %v1629 = vld [vmem:[%s1624 + $0x20] sm:$0xff]
    %v1630 = vlaneseq
    %v1631 = vshrl.u32 %v1630, 7
    %v1632 = vsub.s32 0, %v1631
    %v1633 = vrot.slane %v1629, %v1632
    %1634 = vmatprep.subr.mxu0 0.0
    %1635 = vmatpush1.msra.mxu0 %v1625
    %1636 = vmatprep.subr.mxu0 0.0
    %1637 = vmatpush1.msra.mxu0 %v1626
    %1638 = vmatprep.subr.mxu0 0.0
    %1639 = vmatpush1.msra.mxu0 %v1627
    %1640 = vmatprep.subr.mxu0 0.0
    %1641 = vmatpush1.msra.mxu0 %v1628
    %1642 = vmatprep.subr.mxu0 0.0
    %1643 = vmatpush1.msra.mxu0 0.0
    %1644 = vmatprep.subr.mxu0 0.0
    %1645 = vmatpush1.msra.mxu0 0.0
    %1646 = vmatprep.subr.mxu0 0.0
    %1647 = vmatpush1.msra.mxu0 0.0
    %1648 = vmatprep.subr.mxu0 0.0
    %1649 = vmatpush1.msra.mxu0 0.0
    %1650 = vmatprep.subr.mxu0 0.0
    %1651 = vmatpush1.msra.mxu0 0.0
    %1652 = vmatprep.subr.mxu0 0.0
    %1653 = vmatpush1.msra.mxu0 0.0
    %1654 = vmatprep.subr.mxu0 0.0
    %1655 = vmatpush1.msra.mxu0 0.0
    %1656 = vmatprep.subr.mxu0 0.0
    %1657 = vmatpush1.msra.mxu0 0.0
    %1658 = vmatprep.subr.mxu0 0.0
    %1659 = vmatpush1.msra.mxu0 0.0
    %1660 = vmatprep.subr.mxu0 0.0
    %1661 = vmatpush1.msra.mxu0 0.0
    %1662 = vmatprep.subr.mxu0 0.0
    %1663 = vmatpush1.msra.mxu0 0.0
    %1664 = vmatprep.subr.mxu0 0.0
    %1665 = vmatpush1.msra.mxu0 0.0
    %1666 = vmatprep.subr.mxu0 0.0
    %1667 = vmatpush1.msra.mxu0 0.0
    %1668 = vmatprep.subr.mxu0 0.0
    %1669 = vmatpush1.msra.mxu0 0.0
    %1670 = vmatprep.subr.mxu0 0.0
    %1671 = vmatpush1.msra.mxu0 0.0
    %1672 = vmatprep.subr.mxu0 0.0
    %1673 = vmatpush1.msra.mxu0 0.0
    %1674 = vmatprep.subr.mxu0 0.0
    %1675 = vmatpush1.msra.mxu0 0.0
    %1676 = vmatprep.subr.mxu0 0.0
    %1677 = vmatpush1.msra.mxu0 0.0
    %1678 = vmatprep.subr.mxu0 0.0
    %1679 = vmatpush1.msra.mxu0 0.0
    %1680 = vmatprep.subr.mxu0 0.0
    %1681 = vmatpush1.msra.mxu0 0.0
    %1682 = vmatprep.subr.mxu0 0.0
    %1683 = vmatpush1.msra.mxu0 0.0
    %1684 = vmatprep.subr.mxu0 0.0
    %1685 = vmatpush1.msra.mxu0 0.0
    %1686 = vmatprep.subr.mxu0 0.0
    %1687 = vmatpush1.msra.mxu0 0.0
    %1688 = vmatprep.subr.mxu0 0.0
    %1689 = vmatpush1.msra.mxu0 0.0
    %1690 = vmatprep.subr.mxu0 0.0
    %1691 = vmatpush1.msra.mxu0 0.0
    %1692 = vmatprep.subr.mxu0 0.0
    %1693 = vmatpush1.msra.mxu0 0.0
    %1694 = vmatprep.subr.mxu0 0.0
    %1695 = vmatpush1.msra.mxu0 0.0
    %1696 = vmatprep.subr.mxu0 0.0
    %1697 = vmatpush1.msra.mxu0 0.0
    %1698 = vmatprep.mubr.f32.mxu0 0.0
    %1699 = vmatmul.mubr.f32.gmra.mrb[0].mxu0 %v237
    %v1700 = vpop.f32.mrb[0].mxu0
    %v1701 = vadd.f32 %v1633, %v1700
    %v1702 = vpop.f32.mrb[0].mxu0
    %1703 = vmatprep.mubr.f32.mxu0 0.0
    %1704 = vmatmul.mubr.f32.gmra.mrb[0].mxu0 %v240
    %v1705 = vpop.f32.mrb[0].mxu0
    %v1706 = vadd.f32 %v1633, %v1705
    %v1707 = vpop.f32.mrb[0].mxu0
    %1708 = vmatprep.mubr.f32.mxu0 0.0
    %1709 = vmatmul.mubr.f32.gmra.mrb[0].mxu0 %v243
    %v1710 = vpop.f32.mrb[0].mxu0
    %v1711 = vadd.f32 %v1633, %v1710
    %v1712 = vpop.f32.mrb[0].mxu0
    %1713 = vmatprep.mubr.f32.mxu0 0.0
    %1714 = vmatmul.mubr.f32.gmra.mrb[0].mxu0 %v246
    %v1715 = vpop.f32.mrb[0].mxu0
    %v1716 = vadd.f32 %v1633, %v1715
    %v1717 = vpop.f32.mrb[0].mxu0
    %1718 = vdwg.mxu0
    %s1719 = scalar_lea.vmem %s4, 400
    %v1720 = vld [vmem:[%s1719] sm:$0xff]
    %v1721 = vld [vmem:[%s1719 + $0x8] sm:$0xff]
    %v1722 = vld [vmem:[%s1719 + $0x10] sm:$0xff]
    %v1723 = vld [vmem:[%s1719 + $0x18] sm:$0xff]
    %v1724 = vld [vmem:[%s1719 + $0x20] sm:$0xff]
    %v1725 = vlaneseq
    %v1726 = vshrl.u32 %v1725, 7
    %v1727 = vsub.s32 0, %v1726
    %v1728 = vrot.slane %v1724, %v1727
    %1729 = vmatprep.subr.mxu0 0.0
    %1730 = vmatpush1.msra.mxu0 %v1720
    %1731 = vmatprep.subr.mxu0 0.0
    %1732 = vmatpush1.msra.mxu0 %v1721
    %1733 = vmatprep.subr.mxu0 0.0
    %1734 = vmatpush1.msra.mxu0 %v1722
    %1735 = vmatprep.subr.mxu0 0.0
    %1736 = vmatpush1.msra.mxu0 %v1723
    %1737 = vmatprep.subr.mxu0 0.0
    %1738 = vmatpush1.msra.mxu0 0.0
    %1739 = vmatprep.subr.mxu0 0.0
    %1740 = vmatpush1.msra.mxu0 0.0
    %1741 = vmatprep.subr.mxu0 0.0
    %1742 = vmatpush1.msra.mxu0 0.0
    %1743 = vmatprep.subr.mxu0 0.0
    %1744 = vmatpush1.msra.mxu0 0.0
    %1745 = vmatprep.subr.mxu0 0.0
    %1746 = vmatpush1.msra.mxu0 0.0
    %1747 = vmatprep.subr.mxu0 0.0
    %1748 = vmatpush1.msra.mxu0 0.0
    %1749 = vmatprep.subr.mxu0 0.0
    %1750 = vmatpush1.msra.mxu0 0.0
    %1751 = vmatprep.subr.mxu0 0.0
    %1752 = vmatpush1.msra.mxu0 0.0
    %1753 = vmatprep.subr.mxu0 0.0
    %1754 = vmatpush1.msra.mxu0 0.0
    %1755 = vmatprep.subr.mxu0 0.0
    %1756 = vmatpush1.msra.mxu0 0.0
    %1757 = vmatprep.subr.mxu0 0.0
    %1758 = vmatpush1.msra.mxu0 0.0
    %1759 = vmatprep.subr.mxu0 0.0
    %1760 = vmatpush1.msra.mxu0 0.0
    %1761 = vmatprep.subr.mxu0 0.0
    %1762 = vmatpush1.msra.mxu0 0.0
    %1763 = vmatprep.subr.mxu0 0.0
    %1764 = vmatpush1.msra.mxu0 0.0
    %1765 = vmatprep.subr.mxu0 0.0
    %1766 = vmatpush1.msra.mxu0 0.0
    %1767 = vmatprep.subr.mxu0 0.0
    %1768 = vmatpush1.msra.mxu0 0.0
    %1769 = vmatprep.subr.mxu0 0.0
    %1770 = vmatpush1.msra.mxu0 0.0
    %1771 = vmatprep.subr.mxu0 0.0
    %1772 = vmatpush1.msra.mxu0 0.0
    %1773 = vmatprep.subr.mxu0 0.0
    %1774 = vmatpush1.msra.mxu0 0.0
    %1775 = vmatprep.subr.mxu0 0.0
    %1776 = vmatpush1.msra.mxu0 0.0
    %1777 = vmatprep.subr.mxu0 0.0
    %1778 = vmatpush1.msra.mxu0 0.0
    %1779 = vmatprep.subr.mxu0 0.0
    %1780 = vmatpush1.msra.mxu0 0.0
    %1781 = vmatprep.subr.mxu0 0.0
    %1782 = vmatpush1.msra.mxu0 0.0
    %1783 = vmatprep.subr.mxu0 0.0
    %1784 = vmatpush1.msra.mxu0 0.0
    %1785 = vmatprep.subr.mxu0 0.0
    %1786 = vmatpush1.msra.mxu0 0.0
    %1787 = vmatprep.subr.mxu0 0.0
    %1788 = vmatpush1.msra.mxu0 0.0
    %1789 = vmatprep.subr.mxu0 0.0
    %1790 = vmatpush1.msra.mxu0 0.0
    %1791 = vmatprep.subr.mxu0 0.0
    %1792 = vmatpush1.msra.mxu0 0.0
    %1793 = vmatprep.mubr.f32.mxu0 0.0
    %1794 = vmatmul.mubr.f32.gmra.mrb[0].mxu0 %v237
    %v1795 = vpop.f32.mrb[0].mxu0
    %v1796 = vadd.f32 %v1728, %v1795
    %v1797 = vpop.f32.mrb[0].mxu0
    %1798 = vmatprep.mubr.f32.mxu0 0.0
    %1799 = vmatmul.mubr.f32.gmra.mrb[0].mxu0 %v240
    %v1800 = vpop.f32.mrb[0].mxu0
    %v1801 = vadd.f32 %v1728, %v1800
    %v1802 = vpop.f32.mrb[0].mxu0
    %1803 = vmatprep.mubr.f32.mxu0 0.0
    %1804 = vmatmul.mubr.f32.gmra.mrb[0].mxu0 %v243
    %v1805 = vpop.f32.mrb[0].mxu0
    %v1806 = vadd.f32 %v1728, %v1805
    %v1807 = vpop.f32.mrb[0].mxu0
    %1808 = vmatprep.mubr.f32.mxu0 0.0
    %1809 = vmatmul.mubr.f32.gmra.mrb[0].mxu0 %v246
    %v1810 = vpop.f32.mrb[0].mxu0
    %v1811 = vadd.f32 %v1728, %v1810
    %v1812 = vpop.f32.mrb[0].mxu0
    %1813 = vdwg.mxu0
    %v1815 = vsel %vm523, %v1606, 0
    %v1818 = vsel %vm523, %v1611, 0
    %v1821 = vsel %vm523, %v1616, 0
    %v1824 = vsel %vm523, %v1621, 0
    %v1827 = vsel %vm523, %v1701, 0
    %v1830 = vsel %vm523, %v1706, 0
    %v1833 = vsel %vm523, %v1711, 0
    %v1836 = vsel %vm523, %v1716, 0
    %1838 = vmatprep.subr.mxu0 0.0
    %1839 = vmatpush1.xpose.msra.mxu0 %v1827
    %1840 = vmatprep.subr.mxu0 0.0
    %1841 = vmatpush1.xpose.msra.mxu0 %v1830
    %1842 = vmatprep.subr.mxu0 0.0
    %1843 = vmatpush1.xpose.msra.mxu0 %v1833
    %1844 = vmatprep.subr.mxu0 0.0
    %1845 = vmatpush1.xpose.msra.mxu0 %v1836
    %1846 = vmatprep.subr.mxu0 0.0
    %1847 = vmatpush1.xpose.msra.mxu0 0.0
    %1848 = vmatprep.subr.mxu0 0.0
    %1849 = vmatpush1.xpose.msra.mxu0 0.0
    %1850 = vmatprep.subr.mxu0 0.0
    %1851 = vmatpush1.xpose.msra.mxu0 0.0
    %1852 = vmatprep.subr.mxu0 0.0
    %1853 = vmatpush1.xpose.msra.mxu0 0.0
    %1854 = vmatprep.subr.mxu0 0.0
    %1855 = vmatpush1.xpose.msra.mxu0 0.0
    %1856 = vmatprep.subr.mxu0 0.0
    %1857 = vmatpush1.xpose.msra.mxu0 0.0
    %1858 = vmatprep.subr.mxu0 0.0
    %1859 = vmatpush1.xpose.msra.mxu0 0.0
    %1860 = vmatprep.subr.mxu0 0.0
    %1861 = vmatpush1.xpose.msra.mxu0 0.0
    %1862 = vmatprep.subr.mxu0 0.0
    %1863 = vmatpush1.xpose.msra.mxu0 0.0
    %1864 = vmatprep.subr.mxu0 0.0
    %1865 = vmatpush1.xpose.msra.mxu0 0.0
    %1866 = vmatprep.subr.mxu0 0.0
    %1867 = vmatpush1.xpose.msra.mxu0 0.0
    %1868 = vmatprep.subr.mxu0 0.0
    %1869 = vmatpush1.xpose.msra.mxu0 0.0
    %1870 = vmatprep.subr.mxu0 0.0
    %1871 = vmatpush1.xpose.msra.mxu0 0.0
    %1872 = vmatprep.subr.mxu0 0.0
    %1873 = vmatpush1.xpose.msra.mxu0 0.0
    %1874 = vmatprep.subr.mxu0 0.0
    %1875 = vmatpush1.xpose.msra.mxu0 0.0
    %1876 = vmatprep.subr.mxu0 0.0
    %1877 = vmatpush1.xpose.msra.mxu0 0.0
    %1878 = vmatprep.subr.mxu0 0.0
    %1879 = vmatpush1.xpose.msra.mxu0 0.0
    %1880 = vmatprep.subr.mxu0 0.0
    %1881 = vmatpush1.xpose.msra.mxu0 0.0
    %1882 = vmatprep.subr.mxu0 0.0
    %1883 = vmatpush1.xpose.msra.mxu0 0.0
    %1884 = vmatprep.subr.mxu0 0.0
    %1885 = vmatpush1.xpose.msra.mxu0 0.0
    %1886 = vmatprep.subr.mxu0 0.0
    %1887 = vmatpush1.xpose.msra.mxu0 0.0
    %1888 = vmatprep.subr.mxu0 0.0
    %1889 = vmatpush1.xpose.msra.mxu0 0.0
    %1890 = vmatprep.subr.mxu0 0.0
    %1891 = vmatpush1.xpose.msra.mxu0 0.0
    %1892 = vmatprep.subr.mxu0 0.0
    %1893 = vmatpush1.xpose.msra.mxu0 0.0
    %1894 = vmatprep.subr.mxu0 0.0
    %1895 = vmatpush1.xpose.msra.mxu0 0.0
    %1896 = vmatprep.subr.mxu0 0.0
    %1897 = vmatpush1.xpose.msra.mxu0 0.0
    %1898 = vmatprep.subr.mxu0 0.0
    %1899 = vmatpush1.xpose.msra.mxu0 0.0
    %1900 = vmatprep.subr.mxu0 0.0
    %1901 = vmatpush1.xpose.msra.mxu0 0.0
    %1902 = vmatprep.mubr.f32.mxu0 0.0
    %1903 = vmatmul.mubr.f32.gmra.mrb[0].mxu0 %v1815
    %v1904 = vpop.f32.mrb[0].mxu0
    %v1905 = vadd.f32 0.0, %v1904
    %v1906 = vpop.f32.mrb[0].mxu0
    %1907 = vmatprep.mubr.f32.mxu0 0.0
    %1908 = vmatmul.mubr.f32.gmra.mrb[0].mxu0 %v1818
    %v1909 = vpop.f32.mrb[0].mxu0
    %v1910 = vadd.f32 0.0, %v1909
    %v1911 = vpop.f32.mrb[0].mxu0
    %1912 = vmatprep.mubr.f32.mxu0 0.0
    %1913 = vmatmul.mubr.f32.gmra.mrb[0].mxu0 %v1821
    %v1914 = vpop.f32.mrb[0].mxu0
    %v1915 = vadd.f32 0.0, %v1914
    %v1916 = vpop.f32.mrb[0].mxu0
    %1917 = vmatprep.mubr.f32.mxu0 0.0
    %1918 = vmatmul.mubr.f32.gmra.mrb[0].mxu0 %v1824
    %v1919 = vpop.f32.mrb[0].mxu0
    %v1920 = vadd.f32 0.0, %v1919
    %v1921 = vpop.f32.mrb[0].mxu0
    %1922 = vdwg.mxu0
    %v1923 = vmul.f32 %v1905, 0.35355338
    %v1924 = vmul.f32 %v1910, 0.35355338
    %v1925 = vmul.f32 %v1915, 0.35355338
    %v1926 = vmul.f32 %v1920, 0.35355338
    %v1927 = vadd.f32 %v1923, %v142
    %v1928 = vadd.f32 %v1924, %v143
    %v1929 = vadd.f32 %v1925, %v144
    %v1930 = vadd.f32 %v1926, %v145
    %v1931 = vsel %vm148, %v1927, -inf
    %1932 = vmax.xlane.f32.xlu0 %v1931
    %v1933 = vpop.xlane.xlu0 %1932
    %v1934 = vsel %vm148, %v1928, -inf
    %1935 = vmax.xlane.f32.xlu0 %v1934
    %v1936 = vpop.xlane.xlu0 %1935
    %v1937 = vsel %vm148, %v1929, -inf
    %1938 = vmax.xlane.f32.xlu0 %v1937
    %v1939 = vpop.xlane.xlu0 %1938
    %v1940 = vsel %vm148, %v1930, -inf
    %1941 = vmax.xlane.f32.xlu0 %v1940
    %v1942 = vpop.xlane.xlu0 %1941
    %v1943 = vsub.f32 %v1927, %v1933
    %v1944 = vsub.f32 %v1928, %v1936
    %v1945 = vsub.f32 %v1929, %v1939
    %v1946 = vsub.f32 %v1930, %v1942
    %v1947 = vmul.f32 %v1943, 1.442695
    %v1948 = vpow.pop %v1947
    %v1949 = vmul.f32 %v1944, 1.442695
    %v1950 = vpow.pop %v1949
    %v1951 = vmul.f32 %v1945, 1.442695
    %v1952 = vpow.pop %v1951
    %v1953 = vmul.f32 %v1946, 1.442695
    %v1954 = vpow.pop %v1953
    %v1955 = vsel %vm148, %v1948, 0.0
    %1956 = vadd.xlane.f32.xlu0 %v1955
    %v1957 = vpop.xlane.xlu0 %1956
    %v1958 = vsel %vm148, %v1950, 0.0
    %1959 = vadd.xlane.f32.xlu0 %v1958
    %v1960 = vpop.xlane.xlu0 %1959
    %v1961 = vsel %vm148, %v1952, 0.0
    %1962 = vadd.xlane.f32.xlu0 %v1961
    %v1963 = vpop.xlane.xlu0 %1962
    %v1964 = vsel %vm148, %v1954, 0.0
    %1965 = vadd.xlane.f32.xlu0 %v1964
    %v1966 = vpop.xlane.xlu0 %1965
    %v1967 = vrcp.pop %v1957
    %v1968 = vrcp.pop %v1960
    %v1969 = vrcp.pop %v1963
    %v1970 = vrcp.pop %v1966
    %v1971 = vmul.f32 %v1948, %v1967
    %v1972 = vmul.f32 %v1950, %v1968
    %v1973 = vmul.f32 %v1952, %v1969
    %v1974 = vmul.f32 %v1954, %v1970
    %v1976 = vsel %vm148, %v1971, 0
    %v1979 = vsel %vm148, %v1972, 0
    %v1982 = vsel %vm148, %v1973, 0
    %v1985 = vsel %vm148, %v1974, 0
    %1987 = vmatprep.subr.mxu0 0.0
    %1988 = vmatpush1.msra.mxu0 %v1796
    %1989 = vmatprep.subr.mxu0 0.0
    %1990 = vmatpush1.msra.mxu0 %v1801
    %1991 = vmatprep.subr.mxu0 0.0
    %1992 = vmatpush1.msra.mxu0 %v1806
    %1993 = vmatprep.subr.mxu0 0.0
    %1994 = vmatpush1.msra.mxu0 %v1811
    %1995 = vmatprep.subr.mxu0 0.0
    %1996 = vmatpush1.msra.mxu0 0.0
    %1997 = vmatprep.subr.mxu0 0.0
    %1998 = vmatpush1.msra.mxu0 0.0
    %1999 = vmatprep.subr.mxu0 0.0
    %2000 = vmatpush1.msra.mxu0 0.0
    %2001 = vmatprep.subr.mxu0 0.0
    %2002 = vmatpush1.msra.mxu0 0.0
    %2003 = vmatprep.subr.mxu0 0.0
    %2004 = vmatpush1.msra.mxu0 0.0
    %2005 = vmatprep.subr.mxu0 0.0
    %2006 = vmatpush1.msra.mxu0 0.0
    %2007 = vmatprep.subr.mxu0 0.0
    %2008 = vmatpush1.msra.mxu0 0.0
    %2009 = vmatprep.subr.mxu0 0.0
    %2010 = vmatpush1.msra.mxu0 0.0
    %2011 = vmatprep.subr.mxu0 0.0
    %2012 = vmatpush1.msra.mxu0 0.0
    %2013 = vmatprep.subr.mxu0 0.0
    %2014 = vmatpush1.msra.mxu0 0.0
    %2015 = vmatprep.subr.mxu0 0.0
    %2016 = vmatpush1.msra.mxu0 0.0
    %2017 = vmatprep.subr.mxu0 0.0
    %2018 = vmatpush1.msra.mxu0 0.0
    %2019 = vmatprep.subr.mxu0 0.0
    %2020 = vmatpush1.msra.mxu0 0.0
    %2021 = vmatprep.subr.mxu0 0.0
    %2022 = vmatpush1.msra.mxu0 0.0
    %2023 = vmatprep.subr.mxu0 0.0
    %2024 = vmatpush1.msra.mxu0 0.0
    %2025 = vmatprep.subr.mxu0 0.0
    %2026 = vmatpush1.msra.mxu0 0.0
    %2027 = vmatprep.subr.mxu0 0.0
    %2028 = vmatpush1.msra.mxu0 0.0
    %2029 = vmatprep.subr.mxu0 0.0
    %2030 = vmatpush1.msra.mxu0 0.0
    %2031 = vmatprep.subr.mxu0 0.0
    %2032 = vmatpush1.msra.mxu0 0.0
    %2033 = vmatprep.subr.mxu0 0.0
    %2034 = vmatpush1.msra.mxu0 0.0
    %2035 = vmatprep.subr.mxu0 0.0
    %2036 = vmatpush1.msra.mxu0 0.0
    %2037 = vmatprep.subr.mxu0 0.0
    %2038 = vmatpush1.msra.mxu0 0.0
    %2039 = vmatprep.subr.mxu0 0.0
    %2040 = vmatpush1.msra.mxu0 0.0
    %2041 = vmatprep.subr.mxu0 0.0
    %2042 = vmatpush1.msra.mxu0 0.0
    %2043 = vmatprep.subr.mxu0 0.0
    %2044 = vmatpush1.msra.mxu0 0.0
    %2045 = vmatprep.subr.mxu0 0.0
    %2046 = vmatpush1.msra.mxu0 0.0
    %2047 = vmatprep.subr.mxu0 0.0
    %2048 = vmatpush1.msra.mxu0 0.0
    %2049 = vmatprep.subr.mxu0 0.0
    %2050 = vmatpush1.msra.mxu0 0.0
    %2051 = vmatprep.mubr.f32.mxu0 0.0
    %2052 = vmatmul.mubr.f32.gmra.mrb[0].mxu0 %v1976
    %v2053 = vpop.f32.mrb[0].mxu0
    %v2054 = vadd.f32 0.0, %v2053
    %v2055 = vpop.f32.mrb[0].mxu0
    %2056 = vmatprep.mubr.f32.mxu0 0.0
    %2057 = vmatmul.mubr.f32.gmra.mrb[0].mxu0 %v1979
    %v2058 = vpop.f32.mrb[0].mxu0
    %v2059 = vadd.f32 0.0, %v2058
    %v2060 = vpop.f32.mrb[0].mxu0
    %2061 = vmatprep.mubr.f32.mxu0 0.0
    %2062 = vmatmul.mubr.f32.gmra.mrb[0].mxu0 %v1982
    %v2063 = vpop.f32.mrb[0].mxu0
    %v2064 = vadd.f32 0.0, %v2063
    %v2065 = vpop.f32.mrb[0].mxu0
    %2066 = vmatprep.mubr.f32.mxu0 0.0
    %2067 = vmatmul.mubr.f32.gmra.mrb[0].mxu0 %v1985
    %v2068 = vpop.f32.mrb[0].mxu0
    %v2069 = vadd.f32 0.0, %v2068
    %v2070 = vpop.f32.mrb[0].mxu0
    %2071 = vdwg.mxu0
    %v2072 = vld [vmem:[%s2 + $0x78] sm:$0xff]
    %v2074 = vsel %vm523, %v2054, 0
    %v2077 = vsel %vm523, %v2059, 0
    %v2080 = vsel %vm523, %v2064, 0
    %v2083 = vsel %vm523, %v2069, 0
    %2085 = vmatprep.subr.mxu0 0.0
    %2086 = vmatpush1.msra.mxu0 %v2072
    %2087 = vmatprep.subr.mxu0 0.0
    %2088 = vmatpush1.msra.mxu0 0.0
    %2089 = vmatprep.subr.mxu0 0.0
    %2090 = vmatpush1.msra.mxu0 0.0
    %2091 = vmatprep.subr.mxu0 0.0
    %2092 = vmatpush1.msra.mxu0 0.0
    %2093 = vmatprep.subr.mxu0 0.0
    %2094 = vmatpush1.msra.mxu0 0.0
    %2095 = vmatprep.subr.mxu0 0.0
    %2096 = vmatpush1.msra.mxu0 0.0
    %2097 = vmatprep.subr.mxu0 0.0
    %2098 = vmatpush1.msra.mxu0 0.0
    %2099 = vmatprep.subr.mxu0 0.0
    %2100 = vmatpush1.msra.mxu0 0.0
    %2101 = vmatprep.subr.mxu0 0.0
    %2102 = vmatpush1.msra.mxu0 0.0
    %2103 = vmatprep.subr.mxu0 0.0
    %2104 = vmatpush1.msra.mxu0 0.0
    %2105 = vmatprep.subr.mxu0 0.0
    %2106 = vmatpush1.msra.mxu0 0.0
    %2107 = vmatprep.subr.mxu0 0.0
    %2108 = vmatpush1.msra.mxu0 0.0
    %2109 = vmatprep.subr.mxu0 0.0
    %2110 = vmatpush1.msra.mxu0 0.0
    %2111 = vmatprep.subr.mxu0 0.0
    %2112 = vmatpush1.msra.mxu0 0.0
    %2113 = vmatprep.subr.mxu0 0.0
    %2114 = vmatpush1.msra.mxu0 0.0
    %2115 = vmatprep.subr.mxu0 0.0
    %2116 = vmatpush1.msra.mxu0 0.0
    %2117 = vmatprep.subr.mxu0 0.0
    %2118 = vmatpush1.msra.mxu0 0.0
    %2119 = vmatprep.subr.mxu0 0.0
    %2120 = vmatpush1.msra.mxu0 0.0
    %2121 = vmatprep.subr.mxu0 0.0
    %2122 = vmatpush1.msra.mxu0 0.0
    %2123 = vmatprep.subr.mxu0 0.0
    %2124 = vmatpush1.msra.mxu0 0.0
    %2125 = vmatprep.subr.mxu0 0.0
    %2126 = vmatpush1.msra.mxu0 0.0
    %2127 = vmatprep.subr.mxu0 0.0
    %2128 = vmatpush1.msra.mxu0 0.0
    %2129 = vmatprep.subr.mxu0 0.0
    %2130 = vmatpush1.msra.mxu0 0.0
    %2131 = vmatprep.subr.mxu0 0.0
    %2132 = vmatpush1.msra.mxu0 0.0
    %2133 = vmatprep.subr.mxu0 0.0
    %2134 = vmatpush1.msra.mxu0 0.0
    %2135 = vmatprep.subr.mxu0 0.0
    %2136 = vmatpush1.msra.mxu0 0.0
    %2137 = vmatprep.subr.mxu0 0.0
    %2138 = vmatpush1.msra.mxu0 0.0
    %2139 = vmatprep.subr.mxu0 0.0
    %2140 = vmatpush1.msra.mxu0 0.0
    %2141 = vmatprep.subr.mxu0 0.0
    %2142 = vmatpush1.msra.mxu0 0.0
    %2143 = vmatprep.subr.mxu0 0.0
    %2144 = vmatpush1.msra.mxu0 0.0
    %2145 = vmatprep.subr.mxu0 0.0
    %2146 = vmatpush1.msra.mxu0 0.0
    %2147 = vmatprep.subr.mxu0 0.0
    %2148 = vmatpush1.msra.mxu0 0.0
    %2149 = vmatprep.mubr.f32.mxu0 0.0
    %2150 = vmatmul.mubr.f32.gmra.mrb[0].mxu0 %v2074
    %v2151 = vpop.f32.mrb[0].mxu0
    %v2152 = vadd.f32 0.0, %v2151
    %v2153 = vpop.f32.mrb[0].mxu0
    %2154 = vmatprep.mubr.f32.mxu0 0.0
    %2155 = vmatmul.mubr.f32.gmra.mrb[0].mxu0 %v2077
    %v2156 = vpop.f32.mrb[0].mxu0
    %v2157 = vadd.f32 0.0, %v2156
    %v2158 = vpop.f32.mrb[0].mxu0
    %2159 = vmatprep.mubr.f32.mxu0 0.0
    %2160 = vmatmul.mubr.f32.gmra.mrb[0].mxu0 %v2080
    %v2161 = vpop.f32.mrb[0].mxu0
    %v2162 = vadd.f32 0.0, %v2161
    %v2163 = vpop.f32.mrb[0].mxu0
    %2164 = vmatprep.mubr.f32.mxu0 0.0
    %2165 = vmatmul.mubr.f32.gmra.mrb[0].mxu0 %v2083
    %v2166 = vpop.f32.mrb[0].mxu0
    %v2167 = vadd.f32 0.0, %v2166
    %v2168 = vpop.f32.mrb[0].mxu0
    %2169 = vdwg.mxu0
    %v2170 = vadd.f32 %v1525, %v2152
    %v2171 = vadd.f32 %v1526, %v2157
    %v2172 = vadd.f32 %v1527, %v2162
    %v2173 = vadd.f32 %v1528, %v2167
    %s2174 = scalar_lea.vmem %s4, 120
    %v2175 = vld [vmem:[%s2174] sm:$0xff]
    %v2176 = vld [vmem:[%s2174 + $0x8] sm:$0xff]
    %v2177 = vld [vmem:[%s2174 + $0x10] sm:$0xff]
    %v2178 = vld [vmem:[%s2174 + $0x18] sm:$0xff]
    %v2179 = vld [vmem:[%s2174 + $0x20] sm:$0xff]
    %v2180 = vlaneseq
    %v2181 = vshrl.u32 %v2180, 7
    %v2182 = vsub.s32 0, %v2181
    %v2183 = vrot.slane %v2179, %v2182
    %2184 = vmatprep.subr.mxu0 0.0
    %2185 = vmatpush1.msra.mxu0 %v2175
    %2186 = vmatprep.subr.mxu0 0.0
    %2187 = vmatpush1.msra.mxu0 %v2176
    %2188 = vmatprep.subr.mxu0 0.0
    %2189 = vmatpush1.msra.mxu0 %v2177
    %2190 = vmatprep.subr.mxu0 0.0
    %2191 = vmatpush1.msra.mxu0 %v2178
    %2192 = vmatprep.subr.mxu0 0.0
    %2193 = vmatpush1.msra.mxu0 0.0
    %2194 = vmatprep.subr.mxu0 0.0
    %2195 = vmatpush1.msra.mxu0 0.0
    %2196 = vmatprep.subr.mxu0 0.0
    %2197 = vmatpush1.msra.mxu0 0.0
    %2198 = vmatprep.subr.mxu0 0.0
    %2199 = vmatpush1.msra.mxu0 0.0
    %2200 = vmatprep.subr.mxu0 0.0
    %2201 = vmatpush1.msra.mxu0 0.0
    %2202 = vmatprep.subr.mxu0 0.0
    %2203 = vmatpush1.msra.mxu0 0.0
    %2204 = vmatprep.subr.mxu0 0.0
    %2205 = vmatpush1.msra.mxu0 0.0
    %2206 = vmatprep.subr.mxu0 0.0
    %2207 = vmatpush1.msra.mxu0 0.0
    %2208 = vmatprep.subr.mxu0 0.0
    %2209 = vmatpush1.msra.mxu0 0.0
    %2210 = vmatprep.subr.mxu0 0.0
    %2211 = vmatpush1.msra.mxu0 0.0
    %2212 = vmatprep.subr.mxu0 0.0
    %2213 = vmatpush1.msra.mxu0 0.0
    %2214 = vmatprep.subr.mxu0 0.0
    %2215 = vmatpush1.msra.mxu0 0.0
    %2216 = vmatprep.subr.mxu0 0.0
    %2217 = vmatpush1.msra.mxu0 0.0
    %2218 = vmatprep.subr.mxu0 0.0
    %2219 = vmatpush1.msra.mxu0 0.0
    %2220 = vmatprep.subr.mxu0 0.0
    %2221 = vmatpush1.msra.mxu0 0.0
    %2222 = vmatprep.subr.mxu0 0.0
    %2223 = vmatpush1.msra.mxu0 0.0
    %2224 = vmatprep.subr.mxu0 0.0
    %2225 = vmatpush1.msra.mxu0 0.0
    %2226 = vmatprep.subr.mxu0 0.0
    %2227 = vmatpush1.msra.mxu0 0.0
    %2228 = vmatprep.subr.mxu0 0.0
    %2229 = vmatpush1.msra.mxu0 0.0
    %2230 = vmatprep.subr.mxu0 0.0
    %2231 = vmatpush1.msra.mxu0 0.0
    %2232 = vmatprep.subr.mxu0 0.0
    %2233 = vmatpush1.msra.mxu0 0.0
    %2234 = vmatprep.subr.mxu0 0.0
    %2235 = vmatpush1.msra.mxu0 0.0
    %2236 = vmatprep.subr.mxu0 0.0
    %2237 = vmatpush1.msra.mxu0 0.0
    %2238 = vmatprep.subr.mxu0 0.0
    %2239 = vmatpush1.msra.mxu0 0.0
    %2240 = vmatprep.subr.mxu0 0.0
    %2241 = vmatpush1.msra.mxu0 0.0
    %2242 = vmatprep.subr.mxu0 0.0
    %2243 = vmatpush1.msra.mxu0 0.0
    %2244 = vmatprep.subr.mxu0 0.0
    %2245 = vmatpush1.msra.mxu0 0.0
    %2246 = vmatprep.subr.mxu0 0.0
    %2247 = vmatpush1.msra.mxu0 0.0
    %2248 = vmatprep.mubr.f32.mxu0 0.0
    %2249 = vmatmul.mubr.f32.gmra.mrb[0].mxu0 %v237
    %v2250 = vpop.f32.mrb[0].mxu0
    %v2251 = vadd.f32 %v2183, %v2250
    %v2252 = vpop.f32.mrb[0].mxu0
    %2253 = vmatprep.mubr.f32.mxu0 0.0
    %2254 = vmatmul.mubr.f32.gmra.mrb[0].mxu0 %v240
    %v2255 = vpop.f32.mrb[0].mxu0
    %v2256 = vadd.f32 %v2183, %v2255
    %v2257 = vpop.f32.mrb[0].mxu0
    %2258 = vmatprep.mubr.f32.mxu0 0.0
    %2259 = vmatmul.mubr.f32.gmra.mrb[0].mxu0 %v243
    %v2260 = vpop.f32.mrb[0].mxu0
    %v2261 = vadd.f32 %v2183, %v2260
    %v2262 = vpop.f32.mrb[0].mxu0
    %2263 = vmatprep.mubr.f32.mxu0 0.0
    %2264 = vmatmul.mubr.f32.gmra.mrb[0].mxu0 %v246
    %v2265 = vpop.f32.mrb[0].mxu0
    %v2266 = vadd.f32 %v2183, %v2265
    %v2267 = vpop.f32.mrb[0].mxu0
    %2268 = vdwg.mxu0
    %s2269 = scalar_lea.vmem %s4, 280
    %v2270 = vld [vmem:[%s2269] sm:$0xff]
    %v2271 = vld [vmem:[%s2269 + $0x8] sm:$0xff]
    %v2272 = vld [vmem:[%s2269 + $0x10] sm:$0xff]
    %v2273 = vld [vmem:[%s2269 + $0x18] sm:$0xff]
    %v2274 = vld [vmem:[%s2269 + $0x20] sm:$0xff]
    %v2275 = vlaneseq
    %v2276 = vshrl.u32 %v2275, 7
    %v2277 = vsub.s32 0, %v2276
    %v2278 = vrot.slane %v2274, %v2277
    %2279 = vmatprep.subr.mxu0 0.0
    %2280 = vmatpush1.msra.mxu0 %v2270
    %2281 = vmatprep.subr.mxu0 0.0
    %2282 = vmatpush1.msra.mxu0 %v2271
    %2283 = vmatprep.subr.mxu0 0.0
    %2284 = vmatpush1.msra.mxu0 %v2272
    %2285 = vmatprep.subr.mxu0 0.0
    %2286 = vmatpush1.msra.mxu0 %v2273
    %2287 = vmatprep.subr.mxu0 0.0
    %2288 = vmatpush1.msra.mxu0 0.0
    %2289 = vmatprep.subr.mxu0 0.0
    %2290 = vmatpush1.msra.mxu0 0.0
    %2291 = vmatprep.subr.mxu0 0.0
    %2292 = vmatpush1.msra.mxu0 0.0
    %2293 = vmatprep.subr.mxu0 0.0
    %2294 = vmatpush1.msra.mxu0 0.0
    %2295 = vmatprep.subr.mxu0 0.0
    %2296 = vmatpush1.msra.mxu0 0.0
    %2297 = vmatprep.subr.mxu0 0.0
    %2298 = vmatpush1.msra.mxu0 0.0
    %2299 = vmatprep.subr.mxu0 0.0
    %2300 = vmatpush1.msra.mxu0 0.0
    %2301 = vmatprep.subr.mxu0 0.0
    %2302 = vmatpush1.msra.mxu0 0.0
    %2303 = vmatprep.subr.mxu0 0.0
    %2304 = vmatpush1.msra.mxu0 0.0
    %2305 = vmatprep.subr.mxu0 0.0
    %2306 = vmatpush1.msra.mxu0 0.0
    %2307 = vmatprep.subr.mxu0 0.0
    %2308 = vmatpush1.msra.mxu0 0.0
    %2309 = vmatprep.subr.mxu0 0.0
    %2310 = vmatpush1.msra.mxu0 0.0
    %2311 = vmatprep.subr.mxu0 0.0
    %2312 = vmatpush1.msra.mxu0 0.0
    %2313 = vmatprep.subr.mxu0 0.0
    %2314 = vmatpush1.msra.mxu0 0.0
    %2315 = vmatprep.subr.mxu0 0.0
    %2316 = vmatpush1.msra.mxu0 0.0
    %2317 = vmatprep.subr.mxu0 0.0
    %2318 = vmatpush1.msra.mxu0 0.0
    %2319 = vmatprep.subr.mxu0 0.0
    %2320 = vmatpush1.msra.mxu0 0.0
    %2321 = vmatprep.subr.mxu0 0.0
    %2322 = vmatpush1.msra.mxu0 0.0
    %2323 = vmatprep.subr.mxu0 0.0
    %2324 = vmatpush1.msra.mxu0 0.0
    %2325 = vmatprep.subr.mxu0 0.0
    %2326 = vmatpush1.msra.mxu0 0.0
    %2327 = vmatprep.subr.mxu0 0.0
    %2328 = vmatpush1.msra.mxu0 0.0
    %2329 = vmatprep.subr.mxu0 0.0
    %2330 = vmatpush1.msra.mxu0 0.0
    %2331 = vmatprep.subr.mxu0 0.0
    %2332 = vmatpush1.msra.mxu0 0.0
    %2333 = vmatprep.subr.mxu0 0.0
    %2334 = vmatpush1.msra.mxu0 0.0
    %2335 = vmatprep.subr.mxu0 0.0
    %2336 = vmatpush1.msra.mxu0 0.0
    %2337 = vmatprep.subr.mxu0 0.0
    %2338 = vmatpush1.msra.mxu0 0.0
    %2339 = vmatprep.subr.mxu0 0.0
    %2340 = vmatpush1.msra.mxu0 0.0
    %2341 = vmatprep.subr.mxu0 0.0
    %2342 = vmatpush1.msra.mxu0 0.0
    %2343 = vmatprep.mubr.f32.mxu0 0.0
    %2344 = vmatmul.mubr.f32.gmra.mrb[0].mxu0 %v237
    %v2345 = vpop.f32.mrb[0].mxu0
    %v2346 = vadd.f32 %v2278, %v2345
    %v2347 = vpop.f32.mrb[0].mxu0
    %2348 = vmatprep.mubr.f32.mxu0 0.0
    %2349 = vmatmul.mubr.f32.gmra.mrb[0].mxu0 %v240
    %v2350 = vpop.f32.mrb[0].mxu0
    %v2351 = vadd.f32 %v2278, %v2350
    %v2352 = vpop.f32.mrb[0].mxu0
    %2353 = vmatprep.mubr.f32.mxu0 0.0
    %2354 = vmatmul.mubr.f32.gmra.mrb[0].mxu0 %v243
    %v2355 = vpop.f32.mrb[0].mxu0
    %v2356 = vadd.f32 %v2278, %v2355
    %v2357 = vpop.f32.mrb[0].mxu0
    %2358 = vmatprep.mubr.f32.mxu0 0.0
    %2359 = vmatmul.mubr.f32.gmra.mrb[0].mxu0 %v246
    %v2360 = vpop.f32.mrb[0].mxu0
    %v2361 = vadd.f32 %v2278, %v2360
    %v2362 = vpop.f32.mrb[0].mxu0
    %2363 = vdwg.mxu0
    %s2364 = scalar_lea.vmem %s4, 440
    %v2365 = vld [vmem:[%s2364] sm:$0xff]
    %v2366 = vld [vmem:[%s2364 + $0x8] sm:$0xff]
    %v2367 = vld [vmem:[%s2364 + $0x10] sm:$0xff]
    %v2368 = vld [vmem:[%s2364 + $0x18] sm:$0xff]
    %v2369 = vld [vmem:[%s2364 + $0x20] sm:$0xff]
    %v2370 = vlaneseq
    %v2371 = vshrl.u32 %v2370, 7
    %v2372 = vsub.s32 0, %v2371
    %v2373 = vrot.slane %v2369, %v2372
    %2374 = vmatprep.subr.mxu0 0.0
    %2375 = vmatpush1.msra.mxu0 %v2365
    %2376 = vmatprep.subr.mxu0 0.0
    %2377 = vmatpush1.msra.mxu0 %v2366
    %2378 = vmatprep.subr.mxu0 0.0
    %2379 = vmatpush1.msra.mxu0 %v2367
    %2380 = vmatprep.subr.mxu0 0.0
    %2381 = vmatpush1.msra.mxu0 %v2368
    %2382 = vmatprep.subr.mxu0 0.0
    %2383 = vmatpush1.msra.mxu0 0.0
    %2384 = vmatprep.subr.mxu0 0.0
    %2385 = vmatpush1.msra.mxu0 0.0
    %2386 = vmatprep.subr.mxu0 0.0
    %2387 = vmatpush1.msra.mxu0 0.0
    %2388 = vmatprep.subr.mxu0 0.0
    %2389 = vmatpush1.msra.mxu0 0.0
    %2390 = vmatprep.subr.mxu0 0.0
    %2391 = vmatpush1.msra.mxu0 0.0
    %2392 = vmatprep.subr.mxu0 0.0
    %2393 = vmatpush1.msra.mxu0 0.0
    %2394 = vmatprep.subr.mxu0 0.0
    %2395 = vmatpush1.msra.mxu0 0.0
    %2396 = vmatprep.subr.mxu0 0.0
    %2397 = vmatpush1.msra.mxu0 0.0
    %2398 = vmatprep.subr.mxu0 0.0
    %2399 = vmatpush1.msra.mxu0 0.0
    %2400 = vmatprep.subr.mxu0 0.0
    %2401 = vmatpush1.msra.mxu0 0.0
    %2402 = vmatprep.subr.mxu0 0.0
    %2403 = vmatpush1.msra.mxu0 0.0
    %2404 = vmatprep.subr.mxu0 0.0
    %2405 = vmatpush1.msra.mxu0 0.0
    %2406 = vmatprep.subr.mxu0 0.0
    %2407 = vmatpush1.msra.mxu0 0.0
    %2408 = vmatprep.subr.mxu0 0.0
    %2409 = vmatpush1.msra.mxu0 0.0
    %2410 = vmatprep.subr.mxu0 0.0
    %2411 = vmatpush1.msra.mxu0 0.0
    %2412 = vmatprep.subr.mxu0 0.0
    %2413 = vmatpush1.msra.mxu0 0.0
    %2414 = vmatprep.subr.mxu0 0.0
    %2415 = vmatpush1.msra.mxu0 0.0
    %2416 = vmatprep.subr.mxu0 0.0
    %2417 = vmatpush1.msra.mxu0 0.0
    %2418 = vmatprep.subr.mxu0 0.0
    %2419 = vmatpush1.msra.mxu0 0.0
    %2420 = vmatprep.subr.mxu0 0.0
    %2421 = vmatpush1.msra.mxu0 0.0
    %2422 = vmatprep.subr.mxu0 0.0
    %2423 = vmatpush1.msra.mxu0 0.0
    %2424 = vmatprep.subr.mxu0 0.0
    %2425 = vmatpush1.msra.mxu0 0.0
    %2426 = vmatprep.subr.mxu0 0.0
    %2427 = vmatpush1.msra.mxu0 0.0
    %2428 = vmatprep.subr.mxu0 0.0
    %2429 = vmatpush1.msra.mxu0 0.0
    %2430 = vmatprep.subr.mxu0 0.0
    %2431 = vmatpush1.msra.mxu0 0.0
    %2432 = vmatprep.subr.mxu0 0.0
    %2433 = vmatpush1.msra.mxu0 0.0
    %2434 = vmatprep.subr.mxu0 0.0
    %2435 = vmatpush1.msra.mxu0 0.0
    %2436 = vmatprep.subr.mxu0 0.0
    %2437 = vmatpush1.msra.mxu0 0.0
    %2438 = vmatprep.mubr.f32.mxu0 0.0
    %2439 = vmatmul.mubr.f32.gmra.mrb[0].mxu0 %v237
    %v2440 = vpop.f32.mrb[0].mxu0
    %v2441 = vadd.f32 %v2373, %v2440
    %v2442 = vpop.f32.mrb[0].mxu0
    %2443 = vmatprep.mubr.f32.mxu0 0.0
    %2444 = vmatmul.mubr.f32.gmra.mrb[0].mxu0 %v240
    %v2445 = vpop.f32.mrb[0].mxu0
    %v2446 = vadd.f32 %v2373, %v2445
    %v2447 = vpop.f32.mrb[0].mxu0
    %2448 = vmatprep.mubr.f32.mxu0 0.0
    %2449 = vmatmul.mubr.f32.gmra.mrb[0].mxu0 %v243
    %v2450 = vpop.f32.mrb[0].mxu0
    %v2451 = vadd.f32 %v2373, %v2450
    %v2452 = vpop.f32.mrb[0].mxu0
    %2453 = vmatprep.mubr.f32.mxu0 0.0
    %2454 = vmatmul.mubr.f32.gmra.mrb[0].mxu0 %v246
    %v2455 = vpop.f32.mrb[0].mxu0
    %v2456 = vadd.f32 %v2373, %v2455
    %v2457 = vpop.f32.mrb[0].mxu0
    %2458 = vdwg.mxu0
    %v2460 = vsel %vm523, %v2251, 0
    %v2463 = vsel %vm523, %v2256, 0
    %v2466 = vsel %vm523, %v2261, 0
    %v2469 = vsel %vm523, %v2266, 0
    %v2472 = vsel %vm523, %v2346, 0
    %v2475 = vsel %vm523, %v2351, 0
    %v2478 = vsel %vm523, %v2356, 0
    %v2481 = vsel %vm523, %v2361, 0
    %2483 = vmatprep.subr.mxu0 0.0
    %2484 = vmatpush1.xpose.msra.mxu0 %v2472
    %2485 = vmatprep.subr.mxu0 0.0
    %2486 = vmatpush1.xpose.msra.mxu0 %v2475
    %2487 = vmatprep.subr.mxu0 0.0
    %2488 = vmatpush1.xpose.msra.mxu0 %v2478
    %2489 = vmatprep.subr.mxu0 0.0
    %2490 = vmatpush1.xpose.msra.mxu0 %v2481
    %2491 = vmatprep.subr.mxu0 0.0
    %2492 = vmatpush1.xpose.msra.mxu0 0.0
    %2493 = vmatprep.subr.mxu0 0.0
    %2494 = vmatpush1.xpose.msra.mxu0 0.0
    %2495 = vmatprep.subr.mxu0 0.0
    %2496 = vmatpush1.xpose.msra.mxu0 0.0
    %2497 = vmatprep.subr.mxu0 0.0
    %2498 = vmatpush1.xpose.msra.mxu0 0.0
    %2499 = vmatprep.subr.mxu0 0.0
    %2500 = vmatpush1.xpose.msra.mxu0 0.0
    %2501 = vmatprep.subr.mxu0 0.0
    %2502 = vmatpush1.xpose.msra.mxu0 0.0
    %2503 = vmatprep.subr.mxu0 0.0
    %2504 = vmatpush1.xpose.msra.mxu0 0.0
    %2505 = vmatprep.subr.mxu0 0.0
    %2506 = vmatpush1.xpose.msra.mxu0 0.0
    %2507 = vmatprep.subr.mxu0 0.0
    %2508 = vmatpush1.xpose.msra.mxu0 0.0
    %2509 = vmatprep.subr.mxu0 0.0
    %2510 = vmatpush1.xpose.msra.mxu0 0.0
    %2511 = vmatprep.subr.mxu0 0.0
    %2512 = vmatpush1.xpose.msra.mxu0 0.0
    %2513 = vmatprep.subr.mxu0 0.0
    %2514 = vmatpush1.xpose.msra.mxu0 0.0
    %2515 = vmatprep.subr.mxu0 0.0
    %2516 = vmatpush1.xpose.msra.mxu0 0.0
    %2517 = vmatprep.subr.mxu0 0.0
    %2518 = vmatpush1.xpose.msra.mxu0 0.0
    %2519 = vmatprep.subr.mxu0 0.0
    %2520 = vmatpush1.xpose.msra.mxu0 0.0
    %2521 = vmatprep.subr.mxu0 0.0
    %2522 = vmatpush1.xpose.msra.mxu0 0.0
    %2523 = vmatprep.subr.mxu0 0.0
    %2524 = vmatpush1.xpose.msra.mxu0 0.0
    %2525 = vmatprep.subr.mxu0 0.0
    %2526 = vmatpush1.xpose.msra.mxu0 0.0
    %2527 = vmatprep.subr.mxu0 0.0
    %2528 = vmatpush1.xpose.msra.mxu0 0.0
    %2529 = vmatprep.subr.mxu0 0.0
    %2530 = vmatpush1.xpose.msra.mxu0 0.0
    %2531 = vmatprep.subr.mxu0 0.0
    %2532 = vmatpush1.xpose.msra.mxu0 0.0
    %2533 = vmatprep.subr.mxu0 0.0
    %2534 = vmatpush1.xpose.msra.mxu0 0.0
    %2535 = vmatprep.subr.mxu0 0.0
    %2536 = vmatpush1.xpose.msra.mxu0 0.0
    %2537 = vmatprep.subr.mxu0 0.0
    %2538 = vmatpush1.xpose.msra.mxu0 0.0
    %2539 = vmatprep.subr.mxu0 0.0
    %2540 = vmatpush1.xpose.msra.mxu0 0.0
    %2541 = vmatprep.subr.mxu0 0.0
    %2542 = vmatpush1.xpose.msra.mxu0 0.0
    %2543 = vmatprep.subr.mxu0 0.0
    %2544 = vmatpush1.xpose.msra.mxu0 0.0
    %2545 = vmatprep.subr.mxu0 0.0
    %2546 = vmatpush1.xpose.msra.mxu0 0.0
    %2547 = vmatprep.mubr.f32.mxu0 0.0
    %2548 = vmatmul.mubr.f32.gmra.mrb[0].mxu0 %v2460
    %v2549 = vpop.f32.mrb[0].mxu0
    %v2550 = vadd.f32 0.0, %v2549
    %v2551 = vpop.f32.mrb[0].mxu0
    %2552 = vmatprep.mubr.f32.mxu0 0.0
    %2553 = vmatmul.mubr.f32.gmra.mrb[0].mxu0 %v2463
    %v2554 = vpop.f32.mrb[0].mxu0
    %v2555 = vadd.f32 0.0, %v2554
    %v2556 = vpop.f32.mrb[0].mxu0
    %2557 = vmatprep.mubr.f32.mxu0 0.0
    %2558 = vmatmul.mubr.f32.gmra.mrb[0].mxu0 %v2466
    %v2559 = vpop.f32.mrb[0].mxu0
    %v2560 = vadd.f32 0.0, %v2559
    %v2561 = vpop.f32.mrb[0].mxu0
    %2562 = vmatprep.mubr.f32.mxu0 0.0
    %2563 = vmatmul.mubr.f32.gmra.mrb[0].mxu0 %v2469
    %v2564 = vpop.f32.mrb[0].mxu0
    %v2565 = vadd.f32 0.0, %v2564
    %v2566 = vpop.f32.mrb[0].mxu0
    %2567 = vdwg.mxu0
    %v2568 = vmul.f32 %v2550, 0.35355338
    %v2569 = vmul.f32 %v2555, 0.35355338
    %v2570 = vmul.f32 %v2560, 0.35355338
    %v2571 = vmul.f32 %v2565, 0.35355338
    %v2572 = vadd.f32 %v2568, %v142
    %v2573 = vadd.f32 %v2569, %v143
    %v2574 = vadd.f32 %v2570, %v144
    %v2575 = vadd.f32 %v2571, %v145
    %v2576 = vsel %vm148, %v2572, -inf
    %2577 = vmax.xlane.f32.xlu0 %v2576
    %v2578 = vpop.xlane.xlu0 %2577
    %v2579 = vsel %vm148, %v2573, -inf
    %2580 = vmax.xlane.f32.xlu0 %v2579
    %v2581 = vpop.xlane.xlu0 %2580
    %v2582 = vsel %vm148, %v2574, -inf
    %2583 = vmax.xlane.f32.xlu0 %v2582
    %v2584 = vpop.xlane.xlu0 %2583
    %v2585 = vsel %vm148, %v2575, -inf
    %2586 = vmax.xlane.f32.xlu0 %v2585
    %v2587 = vpop.xlane.xlu0 %2586
    %v2588 = vsub.f32 %v2572, %v2578
    %v2589 = vsub.f32 %v2573, %v2581
    %v2590 = vsub.f32 %v2574, %v2584
    %v2591 = vsub.f32 %v2575, %v2587
    %v2592 = vmul.f32 %v2588, 1.442695
    %v2593 = vpow.pop %v2592
    %v2594 = vmul.f32 %v2589, 1.442695
    %v2595 = vpow.pop %v2594
    %v2596 = vmul.f32 %v2590, 1.442695
    %v2597 = vpow.pop %v2596
    %v2598 = vmul.f32 %v2591, 1.442695
    %v2599 = vpow.pop %v2598
    %v2600 = vsel %vm148, %v2593, 0.0
    %2601 = vadd.xlane.f32.xlu0 %v2600
    %v2602 = vpop.xlane.xlu0 %2601
    %v2603 = vsel %vm148, %v2595, 0.0
    %2604 = vadd.xlane.f32.xlu0 %v2603
    %v2605 = vpop.xlane.xlu0 %2604
    %v2606 = vsel %vm148, %v2597, 0.0
    %2607 = vadd.xlane.f32.xlu0 %v2606
    %v2608 = vpop.xlane.xlu0 %2607
    %v2609 = vsel %vm148, %v2599, 0.0
    %2610 = vadd.xlane.f32.xlu0 %v2609
    %v2611 = vpop.xlane.xlu0 %2610
    %v2612 = vrcp.pop %v2602
    %v2613 = vrcp.pop %v2605
    %v2614 = vrcp.pop %v2608
    %v2615 = vrcp.pop %v2611
    %v2616 = vmul.f32 %v2593, %v2612
    %v2617 = vmul.f32 %v2595, %v2613
    %v2618 = vmul.f32 %v2597, %v2614
    %v2619 = vmul.f32 %v2599, %v2615
    %v2621 = vsel %vm148, %v2616, 0
    %v2624 = vsel %vm148, %v2617, 0
    %v2627 = vsel %vm148, %v2618, 0
    %v2630 = vsel %vm148, %v2619, 0
    %2632 = vmatprep.subr.mxu0 0.0
    %2633 = vmatpush1.msra.mxu0 %v2441
    %2634 = vmatprep.subr.mxu0 0.0
    %2635 = vmatpush1.msra.mxu0 %v2446
    %2636 = vmatprep.subr.mxu0 0.0
    %2637 = vmatpush1.msra.mxu0 %v2451
    %2638 = vmatprep.subr.mxu0 0.0
    %2639 = vmatpush1.msra.mxu0 %v2456
    %2640 = vmatprep.subr.mxu0 0.0
    %2641 = vmatpush1.msra.mxu0 0.0
    %2642 = vmatprep.subr.mxu0 0.0
    %2643 = vmatpush1.msra.mxu0 0.0
    %2644 = vmatprep.subr.mxu0 0.0
    %2645 = vmatpush1.msra.mxu0 0.0
    %2646 = vmatprep.subr.mxu0 0.0
    %2647 = vmatpush1.msra.mxu0 0.0
    %2648 = vmatprep.subr.mxu0 0.0
    %2649 = vmatpush1.msra.mxu0 0.0
    %2650 = vmatprep.subr.mxu0 0.0
    %2651 = vmatpush1.msra.mxu0 0.0
    %2652 = vmatprep.subr.mxu0 0.0
    %2653 = vmatpush1.msra.mxu0 0.0
    %2654 = vmatprep.subr.mxu0 0.0
    %2655 = vmatpush1.msra.mxu0 0.0
    %2656 = vmatprep.subr.mxu0 0.0
    %2657 = vmatpush1.msra.mxu0 0.0
    %2658 = vmatprep.subr.mxu0 0.0
    %2659 = vmatpush1.msra.mxu0 0.0
    %2660 = vmatprep.subr.mxu0 0.0
    %2661 = vmatpush1.msra.mxu0 0.0
    %2662 = vmatprep.subr.mxu0 0.0
    %2663 = vmatpush1.msra.mxu0 0.0
    %2664 = vmatprep.subr.mxu0 0.0
    %2665 = vmatpush1.msra.mxu0 0.0
    %2666 = vmatprep.subr.mxu0 0.0
    %2667 = vmatpush1.msra.mxu0 0.0
    %2668 = vmatprep.subr.mxu0 0.0
    %2669 = vmatpush1.msra.mxu0 0.0
    %2670 = vmatprep.subr.mxu0 0.0
    %2671 = vmatpush1.msra.mxu0 0.0
    %2672 = vmatprep.subr.mxu0 0.0
    %2673 = vmatpush1.msra.mxu0 0.0
    %2674 = vmatprep.subr.mxu0 0.0
    %2675 = vmatpush1.msra.mxu0 0.0
    %2676 = vmatprep.subr.mxu0 0.0
    %2677 = vmatpush1.msra.mxu0 0.0
    %2678 = vmatprep.subr.mxu0 0.0
    %2679 = vmatpush1.msra.mxu0 0.0
    %2680 = vmatprep.subr.mxu0 0.0
    %2681 = vmatpush1.msra.mxu0 0.0
    %2682 = vmatprep.subr.mxu0 0.0
    %2683 = vmatpush1.msra.mxu0 0.0
    %2684 = vmatprep.subr.mxu0 0.0
    %2685 = vmatpush1.msra.mxu0 0.0
    %2686 = vmatprep.subr.mxu0 0.0
    %2687 = vmatpush1.msra.mxu0 0.0
    %2688 = vmatprep.subr.mxu0 0.0
    %2689 = vmatpush1.msra.mxu0 0.0
    %2690 = vmatprep.subr.mxu0 0.0
    %2691 = vmatpush1.msra.mxu0 0.0
    %2692 = vmatprep.subr.mxu0 0.0
    %2693 = vmatpush1.msra.mxu0 0.0
    %2694 = vmatprep.subr.mxu0 0.0
    %2695 = vmatpush1.msra.mxu0 0.0
    %2696 = vmatprep.mubr.f32.mxu0 0.0
    %2697 = vmatmul.mubr.f32.gmra.mrb[0].mxu0 %v2621
    %v2698 = vpop.f32.mrb[0].mxu0
    %v2699 = vadd.f32 0.0, %v2698
    %v2700 = vpop.f32.mrb[0].mxu0
    %2701 = vmatprep.mubr.f32.mxu0 0.0
    %2702 = vmatmul.mubr.f32.gmra.mrb[0].mxu0 %v2624
    %v2703 = vpop.f32.mrb[0].mxu0
    %v2704 = vadd.f32 0.0, %v2703
    %v2705 = vpop.f32.mrb[0].mxu0
    %2706 = vmatprep.mubr.f32.mxu0 0.0
    %2707 = vmatmul.mubr.f32.gmra.mrb[0].mxu0 %v2627
    %v2708 = vpop.f32.mrb[0].mxu0
    %v2709 = vadd.f32 0.0, %v2708
    %v2710 = vpop.f32.mrb[0].mxu0
    %2711 = vmatprep.mubr.f32.mxu0 0.0
    %2712 = vmatmul.mubr.f32.gmra.mrb[0].mxu0 %v2630
    %v2713 = vpop.f32.mrb[0].mxu0
    %v2714 = vadd.f32 0.0, %v2713
    %v2715 = vpop.f32.mrb[0].mxu0
    %2716 = vdwg.mxu0
    %v2717 = vld [vmem:[%s2 + $0x80] sm:$0xff]
    %v2719 = vsel %vm523, %v2699, 0
    %v2722 = vsel %vm523, %v2704, 0
    %v2725 = vsel %vm523, %v2709, 0
    %v2728 = vsel %vm523, %v2714, 0
    %2730 = vmatprep.subr.mxu0 0.0
    %2731 = vmatpush1.msra.mxu0 %v2717
    %2732 = vmatprep.subr.mxu0 0.0
    %2733 = vmatpush1.msra.mxu0 0.0
    %2734 = vmatprep.subr.mxu0 0.0
    %2735 = vmatpush1.msra.mxu0 0.0
    %2736 = vmatprep.subr.mxu0 0.0
    %2737 = vmatpush1.msra.mxu0 0.0
    %2738 = vmatprep.subr.mxu0 0.0
    %2739 = vmatpush1.msra.mxu0 0.0
    %2740 = vmatprep.subr.mxu0 0.0
    %2741 = vmatpush1.msra.mxu0 0.0
    %2742 = vmatprep.subr.mxu0 0.0
    %2743 = vmatpush1.msra.mxu0 0.0
    %2744 = vmatprep.subr.mxu0 0.0
    %2745 = vmatpush1.msra.mxu0 0.0
    %2746 = vmatprep.subr.mxu0 0.0
    %2747 = vmatpush1.msra.mxu0 0.0
    %2748 = vmatprep.subr.mxu0 0.0
    %2749 = vmatpush1.msra.mxu0 0.0
    %2750 = vmatprep.subr.mxu0 0.0
    %2751 = vmatpush1.msra.mxu0 0.0
    %2752 = vmatprep.subr.mxu0 0.0
    %2753 = vmatpush1.msra.mxu0 0.0
    %2754 = vmatprep.subr.mxu0 0.0
    %2755 = vmatpush1.msra.mxu0 0.0
    %2756 = vmatprep.subr.mxu0 0.0
    %2757 = vmatpush1.msra.mxu0 0.0
    %2758 = vmatprep.subr.mxu0 0.0
    %2759 = vmatpush1.msra.mxu0 0.0
    %2760 = vmatprep.subr.mxu0 0.0
    %2761 = vmatpush1.msra.mxu0 0.0
    %2762 = vmatprep.subr.mxu0 0.0
    %2763 = vmatpush1.msra.mxu0 0.0
    %2764 = vmatprep.subr.mxu0 0.0
    %2765 = vmatpush1.msra.mxu0 0.0
    %2766 = vmatprep.subr.mxu0 0.0
    %2767 = vmatpush1.msra.mxu0 0.0
    %2768 = vmatprep.subr.mxu0 0.0
    %2769 = vmatpush1.msra.mxu0 0.0
    %2770 = vmatprep.subr.mxu0 0.0
    %2771 = vmatpush1.msra.mxu0 0.0
    %2772 = vmatprep.subr.mxu0 0.0
    %2773 = vmatpush1.msra.mxu0 0.0
    %2774 = vmatprep.subr.mxu0 0.0
    %2775 = vmatpush1.msra.mxu0 0.0
    %2776 = vmatprep.subr.mxu0 0.0
    %2777 = vmatpush1.msra.mxu0 0.0
    %2778 = vmatprep.subr.mxu0 0.0
    %2779 = vmatpush1.msra.mxu0 0.0
    %2780 = vmatprep.subr.mxu0 0.0
    %2781 = vmatpush1.msra.mxu0 0.0
    %2782 = vmatprep.subr.mxu0 0.0
    %2783 = vmatpush1.msra.mxu0 0.0
    %2784 = vmatprep.subr.mxu0 0.0
    %2785 = vmatpush1.msra.mxu0 0.0
    %2786 = vmatprep.subr.mxu0 0.0
    %2787 = vmatpush1.msra.mxu0 0.0
    %2788 = vmatprep.subr.mxu0 0.0
    %2789 = vmatpush1.msra.mxu0 0.0
    %2790 = vmatprep.subr.mxu0 0.0
    %2791 = vmatpush1.msra.mxu0 0.0
    %2792 = vmatprep.subr.mxu0 0.0
    %2793 = vmatpush1.msra.mxu0 0.0
    %2794 = vmatprep.mubr.f32.mxu0 0.0
    %2795 = vmatmul.mubr.f32.gmra.mrb[0].mxu0 %v2719
    %v2796 = vpop.f32.mrb[0].mxu0
    %v2797 = vadd.f32 0.0, %v2796
    %v2798 = vpop.f32.mrb[0].mxu0
    %2799 = vmatprep.mubr.f32.mxu0 0.0
    %2800 = vmatmul.mubr.f32.gmra.mrb[0].mxu0 %v2722
    %v2801 = vpop.f32.mrb[0].mxu0
    %v2802 = vadd.f32 0.0, %v2801
    %v2803 = vpop.f32.mrb[0].mxu0
    %2804 = vmatprep.mubr.f32.mxu0 0.0
    %2805 = vmatmul.mubr.f32.gmra.mrb[0].mxu0 %v2725
    %v2806 = vpop.f32.mrb[0].mxu0
    %v2807 = vadd.f32 0.0, %v2806
    %v2808 = vpop.f32.mrb[0].mxu0
    %2809 = vmatprep.mubr.f32.mxu0 0.0
    %2810 = vmatmul.mubr.f32.gmra.mrb[0].mxu0 %v2728
    %v2811 = vpop.f32.mrb[0].mxu0
    %v2812 = vadd.f32 0.0, %v2811
    %v2813 = vpop.f32.mrb[0].mxu0
    %2814 = vdwg.mxu0
    %v2815 = vadd.f32 %v2170, %v2797
    %v2816 = vadd.f32 %v2171, %v2802
    %v2817 = vadd.f32 %v2172, %v2807
    %v2818 = vadd.f32 %v2173, %v2812
    %v2819 = vld [vmem:[%s2 + $0x90] sm:$0x1]
    %v2820 = vld [vmem:[%s2 + $0x98] sm:$0x1]
    %v2821 = vsel %vm148, %v2815, 0.0
    %2822 = vadd.xlane.f32.xlu0 %v2821
    %v2823 = vpop.xlane.xlu0 %2822
    %v2824 = vsel %vm148, %v2816, 0.0
    %2825 = vadd.xlane.f32.xlu0 %v2824
    %v2826 = vpop.xlane.xlu0 %2825
    %v2827 = vsel %vm148, %v2817, 0.0
    %2828 = vadd.xlane.f32.xlu0 %v2827
    %v2829 = vpop.xlane.xlu0 %2828
    %v2830 = vsel %vm148, %v2818, 0.0
    %2831 = vadd.xlane.f32.xlu0 %v2830
    %v2832 = vpop.xlane.xlu0 %2831
    %v2833 = vmul.f32 %v2823, %v161
    %v2834 = vmul.f32 %v2826, %v161
    %v2835 = vmul.f32 %v2829, %v161
    %v2836 = vmul.f32 %v2832, %v161
    %v2837 = vsub.f32 %v2815, %v2833
    %v2838 = vsub.f32 %v2816, %v2834
    %v2839 = vsub.f32 %v2817, %v2835
    %v2840 = vsub.f32 %v2818, %v2836
    %v2841 = vmul.f32 %v2837, %v2837
    %v2842 = vmul.f32 %v2838, %v2838
    %v2843 = vmul.f32 %v2839, %v2839
    %v2844 = vmul.f32 %v2840, %v2840
    %v2845 = vsel %vm148, %v2841, 0.0
    %2846 = vadd.xlane.f32.xlu0 %v2845
    %v2847 = vpop.xlane.xlu0 %2846
    %v2848 = vsel %vm148, %v2842, 0.0
    %2849 = vadd.xlane.f32.xlu0 %v2848
    %v2850 = vpop.xlane.xlu0 %2849
    %v2851 = vsel %vm148, %v2843, 0.0
    %2852 = vadd.xlane.f32.xlu0 %v2851
    %v2853 = vpop.xlane.xlu0 %2852
    %v2854 = vsel %vm148, %v2844, 0.0
    %2855 = vadd.xlane.f32.xlu0 %v2854
    %v2856 = vpop.xlane.xlu0 %2855
    %v2857 = vmul.f32 %v2847, %v161
    %v2858 = vmul.f32 %v2850, %v161
    %v2859 = vmul.f32 %v2853, %v161
    %v2860 = vmul.f32 %v2856, %v161
    %v2861 = vadd.f32 %v2857, 1e-05
    %v2862 = vadd.f32 %v2858, 1e-05
    %v2863 = vadd.f32 %v2859, 1e-05
    %v2864 = vadd.f32 %v2860, 1e-05
    %v2865 = vrsqrt.pop %v2861
    %v2866 = vrsqrt.pop %v2862
    %v2867 = vrsqrt.pop %v2863
    %v2868 = vrsqrt.pop %v2864
    %v2869 = vmul.f32 %v2837, %v2865
    %v2870 = vmul.f32 %v2838, %v2866
    %v2871 = vmul.f32 %v2839, %v2867
    %v2872 = vmul.f32 %v2840, %v2868
    %v2873 = vlaneseq
    %v2874 = vshrl.u32 %v2873, 7
    %v2875 = vsub.s32 0, %v2874
    %v2876 = vrot.slane %v2819, %v2875
    %v2877 = vmul.f32 %v2869, %v2876
    %v2878 = vmul.f32 %v2870, %v2876
    %v2879 = vmul.f32 %v2871, %v2876
    %v2880 = vmul.f32 %v2872, %v2876
    %v2881 = vlaneseq
    %v2882 = vshrl.u32 %v2881, 7
    %v2883 = vsub.s32 0, %v2882
    %v2884 = vrot.slane %v2820, %v2883
    %v2885 = vadd.f32 %v2877, %v2884
    %v2886 = vadd.f32 %v2878, %v2884
    %v2887 = vadd.f32 %v2879, %v2884
    %v2888 = vadd.f32 %v2880, %v2884
    %v2889 = vld [vmem:[%s3] sm:$0xff]
    %v2890 = vld [vmem:[%s3 + $0x8] sm:$0xff]
    %v2891 = vld [vmem:[%s3 + $0x10] sm:$0xff]
    %v2892 = vld [vmem:[%s3 + $0x18] sm:$0xff]
    %v2893 = vld [vmem:[%s3 + $0x20] sm:$0x1]
    %v2894 = vlaneseq
    %v2895 = vshrl.u32 %v2894, 7
    %v2896 = vsub.s32 0, %v2895
    %v2897 = vrot.slane %v2893, %v2896
    %v2899 = vsel %vm148, %v2885, 0
    %v2902 = vsel %vm148, %v2886, 0
    %v2905 = vsel %vm148, %v2887, 0
    %v2908 = vsel %vm148, %v2888, 0
    %2910 = vmatprep.subr.mxu0 0.0
    %2911 = vmatpush1.msra.mxu0 %v2889
    %2912 = vmatprep.subr.mxu0 0.0
    %2913 = vmatpush1.msra.mxu0 %v2890
    %2914 = vmatprep.subr.mxu0 0.0
    %2915 = vmatpush1.msra.mxu0 %v2891
    %2916 = vmatprep.subr.mxu0 0.0
    %2917 = vmatpush1.msra.mxu0 %v2892
    %2918 = vmatprep.subr.mxu0 0.0
    %2919 = vmatpush1.msra.mxu0 0.0
    %2920 = vmatprep.subr.mxu0 0.0
    %2921 = vmatpush1.msra.mxu0 0.0
    %2922 = vmatprep.subr.mxu0 0.0
    %2923 = vmatpush1.msra.mxu0 0.0
    %2924 = vmatprep.subr.mxu0 0.0
    %2925 = vmatpush1.msra.mxu0 0.0
    %2926 = vmatprep.subr.mxu0 0.0
    %2927 = vmatpush1.msra.mxu0 0.0
    %2928 = vmatprep.subr.mxu0 0.0
    %2929 = vmatpush1.msra.mxu0 0.0
    %2930 = vmatprep.subr.mxu0 0.0
    %2931 = vmatpush1.msra.mxu0 0.0
    %2932 = vmatprep.subr.mxu0 0.0
    %2933 = vmatpush1.msra.mxu0 0.0
    %2934 = vmatprep.subr.mxu0 0.0
    %2935 = vmatpush1.msra.mxu0 0.0
    %2936 = vmatprep.subr.mxu0 0.0
    %2937 = vmatpush1.msra.mxu0 0.0
    %2938 = vmatprep.subr.mxu0 0.0
    %2939 = vmatpush1.msra.mxu0 0.0
    %2940 = vmatprep.subr.mxu0 0.0
    %2941 = vmatpush1.msra.mxu0 0.0
    %2942 = vmatprep.subr.mxu0 0.0
    %2943 = vmatpush1.msra.mxu0 0.0
    %2944 = vmatprep.subr.mxu0 0.0
    %2945 = vmatpush1.msra.mxu0 0.0
    %2946 = vmatprep.subr.mxu0 0.0
    %2947 = vmatpush1.msra.mxu0 0.0
    %2948 = vmatprep.subr.mxu0 0.0
    %2949 = vmatpush1.msra.mxu0 0.0
    %2950 = vmatprep.subr.mxu0 0.0
    %2951 = vmatpush1.msra.mxu0 0.0
    %2952 = vmatprep.subr.mxu0 0.0
    %2953 = vmatpush1.msra.mxu0 0.0
    %2954 = vmatprep.subr.mxu0 0.0
    %2955 = vmatpush1.msra.mxu0 0.0
    %2956 = vmatprep.subr.mxu0 0.0
    %2957 = vmatpush1.msra.mxu0 0.0
    %2958 = vmatprep.subr.mxu0 0.0
    %2959 = vmatpush1.msra.mxu0 0.0
    %2960 = vmatprep.subr.mxu0 0.0
    %2961 = vmatpush1.msra.mxu0 0.0
    %2962 = vmatprep.subr.mxu0 0.0
    %2963 = vmatpush1.msra.mxu0 0.0
    %2964 = vmatprep.subr.mxu0 0.0
    %2965 = vmatpush1.msra.mxu0 0.0
    %2966 = vmatprep.subr.mxu0 0.0
    %2967 = vmatpush1.msra.mxu0 0.0
    %2968 = vmatprep.subr.mxu0 0.0
    %2969 = vmatpush1.msra.mxu0 0.0
    %2970 = vmatprep.subr.mxu0 0.0
    %2971 = vmatpush1.msra.mxu0 0.0
    %2972 = vmatprep.subr.mxu0 0.0
    %2973 = vmatpush1.msra.mxu0 0.0
    %2974 = vmatprep.mubr.f32.mxu0 0.0
    %2975 = vmatmul.mubr.f32.gmra.mrb[0].mxu0 %v2899
    %v2976 = vpop.f32.mrb[0].mxu0
    %v2977 = vadd.f32 %v2897, %v2976
    %v2978 = vpop.f32.mrb[0].mxu0
    %2979 = vmatprep.mubr.f32.mxu0 0.0
    %2980 = vmatmul.mubr.f32.gmra.mrb[0].mxu0 %v2902
    %v2981 = vpop.f32.mrb[0].mxu0
    %v2982 = vadd.f32 %v2897, %v2981
    %v2983 = vpop.f32.mrb[0].mxu0
    %2984 = vmatprep.mubr.f32.mxu0 0.0
    %2985 = vmatmul.mubr.f32.gmra.mrb[0].mxu0 %v2905
    %v2986 = vpop.f32.mrb[0].mxu0
    %v2987 = vadd.f32 %v2897, %v2986
    %v2988 = vpop.f32.mrb[0].mxu0
    %2989 = vmatprep.mubr.f32.mxu0 0.0
    %2990 = vmatmul.mubr.f32.gmra.mrb[0].mxu0 %v2908
    %v2991 = vpop.f32.mrb[0].mxu0
    %v2992 = vadd.f32 %v2897, %v2991
    %v2993 = vpop.f32.mrb[0].mxu0
    %2994 = vdwg.mxu0
    %v2995 = vmul.f32 %v2977, 1.702
    %v2996 = vmul.f32 %v2982, 1.702
    %v2997 = vmul.f32 %v2987, 1.702
    %v2998 = vmul.f32 %v2992, 1.702
    %v2999 = vxor.u32 %v2995, 2147483648
    %v3000 = vxor.u32 %v2996, 2147483648
    %v3001 = vxor.u32 %v2997, 2147483648
    %v3002 = vxor.u32 %v2998, 2147483648
    %v3003 = vmul.f32 %v2999, 1.442695
    %v3004 = vpow.pop %v3003
    %v3005 = vmul.f32 %v3000, 1.442695
    %v3006 = vpow.pop %v3005
    %v3007 = vmul.f32 %v3001, 1.442695
    %v3008 = vpow.pop %v3007
    %v3009 = vmul.f32 %v3002, 1.442695
    %v3010 = vpow.pop %v3009
    %v3011 = vadd.f32 %v3004, 1.0
    %v3012 = vadd.f32 %v3006, 1.0
    %v3013 = vadd.f32 %v3008, 1.0
    %v3014 = vadd.f32 %v3010, 1.0
    %v3015 = vrcp.pop %v3011
    %v3016 = vmul.f32 1.0, %v3015
    %v3017 = vrcp.pop %v3012
    %v3018 = vmul.f32 1.0, %v3017
    %v3019 = vrcp.pop %v3013
    %v3020 = vmul.f32 1.0, %v3019
    %v3021 = vrcp.pop %v3014
    %v3022 = vmul.f32 1.0, %v3021
    %v3023 = vmul.f32 %v2977, %v3016
    %v3024 = vmul.f32 %v2982, %v3018
    %v3025 = vmul.f32 %v2987, %v3020
    %v3026 = vmul.f32 %v2992, %v3022
    %v3027 = vld [vmem:[%s2 + $0xa0] sm:$0xff]
    %v3028 = vld [vmem:[%s2 + $0xa8] sm:$0xff]
    %v3029 = vld [vmem:[%s2 + $0xb0] sm:$0xff]
    %v3030 = vld [vmem:[%s2 + $0xb8] sm:$0xff]
    %v3031 = vld [vmem:[%s2 + $0xc0] sm:$0xff]
    %v3032 = vld [vmem:[%s2 + $0xc8] sm:$0xff]
    %v3033 = vld [vmem:[%s2 + $0xd0] sm:$0xff]
    %v3034 = vld [vmem:[%s2 + $0xd8] sm:$0xff]
    %v3035 = vld [vmem:[%s2 + $0xe0] sm:$0xff]
    %v3036 = vld [vmem:[%s2 + $0xe8] sm:$0xff]
    %v3037 = vld [vmem:[%s2 + $0xf0] sm:$0xff]
    %v3038 = vld [vmem:[%s2 + $0xf8] sm:$0xff]
    %v3039 = vld [vmem:[%s2 + $0x100] sm:$0xff]
    %v3040 = vld [vmem:[%s2 + $0x108] sm:$0xff]
    %v3041 = vld [vmem:[%s2 + $0x110] sm:$0xff]
    %v3042 = vld [vmem:[%s2 + $0x118] sm:$0xff]
    %3043 = vmatprep.subr.mxu0 0.0
    %3044 = vmatpush1.msra.mxu0 %v3027
    %3045 = vmatprep.subr.mxu0 0.0
    %3046 = vmatpush1.msra.mxu0 %v3028
    %3047 = vmatprep.subr.mxu0 0.0
    %3048 = vmatpush1.msra.mxu0 %v3029
    %3049 = vmatprep.subr.mxu0 0.0
    %3050 = vmatpush1.msra.mxu0 %v3030
    %3051 = vmatprep.subr.mxu0 0.0
    %3052 = vmatpush1.msra.mxu0 %v3031
    %3053 = vmatprep.subr.mxu0 0.0
    %3054 = vmatpush1.msra.mxu0 %v3032
    %3055 = vmatprep.subr.mxu0 0.0
    %3056 = vmatpush1.msra.mxu0 %v3033
    %3057 = vmatprep.subr.mxu0 0.0
    %3058 = vmatpush1.msra.mxu0 %v3034
    %3059 = vmatprep.subr.mxu0 0.0
    %3060 = vmatpush1.msra.mxu0 %v3035
    %3061 = vmatprep.subr.mxu0 0.0
    %3062 = vmatpush1.msra.mxu0 %v3036
    %3063 = vmatprep.subr.mxu0 0.0
    %3064 = vmatpush1.msra.mxu0 %v3037
    %3065 = vmatprep.subr.mxu0 0.0
    %3066 = vmatpush1.msra.mxu0 %v3038
    %3067 = vmatprep.subr.mxu0 0.0
    %3068 = vmatpush1.msra.mxu0 %v3039
    %3069 = vmatprep.subr.mxu0 0.0
    %3070 = vmatpush1.msra.mxu0 %v3040
    %3071 = vmatprep.subr.mxu0 0.0
    %3072 = vmatpush1.msra.mxu0 %v3041
    %3073 = vmatprep.subr.mxu0 0.0
    %3074 = vmatpush1.msra.mxu0 %v3042
    %3075 = vmatprep.subr.mxu0 0.0
    %3076 = vmatpush1.msra.mxu0 0.0
    %3077 = vmatprep.subr.mxu0 0.0
    %3078 = vmatpush1.msra.mxu0 0.0
    %3079 = vmatprep.subr.mxu0 0.0
    %3080 = vmatpush1.msra.mxu0 0.0
    %3081 = vmatprep.subr.mxu0 0.0
    %3082 = vmatpush1.msra.mxu0 0.0
    %3083 = vmatprep.subr.mxu0 0.0
    %3084 = vmatpush1.msra.mxu0 0.0
    %3085 = vmatprep.subr.mxu0 0.0
    %3086 = vmatpush1.msra.mxu0 0.0
    %3087 = vmatprep.subr.mxu0 0.0
    %3088 = vmatpush1.msra.mxu0 0.0
    %3089 = vmatprep.subr.mxu0 0.0
    %3090 = vmatpush1.msra.mxu0 0.0
    %3091 = vmatprep.subr.mxu0 0.0
    %3092 = vmatpush1.msra.mxu0 0.0
    %3093 = vmatprep.subr.mxu0 0.0
    %3094 = vmatpush1.msra.mxu0 0.0
    %3095 = vmatprep.subr.mxu0 0.0
    %3096 = vmatpush1.msra.mxu0 0.0
    %3097 = vmatprep.subr.mxu0 0.0
    %3098 = vmatpush1.msra.mxu0 0.0
    %3099 = vmatprep.subr.mxu0 0.0
    %3100 = vmatpush1.msra.mxu0 0.0
    %3101 = vmatprep.subr.mxu0 0.0
    %3102 = vmatpush1.msra.mxu0 0.0
    %3103 = vmatprep.subr.mxu0 0.0
    %3104 = vmatpush1.msra.mxu0 0.0
    %3105 = vmatprep.subr.mxu0 0.0
    %3106 = vmatpush1.msra.mxu0 0.0
    %3107 = vmatprep.mubr.f32.mxu0 0.0
    %3108 = vmatmul.mubr.f32.gmra.mrb[0].mxu0 %v3023
    %v3109 = vpop.f32.mrb[0].mxu0
    %v3110 = vadd.f32 0.0, %v3109
    %v3111 = vpop.f32.mrb[0].mxu0
    %3112 = vmatprep.mubr.f32.mxu0 0.0
    %3113 = vmatmul.mubr.f32.gmra.mrb[0].mxu0 %v3024
    %v3114 = vpop.f32.mrb[0].mxu0
    %v3115 = vadd.f32 0.0, %v3114
    %v3116 = vpop.f32.mrb[0].mxu0
    %3117 = vmatprep.mubr.f32.mxu0 0.0
    %3118 = vmatmul.mubr.f32.gmra.mrb[0].mxu0 %v3025
    %v3119 = vpop.f32.mrb[0].mxu0
    %v3120 = vadd.f32 0.0, %v3119
    %v3121 = vpop.f32.mrb[0].mxu0
    %3122 = vmatprep.mubr.f32.mxu0 0.0
    %3123 = vmatmul.mubr.f32.gmra.mrb[0].mxu0 %v3026
    %v3124 = vpop.f32.mrb[0].mxu0
    %v3125 = vadd.f32 0.0, %v3124
    %v3126 = vpop.f32.mrb[0].mxu0
    %3127 = vdwg.mxu0
    %v3128 = vadd.f32 %v2815, %v3110
    %v3129 = vadd.f32 %v2816, %v3115
    %v3130 = vadd.f32 %v2817, %v3120
    %v3131 = vadd.f32 %v2818, %v3125
    %v3132 = vld [vmem:[%s2 + $0x120] sm:$0x1]
    %v3133 = vlaneseq
    %v3134 = vshrl.u32 %v3133, 7
    %v3135 = vsub.s32 0, %v3134
    %v3136 = vrot.slane %v3132, %v3135
    %v3137 = vadd.f32 %v3128, %v3136
    %v3138 = vadd.f32 %v3129, %v3136
    %v3139 = vadd.f32 %v3130, %v3136
    %v3140 = vadd.f32 %v3131, %v3136
    %v3141 = vld [vmem:[%s2 + $0x128] sm:$0x1]
    %v3142 = vld [vmem:[%s2 + $0x130] sm:$0x1]
    %v3143 = vsel %vm148, %v3137, 0.0
    %3144 = vadd.xlane.f32.xlu0 %v3143
    %v3145 = vpop.xlane.xlu0 %3144
    %v3146 = vsel %vm148, %v3138, 0.0
    %3147 = vadd.xlane.f32.xlu0 %v3146
    %v3148 = vpop.xlane.xlu0 %3147
    %v3149 = vsel %vm148, %v3139, 0.0
    %3150 = vadd.xlane.f32.xlu0 %v3149
    %v3151 = vpop.xlane.xlu0 %3150
    %v3152 = vsel %vm148, %v3140, 0.0
    %3153 = vadd.xlane.f32.xlu0 %v3152
    %v3154 = vpop.xlane.xlu0 %3153
    %v3155 = vmul.f32 %v3145, %v161
    %v3156 = vmul.f32 %v3148, %v161
    %v3157 = vmul.f32 %v3151, %v161
    %v3158 = vmul.f32 %v3154, %v161
    %v3159 = vsub.f32 %v3137, %v3155
    %v3160 = vsub.f32 %v3138, %v3156
    %v3161 = vsub.f32 %v3139, %v3157
    %v3162 = vsub.f32 %v3140, %v3158
    %v3163 = vmul.f32 %v3159, %v3159
    %v3164 = vmul.f32 %v3160, %v3160
    %v3165 = vmul.f32 %v3161, %v3161
    %v3166 = vmul.f32 %v3162, %v3162
    %v3167 = vsel %vm148, %v3163, 0.0
    %3168 = vadd.xlane.f32.xlu0 %v3167
    %v3169 = vpop.xlane.xlu0 %3168
    %v3170 = vsel %vm148, %v3164, 0.0
    %3171 = vadd.xlane.f32.xlu0 %v3170
    %v3172 = vpop.xlane.xlu0 %3171
    %v3173 = vsel %vm148, %v3165, 0.0
    %3174 = vadd.xlane.f32.xlu0 %v3173
    %v3175 = vpop.xlane.xlu0 %3174
    %v3176 = vsel %vm148, %v3166, 0.0
    %3177 = vadd.xlane.f32.xlu0 %v3176
    %v3178 = vpop.xlane.xlu0 %3177
    %v3179 = vmul.f32 %v3169, %v161
    %v3180 = vmul.f32 %v3172, %v161
    %v3181 = vmul.f32 %v3175, %v161
    %v3182 = vmul.f32 %v3178, %v161
    %v3183 = vadd.f32 %v3179, 1e-05
    %v3184 = vadd.f32 %v3180, 1e-05
    %v3185 = vadd.f32 %v3181, 1e-05
    %v3186 = vadd.f32 %v3182, 1e-05
    %v3187 = vrsqrt.pop %v3183
    %v3188 = vrsqrt.pop %v3184
    %v3189 = vrsqrt.pop %v3185
    %v3190 = vrsqrt.pop %v3186
    %v3191 = vmul.f32 %v3159, %v3187
    %v3192 = vmul.f32 %v3160, %v3188
    %v3193 = vmul.f32 %v3161, %v3189
    %v3194 = vmul.f32 %v3162, %v3190
    %v3195 = vlaneseq
    %v3196 = vshrl.u32 %v3195, 7
    %v3197 = vsub.s32 0, %v3196
    %v3198 = vrot.slane %v3141, %v3197
    %v3199 = vmul.f32 %v3191, %v3198
    %v3200 = vmul.f32 %v3192, %v3198
    %v3201 = vmul.f32 %v3193, %v3198
    %v3202 = vmul.f32 %v3194, %v3198
    %v3203 = vlaneseq
    %v3204 = vshrl.u32 %v3203, 7
    %v3205 = vsub.s32 0, %v3204
    %v3206 = vrot.slane %v3142, %v3205
    %v3207 = vadd.f32 %v3199, %v3206
    %v3208 = vadd.f32 %v3200, %v3206
    %v3209 = vadd.f32 %v3201, %v3206
    %v3210 = vadd.f32 %v3202, %v3206
    %v3211 = vld [vmem:[%s2 + $0x178] sm:$0x3]
    %v3213 = vsel %vm148, %v3211, 0
    %3215 = vmatprep.subr.mxu0 0.0
    %3216 = vmatpush1.msra.mxu0 %v3207
    %3217 = vmatprep.subr.mxu0 0.0
    %3218 = vmatpush1.msra.mxu0 %v3208
    %3219 = vmatprep.subr.mxu0 0.0
    %3220 = vmatpush1.msra.mxu0 %v3209
    %3221 = vmatprep.subr.mxu0 0.0
    %3222 = vmatpush1.msra.mxu0 %v3210
    %3223 = vmatprep.subr.mxu0 0.0
    %3224 = vmatpush1.msra.mxu0 0.0
    %3225 = vmatprep.subr.mxu0 0.0
    %3226 = vmatpush1.msra.mxu0 0.0
    %3227 = vmatprep.subr.mxu0 0.0
    %3228 = vmatpush1.msra.mxu0 0.0
    %3229 = vmatprep.subr.mxu0 0.0
    %3230 = vmatpush1.msra.mxu0 0.0
    %3231 = vmatprep.subr.mxu0 0.0
    %3232 = vmatpush1.msra.mxu0 0.0
    %3233 = vmatprep.subr.mxu0 0.0
    %3234 = vmatpush1.msra.mxu0 0.0
    %3235 = vmatprep.subr.mxu0 0.0
    %3236 = vmatpush1.msra.mxu0 0.0
    %3237 = vmatprep.subr.mxu0 0.0
    %3238 = vmatpush1.msra.mxu0 0.0
    %3239 = vmatprep.subr.mxu0 0.0
    %3240 = vmatpush1.msra.mxu0 0.0
    %3241 = vmatprep.subr.mxu0 0.0
    %3242 = vmatpush1.msra.mxu0 0.0
    %3243 = vmatprep.subr.mxu0 0.0
    %3244 = vmatpush1.msra.mxu0 0.0
    %3245 = vmatprep.subr.mxu0 0.0
    %3246 = vmatpush1.msra.mxu0 0.0
    %3247 = vmatprep.subr.mxu0 0.0
    %3248 = vmatpush1.msra.mxu0 0.0
    %3249 = vmatprep.subr.mxu0 0.0
    %3250 = vmatpush1.msra.mxu0 0.0
    %3251 = vmatprep.subr.mxu0 0.0
    %3252 = vmatpush1.msra.mxu0 0.0
    %3253 = vmatprep.subr.mxu0 0.0
    %3254 = vmatpush1.msra.mxu0 0.0
    %3255 = vmatprep.subr.mxu0 0.0
    %3256 = vmatpush1.msra.mxu0 0.0
    %3257 = vmatprep.subr.mxu0 0.0
    %3258 = vmatpush1.msra.mxu0 0.0
    %3259 = vmatprep.subr.mxu0 0.0
    %3260 = vmatpush1.msra.mxu0 0.0
    %3261 = vmatprep.subr.mxu0 0.0
    %3262 = vmatpush1.msra.mxu0 0.0
    %3263 = vmatprep.subr.mxu0 0.0
    %3264 = vmatpush1.msra.mxu0 0.0
    %3265 = vmatprep.subr.mxu0 0.0
    %3266 = vmatpush1.msra.mxu0 0.0
    %3267 = vmatprep.subr.mxu0 0.0
    %3268 = vmatpush1.msra.mxu0 0.0
    %3269 = vmatprep.subr.mxu0 0.0
    %3270 = vmatpush1.msra.mxu0 0.0
    %3271 = vmatprep.subr.mxu0 0.0
    %3272 = vmatpush1.msra.mxu0 0.0
    %3273 = vmatprep.subr.mxu0 0.0
    %3274 = vmatpush1.msra.mxu0 0.0
    %3275 = vmatprep.subr.mxu0 0.0
    %3276 = vmatpush1.msra.mxu0 0.0
    %3277 = vmatprep.subr.mxu0 0.0
    %3278 = vmatpush1.msra.mxu0 0.0
    %3279 = vmatprep.mubr.f32.mxu0 0.0
    %3280 = vmatmul.mubr.f32.gmra.mrb[0].mxu0 %v3213
    %v3281 = vpop.f32.mrb[0].mxu0
    %v3282 = vadd.f32 0.0, %v3281
    %v3283 = vpop.f32.mrb[0].mxu0
    %3284 = vdwg.mxu0
    %v3285 = vld [vmem:[%s2 + $0x138] sm:$0xff]
    %v3286 = vld [vmem:[%s2 + $0x140] sm:$0xff]
    %v3287 = vld [vmem:[%s2 + $0x148] sm:$0xff]
    %v3288 = vld [vmem:[%s2 + $0x150] sm:$0xff]
    %v3290 = vsel %vm148, %v3282, 0
    %3292 = vmatprep.subr.mxu0 0.0
    %3293 = vmatpush1.msra.mxu0 %v3285
    %3294 = vmatprep.subr.mxu0 0.0
    %3295 = vmatpush1.msra.mxu0 %v3286
    %3296 = vmatprep.subr.mxu0 0.0
    %3297 = vmatpush1.msra.mxu0 %v3287
    %3298 = vmatprep.subr.mxu0 0.0
    %3299 = vmatpush1.msra.mxu0 %v3288
    %3300 = vmatprep.subr.mxu0 0.0
    %3301 = vmatpush1.msra.mxu0 0.0
    %3302 = vmatprep.subr.mxu0 0.0
    %3303 = vmatpush1.msra.mxu0 0.0
    %3304 = vmatprep.subr.mxu0 0.0
    %3305 = vmatpush1.msra.mxu0 0.0
    %3306 = vmatprep.subr.mxu0 0.0
    %3307 = vmatpush1.msra.mxu0 0.0
    %3308 = vmatprep.subr.mxu0 0.0
    %3309 = vmatpush1.msra.mxu0 0.0
    %3310 = vmatprep.subr.mxu0 0.0
    %3311 = vmatpush1.msra.mxu0 0.0
    %3312 = vmatprep.subr.mxu0 0.0
    %3313 = vmatpush1.msra.mxu0 0.0
    %3314 = vmatprep.subr.mxu0 0.0
    %3315 = vmatpush1.msra.mxu0 0.0
    %3316 = vmatprep.subr.mxu0 0.0
    %3317 = vmatpush1.msra.mxu0 0.0
    %3318 = vmatprep.subr.mxu0 0.0
    %3319 = vmatpush1.msra.mxu0 0.0
    %3320 = vmatprep.subr.mxu0 0.0
    %3321 = vmatpush1.msra.mxu0 0.0
    %3322 = vmatprep.subr.mxu0 0.0
    %3323 = vmatpush1.msra.mxu0 0.0
    %3324 = vmatprep.subr.mxu0 0.0
    %3325 = vmatpush1.msra.mxu0 0.0
    %3326 = vmatprep.subr.mxu0 0.0
    %3327 = vmatpush1.msra.mxu0 0.0
    %3328 = vmatprep.subr.mxu0 0.0
    %3329 = vmatpush1.msra.mxu0 0.0
    %3330 = vmatprep.subr.mxu0 0.0
    %3331 = vmatpush1.msra.mxu0 0.0
    %3332 = vmatprep.subr.mxu0 0.0
    %3333 = vmatpush1.msra.mxu0 0.0
    %3334 = vmatprep.subr.mxu0 0.0
    %3335 = vmatpush1.msra.mxu0 0.0
    %3336 = vmatprep.subr.mxu0 0.0
    %3337 = vmatpush1.msra.mxu0 0.0
    %3338 = vmatprep.subr.mxu0 0.0
    %3339 = vmatpush1.msra.mxu0 0.0
    %3340 = vmatprep.subr.mxu0 0.0
    %3341 = vmatpush1.msra.mxu0 0.0
    %3342 = vmatprep.subr.mxu0 0.0
    %3343 = vmatpush1.msra.mxu0 0.0
    %3344 = vmatprep.subr.mxu0 0.0
    %3345 = vmatpush1.msra.mxu0 0.0
    %3346 = vmatprep.subr.mxu0 0.0
    %3347 = vmatpush1.msra.mxu0 0.0
    %3348 = vmatprep.subr.mxu0 0.0
    %3349 = vmatpush1.msra.mxu0 0.0
    %3350 = vmatprep.subr.mxu0 0.0
    %3351 = vmatpush1.msra.mxu0 0.0
    %3352 = vmatprep.subr.mxu0 0.0
    %3353 = vmatpush1.msra.mxu0 0.0
    %3354 = vmatprep.subr.mxu0 0.0
    %3355 = vmatpush1.msra.mxu0 0.0
    %3356 = vmatprep.mubr.f32.mxu0 0.0
    %3357 = vmatmul.mubr.f32.gmra.mrb[0].mxu0 %v3290
    %v3358 = vpop.f32.mrb[0].mxu0
    %v3359 = vadd.f32 0.0, %v3358
    %v3360 = vpop.f32.mrb[0].mxu0
    %3361 = vdwg.mxu0
    %v3362 = vmul.f32 %v3359, %v3359
    %vm3363 = vcmask 254976
    %v3364 = vsel %vm3363, %v3362, 0.0
    %3365 = vadd.xlane.f32.xlu0 %v3364
    %v3366 = vpop.xlane.xlu0 %3365
    %v3367 = vadd.f32 %v3366, 1e-12
    %v3368 = vrsqrt.pop %v3367
    %v3369 = vmul.f32 %v3359, %v3368
    %v3370 = vlaneseq
    %v3371 = vand.u32 %v3370, 127
    %v3372 = vld [vmem:[%s1] sm:$0xff]
    %v3373 = vld [vmem:[%s1 + $0x8] sm:$0xff]
    %3374 = vset.pattern.permute.xlu0 0
    %3375 = vperm.xlu0 %3374, %v3372
    %v3376 = vpop.permute.xlu0 %3375
    %3377 = vset.pattern.permute.xlu0 0
    %3378 = vperm.xlu0 %3377, %v3373
    %v3379 = vpop.permute.xlu0 %3378
    %vm3380 = vcmp.eq.s32.totalorder %v3376, %v3371
    %vm3381 = vcmp.eq.s32.totalorder %v3379, %v3371
    %v3382 = vsel %vm3380, 1, 0
    %v3383 = vsel %vm3381, 1, 0
    %v3384 = vcvt.s32.f32 %v3382
    %v3385 = vcvt.s32.f32 %v3383
    %v3386 = vld [vmem:[%s2 + $0x180] sm:$0xff]
    %v3387 = vld [vmem:[%s2 + $0x188] sm:$0xff]
    %v3388 = vld [vmem:[%s2 + $0x190] sm:$0xff]
    %v3389 = vld [vmem:[%s2 + $0x198] sm:$0xff]
    %v3390 = vld [vmem:[%s2 + $0x1a0] sm:$0xff]
    %v3391 = vld [vmem:[%s2 + $0x1a8] sm:$0xff]
    %v3392 = vld [vmem:[%s2 + $0x1b0] sm:$0xff]
    %v3393 = vld [vmem:[%s2 + $0x1b8] sm:$0xff]
    %v3394 = vld [vmem:[%s2 + $0x1c0] sm:$0xff]
    %v3395 = vld [vmem:[%s2 + $0x1c8] sm:$0xff]
    %vm3396 = vcmask 523264
    %v3398 = vsel %vm3396, %v3384, 0
    %v3401 = vsel %vm3396, %v3385, 0
    %3403 = vmatprep.subr.mxu0 0.0
    %3404 = vmatpush1.msra.mxu0 %v3386
    %3405 = vmatprep.subr.mxu0 0.0
    %3406 = vmatpush1.msra.mxu0 %v3387
    %3407 = vmatprep.subr.mxu0 0.0
    %3408 = vmatpush1.msra.mxu0 %v3388
    %3409 = vmatprep.subr.mxu0 0.0
    %3410 = vmatpush1.msra.mxu0 %v3389
    %3411 = vmatprep.subr.mxu0 0.0
    %3412 = vmatpush1.msra.mxu0 %v3390
    %3413 = vmatprep.subr.mxu0 0.0
    %3414 = vmatpush1.msra.mxu0 %v3391
    %3415 = vmatprep.subr.mxu0 0.0
    %3416 = vmatpush1.msra.mxu0 %v3392
    %3417 = vmatprep.subr.mxu0 0.0
    %3418 = vmatpush1.msra.mxu0 %v3393
    %3419 = vmatprep.subr.mxu0 0.0
    %3420 = vmatpush1.msra.mxu0 0.0
    %3421 = vmatprep.subr.mxu0 0.0
    %3422 = vmatpush1.msra.mxu0 0.0
    %3423 = vmatprep.subr.mxu0 0.0
    %3424 = vmatpush1.msra.mxu0 0.0
    %3425 = vmatprep.subr.mxu0 0.0
    %3426 = vmatpush1.msra.mxu0 0.0
    %3427 = vmatprep.subr.mxu0 0.0
    %3428 = vmatpush1.msra.mxu0 0.0
    %3429 = vmatprep.subr.mxu0 0.0
    %3430 = vmatpush1.msra.mxu0 0.0
    %3431 = vmatprep.subr.mxu0 0.0
    %3432 = vmatpush1.msra.mxu0 0.0
    %3433 = vmatprep.subr.mxu0 0.0
    %3434 = vmatpush1.msra.mxu0 0.0
    %3435 = vmatprep.subr.mxu0 0.0
    %3436 = vmatpush1.msra.mxu0 0.0
    %3437 = vmatprep.subr.mxu0 0.0
    %3438 = vmatpush1.msra.mxu0 0.0
    %3439 = vmatprep.subr.mxu0 0.0
    %3440 = vmatpush1.msra.mxu0 0.0
    %3441 = vmatprep.subr.mxu0 0.0
    %3442 = vmatpush1.msra.mxu0 0.0
    %3443 = vmatprep.subr.mxu0 0.0
    %3444 = vmatpush1.msra.mxu0 0.0
    %3445 = vmatprep.subr.mxu0 0.0
    %3446 = vmatpush1.msra.mxu0 0.0
    %3447 = vmatprep.subr.mxu0 0.0
    %3448 = vmatpush1.msra.mxu0 0.0
    %3449 = vmatprep.subr.mxu0 0.0
    %3450 = vmatpush1.msra.mxu0 0.0
    %3451 = vmatprep.subr.mxu0 0.0
    %3452 = vmatpush1.msra.mxu0 0.0
    %3453 = vmatprep.subr.mxu0 0.0
    %3454 = vmatpush1.msra.mxu0 0.0
    %3455 = vmatprep.subr.mxu0 0.0
    %3456 = vmatpush1.msra.mxu0 0.0
    %3457 = vmatprep.subr.mxu0 0.0
    %3458 = vmatpush1.msra.mxu0 0.0
    %3459 = vmatprep.subr.mxu0 0.0
    %3460 = vmatpush1.msra.mxu0 0.0
    %3461 = vmatprep.subr.mxu0 0.0
    %3462 = vmatpush1.msra.mxu0 0.0
    %3463 = vmatprep.subr.mxu0 0.0
    %3464 = vmatpush1.msra.mxu0 0.0
    %3465 = vmatprep.subr.mxu0 0.0
    %3466 = vmatpush1.msra.mxu0 0.0
    %3467 = vmatprep.mubr.f32.mxu0 0.0
    %3468 = vmatmul.mubr.f32.gmra.mrb[0].mxu0 %v3398
    %v3469 = vpop.f32.mrb[0].mxu0
    %v3470 = vadd.f32 %v3394, %v3469
    %v3471 = vpop.f32.mrb[0].mxu0
    %3472 = vmatprep.mubr.f32.mxu0 0.0
    %3473 = vmatmul.mubr.f32.gmra.mrb[0].mxu0 %v3401
    %v3474 = vpop.f32.mrb[0].mxu0
    %v3475 = vadd.f32 %v3395, %v3474
    %v3476 = vpop.f32.mrb[0].mxu0
    %3477 = vdwg.mxu0
    %v3478 = vld [vmem:[%s2 + $0x2d0] sm:$0xff]
    %v3479 = vld [vmem:[%s2 + $0x2d8] sm:$0xff]
    %v3480 = vld [vmem:[%s2 + $0x1d0] sm:$0x1]
    %v3481 = vld [vmem:[%s2 + $0x1d8] sm:$0x1]
    %v3482 = vsel %vm148, %v3470, 0.0
    %3483 = vadd.xlane.f32.xlu0 %v3482
    %v3484 = vpop.xlane.xlu0 %3483
    %v3485 = vsel %vm148, %v3475, 0.0
    %3486 = vadd.xlane.f32.xlu0 %v3485
    %v3487 = vpop.xlane.xlu0 %3486
    %v3488 = vmul.f32 %v3484, %v161
    %v3489 = vmul.f32 %v3487, %v161
    %v3490 = vsub.f32 %v3470, %v3488
    %v3491 = vsub.f32 %v3475, %v3489
    %v3492 = vmul.f32 %v3490, %v3490
    %v3493 = vmul.f32 %v3491, %v3491
    %v3494 = vsel %vm148, %v3492, 0.0
    %3495 = vadd.xlane.f32.xlu0 %v3494
    %v3496 = vpop.xlane.xlu0 %3495
    %v3497 = vsel %vm148, %v3493, 0.0
    %3498 = vadd.xlane.f32.xlu0 %v3497
    %v3499 = vpop.xlane.xlu0 %3498
    %v3500 = vmul.f32 %v3496, %v161
    %v3501 = vmul.f32 %v3499, %v161
    %v3502 = vadd.f32 %v3500, 1e-05
    %v3503 = vadd.f32 %v3501, 1e-05
    %v3504 = vrsqrt.pop %v3502
    %v3505 = vrsqrt.pop %v3503
    %v3506 = vmul.f32 %v3490, %v3504
    %v3507 = vmul.f32 %v3491, %v3505
    %v3508 = vlaneseq
    %v3509 = vshrl.u32 %v3508, 7
    %v3510 = vsub.s32 0, %v3509
    %v3511 = vrot.slane %v3480, %v3510
    %v3512 = vmul.f32 %v3506, %v3511
    %v3513 = vmul.f32 %v3507, %v3511
    %v3514 = vlaneseq
    %v3515 = vshrl.u32 %v3514, 7
    %v3516 = vsub.s32 0, %v3515
    %v3517 = vrot.slane %v3481, %v3516
    %v3518 = vadd.f32 %v3512, %v3517
    %v3519 = vadd.f32 %v3513, %v3517
    %v3520 = vld [vmem:[%s2 + $0x200] sm:$0x1]
    %v3521 = vlaneseq
    %v3522 = vshrl.u32 %v3521, 7
    %v3523 = vsub.s32 0, %v3522
    %v3524 = vrot.slane %v3520, %v3523
    %v3525 = vadd.f32 %v3470, %v3524
    %v3526 = vadd.f32 %v3475, %v3524
    %s3527 = scalar_lea.vmem %s4, 480
    %v3528 = vld [vmem:[%s3527] sm:$0xff]
    %v3529 = vld [vmem:[%s3527 + $0x8] sm:$0xff]
    %v3530 = vld [vmem:[%s3527 + $0x10] sm:$0xff]
    %v3531 = vld [vmem:[%s3527 + $0x18] sm:$0xff]
    %v3532 = vld [vmem:[%s3527 + $0x20] sm:$0xff]
    %v3533 = vlaneseq
    %v3534 = vshrl.u32 %v3533, 7
    %v3535 = vsub.s32 0, %v3534
    %v3536 = vrot.slane %v3532, %v3535
    %v3538 = vsel %vm148, %v3518, 0
    %v3541 = vsel %vm148, %v3519, 0
    %3543 = vmatprep.subr.mxu0 0.0
    %3544 = vmatpush1.msra.mxu0 %v3528
    %3545 = vmatprep.subr.mxu0 0.0
    %3546 = vmatpush1.msra.mxu0 %v3529
    %3547 = vmatprep.subr.mxu0 0.0
    %3548 = vmatpush1.msra.mxu0 %v3530
    %3549 = vmatprep.subr.mxu0 0.0
    %3550 = vmatpush1.msra.mxu0 %v3531
    %3551 = vmatprep.subr.mxu0 0.0
    %3552 = vmatpush1.msra.mxu0 0.0
    %3553 = vmatprep.subr.mxu0 0.0
    %3554 = vmatpush1.msra.mxu0 0.0
    %3555 = vmatprep.subr.mxu0 0.0
    %3556 = vmatpush1.msra.mxu0 0.0
    %3557 = vmatprep.subr.mxu0 0.0
    %3558 = vmatpush1.msra.mxu0 0.0
    %3559 = vmatprep.subr.mxu0 0.0
    %3560 = vmatpush1.msra.mxu0 0.0
    %3561 = vmatprep.subr.mxu0 0.0
    %3562 = vmatpush1.msra.mxu0 0.0
    %3563 = vmatprep.subr.mxu0 0.0
    %3564 = vmatpush1.msra.mxu0 0.0
    %3565 = vmatprep.subr.mxu0 0.0
    %3566 = vmatpush1.msra.mxu0 0.0
    %3567 = vmatprep.subr.mxu0 0.0
    %3568 = vmatpush1.msra.mxu0 0.0
    %3569 = vmatprep.subr.mxu0 0.0
    %3570 = vmatpush1.msra.mxu0 0.0
    %3571 = vmatprep.subr.mxu0 0.0
    %3572 = vmatpush1.msra.mxu0 0.0
    %3573 = vmatprep.subr.mxu0 0.0
    %3574 = vmatpush1.msra.mxu0 0.0
    %3575 = vmatprep.subr.mxu0 0.0
    %3576 = vmatpush1.msra.mxu0 0.0
    %3577 = vmatprep.subr.mxu0 0.0
    %3578 = vmatpush1.msra.mxu0 0.0
    %3579 = vmatprep.subr.mxu0 0.0
    %3580 = vmatpush1.msra.mxu0 0.0
    %3581 = vmatprep.subr.mxu0 0.0
    %3582 = vmatpush1.msra.mxu0 0.0
    %3583 = vmatprep.subr.mxu0 0.0
    %3584 = vmatpush1.msra.mxu0 0.0
    %3585 = vmatprep.subr.mxu0 0.0
    %3586 = vmatpush1.msra.mxu0 0.0
    %3587 = vmatprep.subr.mxu0 0.0
    %3588 = vmatpush1.msra.mxu0 0.0
    %3589 = vmatprep.subr.mxu0 0.0
    %3590 = vmatpush1.msra.mxu0 0.0
    %3591 = vmatprep.subr.mxu0 0.0
    %3592 = vmatpush1.msra.mxu0 0.0
    %3593 = vmatprep.subr.mxu0 0.0
    %3594 = vmatpush1.msra.mxu0 0.0
    %3595 = vmatprep.subr.mxu0 0.0
    %3596 = vmatpush1.msra.mxu0 0.0
    %3597 = vmatprep.subr.mxu0 0.0
    %3598 = vmatpush1.msra.mxu0 0.0
    %3599 = vmatprep.subr.mxu0 0.0
    %3600 = vmatpush1.msra.mxu0 0.0
    %3601 = vmatprep.subr.mxu0 0.0
    %3602 = vmatpush1.msra.mxu0 0.0
    %3603 = vmatprep.subr.mxu0 0.0
    %3604 = vmatpush1.msra.mxu0 0.0
    %3605 = vmatprep.subr.mxu0 0.0
    %3606 = vmatpush1.msra.mxu0 0.0
    %3607 = vmatprep.mubr.f32.mxu0 0.0
    %3608 = vmatmul.mubr.f32.gmra.mrb[0].mxu0 %v3538
    %v3609 = vpop.f32.mrb[0].mxu0
    %v3610 = vadd.f32 %v3536, %v3609
    %v3611 = vpop.f32.mrb[0].mxu0
    %3612 = vmatprep.mubr.f32.mxu0 0.0
    %3613 = vmatmul.mubr.f32.gmra.mrb[0].mxu0 %v3541
    %v3614 = vpop.f32.mrb[0].mxu0
    %v3615 = vadd.f32 %v3536, %v3614
    %v3616 = vpop.f32.mrb[0].mxu0
    %3617 = vdwg.mxu0
    %s3618 = scalar_lea.vmem %s4, 640
    %v3619 = vld [vmem:[%s3618] sm:$0xff]
    %v3620 = vld [vmem:[%s3618 + $0x8] sm:$0xff]
    %v3621 = vld [vmem:[%s3618 + $0x10] sm:$0xff]
    %v3622 = vld [vmem:[%s3618 + $0x18] sm:$0xff]
    %v3623 = vld [vmem:[%s3618 + $0x20] sm:$0xff]
    %v3624 = vlaneseq
    %v3625 = vshrl.u32 %v3624, 7
    %v3626 = vsub.s32 0, %v3625
    %v3627 = vrot.slane %v3623, %v3626
    %3628 = vmatprep.subr.mxu0 0.0
    %3629 = vmatpush1.msra.mxu0 %v3619
    %3630 = vmatprep.subr.mxu0 0.0
    %3631 = vmatpush1.msra.mxu0 %v3620
    %3632 = vmatprep.subr.mxu0 0.0
    %3633 = vmatpush1.msra.mxu0 %v3621
    %3634 = vmatprep.subr.mxu0 0.0
    %3635 = vmatpush1.msra.mxu0 %v3622
    %3636 = vmatprep.subr.mxu0 0.0
    %3637 = vmatpush1.msra.mxu0 0.0
    %3638 = vmatprep.subr.mxu0 0.0
    %3639 = vmatpush1.msra.mxu0 0.0
    %3640 = vmatprep.subr.mxu0 0.0
    %3641 = vmatpush1.msra.mxu0 0.0
    %3642 = vmatprep.subr.mxu0 0.0
    %3643 = vmatpush1.msra.mxu0 0.0
    %3644 = vmatprep.subr.mxu0 0.0
    %3645 = vmatpush1.msra.mxu0 0.0
    %3646 = vmatprep.subr.mxu0 0.0
    %3647 = vmatpush1.msra.mxu0 0.0
    %3648 = vmatprep.subr.mxu0 0.0
    %3649 = vmatpush1.msra.mxu0 0.0
    %3650 = vmatprep.subr.mxu0 0.0
    %3651 = vmatpush1.msra.mxu0 0.0
    %3652 = vmatprep.subr.mxu0 0.0
    %3653 = vmatpush1.msra.mxu0 0.0
    %3654 = vmatprep.subr.mxu0 0.0
    %3655 = vmatpush1.msra.mxu0 0.0
    %3656 = vmatprep.subr.mxu0 0.0
    %3657 = vmatpush1.msra.mxu0 0.0
    %3658 = vmatprep.subr.mxu0 0.0
    %3659 = vmatpush1.msra.mxu0 0.0
    %3660 = vmatprep.subr.mxu0 0.0
    %3661 = vmatpush1.msra.mxu0 0.0
    %3662 = vmatprep.subr.mxu0 0.0
    %3663 = vmatpush1.msra.mxu0 0.0
    %3664 = vmatprep.subr.mxu0 0.0
    %3665 = vmatpush1.msra.mxu0 0.0
    %3666 = vmatprep.subr.mxu0 0.0
    %3667 = vmatpush1.msra.mxu0 0.0
    %3668 = vmatprep.subr.mxu0 0.0
    %3669 = vmatpush1.msra.mxu0 0.0
    %3670 = vmatprep.subr.mxu0 0.0
    %3671 = vmatpush1.msra.mxu0 0.0
    %3672 = vmatprep.subr.mxu0 0.0
    %3673 = vmatpush1.msra.mxu0 0.0
    %3674 = vmatprep.subr.mxu0 0.0
    %3675 = vmatpush1.msra.mxu0 0.0
    %3676 = vmatprep.subr.mxu0 0.0
    %3677 = vmatpush1.msra.mxu0 0.0
    %3678 = vmatprep.subr.mxu0 0.0
    %3679 = vmatpush1.msra.mxu0 0.0
    %3680 = vmatprep.subr.mxu0 0.0
    %3681 = vmatpush1.msra.mxu0 0.0
    %3682 = vmatprep.subr.mxu0 0.0
    %3683 = vmatpush1.msra.mxu0 0.0
    %3684 = vmatprep.subr.mxu0 0.0
    %3685 = vmatpush1.msra.mxu0 0.0
    %3686 = vmatprep.subr.mxu0 0.0
    %3687 = vmatpush1.msra.mxu0 0.0
    %3688 = vmatprep.subr.mxu0 0.0
    %3689 = vmatpush1.msra.mxu0 0.0
    %3690 = vmatprep.subr.mxu0 0.0
    %3691 = vmatpush1.msra.mxu0 0.0
    %3692 = vmatprep.mubr.f32.mxu0 0.0
    %3693 = vmatmul.mubr.f32.gmra.mrb[0].mxu0 %v3538
    %v3694 = vpop.f32.mrb[0].mxu0
    %v3695 = vadd.f32 %v3627, %v3694
    %v3696 = vpop.f32.mrb[0].mxu0
    %3697 = vmatprep.mubr.f32.mxu0 0.0
    %3698 = vmatmul.mubr.f32.gmra.mrb[0].mxu0 %v3541
    %v3699 = vpop.f32.mrb[0].mxu0
    %v3700 = vadd.f32 %v3627, %v3699
    %v3701 = vpop.f32.mrb[0].mxu0
    %3702 = vdwg.mxu0
    %s3703 = scalar_lea.vmem %s4, 800
    %v3704 = vld [vmem:[%s3703] sm:$0xff]
    %v3705 = vld [vmem:[%s3703 + $0x8] sm:$0xff]
    %v3706 = vld [vmem:[%s3703 + $0x10] sm:$0xff]
    %v3707 = vld [vmem:[%s3703 + $0x18] sm:$0xff]
    %v3708 = vld [vmem:[%s3703 + $0x20] sm:$0xff]
    %v3709 = vlaneseq
    %v3710 = vshrl.u32 %v3709, 7
    %v3711 = vsub.s32 0, %v3710
    %v3712 = vrot.slane %v3708, %v3711
    %3713 = vmatprep.subr.mxu0 0.0
    %3714 = vmatpush1.msra.mxu0 %v3704
    %3715 = vmatprep.subr.mxu0 0.0
    %3716 = vmatpush1.msra.mxu0 %v3705
    %3717 = vmatprep.subr.mxu0 0.0
    %3718 = vmatpush1.msra.mxu0 %v3706
    %3719 = vmatprep.subr.mxu0 0.0
    %3720 = vmatpush1.msra.mxu0 %v3707
    %3721 = vmatprep.subr.mxu0 0.0
    %3722 = vmatpush1.msra.mxu0 0.0
    %3723 = vmatprep.subr.mxu0 0.0
    %3724 = vmatpush1.msra.mxu0 0.0
    %3725 = vmatprep.subr.mxu0 0.0
    %3726 = vmatpush1.msra.mxu0 0.0
    %3727 = vmatprep.subr.mxu0 0.0
    %3728 = vmatpush1.msra.mxu0 0.0
    %3729 = vmatprep.subr.mxu0 0.0
    %3730 = vmatpush1.msra.mxu0 0.0
    %3731 = vmatprep.subr.mxu0 0.0
    %3732 = vmatpush1.msra.mxu0 0.0
    %3733 = vmatprep.subr.mxu0 0.0
    %3734 = vmatpush1.msra.mxu0 0.0
    %3735 = vmatprep.subr.mxu0 0.0
    %3736 = vmatpush1.msra.mxu0 0.0
    %3737 = vmatprep.subr.mxu0 0.0
    %3738 = vmatpush1.msra.mxu0 0.0
    %3739 = vmatprep.subr.mxu0 0.0
    %3740 = vmatpush1.msra.mxu0 0.0
    %3741 = vmatprep.subr.mxu0 0.0
    %3742 = vmatpush1.msra.mxu0 0.0
    %3743 = vmatprep.subr.mxu0 0.0
    %3744 = vmatpush1.msra.mxu0 0.0
    %3745 = vmatprep.subr.mxu0 0.0
    %3746 = vmatpush1.msra.mxu0 0.0
    %3747 = vmatprep.subr.mxu0 0.0
    %3748 = vmatpush1.msra.mxu0 0.0
    %3749 = vmatprep.subr.mxu0 0.0
    %3750 = vmatpush1.msra.mxu0 0.0
    %3751 = vmatprep.subr.mxu0 0.0
    %3752 = vmatpush1.msra.mxu0 0.0
    %3753 = vmatprep.subr.mxu0 0.0
    %3754 = vmatpush1.msra.mxu0 0.0
    %3755 = vmatprep.subr.mxu0 0.0
    %3756 = vmatpush1.msra.mxu0 0.0
    %3757 = vmatprep.subr.mxu0 0.0
    %3758 = vmatpush1.msra.mxu0 0.0
    %3759 = vmatprep.subr.mxu0 0.0
    %3760 = vmatpush1.msra.mxu0 0.0
    %3761 = vmatprep.subr.mxu0 0.0
    %3762 = vmatpush1.msra.mxu0 0.0
    %3763 = vmatprep.subr.mxu0 0.0
    %3764 = vmatpush1.msra.mxu0 0.0
    %3765 = vmatprep.subr.mxu0 0.0
    %3766 = vmatpush1.msra.mxu0 0.0
    %3767 = vmatprep.subr.mxu0 0.0
    %3768 = vmatpush1.msra.mxu0 0.0
    %3769 = vmatprep.subr.mxu0 0.0
    %3770 = vmatpush1.msra.mxu0 0.0
    %3771 = vmatprep.subr.mxu0 0.0
    %3772 = vmatpush1.msra.mxu0 0.0
    %3773 = vmatprep.subr.mxu0 0.0
    %3774 = vmatpush1.msra.mxu0 0.0
    %3775 = vmatprep.subr.mxu0 0.0
    %3776 = vmatpush1.msra.mxu0 0.0
    %3777 = vmatprep.mubr.f32.mxu0 0.0
    %3778 = vmatmul.mubr.f32.gmra.mrb[0].mxu0 %v3538
    %v3779 = vpop.f32.mrb[0].mxu0
    %v3780 = vadd.f32 %v3712, %v3779
    %v3781 = vpop.f32.mrb[0].mxu0
    %3782 = vmatprep.mubr.f32.mxu0 0.0
    %3783 = vmatmul.mubr.f32.gmra.mrb[0].mxu0 %v3541
    %v3784 = vpop.f32.mrb[0].mxu0
    %v3785 = vadd.f32 %v3712, %v3784
    %v3786 = vpop.f32.mrb[0].mxu0
    %3787 = vdwg.mxu0
    %v3789 = vsel %vm523, %v3610, 0
    %v3792 = vsel %vm523, %v3615, 0
    %v3795 = vsel %vm523, %v3695, 0
    %v3798 = vsel %vm523, %v3700, 0
    %3800 = vmatprep.subr.mxu0 0.0
    %3801 = vmatpush1.xpose.msra.mxu0 %v3795
    %3802 = vmatprep.subr.mxu0 0.0
    %3803 = vmatpush1.xpose.msra.mxu0 %v3798
    %3804 = vmatprep.subr.mxu0 0.0
    %3805 = vmatpush1.xpose.msra.mxu0 0.0
    %3806 = vmatprep.subr.mxu0 0.0
    %3807 = vmatpush1.xpose.msra.mxu0 0.0
    %3808 = vmatprep.subr.mxu0 0.0
    %3809 = vmatpush1.xpose.msra.mxu0 0.0
    %3810 = vmatprep.subr.mxu0 0.0
    %3811 = vmatpush1.xpose.msra.mxu0 0.0
    %3812 = vmatprep.subr.mxu0 0.0
    %3813 = vmatpush1.xpose.msra.mxu0 0.0
    %3814 = vmatprep.subr.mxu0 0.0
    %3815 = vmatpush1.xpose.msra.mxu0 0.0
    %3816 = vmatprep.subr.mxu0 0.0
    %3817 = vmatpush1.xpose.msra.mxu0 0.0
    %3818 = vmatprep.subr.mxu0 0.0
    %3819 = vmatpush1.xpose.msra.mxu0 0.0
    %3820 = vmatprep.subr.mxu0 0.0
    %3821 = vmatpush1.xpose.msra.mxu0 0.0
    %3822 = vmatprep.subr.mxu0 0.0
    %3823 = vmatpush1.xpose.msra.mxu0 0.0
    %3824 = vmatprep.subr.mxu0 0.0
    %3825 = vmatpush1.xpose.msra.mxu0 0.0
    %3826 = vmatprep.subr.mxu0 0.0
    %3827 = vmatpush1.xpose.msra.mxu0 0.0
    %3828 = vmatprep.subr.mxu0 0.0
    %3829 = vmatpush1.xpose.msra.mxu0 0.0
    %3830 = vmatprep.subr.mxu0 0.0
    %3831 = vmatpush1.xpose.msra.mxu0 0.0
    %3832 = vmatprep.subr.mxu0 0.0
    %3833 = vmatpush1.xpose.msra.mxu0 0.0
    %3834 = vmatprep.subr.mxu0 0.0
    %3835 = vmatpush1.xpose.msra.mxu0 0.0
    %3836 = vmatprep.subr.mxu0 0.0
    %3837 = vmatpush1.xpose.msra.mxu0 0.0
    %3838 = vmatprep.subr.mxu0 0.0
    %3839 = vmatpush1.xpose.msra.mxu0 0.0
    %3840 = vmatprep.subr.mxu0 0.0
    %3841 = vmatpush1.xpose.msra.mxu0 0.0
    %3842 = vmatprep.subr.mxu0 0.0
    %3843 = vmatpush1.xpose.msra.mxu0 0.0
    %3844 = vmatprep.subr.mxu0 0.0
    %3845 = vmatpush1.xpose.msra.mxu0 0.0
    %3846 = vmatprep.subr.mxu0 0.0
    %3847 = vmatpush1.xpose.msra.mxu0 0.0
    %3848 = vmatprep.subr.mxu0 0.0
    %3849 = vmatpush1.xpose.msra.mxu0 0.0
    %3850 = vmatprep.subr.mxu0 0.0
    %3851 = vmatpush1.xpose.msra.mxu0 0.0
    %3852 = vmatprep.subr.mxu0 0.0
    %3853 = vmatpush1.xpose.msra.mxu0 0.0
    %3854 = vmatprep.subr.mxu0 0.0
    %3855 = vmatpush1.xpose.msra.mxu0 0.0
    %3856 = vmatprep.subr.mxu0 0.0
    %3857 = vmatpush1.xpose.msra.mxu0 0.0
    %3858 = vmatprep.subr.mxu0 0.0
    %3859 = vmatpush1.xpose.msra.mxu0 0.0
    %3860 = vmatprep.subr.mxu0 0.0
    %3861 = vmatpush1.xpose.msra.mxu0 0.0
    %3862 = vmatprep.subr.mxu0 0.0
    %3863 = vmatpush1.xpose.msra.mxu0 0.0
    %3864 = vmatprep.mubr.f32.mxu0 0.0
    %3865 = vmatmul.mubr.f32.gmra.mrb[0].mxu0 %v3789
    %v3866 = vpop.f32.mrb[0].mxu0
    %v3867 = vadd.f32 0.0, %v3866
    %v3868 = vpop.f32.mrb[0].mxu0
    %3869 = vmatprep.mubr.f32.mxu0 0.0
    %3870 = vmatmul.mubr.f32.gmra.mrb[0].mxu0 %v3792
    %v3871 = vpop.f32.mrb[0].mxu0
    %v3872 = vadd.f32 0.0, %v3871
    %v3873 = vpop.f32.mrb[0].mxu0
    %3874 = vdwg.mxu0
    %v3875 = vmul.f32 %v3867, 0.35355338
    %v3876 = vmul.f32 %v3872, 0.35355338
    %v3877 = vadd.f32 %v3875, %v3478
    %v3878 = vadd.f32 %v3876, %v3479
    %vm3879 = vcmask 130048
    %v3880 = vsel %vm3879, %v3877, -inf
    %3881 = vmax.xlane.f32.xlu0 %v3880
    %v3882 = vpop.xlane.xlu0 %3881
    %v3883 = vsel %vm3879, %v3878, -inf
    %3884 = vmax.xlane.f32.xlu0 %v3883
    %v3885 = vpop.xlane.xlu0 %3884
    %v3886 = vsub.f32 %v3877, %v3882
    %v3887 = vsub.f32 %v3878, %v3885
    %v3888 = vmul.f32 %v3886, 1.442695
    %v3889 = vpow.pop %v3888
    %v3890 = vmul.f32 %v3887, 1.442695
    %v3891 = vpow.pop %v3890
    %v3892 = vsel %vm3879, %v3889, 0.0
    %3893 = vadd.xlane.f32.xlu0 %v3892
    %v3894 = vpop.xlane.xlu0 %3893
    %v3895 = vsel %vm3879, %v3891, 0.0
    %3896 = vadd.xlane.f32.xlu0 %v3895
    %v3897 = vpop.xlane.xlu0 %3896
    %v3898 = vrcp.pop %v3894
    %v3899 = vrcp.pop %v3897
    %v3900 = vmul.f32 %v3889, %v3898
    %v3901 = vmul.f32 %v3891, %v3899
    %v3903 = vsel %vm3879, %v3900, 0
    %v3906 = vsel %vm3879, %v3901, 0
    %3908 = vmatprep.subr.mxu0 0.0
    %3909 = vmatpush1.msra.mxu0 %v3780
    %3910 = vmatprep.subr.mxu0 0.0
    %3911 = vmatpush1.msra.mxu0 %v3785
    %3912 = vmatprep.subr.mxu0 0.0
    %3913 = vmatpush1.msra.mxu0 0.0
    %3914 = vmatprep.subr.mxu0 0.0
    %3915 = vmatpush1.msra.mxu0 0.0
    %3916 = vmatprep.subr.mxu0 0.0
    %3917 = vmatpush1.msra.mxu0 0.0
    %3918 = vmatprep.subr.mxu0 0.0
    %3919 = vmatpush1.msra.mxu0 0.0
    %3920 = vmatprep.subr.mxu0 0.0
    %3921 = vmatpush1.msra.mxu0 0.0
    %3922 = vmatprep.subr.mxu0 0.0
    %3923 = vmatpush1.msra.mxu0 0.0
    %3924 = vmatprep.subr.mxu0 0.0
    %3925 = vmatpush1.msra.mxu0 0.0
    %3926 = vmatprep.subr.mxu0 0.0
    %3927 = vmatpush1.msra.mxu0 0.0
    %3928 = vmatprep.subr.mxu0 0.0
    %3929 = vmatpush1.msra.mxu0 0.0
    %3930 = vmatprep.subr.mxu0 0.0
    %3931 = vmatpush1.msra.mxu0 0.0
    %3932 = vmatprep.subr.mxu0 0.0
    %3933 = vmatpush1.msra.mxu0 0.0
    %3934 = vmatprep.subr.mxu0 0.0
    %3935 = vmatpush1.msra.mxu0 0.0
    %3936 = vmatprep.subr.mxu0 0.0
    %3937 = vmatpush1.msra.mxu0 0.0
    %3938 = vmatprep.subr.mxu0 0.0
    %3939 = vmatpush1.msra.mxu0 0.0
    %3940 = vmatprep.subr.mxu0 0.0
    %3941 = vmatpush1.msra.mxu0 0.0
    %3942 = vmatprep.subr.mxu0 0.0
    %3943 = vmatpush1.msra.mxu0 0.0
    %3944 = vmatprep.subr.mxu0 0.0
    %3945 = vmatpush1.msra.mxu0 0.0
    %3946 = vmatprep.subr.mxu0 0.0
    %3947 = vmatpush1.msra.mxu0 0.0
    %3948 = vmatprep.subr.mxu0 0.0
    %3949 = vmatpush1.msra.mxu0 0.0
    %3950 = vmatprep.subr.mxu0 0.0
    %3951 = vmatpush1.msra.mxu0 0.0
    %3952 = vmatprep.subr.mxu0 0.0
    %3953 = vmatpush1.msra.mxu0 0.0
    %3954 = vmatprep.subr.mxu0 0.0
    %3955 = vmatpush1.msra.mxu0 0.0
    %3956 = vmatprep.subr.mxu0 0.0
    %3957 = vmatpush1.msra.mxu0 0.0
    %3958 = vmatprep.subr.mxu0 0.0
    %3959 = vmatpush1.msra.mxu0 0.0
    %3960 = vmatprep.subr.mxu0 0.0
    %3961 = vmatpush1.msra.mxu0 0.0
    %3962 = vmatprep.subr.mxu0 0.0
    %3963 = vmatpush1.msra.mxu0 0.0
    %3964 = vmatprep.subr.mxu0 0.0
    %3965 = vmatpush1.msra.mxu0 0.0
    %3966 = vmatprep.subr.mxu0 0.0
    %3967 = vmatpush1.msra.mxu0 0.0
    %3968 = vmatprep.subr.mxu0 0.0
    %3969 = vmatpush1.msra.mxu0 0.0
    %3970 = vmatprep.subr.mxu0 0.0
    %3971 = vmatpush1.msra.mxu0 0.0
    %3972 = vmatprep.mubr.f32.mxu0 0.0
    %3973 = vmatmul.mubr.f32.gmra.mrb[0].mxu0 %v3903
    %v3974 = vpop.f32.mrb[0].mxu0
    %v3975 = vadd.f32 0.0, %v3974
    %v3976 = vpop.f32.mrb[0].mxu0
    %3977 = vmatprep.mubr.f32.mxu0 0.0
    %3978 = vmatmul.mubr.f32.gmra.mrb[0].mxu0 %v3906
    %v3979 = vpop.f32.mrb[0].mxu0
    %v3980 = vadd.f32 0.0, %v3979
    %v3981 = vpop.f32.mrb[0].mxu0
    %3982 = vdwg.mxu0
    %v3983 = vld [vmem:[%s2 + $0x1e0] sm:$0xff]
    %v3985 = vsel %vm523, %v3975, 0
    %v3988 = vsel %vm523, %v3980, 0
    %3990 = vmatprep.subr.mxu0 0.0
    %3991 = vmatpush1.msra.mxu0 %v3983
    %3992 = vmatprep.subr.mxu0 0.0
    %3993 = vmatpush1.msra.mxu0 0.0
    %3994 = vmatprep.subr.mxu0 0.0
    %3995 = vmatpush1.msra.mxu0 0.0
    %3996 = vmatprep.subr.mxu0 0.0
    %3997 = vmatpush1.msra.mxu0 0.0
    %3998 = vmatprep.subr.mxu0 0.0
    %3999 = vmatpush1.msra.mxu0 0.0
    %4000 = vmatprep.subr.mxu0 0.0
    %4001 = vmatpush1.msra.mxu0 0.0
    %4002 = vmatprep.subr.mxu0 0.0
    %4003 = vmatpush1.msra.mxu0 0.0
    %4004 = vmatprep.subr.mxu0 0.0
    %4005 = vmatpush1.msra.mxu0 0.0
    %4006 = vmatprep.subr.mxu0 0.0
    %4007 = vmatpush1.msra.mxu0 0.0
    %4008 = vmatprep.subr.mxu0 0.0
    %4009 = vmatpush1.msra.mxu0 0.0
    %4010 = vmatprep.subr.mxu0 0.0
    %4011 = vmatpush1.msra.mxu0 0.0
    %4012 = vmatprep.subr.mxu0 0.0
    %4013 = vmatpush1.msra.mxu0 0.0
    %4014 = vmatprep.subr.mxu0 0.0
    %4015 = vmatpush1.msra.mxu0 0.0
    %4016 = vmatprep.subr.mxu0 0.0
    %4017 = vmatpush1.msra.mxu0 0.0
    %4018 = vmatprep.subr.mxu0 0.0
    %4019 = vmatpush1.msra.mxu0 0.0
    %4020 = vmatprep.subr.mxu0 0.0
    %4021 = vmatpush1.msra.mxu0 0.0
    %4022 = vmatprep.subr.mxu0 0.0
    %4023 = vmatpush1.msra.mxu0 0.0
    %4024 = vmatprep.subr.mxu0 0.0
    %4025 = vmatpush1.msra.mxu0 0.0
    %4026 = vmatprep.subr.mxu0 0.0
    %4027 = vmatpush1.msra.mxu0 0.0
    %4028 = vmatprep.subr.mxu0 0.0
    %4029 = vmatpush1.msra.mxu0 0.0
    %4030 = vmatprep.subr.mxu0 0.0
    %4031 = vmatpush1.msra.mxu0 0.0
    %4032 = vmatprep.subr.mxu0 0.0
    %4033 = vmatpush1.msra.mxu0 0.0
    %4034 = vmatprep.subr.mxu0 0.0
    %4035 = vmatpush1.msra.mxu0 0.0
    %4036 = vmatprep.subr.mxu0 0.0
    %4037 = vmatpush1.msra.mxu0 0.0
    %4038 = vmatprep.subr.mxu0 0.0
    %4039 = vmatpush1.msra.mxu0 0.0
    %4040 = vmatprep.subr.mxu0 0.0
    %4041 = vmatpush1.msra.mxu0 0.0
    %4042 = vmatprep.subr.mxu0 0.0
    %4043 = vmatpush1.msra.mxu0 0.0
    %4044 = vmatprep.subr.mxu0 0.0
    %4045 = vmatpush1.msra.mxu0 0.0
    %4046 = vmatprep.subr.mxu0 0.0
    %4047 = vmatpush1.msra.mxu0 0.0
    %4048 = vmatprep.subr.mxu0 0.0
    %4049 = vmatpush1.msra.mxu0 0.0
    %4050 = vmatprep.subr.mxu0 0.0
    %4051 = vmatpush1.msra.mxu0 0.0
    %4052 = vmatprep.subr.mxu0 0.0
    %4053 = vmatpush1.msra.mxu0 0.0
    %4054 = vmatprep.mubr.f32.mxu0 0.0
    %4055 = vmatmul.mubr.f32.gmra.mrb[0].mxu0 %v3985
    %v4056 = vpop.f32.mrb[0].mxu0
    %v4057 = vadd.f32 0.0, %v4056
    %v4058 = vpop.f32.mrb[0].mxu0
    %4059 = vmatprep.mubr.f32.mxu0 0.0
    %4060 = vmatmul.mubr.f32.gmra.mrb[0].mxu0 %v3988
    %v4061 = vpop.f32.mrb[0].mxu0
    %v4062 = vadd.f32 0.0, %v4061
    %v4063 = vpop.f32.mrb[0].mxu0
    %4064 = vdwg.mxu0
    %v4065 = vadd.f32 %v3525, %v4057
    %v4066 = vadd.f32 %v3526, %v4062
    %s4067 = scalar_lea.vmem %s4, 520
    %v4068 = vld [vmem:[%s4067] sm:$0xff]
    %v4069 = vld [vmem:[%s4067 + $0x8] sm:$0xff]
    %v4070 = vld [vmem:[%s4067 + $0x10] sm:$0xff]
    %v4071 = vld [vmem:[%s4067 + $0x18] sm:$0xff]
    %v4072 = vld [vmem:[%s4067 + $0x20] sm:$0xff]
    %v4073 = vlaneseq
    %v4074 = vshrl.u32 %v4073, 7
    %v4075 = vsub.s32 0, %v4074
    %v4076 = vrot.slane %v4072, %v4075
    %4077 = vmatprep.subr.mxu0 0.0
    %4078 = vmatpush1.msra.mxu0 %v4068
    %4079 = vmatprep.subr.mxu0 0.0
    %4080 = vmatpush1.msra.mxu0 %v4069
    %4081 = vmatprep.subr.mxu0 0.0
    %4082 = vmatpush1.msra.mxu0 %v4070
    %4083 = vmatprep.subr.mxu0 0.0
    %4084 = vmatpush1.msra.mxu0 %v4071
    %4085 = vmatprep.subr.mxu0 0.0
    %4086 = vmatpush1.msra.mxu0 0.0
    %4087 = vmatprep.subr.mxu0 0.0
    %4088 = vmatpush1.msra.mxu0 0.0
    %4089 = vmatprep.subr.mxu0 0.0
    %4090 = vmatpush1.msra.mxu0 0.0
    %4091 = vmatprep.subr.mxu0 0.0
    %4092 = vmatpush1.msra.mxu0 0.0
    %4093 = vmatprep.subr.mxu0 0.0
    %4094 = vmatpush1.msra.mxu0 0.0
    %4095 = vmatprep.subr.mxu0 0.0
    %4096 = vmatpush1.msra.mxu0 0.0
    %4097 = vmatprep.subr.mxu0 0.0
    %4098 = vmatpush1.msra.mxu0 0.0
    %4099 = vmatprep.subr.mxu0 0.0
    %4100 = vmatpush1.msra.mxu0 0.0
    %4101 = vmatprep.subr.mxu0 0.0
    %4102 = vmatpush1.msra.mxu0 0.0
    %4103 = vmatprep.subr.mxu0 0.0
    %4104 = vmatpush1.msra.mxu0 0.0
    %4105 = vmatprep.subr.mxu0 0.0
    %4106 = vmatpush1.msra.mxu0 0.0
    %4107 = vmatprep.subr.mxu0 0.0
    %4108 = vmatpush1.msra.mxu0 0.0
    %4109 = vmatprep.subr.mxu0 0.0
    %4110 = vmatpush1.msra.mxu0 0.0
    %4111 = vmatprep.subr.mxu0 0.0
    %4112 = vmatpush1.msra.mxu0 0.0
    %4113 = vmatprep.subr.mxu0 0.0
    %4114 = vmatpush1.msra.mxu0 0.0
    %4115 = vmatprep.subr.mxu0 0.0
    %4116 = vmatpush1.msra.mxu0 0.0
    %4117 = vmatprep.subr.mxu0 0.0
    %4118 = vmatpush1.msra.mxu0 0.0
    %4119 = vmatprep.subr.mxu0 0.0
    %4120 = vmatpush1.msra.mxu0 0.0
    %4121 = vmatprep.subr.mxu0 0.0
    %4122 = vmatpush1.msra.mxu0 0.0
    %4123 = vmatprep.subr.mxu0 0.0
    %4124 = vmatpush1.msra.mxu0 0.0
    %4125 = vmatprep.subr.mxu0 0.0
    %4126 = vmatpush1.msra.mxu0 0.0
    %4127 = vmatprep.subr.mxu0 0.0
    %4128 = vmatpush1.msra.mxu0 0.0
    %4129 = vmatprep.subr.mxu0 0.0
    %4130 = vmatpush1.msra.mxu0 0.0
    %4131 = vmatprep.subr.mxu0 0.0
    %4132 = vmatpush1.msra.mxu0 0.0
    %4133 = vmatprep.subr.mxu0 0.0
    %4134 = vmatpush1.msra.mxu0 0.0
    %4135 = vmatprep.subr.mxu0 0.0
    %4136 = vmatpush1.msra.mxu0 0.0
    %4137 = vmatprep.subr.mxu0 0.0
    %4138 = vmatpush1.msra.mxu0 0.0
    %4139 = vmatprep.subr.mxu0 0.0
    %4140 = vmatpush1.msra.mxu0 0.0
    %4141 = vmatprep.mubr.f32.mxu0 0.0
    %4142 = vmatmul.mubr.f32.gmra.mrb[0].mxu0 %v3538
    %v4143 = vpop.f32.mrb[0].mxu0
    %v4144 = vadd.f32 %v4076, %v4143
    %v4145 = vpop.f32.mrb[0].mxu0
    %4146 = vmatprep.mubr.f32.mxu0 0.0
    %4147 = vmatmul.mubr.f32.gmra.mrb[0].mxu0 %v3541
    %v4148 = vpop.f32.mrb[0].mxu0
    %v4149 = vadd.f32 %v4076, %v4148
    %v4150 = vpop.f32.mrb[0].mxu0
    %4151 = vdwg.mxu0
    %s4152 = scalar_lea.vmem %s4, 680
    %v4153 = vld [vmem:[%s4152] sm:$0xff]
    %v4154 = vld [vmem:[%s4152 + $0x8] sm:$0xff]
    %v4155 = vld [vmem:[%s4152 + $0x10] sm:$0xff]
    %v4156 = vld [vmem:[%s4152 + $0x18] sm:$0xff]
    %v4157 = vld [vmem:[%s4152 + $0x20] sm:$0xff]
    %v4158 = vlaneseq
    %v4159 = vshrl.u32 %v4158, 7
    %v4160 = vsub.s32 0, %v4159
    %v4161 = vrot.slane %v4157, %v4160
    %4162 = vmatprep.subr.mxu0 0.0
    %4163 = vmatpush1.msra.mxu0 %v4153
    %4164 = vmatprep.subr.mxu0 0.0
    %4165 = vmatpush1.msra.mxu0 %v4154
    %4166 = vmatprep.subr.mxu0 0.0
    %4167 = vmatpush1.msra.mxu0 %v4155
    %4168 = vmatprep.subr.mxu0 0.0
    %4169 = vmatpush1.msra.mxu0 %v4156
    %4170 = vmatprep.subr.mxu0 0.0
    %4171 = vmatpush1.msra.mxu0 0.0
    %4172 = vmatprep.subr.mxu0 0.0
    %4173 = vmatpush1.msra.mxu0 0.0
    %4174 = vmatprep.subr.mxu0 0.0
    %4175 = vmatpush1.msra.mxu0 0.0
    %4176 = vmatprep.subr.mxu0 0.0
    %4177 = vmatpush1.msra.mxu0 0.0
    %4178 = vmatprep.subr.mxu0 0.0
    %4179 = vmatpush1.msra.mxu0 0.0
    %4180 = vmatprep.subr.mxu0 0.0
    %4181 = vmatpush1.msra.mxu0 0.0
    %4182 = vmatprep.subr.mxu0 0.0
    %4183 = vmatpush1.msra.mxu0 0.0
    %4184 = vmatprep.subr.mxu0 0.0
    %4185 = vmatpush1.msra.mxu0 0.0
    %4186 = vmatprep.subr.mxu0 0.0
    %4187 = vmatpush1.msra.mxu0 0.0
    %4188 = vmatprep.subr.mxu0 0.0
    %4189 = vmatpush1.msra.mxu0 0.0
    %4190 = vmatprep.subr.mxu0 0.0
    %4191 = vmatpush1.msra.mxu0 0.0
    %4192 = vmatprep.subr.mxu0 0.0
    %4193 = vmatpush1.msra.mxu0 0.0
    %4194 = vmatprep.subr.mxu0 0.0
    %4195 = vmatpush1.msra.mxu0 0.0
    %4196 = vmatprep.subr.mxu0 0.0
    %4197 = vmatpush1.msra.mxu0 0.0
    %4198 = vmatprep.subr.mxu0 0.0
    %4199 = vmatpush1.msra.mxu0 0.0
    %4200 = vmatprep.subr.mxu0 0.0
    %4201 = vmatpush1.msra.mxu0 0.0
    %4202 = vmatprep.subr.mxu0 0.0
    %4203 = vmatpush1.msra.mxu0 0.0
    %4204 = vmatprep.subr.mxu0 0.0
    %4205 = vmatpush1.msra.mxu0 0.0
    %4206 = vmatprep.subr.mxu0 0.0
    %4207 = vmatpush1.msra.mxu0 0.0
    %4208 = vmatprep.subr.mxu0 0.0
    %4209 = vmatpush1.msra.mxu0 0.0
    %4210 = vmatprep.subr.mxu0 0.0
    %4211 = vmatpush1.msra.mxu0 0.0
    %4212 = vmatprep.subr.mxu0 0.0
    %4213 = vmatpush1.msra.mxu0 0.0
    %4214 = vmatprep.subr.mxu0 0.0
    %4215 = vmatpush1.msra.mxu0 0.0
    %4216 = vmatprep.subr.mxu0 0.0
    %4217 = vmatpush1.msra.mxu0 0.0
    %4218 = vmatprep.subr.mxu0 0.0
    %4219 = vmatpush1.msra.mxu0 0.0
    %4220 = vmatprep.subr.mxu0 0.0
    %4221 = vmatpush1.msra.mxu0 0.0
    %4222 = vmatprep.subr.mxu0 0.0
    %4223 = vmatpush1.msra.mxu0 0.0
    %4224 = vmatprep.subr.mxu0 0.0
    %4225 = vmatpush1.msra.mxu0 0.0
    %4226 = vmatprep.mubr.f32.mxu0 0.0
    %4227 = vmatmul.mubr.f32.gmra.mrb[0].mxu0 %v3538
    %v4228 = vpop.f32.mrb[0].mxu0
    %v4229 = vadd.f32 %v4161, %v4228
    %v4230 = vpop.f32.mrb[0].mxu0
    %4231 = vmatprep.mubr.f32.mxu0 0.0
    %4232 = vmatmul.mubr.f32.gmra.mrb[0].mxu0 %v3541
    %v4233 = vpop.f32.mrb[0].mxu0
    %v4234 = vadd.f32 %v4161, %v4233
    %v4235 = vpop.f32.mrb[0].mxu0
    %4236 = vdwg.mxu0
    %s4237 = scalar_lea.vmem %s4, 840
    %v4238 = vld [vmem:[%s4237] sm:$0xff]
    %v4239 = vld [vmem:[%s4237 + $0x8] sm:$0xff]
    %v4240 = vld [vmem:[%s4237 + $0x10] sm:$0xff]
    %v4241 = vld [vmem:[%s4237 + $0x18] sm:$0xff]
    %v4242 = vld [vmem:[%s4237 + $0x20] sm:$0xff]
    %v4243 = vlaneseq
    %v4244 = vshrl.u32 %v4243, 7
    %v4245 = vsub.s32 0, %v4244
    %v4246 = vrot.slane %v4242, %v4245
    %4247 = vmatprep.subr.mxu0 0.0
    %4248 = vmatpush1.msra.mxu0 %v4238
    %4249 = vmatprep.subr.mxu0 0.0
    %4250 = vmatpush1.msra.mxu0 %v4239
    %4251 = vmatprep.subr.mxu0 0.0
    %4252 = vmatpush1.msra.mxu0 %v4240
    %4253 = vmatprep.subr.mxu0 0.0
    %4254 = vmatpush1.msra.mxu0 %v4241
    %4255 = vmatprep.subr.mxu0 0.0
    %4256 = vmatpush1.msra.mxu0 0.0
    %4257 = vmatprep.subr.mxu0 0.0
    %4258 = vmatpush1.msra.mxu0 0.0
    %4259 = vmatprep.subr.mxu0 0.0
    %4260 = vmatpush1.msra.mxu0 0.0
    %4261 = vmatprep.subr.mxu0 0.0
    %4262 = vmatpush1.msra.mxu0 0.0
    %4263 = vmatprep.subr.mxu0 0.0
    %4264 = vmatpush1.msra.mxu0 0.0
    %4265 = vmatprep.subr.mxu0 0.0
    %4266 = vmatpush1.msra.mxu0 0.0
    %4267 = vmatprep.subr.mxu0 0.0
    %4268 = vmatpush1.msra.mxu0 0.0
    %4269 = vmatprep.subr.mxu0 0.0
    %4270 = vmatpush1.msra.mxu0 0.0
    %4271 = vmatprep.subr.mxu0 0.0
    %4272 = vmatpush1.msra.mxu0 0.0
    %4273 = vmatprep.subr.mxu0 0.0
    %4274 = vmatpush1.msra.mxu0 0.0
    %4275 = vmatprep.subr.mxu0 0.0
    %4276 = vmatpush1.msra.mxu0 0.0
    %4277 = vmatprep.subr.mxu0 0.0
    %4278 = vmatpush1.msra.mxu0 0.0
    %4279 = vmatprep.subr.mxu0 0.0
    %4280 = vmatpush1.msra.mxu0 0.0
    %4281 = vmatprep.subr.mxu0 0.0
    %4282 = vmatpush1.msra.mxu0 0.0
    %4283 = vmatprep.subr.mxu0 0.0
    %4284 = vmatpush1.msra.mxu0 0.0
    %4285 = vmatprep.subr.mxu0 0.0
    %4286 = vmatpush1.msra.mxu0 0.0
    %4287 = vmatprep.subr.mxu0 0.0
    %4288 = vmatpush1.msra.mxu0 0.0
    %4289 = vmatprep.subr.mxu0 0.0
    %4290 = vmatpush1.msra.mxu0 0.0
    %4291 = vmatprep.subr.mxu0 0.0
    %4292 = vmatpush1.msra.mxu0 0.0
    %4293 = vmatprep.subr.mxu0 0.0
    %4294 = vmatpush1.msra.mxu0 0.0
    %4295 = vmatprep.subr.mxu0 0.0
    %4296 = vmatpush1.msra.mxu0 0.0
    %4297 = vmatprep.subr.mxu0 0.0
    %4298 = vmatpush1.msra.mxu0 0.0
    %4299 = vmatprep.subr.mxu0 0.0
    %4300 = vmatpush1.msra.mxu0 0.0
    %4301 = vmatprep.subr.mxu0 0.0
    %4302 = vmatpush1.msra.mxu0 0.0
    %4303 = vmatprep.subr.mxu0 0.0
    %4304 = vmatpush1.msra.mxu0 0.0
    %4305 = vmatprep.subr.mxu0 0.0
    %4306 = vmatpush1.msra.mxu0 0.0
    %4307 = vmatprep.subr.mxu0 0.0
    %4308 = vmatpush1.msra.mxu0 0.0
    %4309 = vmatprep.subr.mxu0 0.0
    %4310 = vmatpush1.msra.mxu0 0.0
    %4311 = vmatprep.mubr.f32.mxu0 0.0
    %4312 = vmatmul.mubr.f32.gmra.mrb[0].mxu0 %v3538
    %v4313 = vpop.f32.mrb[0].mxu0
    %v4314 = vadd.f32 %v4246, %v4313
    %v4315 = vpop.f32.mrb[0].mxu0
    %4316 = vmatprep.mubr.f32.mxu0 0.0
    %4317 = vmatmul.mubr.f32.gmra.mrb[0].mxu0 %v3541
    %v4318 = vpop.f32.mrb[0].mxu0
    %v4319 = vadd.f32 %v4246, %v4318
    %v4320 = vpop.f32.mrb[0].mxu0
    %4321 = vdwg.mxu0
    %v4323 = vsel %vm523, %v4144, 0
    %v4326 = vsel %vm523, %v4149, 0
    %v4329 = vsel %vm523, %v4229, 0
    %v4332 = vsel %vm523, %v4234, 0
    %4334 = vmatprep.subr.mxu0 0.0
    %4335 = vmatpush1.xpose.msra.mxu0 %v4329
    %4336 = vmatprep.subr.mxu0 0.0
    %4337 = vmatpush1.xpose.msra.mxu0 %v4332
    %4338 = vmatprep.subr.mxu0 0.0
    %4339 = vmatpush1.xpose.msra.mxu0 0.0
    %4340 = vmatprep.subr.mxu0 0.0
    %4341 = vmatpush1.xpose.msra.mxu0 0.0
    %4342 = vmatprep.subr.mxu0 0.0
    %4343 = vmatpush1.xpose.msra.mxu0 0.0
    %4344 = vmatprep.subr.mxu0 0.0
    %4345 = vmatpush1.xpose.msra.mxu0 0.0
    %4346 = vmatprep.subr.mxu0 0.0
    %4347 = vmatpush1.xpose.msra.mxu0 0.0
    %4348 = vmatprep.subr.mxu0 0.0
    %4349 = vmatpush1.xpose.msra.mxu0 0.0
    %4350 = vmatprep.subr.mxu0 0.0
    %4351 = vmatpush1.xpose.msra.mxu0 0.0
    %4352 = vmatprep.subr.mxu0 0.0
    %4353 = vmatpush1.xpose.msra.mxu0 0.0
    %4354 = vmatprep.subr.mxu0 0.0
    %4355 = vmatpush1.xpose.msra.mxu0 0.0
    %4356 = vmatprep.subr.mxu0 0.0
    %4357 = vmatpush1.xpose.msra.mxu0 0.0
    %4358 = vmatprep.subr.mxu0 0.0
    %4359 = vmatpush1.xpose.msra.mxu0 0.0
    %4360 = vmatprep.subr.mxu0 0.0
    %4361 = vmatpush1.xpose.msra.mxu0 0.0
    %4362 = vmatprep.subr.mxu0 0.0
    %4363 = vmatpush1.xpose.msra.mxu0 0.0
    %4364 = vmatprep.subr.mxu0 0.0
    %4365 = vmatpush1.xpose.msra.mxu0 0.0
    %4366 = vmatprep.subr.mxu0 0.0
    %4367 = vmatpush1.xpose.msra.mxu0 0.0
    %4368 = vmatprep.subr.mxu0 0.0
    %4369 = vmatpush1.xpose.msra.mxu0 0.0
    %4370 = vmatprep.subr.mxu0 0.0
    %4371 = vmatpush1.xpose.msra.mxu0 0.0
    %4372 = vmatprep.subr.mxu0 0.0
    %4373 = vmatpush1.xpose.msra.mxu0 0.0
    %4374 = vmatprep.subr.mxu0 0.0
    %4375 = vmatpush1.xpose.msra.mxu0 0.0
    %4376 = vmatprep.subr.mxu0 0.0
    %4377 = vmatpush1.xpose.msra.mxu0 0.0
    %4378 = vmatprep.subr.mxu0 0.0
    %4379 = vmatpush1.xpose.msra.mxu0 0.0
    %4380 = vmatprep.subr.mxu0 0.0
    %4381 = vmatpush1.xpose.msra.mxu0 0.0
    %4382 = vmatprep.subr.mxu0 0.0
    %4383 = vmatpush1.xpose.msra.mxu0 0.0
    %4384 = vmatprep.subr.mxu0 0.0
    %4385 = vmatpush1.xpose.msra.mxu0 0.0
    %4386 = vmatprep.subr.mxu0 0.0
    %4387 = vmatpush1.xpose.msra.mxu0 0.0
    %4388 = vmatprep.subr.mxu0 0.0
    %4389 = vmatpush1.xpose.msra.mxu0 0.0
    %4390 = vmatprep.subr.mxu0 0.0
    %4391 = vmatpush1.xpose.msra.mxu0 0.0
    %4392 = vmatprep.subr.mxu0 0.0
    %4393 = vmatpush1.xpose.msra.mxu0 0.0
    %4394 = vmatprep.subr.mxu0 0.0
    %4395 = vmatpush1.xpose.msra.mxu0 0.0
    %4396 = vmatprep.subr.mxu0 0.0
    %4397 = vmatpush1.xpose.msra.mxu0 0.0
    %4398 = vmatprep.mubr.f32.mxu0 0.0
    %4399 = vmatmul.mubr.f32.gmra.mrb[0].mxu0 %v4323
    %v4400 = vpop.f32.mrb[0].mxu0
    %v4401 = vadd.f32 0.0, %v4400
    %v4402 = vpop.f32.mrb[0].mxu0
    %4403 = vmatprep.mubr.f32.mxu0 0.0
    %4404 = vmatmul.mubr.f32.gmra.mrb[0].mxu0 %v4326
    %v4405 = vpop.f32.mrb[0].mxu0
    %v4406 = vadd.f32 0.0, %v4405
    %v4407 = vpop.f32.mrb[0].mxu0
    %4408 = vdwg.mxu0
    %v4409 = vmul.f32 %v4401, 0.35355338
    %v4410 = vmul.f32 %v4406, 0.35355338
    %v4411 = vadd.f32 %v4409, %v3478
    %v4412 = vadd.f32 %v4410, %v3479
    %v4413 = vsel %vm3879, %v4411, -inf
    %4414 = vmax.xlane.f32.xlu0 %v4413
    %v4415 = vpop.xlane.xlu0 %4414
    %v4416 = vsel %vm3879, %v4412, -inf
    %4417 = vmax.xlane.f32.xlu0 %v4416
    %v4418 = vpop.xlane.xlu0 %4417
    %v4419 = vsub.f32 %v4411, %v4415
    %v4420 = vsub.f32 %v4412, %v4418
    %v4421 = vmul.f32 %v4419, 1.442695
    %v4422 = vpow.pop %v4421
    %v4423 = vmul.f32 %v4420, 1.442695
    %v4424 = vpow.pop %v4423
    %v4425 = vsel %vm3879, %v4422, 0.0
    %4426 = vadd.xlane.f32.xlu0 %v4425
    %v4427 = vpop.xlane.xlu0 %4426
    %v4428 = vsel %vm3879, %v4424, 0.0
    %4429 = vadd.xlane.f32.xlu0 %v4428
    %v4430 = vpop.xlane.xlu0 %4429
    %v4431 = vrcp.pop %v4427
    %v4432 = vrcp.pop %v4430
    %v4433 = vmul.f32 %v4422, %v4431
    %v4434 = vmul.f32 %v4424, %v4432
    %v4436 = vsel %vm3879, %v4433, 0
    %v4439 = vsel %vm3879, %v4434, 0
    %4441 = vmatprep.subr.mxu0 0.0
    %4442 = vmatpush1.msra.mxu0 %v4314
    %4443 = vmatprep.subr.mxu0 0.0
    %4444 = vmatpush1.msra.mxu0 %v4319
    %4445 = vmatprep.subr.mxu0 0.0
    %4446 = vmatpush1.msra.mxu0 0.0
    %4447 = vmatprep.subr.mxu0 0.0
    %4448 = vmatpush1.msra.mxu0 0.0
    %4449 = vmatprep.subr.mxu0 0.0
    %4450 = vmatpush1.msra.mxu0 0.0
    %4451 = vmatprep.subr.mxu0 0.0
    %4452 = vmatpush1.msra.mxu0 0.0
    %4453 = vmatprep.subr.mxu0 0.0
    %4454 = vmatpush1.msra.mxu0 0.0
    %4455 = vmatprep.subr.mxu0 0.0
    %4456 = vmatpush1.msra.mxu0 0.0
    %4457 = vmatprep.subr.mxu0 0.0
    %4458 = vmatpush1.msra.mxu0 0.0
    %4459 = vmatprep.subr.mxu0 0.0
    %4460 = vmatpush1.msra.mxu0 0.0
    %4461 = vmatprep.subr.mxu0 0.0
    %4462 = vmatpush1.msra.mxu0 0.0
    %4463 = vmatprep.subr.mxu0 0.0
    %4464 = vmatpush1.msra.mxu0 0.0
    %4465 = vmatprep.subr.mxu0 0.0
    %4466 = vmatpush1.msra.mxu0 0.0
    %4467 = vmatprep.subr.mxu0 0.0
    %4468 = vmatpush1.msra.mxu0 0.0
    %4469 = vmatprep.subr.mxu0 0.0
    %4470 = vmatpush1.msra.mxu0 0.0
    %4471 = vmatprep.subr.mxu0 0.0
    %4472 = vmatpush1.msra.mxu0 0.0
    %4473 = vmatprep.subr.mxu0 0.0
    %4474 = vmatpush1.msra.mxu0 0.0
    %4475 = vmatprep.subr.mxu0 0.0
    %4476 = vmatpush1.msra.mxu0 0.0
    %4477 = vmatprep.subr.mxu0 0.0
    %4478 = vmatpush1.msra.mxu0 0.0
    %4479 = vmatprep.subr.mxu0 0.0
    %4480 = vmatpush1.msra.mxu0 0.0
    %4481 = vmatprep.subr.mxu0 0.0
    %4482 = vmatpush1.msra.mxu0 0.0
    %4483 = vmatprep.subr.mxu0 0.0
    %4484 = vmatpush1.msra.mxu0 0.0
    %4485 = vmatprep.subr.mxu0 0.0
    %4486 = vmatpush1.msra.mxu0 0.0
    %4487 = vmatprep.subr.mxu0 0.0
    %4488 = vmatpush1.msra.mxu0 0.0
    %4489 = vmatprep.subr.mxu0 0.0
    %4490 = vmatpush1.msra.mxu0 0.0
    %4491 = vmatprep.subr.mxu0 0.0
    %4492 = vmatpush1.msra.mxu0 0.0
    %4493 = vmatprep.subr.mxu0 0.0
    %4494 = vmatpush1.msra.mxu0 0.0
    %4495 = vmatprep.subr.mxu0 0.0
    %4496 = vmatpush1.msra.mxu0 0.0
    %4497 = vmatprep.subr.mxu0 0.0
    %4498 = vmatpush1.msra.mxu0 0.0
    %4499 = vmatprep.subr.mxu0 0.0
    %4500 = vmatpush1.msra.mxu0 0.0
    %4501 = vmatprep.subr.mxu0 0.0
    %4502 = vmatpush1.msra.mxu0 0.0
    %4503 = vmatprep.subr.mxu0 0.0
    %4504 = vmatpush1.msra.mxu0 0.0
    %4505 = vmatprep.mubr.f32.mxu0 0.0
    %4506 = vmatmul.mubr.f32.gmra.mrb[0].mxu0 %v4436
    %v4507 = vpop.f32.mrb[0].mxu0
    %v4508 = vadd.f32 0.0, %v4507
    %v4509 = vpop.f32.mrb[0].mxu0
    %4510 = vmatprep.mubr.f32.mxu0 0.0
    %4511 = vmatmul.mubr.f32.gmra.mrb[0].mxu0 %v4439
    %v4512 = vpop.f32.mrb[0].mxu0
    %v4513 = vadd.f32 0.0, %v4512
    %v4514 = vpop.f32.mrb[0].mxu0
    %4515 = vdwg.mxu0
    %v4516 = vld [vmem:[%s2 + $0x1e8] sm:$0xff]
    %v4518 = vsel %vm523, %v4508, 0
    %v4521 = vsel %vm523, %v4513, 0
    %4523 = vmatprep.subr.mxu0 0.0
    %4524 = vmatpush1.msra.mxu0 %v4516
    %4525 = vmatprep.subr.mxu0 0.0
    %4526 = vmatpush1.msra.mxu0 0.0
    %4527 = vmatprep.subr.mxu0 0.0
    %4528 = vmatpush1.msra.mxu0 0.0
    %4529 = vmatprep.subr.mxu0 0.0
    %4530 = vmatpush1.msra.mxu0 0.0
    %4531 = vmatprep.subr.mxu0 0.0
    %4532 = vmatpush1.msra.mxu0 0.0
    %4533 = vmatprep.subr.mxu0 0.0
    %4534 = vmatpush1.msra.mxu0 0.0
    %4535 = vmatprep.subr.mxu0 0.0
    %4536 = vmatpush1.msra.mxu0 0.0
    %4537 = vmatprep.subr.mxu0 0.0
    %4538 = vmatpush1.msra.mxu0 0.0
    %4539 = vmatprep.subr.mxu0 0.0
    %4540 = vmatpush1.msra.mxu0 0.0
    %4541 = vmatprep.subr.mxu0 0.0
    %4542 = vmatpush1.msra.mxu0 0.0
    %4543 = vmatprep.subr.mxu0 0.0
    %4544 = vmatpush1.msra.mxu0 0.0
    %4545 = vmatprep.subr.mxu0 0.0
    %4546 = vmatpush1.msra.mxu0 0.0
    %4547 = vmatprep.subr.mxu0 0.0
    %4548 = vmatpush1.msra.mxu0 0.0
    %4549 = vmatprep.subr.mxu0 0.0
    %4550 = vmatpush1.msra.mxu0 0.0
    %4551 = vmatprep.subr.mxu0 0.0
    %4552 = vmatpush1.msra.mxu0 0.0
    %4553 = vmatprep.subr.mxu0 0.0
    %4554 = vmatpush1.msra.mxu0 0.0
    %4555 = vmatprep.subr.mxu0 0.0
    %4556 = vmatpush1.msra.mxu0 0.0
    %4557 = vmatprep.subr.mxu0 0.0
    %4558 = vmatpush1.msra.mxu0 0.0
    %4559 = vmatprep.subr.mxu0 0.0
    %4560 = vmatpush1.msra.mxu0 0.0
    %4561 = vmatprep.subr.mxu0 0.0
    %4562 = vmatpush1.msra.mxu0 0.0
    %4563 = vmatprep.subr.mxu0 0.0
    %4564 = vmatpush1.msra.mxu0 0.0
    %4565 = vmatprep.subr.mxu0 0.0
    %4566 = vmatpush1.msra.mxu0 0.0
    %4567 = vmatprep.subr.mxu0 0.0
    %4568 = vmatpush1.msra.mxu0 0.0
    %4569 = vmatprep.subr.mxu0 0.0
    %4570 = vmatpush1.msra.mxu0 0.0
    %4571 = vmatprep.subr.mxu0 0.0
    %4572 = vmatpush1.msra.mxu0 0.0
    %4573 = vmatprep.subr.mxu0 0.0
    %4574 = vmatpush1.msra.mxu0 0.0
    %4575 = vmatprep.subr.mxu0 0.0
    %4576 = vmatpush1.msra.mxu0 0.0
    %4577 = vmatprep.subr.mxu0 0.0
    %4578 = vmatpush1.msra.mxu0 0.0
    %4579 = vmatprep.subr.mxu0 0.0
    %4580 = vmatpush1.msra.mxu0 0.0
    %4581 = vmatprep.subr.mxu0 0.0
    %4582 = vmatpush1.msra.mxu0 0.0
    %4583 = vmatprep.subr.mxu0 0.0
    %4584 = vmatpush1.msra.mxu0 0.0
    %4585 = vmatprep.subr.mxu0 0.0
    %4586 = vmatpush1.msra.mxu0 0.0
    %4587 = vmatprep.mubr.f32.mxu0 0.0
    %4588 = vmatmul.mubr.f32.gmra.mrb[0].mxu0 %v4518
    %v4589 = vpop.f32.mrb[0].mxu0
    %v4590 = vadd.f32 0.0, %v4589
    %v4591 = vpop.f32.mrb[0].mxu0
    %4592 = vmatprep.mubr.f32.mxu0 0.0
    %4593 = vmatmul.mubr.f32.gmra.mrb[0].mxu0 %v4521
    %v4594 = vpop.f32.mrb[0].mxu0
    %v4595 = vadd.f32 0.0, %v4594
    %v4596 = vpop.f32.mrb[0].mxu0
    %4597 = vdwg.mxu0
    %v4598 = vadd.f32 %v4065, %v4590
    %v4599 = vadd.f32 %v4066, %v4595
    %s4600 = scalar_lea.vmem %s4, 560
    %v4601 = vld [vmem:[%s4600] sm:$0xff]
    %v4602 = vld [vmem:[%s4600 + $0x8] sm:$0xff]
    %v4603 = vld [vmem:[%s4600 + $0x10] sm:$0xff]
    %v4604 = vld [vmem:[%s4600 + $0x18] sm:$0xff]
    %v4605 = vld [vmem:[%s4600 + $0x20] sm:$0xff]
    %v4606 = vlaneseq
    %v4607 = vshrl.u32 %v4606, 7
    %v4608 = vsub.s32 0, %v4607
    %v4609 = vrot.slane %v4605, %v4608
    %4610 = vmatprep.subr.mxu0 0.0
    %4611 = vmatpush1.msra.mxu0 %v4601
    %4612 = vmatprep.subr.mxu0 0.0
    %4613 = vmatpush1.msra.mxu0 %v4602
    %4614 = vmatprep.subr.mxu0 0.0
    %4615 = vmatpush1.msra.mxu0 %v4603
    %4616 = vmatprep.subr.mxu0 0.0
    %4617 = vmatpush1.msra.mxu0 %v4604
    %4618 = vmatprep.subr.mxu0 0.0
    %4619 = vmatpush1.msra.mxu0 0.0
    %4620 = vmatprep.subr.mxu0 0.0
    %4621 = vmatpush1.msra.mxu0 0.0
    %4622 = vmatprep.subr.mxu0 0.0
    %4623 = vmatpush1.msra.mxu0 0.0
    %4624 = vmatprep.subr.mxu0 0.0
    %4625 = vmatpush1.msra.mxu0 0.0
    %4626 = vmatprep.subr.mxu0 0.0
    %4627 = vmatpush1.msra.mxu0 0.0
    %4628 = vmatprep.subr.mxu0 0.0
    %4629 = vmatpush1.msra.mxu0 0.0
    %4630 = vmatprep.subr.mxu0 0.0
    %4631 = vmatpush1.msra.mxu0 0.0
    %4632 = vmatprep.subr.mxu0 0.0
    %4633 = vmatpush1.msra.mxu0 0.0
    %4634 = vmatprep.subr.mxu0 0.0
    %4635 = vmatpush1.msra.mxu0 0.0
    %4636 = vmatprep.subr.mxu0 0.0
    %4637 = vmatpush1.msra.mxu0 0.0
    %4638 = vmatprep.subr.mxu0 0.0
    %4639 = vmatpush1.msra.mxu0 0.0
    %4640 = vmatprep.subr.mxu0 0.0
    %4641 = vmatpush1.msra.mxu0 0.0
    %4642 = vmatprep.subr.mxu0 0.0
    %4643 = vmatpush1.msra.mxu0 0.0
    %4644 = vmatprep.subr.mxu0 0.0
    %4645 = vmatpush1.msra.mxu0 0.0
    %4646 = vmatprep.subr.mxu0 0.0
    %4647 = vmatpush1.msra.mxu0 0.0
    %4648 = vmatprep.subr.mxu0 0.0
    %4649 = vmatpush1.msra.mxu0 0.0
    %4650 = vmatprep.subr.mxu0 0.0
    %4651 = vmatpush1.msra.mxu0 0.0
    %4652 = vmatprep.subr.mxu0 0.0
    %4653 = vmatpush1.msra.mxu0 0.0
    %4654 = vmatprep.subr.mxu0 0.0
    %4655 = vmatpush1.msra.mxu0 0.0
    %4656 = vmatprep.subr.mxu0 0.0
    %4657 = vmatpush1.msra.mxu0 0.0
    %4658 = vmatprep.subr.mxu0 0.0
    %4659 = vmatpush1.msra.mxu0 0.0
    %4660 = vmatprep.subr.mxu0 0.0
    %4661 = vmatpush1.msra.mxu0 0.0
    %4662 = vmatprep.subr.mxu0 0.0
    %4663 = vmatpush1.msra.mxu0 0.0
    %4664 = vmatprep.subr.mxu0 0.0
    %4665 = vmatpush1.msra.mxu0 0.0
    %4666 = vmatprep.subr.mxu0 0.0
    %4667 = vmatpush1.msra.mxu0 0.0
    %4668 = vmatprep.subr.mxu0 0.0
    %4669 = vmatpush1.msra.mxu0 0.0
    %4670 = vmatprep.subr.mxu0 0.0
    %4671 = vmatpush1.msra.mxu0 0.0
    %4672 = vmatprep.subr.mxu0 0.0
    %4673 = vmatpush1.msra.mxu0 0.0
    %4674 = vmatprep.mubr.f32.mxu0 0.0
    %4675 = vmatmul.mubr.f32.gmra.mrb[0].mxu0 %v3538
    %v4676 = vpop.f32.mrb[0].mxu0
    %v4677 = vadd.f32 %v4609, %v4676
    %v4678 = vpop.f32.mrb[0].mxu0
    %4679 = vmatprep.mubr.f32.mxu0 0.0
    %4680 = vmatmul.mubr.f32.gmra.mrb[0].mxu0 %v3541
    %v4681 = vpop.f32.mrb[0].mxu0
    %v4682 = vadd.f32 %v4609, %v4681
    %v4683 = vpop.f32.mrb[0].mxu0
    %4684 = vdwg.mxu0
    %s4685 = scalar_lea.vmem %s4, 720
    %v4686 = vld [vmem:[%s4685] sm:$0xff]
    %v4687 = vld [vmem:[%s4685 + $0x8] sm:$0xff]
    %v4688 = vld [vmem:[%s4685 + $0x10] sm:$0xff]
    %v4689 = vld [vmem:[%s4685 + $0x18] sm:$0xff]
    %v4690 = vld [vmem:[%s4685 + $0x20] sm:$0xff]
    %v4691 = vlaneseq
    %v4692 = vshrl.u32 %v4691, 7
    %v4693 = vsub.s32 0, %v4692
    %v4694 = vrot.slane %v4690, %v4693
    %4695 = vmatprep.subr.mxu0 0.0
    %4696 = vmatpush1.msra.mxu0 %v4686
    %4697 = vmatprep.subr.mxu0 0.0
    %4698 = vmatpush1.msra.mxu0 %v4687
    %4699 = vmatprep.subr.mxu0 0.0
    %4700 = vmatpush1.msra.mxu0 %v4688
    %4701 = vmatprep.subr.mxu0 0.0
    %4702 = vmatpush1.msra.mxu0 %v4689
    %4703 = vmatprep.subr.mxu0 0.0
    %4704 = vmatpush1.msra.mxu0 0.0
    %4705 = vmatprep.subr.mxu0 0.0
    %4706 = vmatpush1.msra.mxu0 0.0
    %4707 = vmatprep.subr.mxu0 0.0
    %4708 = vmatpush1.msra.mxu0 0.0
    %4709 = vmatprep.subr.mxu0 0.0
    %4710 = vmatpush1.msra.mxu0 0.0
    %4711 = vmatprep.subr.mxu0 0.0
    %4712 = vmatpush1.msra.mxu0 0.0
    %4713 = vmatprep.subr.mxu0 0.0
    %4714 = vmatpush1.msra.mxu0 0.0
    %4715 = vmatprep.subr.mxu0 0.0
    %4716 = vmatpush1.msra.mxu0 0.0
    %4717 = vmatprep.subr.mxu0 0.0
    %4718 = vmatpush1.msra.mxu0 0.0
    %4719 = vmatprep.subr.mxu0 0.0
    %4720 = vmatpush1.msra.mxu0 0.0
    %4721 = vmatprep.subr.mxu0 0.0
    %4722 = vmatpush1.msra.mxu0 0.0
    %4723 = vmatprep.subr.mxu0 0.0
    %4724 = vmatpush1.msra.mxu0 0.0
    %4725 = vmatprep.subr.mxu0 0.0
    %4726 = vmatpush1.msra.mxu0 0.0
    %4727 = vmatprep.subr.mxu0 0.0
    %4728 = vmatpush1.msra.mxu0 0.0
    %4729 = vmatprep.subr.mxu0 0.0
    %4730 = vmatpush1.msra.mxu0 0.0
    %4731 = vmatprep.subr.mxu0 0.0
    %4732 = vmatpush1.msra.mxu0 0.0
    %4733 = vmatprep.subr.mxu0 0.0
    %4734 = vmatpush1.msra.mxu0 0.0
    %4735 = vmatprep.subr.mxu0 0.0
    %4736 = vmatpush1.msra.mxu0 0.0
    %4737 = vmatprep.subr.mxu0 0.0
    %4738 = vmatpush1.msra.mxu0 0.0
    %4739 = vmatprep.subr.mxu0 0.0
    %4740 = vmatpush1.msra.mxu0 0.0
    %4741 = vmatprep.subr.mxu0 0.0
    %4742 = vmatpush1.msra.mxu0 0.0
    %4743 = vmatprep.subr.mxu0 0.0
    %4744 = vmatpush1.msra.mxu0 0.0
    %4745 = vmatprep.subr.mxu0 0.0
    %4746 = vmatpush1.msra.mxu0 0.0
    %4747 = vmatprep.subr.mxu0 0.0
    %4748 = vmatpush1.msra.mxu0 0.0
    %4749 = vmatprep.subr.mxu0 0.0
    %4750 = vmatpush1.msra.mxu0 0.0
    %4751 = vmatprep.subr.mxu0 0.0
    %4752 = vmatpush1.msra.mxu0 0.0
    %4753 = vmatprep.subr.mxu0 0.0
    %4754 = vmatpush1.msra.mxu0 0.0
    %4755 = vmatprep.subr.mxu0 0.0
    %4756 = vmatpush1.msra.mxu0 0.0
    %4757 = vmatprep.subr.mxu0 0.0
    %4758 = vmatpush1.msra.mxu0 0.0
    %4759 = vmatprep.mubr.f32.mxu0 0.0
    %4760 = vmatmul.mubr.f32.gmra.mrb[0].mxu0 %v3538
    %v4761 = vpop.f32.mrb[0].mxu0
    %v4762 = vadd.f32 %v4694, %v4761
    %v4763 = vpop.f32.mrb[0].mxu0
    %4764 = vmatprep.mubr.f32.mxu0 0.0
    %4765 = vmatmul.mubr.f32.gmra.mrb[0].mxu0 %v3541
    %v4766 = vpop.f32.mrb[0].mxu0
    %v4767 = vadd.f32 %v4694, %v4766
    %v4768 = vpop.f32.mrb[0].mxu0
    %4769 = vdwg.mxu0
    %s4770 = scalar_lea.vmem %s4, 880
    %v4771 = vld [vmem:[%s4770] sm:$0xff]
    %v4772 = vld [vmem:[%s4770 + $0x8] sm:$0xff]
    %v4773 = vld [vmem:[%s4770 + $0x10] sm:$0xff]
    %v4774 = vld [vmem:[%s4770 + $0x18] sm:$0xff]
    %v4775 = vld [vmem:[%s4770 + $0x20] sm:$0xff]
    %v4776 = vlaneseq
    %v4777 = vshrl.u32 %v4776, 7
    %v4778 = vsub.s32 0, %v4777
    %v4779 = vrot.slane %v4775, %v4778
    %4780 = vmatprep.subr.mxu0 0.0
    %4781 = vmatpush1.msra.mxu0 %v4771
    %4782 = vmatprep.subr.mxu0 0.0
    %4783 = vmatpush1.msra.mxu0 %v4772
    %4784 = vmatprep.subr.mxu0 0.0
    %4785 = vmatpush1.msra.mxu0 %v4773
    %4786 = vmatprep.subr.mxu0 0.0
    %4787 = vmatpush1.msra.mxu0 %v4774
    %4788 = vmatprep.subr.mxu0 0.0
    %4789 = vmatpush1.msra.mxu0 0.0
    %4790 = vmatprep.subr.mxu0 0.0
    %4791 = vmatpush1.msra.mxu0 0.0
    %4792 = vmatprep.subr.mxu0 0.0
    %4793 = vmatpush1.msra.mxu0 0.0
    %4794 = vmatprep.subr.mxu0 0.0
    %4795 = vmatpush1.msra.mxu0 0.0
    %4796 = vmatprep.subr.mxu0 0.0
    %4797 = vmatpush1.msra.mxu0 0.0
    %4798 = vmatprep.subr.mxu0 0.0
    %4799 = vmatpush1.msra.mxu0 0.0
    %4800 = vmatprep.subr.mxu0 0.0
    %4801 = vmatpush1.msra.mxu0 0.0
    %4802 = vmatprep.subr.mxu0 0.0
    %4803 = vmatpush1.msra.mxu0 0.0
    %4804 = vmatprep.subr.mxu0 0.0
    %4805 = vmatpush1.msra.mxu0 0.0
    %4806 = vmatprep.subr.mxu0 0.0
    %4807 = vmatpush1.msra.mxu0 0.0
    %4808 = vmatprep.subr.mxu0 0.0
    %4809 = vmatpush1.msra.mxu0 0.0
    %4810 = vmatprep.subr.mxu0 0.0
    %4811 = vmatpush1.msra.mxu0 0.0
    %4812 = vmatprep.subr.mxu0 0.0
    %4813 = vmatpush1.msra.mxu0 0.0
    %4814 = vmatprep.subr.mxu0 0.0
    %4815 = vmatpush1.msra.mxu0 0.0
    %4816 = vmatprep.subr.mxu0 0.0
    %4817 = vmatpush1.msra.mxu0 0.0
    %4818 = vmatprep.subr.mxu0 0.0
    %4819 = vmatpush1.msra.mxu0 0.0
    %4820 = vmatprep.subr.mxu0 0.0
    %4821 = vmatpush1.msra.mxu0 0.0
    %4822 = vmatprep.subr.mxu0 0.0
    %4823 = vmatpush1.msra.mxu0 0.0
    %4824 = vmatprep.subr.mxu0 0.0
    %4825 = vmatpush1.msra.mxu0 0.0
    %4826 = vmatprep.subr.mxu0 0.0
    %4827 = vmatpush1.msra.mxu0 0.0
    %4828 = vmatprep.subr.mxu0 0.0
    %4829 = vmatpush1.msra.mxu0 0.0
    %4830 = vmatprep.subr.mxu0 0.0
    %4831 = vmatpush1.msra.mxu0 0.0
    %4832 = vmatprep.subr.mxu0 0.0
    %4833 = vmatpush1.msra.mxu0 0.0
    %4834 = vmatprep.subr.mxu0 0.0
    %4835 = vmatpush1.msra.mxu0 0.0
    %4836 = vmatprep.subr.mxu0 0.0
    %4837 = vmatpush1.msra.mxu0 0.0
    %4838 = vmatprep.subr.mxu0 0.0
    %4839 = vmatpush1.msra.mxu0 0.0
    %4840 = vmatprep.subr.mxu0 0.0
    %4841 = vmatpush1.msra.mxu0 0.0
    %4842 = vmatprep.subr.mxu0 0.0
    %4843 = vmatpush1.msra.mxu0 0.0
    %4844 = vmatprep.mubr.f32.mxu0 0.0
    %4845 = vmatmul.mubr.f32.gmra.mrb[0].mxu0 %v3538
    %v4846 = vpop.f32.mrb[0].mxu0
    %v4847 = vadd.f32 %v4779, %v4846
    %v4848 = vpop.f32.mrb[0].mxu0
    %4849 = vmatprep.mubr.f32.mxu0 0.0
    %4850 = vmatmul.mubr.f32.gmra.mrb[0].mxu0 %v3541
    %v4851 = vpop.f32.mrb[0].mxu0
    %v4852 = vadd.f32 %v4779, %v4851
    %v4853 = vpop.f32.mrb[0].mxu0
    %4854 = vdwg.mxu0
    %v4856 = vsel %vm523, %v4677, 0
    %v4859 = vsel %vm523, %v4682, 0
    %v4862 = vsel %vm523, %v4762, 0
    %v4865 = vsel %vm523, %v4767, 0
    %4867 = vmatprep.subr.mxu0 0.0
    %4868 = vmatpush1.xpose.msra.mxu0 %v4862
    %4869 = vmatprep.subr.mxu0 0.0
    %4870 = vmatpush1.xpose.msra.mxu0 %v4865
    %4871 = vmatprep.subr.mxu0 0.0
    %4872 = vmatpush1.xpose.msra.mxu0 0.0
    %4873 = vmatprep.subr.mxu0 0.0
    %4874 = vmatpush1.xpose.msra.mxu0 0.0
    %4875 = vmatprep.subr.mxu0 0.0
    %4876 = vmatpush1.xpose.msra.mxu0 0.0
    %4877 = vmatprep.subr.mxu0 0.0
    %4878 = vmatpush1.xpose.msra.mxu0 0.0
    %4879 = vmatprep.subr.mxu0 0.0
    %4880 = vmatpush1.xpose.msra.mxu0 0.0
    %4881 = vmatprep.subr.mxu0 0.0
    %4882 = vmatpush1.xpose.msra.mxu0 0.0
    %4883 = vmatprep.subr.mxu0 0.0
    %4884 = vmatpush1.xpose.msra.mxu0 0.0
    %4885 = vmatprep.subr.mxu0 0.0
    %4886 = vmatpush1.xpose.msra.mxu0 0.0
    %4887 = vmatprep.subr.mxu0 0.0
    %4888 = vmatpush1.xpose.msra.mxu0 0.0
    %4889 = vmatprep.subr.mxu0 0.0
    %4890 = vmatpush1.xpose.msra.mxu0 0.0
    %4891 = vmatprep.subr.mxu0 0.0
    %4892 = vmatpush1.xpose.msra.mxu0 0.0
    %4893 = vmatprep.subr.mxu0 0.0
    %4894 = vmatpush1.xpose.msra.mxu0 0.0
    %4895 = vmatprep.subr.mxu0 0.0
    %4896 = vmatpush1.xpose.msra.mxu0 0.0
    %4897 = vmatprep.subr.mxu0 0.0
    %4898 = vmatpush1.xpose.msra.mxu0 0.0
    %4899 = vmatprep.subr.mxu0 0.0
    %4900 = vmatpush1.xpose.msra.mxu0 0.0
    %4901 = vmatprep.subr.mxu0 0.0
    %4902 = vmatpush1.xpose.msra.mxu0 0.0
    %4903 = vmatprep.subr.mxu0 0.0
    %4904 = vmatpush1.xpose.msra.mxu0 0.0
    %4905 = vmatprep.subr.mxu0 0.0
    %4906 = vmatpush1.xpose.msra.mxu0 0.0
    %4907 = vmatprep.subr.mxu0 0.0
    %4908 = vmatpush1.xpose.msra.mxu0 0.0
    %4909 = vmatprep.subr.mxu0 0.0
    %4910 = vmatpush1.xpose.msra.mxu0 0.0
    %4911 = vmatprep.subr.mxu0 0.0
    %4912 = vmatpush1.xpose.msra.mxu0 0.0
    %4913 = vmatprep.subr.mxu0 0.0
    %4914 = vmatpush1.xpose.msra.mxu0 0.0
    %4915 = vmatprep.subr.mxu0 0.0
    %4916 = vmatpush1.xpose.msra.mxu0 0.0
    %4917 = vmatprep.subr.mxu0 0.0
    %4918 = vmatpush1.xpose.msra.mxu0 0.0
    %4919 = vmatprep.subr.mxu0 0.0
    %4920 = vmatpush1.xpose.msra.mxu0 0.0
    %4921 = vmatprep.subr.mxu0 0.0
    %4922 = vmatpush1.xpose.msra.mxu0 0.0
    %4923 = vmatprep.subr.mxu0 0.0
    %4924 = vmatpush1.xpose.msra.mxu0 0.0
    %4925 = vmatprep.subr.mxu0 0.0
    %4926 = vmatpush1.xpose.msra.mxu0 0.0
    %4927 = vmatprep.subr.mxu0 0.0
    %4928 = vmatpush1.xpose.msra.mxu0 0.0
    %4929 = vmatprep.subr.mxu0 0.0
    %4930 = vmatpush1.xpose.msra.mxu0 0.0
    %4931 = vmatprep.mubr.f32.mxu0 0.0
    %4932 = vmatmul.mubr.f32.gmra.mrb[0].mxu0 %v4856
    %v4933 = vpop.f32.mrb[0].mxu0
    %v4934 = vadd.f32 0.0, %v4933
    %v4935 = vpop.f32.mrb[0].mxu0
    %4936 = vmatprep.mubr.f32.mxu0 0.0
    %4937 = vmatmul.mubr.f32.gmra.mrb[0].mxu0 %v4859
    %v4938 = vpop.f32.mrb[0].mxu0
    %v4939 = vadd.f32 0.0, %v4938
    %v4940 = vpop.f32.mrb[0].mxu0
    %4941 = vdwg.mxu0
    %v4942 = vmul.f32 %v4934, 0.35355338
    %v4943 = vmul.f32 %v4939, 0.35355338
    %v4944 = vadd.f32 %v4942, %v3478
    %v4945 = vadd.f32 %v4943, %v3479
    %v4946 = vsel %vm3879, %v4944, -inf
    %4947 = vmax.xlane.f32.xlu0 %v4946
    %v4948 = vpop.xlane.xlu0 %4947
    %v4949 = vsel %vm3879, %v4945, -inf
    %4950 = vmax.xlane.f32.xlu0 %v4949
    %v4951 = vpop.xlane.xlu0 %4950
    %v4952 = vsub.f32 %v4944, %v4948
    %v4953 = vsub.f32 %v4945, %v4951
    %v4954 = vmul.f32 %v4952, 1.442695
    %v4955 = vpow.pop %v4954
    %v4956 = vmul.f32 %v4953, 1.442695
    %v4957 = vpow.pop %v4956
    %v4958 = vsel %vm3879, %v4955, 0.0
    %4959 = vadd.xlane.f32.xlu0 %v4958
    %v4960 = vpop.xlane.xlu0 %4959
    %v4961 = vsel %vm3879, %v4957, 0.0
    %4962 = vadd.xlane.f32.xlu0 %v4961
    %v4963 = vpop.xlane.xlu0 %4962
    %v4964 = vrcp.pop %v4960
    %v4965 = vrcp.pop %v4963
    %v4966 = vmul.f32 %v4955, %v4964
    %v4967 = vmul.f32 %v4957, %v4965
    %v4969 = vsel %vm3879, %v4966, 0
    %v4972 = vsel %vm3879, %v4967, 0
    %4974 = vmatprep.subr.mxu0 0.0
    %4975 = vmatpush1.msra.mxu0 %v4847
    %4976 = vmatprep.subr.mxu0 0.0
    %4977 = vmatpush1.msra.mxu0 %v4852
    %4978 = vmatprep.subr.mxu0 0.0
    %4979 = vmatpush1.msra.mxu0 0.0
    %4980 = vmatprep.subr.mxu0 0.0
    %4981 = vmatpush1.msra.mxu0 0.0
    %4982 = vmatprep.subr.mxu0 0.0
    %4983 = vmatpush1.msra.mxu0 0.0
    %4984 = vmatprep.subr.mxu0 0.0
    %4985 = vmatpush1.msra.mxu0 0.0
    %4986 = vmatprep.subr.mxu0 0.0
    %4987 = vmatpush1.msra.mxu0 0.0
    %4988 = vmatprep.subr.mxu0 0.0
    %4989 = vmatpush1.msra.mxu0 0.0
    %4990 = vmatprep.subr.mxu0 0.0
    %4991 = vmatpush1.msra.mxu0 0.0
    %4992 = vmatprep.subr.mxu0 0.0
    %4993 = vmatpush1.msra.mxu0 0.0
    %4994 = vmatprep.subr.mxu0 0.0
    %4995 = vmatpush1.msra.mxu0 0.0
    %4996 = vmatprep.subr.mxu0 0.0
    %4997 = vmatpush1.msra.mxu0 0.0
    %4998 = vmatprep.subr.mxu0 0.0
    %4999 = vmatpush1.msra.mxu0 0.0
    %5000 = vmatprep.subr.mxu0 0.0
    %5001 = vmatpush1.msra.mxu0 0.0
    %5002 = vmatprep.subr.mxu0 0.0
    %5003 = vmatpush1.msra.mxu0 0.0
    %5004 = vmatprep.subr.mxu0 0.0
    %5005 = vmatpush1.msra.mxu0 0.0
    %5006 = vmatprep.subr.mxu0 0.0
    %5007 = vmatpush1.msra.mxu0 0.0
    %5008 = vmatprep.subr.mxu0 0.0
    %5009 = vmatpush1.msra.mxu0 0.0
    %5010 = vmatprep.subr.mxu0 0.0
    %5011 = vmatpush1.msra.mxu0 0.0
    %5012 = vmatprep.subr.mxu0 0.0
    %5013 = vmatpush1.msra.mxu0 0.0
    %5014 = vmatprep.subr.mxu0 0.0
    %5015 = vmatpush1.msra.mxu0 0.0
    %5016 = vmatprep.subr.mxu0 0.0
    %5017 = vmatpush1.msra.mxu0 0.0
    %5018 = vmatprep.subr.mxu0 0.0
    %5019 = vmatpush1.msra.mxu0 0.0
    %5020 = vmatprep.subr.mxu0 0.0
    %5021 = vmatpush1.msra.mxu0 0.0
    %5022 = vmatprep.subr.mxu0 0.0
    %5023 = vmatpush1.msra.mxu0 0.0
    %5024 = vmatprep.subr.mxu0 0.0
    %5025 = vmatpush1.msra.mxu0 0.0
    %5026 = vmatprep.subr.mxu0 0.0
    %5027 = vmatpush1.msra.mxu0 0.0
    %5028 = vmatprep.subr.mxu0 0.0
    %5029 = vmatpush1.msra.mxu0 0.0
    %5030 = vmatprep.subr.mxu0 0.0
    %5031 = vmatpush1.msra.mxu0 0.0
    %5032 = vmatprep.subr.mxu0 0.0
    %5033 = vmatpush1.msra.mxu0 0.0
    %5034 = vmatprep.subr.mxu0 0.0
    %5035 = vmatpush1.msra.mxu0 0.0
    %5036 = vmatprep.subr.mxu0 0.0
    %5037 = vmatpush1.msra.mxu0 0.0
    %5038 = vmatprep.mubr.f32.mxu0 0.0
    %5039 = vmatmul.mubr.f32.gmra.mrb[0].mxu0 %v4969
    %v5040 = vpop.f32.mrb[0].mxu0
    %v5041 = vadd.f32 0.0, %v5040
    %v5042 = vpop.f32.mrb[0].mxu0
    %5043 = vmatprep.mubr.f32.mxu0 0.0
    %5044 = vmatmul.mubr.f32.gmra.mrb[0].mxu0 %v4972
    %v5045 = vpop.f32.mrb[0].mxu0
    %v5046 = vadd.f32 0.0, %v5045
    %v5047 = vpop.f32.mrb[0].mxu0
    %5048 = vdwg.mxu0
    %v5049 = vld [vmem:[%s2 + $0x1f0] sm:$0xff]
    %v5051 = vsel %vm523, %v5041, 0
    %v5054 = vsel %vm523, %v5046, 0
    %5056 = vmatprep.subr.mxu0 0.0
    %5057 = vmatpush1.msra.mxu0 %v5049
    %5058 = vmatprep.subr.mxu0 0.0
    %5059 = vmatpush1.msra.mxu0 0.0
    %5060 = vmatprep.subr.mxu0 0.0
    %5061 = vmatpush1.msra.mxu0 0.0
    %5062 = vmatprep.subr.mxu0 0.0
    %5063 = vmatpush1.msra.mxu0 0.0
    %5064 = vmatprep.subr.mxu0 0.0
    %5065 = vmatpush1.msra.mxu0 0.0
    %5066 = vmatprep.subr.mxu0 0.0
    %5067 = vmatpush1.msra.mxu0 0.0
    %5068 = vmatprep.subr.mxu0 0.0
    %5069 = vmatpush1.msra.mxu0 0.0
    %5070 = vmatprep.subr.mxu0 0.0
    %5071 = vmatpush1.msra.mxu0 0.0
    %5072 = vmatprep.subr.mxu0 0.0
    %5073 = vmatpush1.msra.mxu0 0.0
    %5074 = vmatprep.subr.mxu0 0.0
    %5075 = vmatpush1.msra.mxu0 0.0
    %5076 = vmatprep.subr.mxu0 0.0
    %5077 = vmatpush1.msra.mxu0 0.0
    %5078 = vmatprep.subr.mxu0 0.0
    %5079 = vmatpush1.msra.mxu0 0.0
    %5080 = vmatprep.subr.mxu0 0.0
    %5081 = vmatpush1.msra.mxu0 0.0
    %5082 = vmatprep.subr.mxu0 0.0
    %5083 = vmatpush1.msra.mxu0 0.0
    %5084 = vmatprep.subr.mxu0 0.0
    %5085 = vmatpush1.msra.mxu0 0.0
    %5086 = vmatprep.subr.mxu0 0.0
    %5087 = vmatpush1.msra.mxu0 0.0
    %5088 = vmatprep.subr.mxu0 0.0
    %5089 = vmatpush1.msra.mxu0 0.0
    %5090 = vmatprep.subr.mxu0 0.0
    %5091 = vmatpush1.msra.mxu0 0.0
    %5092 = vmatprep.subr.mxu0 0.0
    %5093 = vmatpush1.msra.mxu0 0.0
    %5094 = vmatprep.subr.mxu0 0.0
    %5095 = vmatpush1.msra.mxu0 0.0
    %5096 = vmatprep.subr.mxu0 0.0
    %5097 = vmatpush1.msra.mxu0 0.0
    %5098 = vmatprep.subr.mxu0 0.0
    %5099 = vmatpush1.msra.mxu0 0.0
    %5100 = vmatprep.subr.mxu0 0.0
    %5101 = vmatpush1.msra.mxu0 0.0
    %5102 = vmatprep.subr.mxu0 0.0
    %5103 = vmatpush1.msra.mxu0 0.0
    %5104 = vmatprep.subr.mxu0 0.0
    %5105 = vmatpush1.msra.mxu0 0.0
    %5106 = vmatprep.subr.mxu0 0.0
    %5107 = vmatpush1.msra.mxu0 0.0
    %5108 = vmatprep.subr.mxu0 0.0
    %5109 = vmatpush1.msra.mxu0 0.0
    %5110 = vmatprep.subr.mxu0 0.0
    %5111 = vmatpush1.msra.mxu0 0.0
    %5112 = vmatprep.subr.mxu0 0.0
    %5113 = vmatpush1.msra.mxu0 0.0
    %5114 = vmatprep.subr.mxu0 0.0
    %5115 = vmatpush1.msra.mxu0 0.0
    %5116 = vmatprep.subr.mxu0 0.0
    %5117 = vmatpush1.msra.mxu0 0.0
    %5118 = vmatprep.subr.mxu0 0.0
    %5119 = vmatpush1.msra.mxu0 0.0
    %5120 = vmatprep.mubr.f32.mxu0 0.0
    %5121 = vmatmul.mubr.f32.gmra.mrb[0].mxu0 %v5051
    %v5122 = vpop.f32.mrb[0].mxu0
    %v5123 = vadd.f32 0.0, %v5122
    %v5124 = vpop.f32.mrb[0].mxu0
    %5125 = vmatprep.mubr.f32.mxu0 0.0
    %5126 = vmatmul.mubr.f32.gmra.mrb[0].mxu0 %v5054
    %v5127 = vpop.f32.mrb[0].mxu0
    %v5128 = vadd.f32 0.0, %v5127
    %v5129 = vpop.f32.mrb[0].mxu0
    %5130 = vdwg.mxu0
    %v5131 = vadd.f32 %v4598, %v5123
    %v5132 = vadd.f32 %v4599, %v5128
    %s5133 = scalar_lea.vmem %s4, 600
    %v5134 = vld [vmem:[%s5133] sm:$0xff]
    %v5135 = vld [vmem:[%s5133 + $0x8] sm:$0xff]
    %v5136 = vld [vmem:[%s5133 + $0x10] sm:$0xff]
    %v5137 = vld [vmem:[%s5133 + $0x18] sm:$0xff]
    %v5138 = vld [vmem:[%s5133 + $0x20] sm:$0xff]
    %v5139 = vlaneseq
    %v5140 = vshrl.u32 %v5139, 7
    %v5141 = vsub.s32 0, %v5140
    %v5142 = vrot.slane %v5138, %v5141
    %5143 = vmatprep.subr.mxu0 0.0
    %5144 = vmatpush1.msra.mxu0 %v5134
    %5145 = vmatprep.subr.mxu0 0.0
    %5146 = vmatpush1.msra.mxu0 %v5135
    %5147 = vmatprep.subr.mxu0 0.0
    %5148 = vmatpush1.msra.mxu0 %v5136
    %5149 = vmatprep.subr.mxu0 0.0
    %5150 = vmatpush1.msra.mxu0 %v5137
    %5151 = vmatprep.subr.mxu0 0.0
    %5152 = vmatpush1.msra.mxu0 0.0
    %5153 = vmatprep.subr.mxu0 0.0
    %5154 = vmatpush1.msra.mxu0 0.0
    %5155 = vmatprep.subr.mxu0 0.0
    %5156 = vmatpush1.msra.mxu0 0.0
    %5157 = vmatprep.subr.mxu0 0.0
    %5158 = vmatpush1.msra.mxu0 0.0
    %5159 = vmatprep.subr.mxu0 0.0
    %5160 = vmatpush1.msra.mxu0 0.0
    %5161 = vmatprep.subr.mxu0 0.0
    %5162 = vmatpush1.msra.mxu0 0.0
    %5163 = vmatprep.subr.mxu0 0.0
    %5164 = vmatpush1.msra.mxu0 0.0
    %5165 = vmatprep.subr.mxu0 0.0
    %5166 = vmatpush1.msra.mxu0 0.0
    %5167 = vmatprep.subr.mxu0 0.0
    %5168 = vmatpush1.msra.mxu0 0.0
    %5169 = vmatprep.subr.mxu0 0.0
    %5170 = vmatpush1.msra.mxu0 0.0
    %5171 = vmatprep.subr.mxu0 0.0
    %5172 = vmatpush1.msra.mxu0 0.0
    %5173 = vmatprep.subr.mxu0 0.0
    %5174 = vmatpush1.msra.mxu0 0.0
    %5175 = vmatprep.subr.mxu0 0.0
    %5176 = vmatpush1.msra.mxu0 0.0
    %5177 = vmatprep.subr.mxu0 0.0
    %5178 = vmatpush1.msra.mxu0 0.0
    %5179 = vmatprep.subr.mxu0 0.0
    %5180 = vmatpush1.msra.mxu0 0.0
    %5181 = vmatprep.subr.mxu0 0.0
    %5182 = vmatpush1.msra.mxu0 0.0
    %5183 = vmatprep.subr.mxu0 0.0
    %5184 = vmatpush1.msra.mxu0 0.0
    %5185 = vmatprep.subr.mxu0 0.0
    %5186 = vmatpush1.msra.mxu0 0.0
    %5187 = vmatprep.subr.mxu0 0.0
    %5188 = vmatpush1.msra.mxu0 0.0
    %5189 = vmatprep.subr.mxu0 0.0
    %5190 = vmatpush1.msra.mxu0 0.0
    %5191 = vmatprep.subr.mxu0 0.0
    %5192 = vmatpush1.msra.mxu0 0.0
    %5193 = vmatprep.subr.mxu0 0.0
    %5194 = vmatpush1.msra.mxu0 0.0
    %5195 = vmatprep.subr.mxu0 0.0
    %5196 = vmatpush1.msra.mxu0 0.0
    %5197 = vmatprep.subr.mxu0 0.0
    %5198 = vmatpush1.msra.mxu0 0.0
    %5199 = vmatprep.subr.mxu0 0.0
    %5200 = vmatpush1.msra.mxu0 0.0
    %5201 = vmatprep.subr.mxu0 0.0
    %5202 = vmatpush1.msra.mxu0 0.0
    %5203 = vmatprep.subr.mxu0 0.0
    %5204 = vmatpush1.msra.mxu0 0.0
    %5205 = vmatprep.subr.mxu0 0.0
    %5206 = vmatpush1.msra.mxu0 0.0
    %5207 = vmatprep.mubr.f32.mxu0 0.0
    %5208 = vmatmul.mubr.f32.gmra.mrb[0].mxu0 %v3538
    %v5209 = vpop.f32.mrb[0].mxu0
    %v5210 = vadd.f32 %v5142, %v5209
    %v5211 = vpop.f32.mrb[0].mxu0
    %5212 = vmatprep.mubr.f32.mxu0 0.0
    %5213 = vmatmul.mubr.f32.gmra.mrb[0].mxu0 %v3541
    %v5214 = vpop.f32.mrb[0].mxu0
    %v5215 = vadd.f32 %v5142, %v5214
    %v5216 = vpop.f32.mrb[0].mxu0
    %5217 = vdwg.mxu0
    %s5218 = scalar_lea.vmem %s4, 760
    %v5219 = vld [vmem:[%s5218] sm:$0xff]
    %v5220 = vld [vmem:[%s5218 + $0x8] sm:$0xff]
    %v5221 = vld [vmem:[%s5218 + $0x10] sm:$0xff]
    %v5222 = vld [vmem:[%s5218 + $0x18] sm:$0xff]
    %v5223 = vld [vmem:[%s5218 + $0x20] sm:$0xff]
    %v5224 = vlaneseq
    %v5225 = vshrl.u32 %v5224, 7
    %v5226 = vsub.s32 0, %v5225
    %v5227 = vrot.slane %v5223, %v5226
    %5228 = vmatprep.subr.mxu0 0.0
    %5229 = vmatpush1.msra.mxu0 %v5219
    %5230 = vmatprep.subr.mxu0 0.0
    %5231 = vmatpush1.msra.mxu0 %v5220
    %5232 = vmatprep.subr.mxu0 0.0
    %5233 = vmatpush1.msra.mxu0 %v5221
    %5234 = vmatprep.subr.mxu0 0.0
    %5235 = vmatpush1.msra.mxu0 %v5222
    %5236 = vmatprep.subr.mxu0 0.0
    %5237 = vmatpush1.msra.mxu0 0.0
    %5238 = vmatprep.subr.mxu0 0.0
    %5239 = vmatpush1.msra.mxu0 0.0
    %5240 = vmatprep.subr.mxu0 0.0
    %5241 = vmatpush1.msra.mxu0 0.0
    %5242 = vmatprep.subr.mxu0 0.0
    %5243 = vmatpush1.msra.mxu0 0.0
    %5244 = vmatprep.subr.mxu0 0.0
    %5245 = vmatpush1.msra.mxu0 0.0
    %5246 = vmatprep.subr.mxu0 0.0
    %5247 = vmatpush1.msra.mxu0 0.0
    %5248 = vmatprep.subr.mxu0 0.0
    %5249 = vmatpush1.msra.mxu0 0.0
    %5250 = vmatprep.subr.mxu0 0.0
    %5251 = vmatpush1.msra.mxu0 0.0
    %5252 = vmatprep.subr.mxu0 0.0
    %5253 = vmatpush1.msra.mxu0 0.0
    %5254 = vmatprep.subr.mxu0 0.0
    %5255 = vmatpush1.msra.mxu0 0.0
    %5256 = vmatprep.subr.mxu0 0.0
    %5257 = vmatpush1.msra.mxu0 0.0
    %5258 = vmatprep.subr.mxu0 0.0
    %5259 = vmatpush1.msra.mxu0 0.0
    %5260 = vmatprep.subr.mxu0 0.0
    %5261 = vmatpush1.msra.mxu0 0.0
    %5262 = vmatprep.subr.mxu0 0.0
    %5263 = vmatpush1.msra.mxu0 0.0
    %5264 = vmatprep.subr.mxu0 0.0
    %5265 = vmatpush1.msra.mxu0 0.0
    %5266 = vmatprep.subr.mxu0 0.0
    %5267 = vmatpush1.msra.mxu0 0.0
    %5268 = vmatprep.subr.mxu0 0.0
    %5269 = vmatpush1.msra.mxu0 0.0
    %5270 = vmatprep.subr.mxu0 0.0
    %5271 = vmatpush1.msra.mxu0 0.0
    %5272 = vmatprep.subr.mxu0 0.0
    %5273 = vmatpush1.msra.mxu0 0.0
    %5274 = vmatprep.subr.mxu0 0.0
    %5275 = vmatpush1.msra.mxu0 0.0
    %5276 = vmatprep.subr.mxu0 0.0
    %5277 = vmatpush1.msra.mxu0 0.0
    %5278 = vmatprep.subr.mxu0 0.0
    %5279 = vmatpush1.msra.mxu0 0.0
    %5280 = vmatprep.subr.mxu0 0.0
    %5281 = vmatpush1.msra.mxu0 0.0
    %5282 = vmatprep.subr.mxu0 0.0
    %5283 = vmatpush1.msra.mxu0 0.0
    %5284 = vmatprep.subr.mxu0 0.0
    %5285 = vmatpush1.msra.mxu0 0.0
    %5286 = vmatprep.subr.mxu0 0.0
    %5287 = vmatpush1.msra.mxu0 0.0
    %5288 = vmatprep.subr.mxu0 0.0
    %5289 = vmatpush1.msra.mxu0 0.0
    %5290 = vmatprep.subr.mxu0 0.0
    %5291 = vmatpush1.msra.mxu0 0.0
    %5292 = vmatprep.mubr.f32.mxu0 0.0
    %5293 = vmatmul.mubr.f32.gmra.mrb[0].mxu0 %v3538
    %v5294 = vpop.f32.mrb[0].mxu0
    %v5295 = vadd.f32 %v5227, %v5294
    %v5296 = vpop.f32.mrb[0].mxu0
    %5297 = vmatprep.mubr.f32.mxu0 0.0
    %5298 = vmatmul.mubr.f32.gmra.mrb[0].mxu0 %v3541
    %v5299 = vpop.f32.mrb[0].mxu0
    %v5300 = vadd.f32 %v5227, %v5299
    %v5301 = vpop.f32.mrb[0].mxu0
    %5302 = vdwg.mxu0
    %s5303 = scalar_lea.vmem %s4, 920
    %v5304 = vld [vmem:[%s5303] sm:$0xff]
    %v5305 = vld [vmem:[%s5303 + $0x8] sm:$0xff]
    %v5306 = vld [vmem:[%s5303 + $0x10] sm:$0xff]
    %v5307 = vld [vmem:[%s5303 + $0x18] sm:$0xff]
    %v5308 = vld [vmem:[%s5303 + $0x20] sm:$0xff]
    %v5309 = vlaneseq
    %v5310 = vshrl.u32 %v5309, 7
    %v5311 = vsub.s32 0, %v5310
    %v5312 = vrot.slane %v5308, %v5311
    %5313 = vmatprep.subr.mxu0 0.0
    %5314 = vmatpush1.msra.mxu0 %v5304
    %5315 = vmatprep.subr.mxu0 0.0
    %5316 = vmatpush1.msra.mxu0 %v5305
    %5317 = vmatprep.subr.mxu0 0.0
    %5318 = vmatpush1.msra.mxu0 %v5306
    %5319 = vmatprep.subr.mxu0 0.0
    %5320 = vmatpush1.msra.mxu0 %v5307
    %5321 = vmatprep.subr.mxu0 0.0
    %5322 = vmatpush1.msra.mxu0 0.0
    %5323 = vmatprep.subr.mxu0 0.0
    %5324 = vmatpush1.msra.mxu0 0.0
    %5325 = vmatprep.subr.mxu0 0.0
    %5326 = vmatpush1.msra.mxu0 0.0
    %5327 = vmatprep.subr.mxu0 0.0
    %5328 = vmatpush1.msra.mxu0 0.0
    %5329 = vmatprep.subr.mxu0 0.0
    %5330 = vmatpush1.msra.mxu0 0.0
    %5331 = vmatprep.subr.mxu0 0.0
    %5332 = vmatpush1.msra.mxu0 0.0
    %5333 = vmatprep.subr.mxu0 0.0
    %5334 = vmatpush1.msra.mxu0 0.0
    %5335 = vmatprep.subr.mxu0 0.0
    %5336 = vmatpush1.msra.mxu0 0.0
    %5337 = vmatprep.subr.mxu0 0.0
    %5338 = vmatpush1.msra.mxu0 0.0
    %5339 = vmatprep.subr.mxu0 0.0
    %5340 = vmatpush1.msra.mxu0 0.0
    %5341 = vmatprep.subr.mxu0 0.0
    %5342 = vmatpush1.msra.mxu0 0.0
    %5343 = vmatprep.subr.mxu0 0.0
    %5344 = vmatpush1.msra.mxu0 0.0
    %5345 = vmatprep.subr.mxu0 0.0
    %5346 = vmatpush1.msra.mxu0 0.0
    %5347 = vmatprep.subr.mxu0 0.0
    %5348 = vmatpush1.msra.mxu0 0.0
    %5349 = vmatprep.subr.mxu0 0.0
    %5350 = vmatpush1.msra.mxu0 0.0
    %5351 = vmatprep.subr.mxu0 0.0
    %5352 = vmatpush1.msra.mxu0 0.0
    %5353 = vmatprep.subr.mxu0 0.0
    %5354 = vmatpush1.msra.mxu0 0.0
    %5355 = vmatprep.subr.mxu0 0.0
    %5356 = vmatpush1.msra.mxu0 0.0
    %5357 = vmatprep.subr.mxu0 0.0
    %5358 = vmatpush1.msra.mxu0 0.0
    %5359 = vmatprep.subr.mxu0 0.0
    %5360 = vmatpush1.msra.mxu0 0.0
    %5361 = vmatprep.subr.mxu0 0.0
    %5362 = vmatpush1.msra.mxu0 0.0
    %5363 = vmatprep.subr.mxu0 0.0
    %5364 = vmatpush1.msra.mxu0 0.0
    %5365 = vmatprep.subr.mxu0 0.0
    %5366 = vmatpush1.msra.mxu0 0.0
    %5367 = vmatprep.subr.mxu0 0.0
    %5368 = vmatpush1.msra.mxu0 0.0
    %5369 = vmatprep.subr.mxu0 0.0
    %5370 = vmatpush1.msra.mxu0 0.0
    %5371 = vmatprep.subr.mxu0 0.0
    %5372 = vmatpush1.msra.mxu0 0.0
    %5373 = vmatprep.subr.mxu0 0.0
    %5374 = vmatpush1.msra.mxu0 0.0
    %5375 = vmatprep.subr.mxu0 0.0
    %5376 = vmatpush1.msra.mxu0 0.0
    %5377 = vmatprep.mubr.f32.mxu0 0.0
    %5378 = vmatmul.mubr.f32.gmra.mrb[0].mxu0 %v3538
    %v5379 = vpop.f32.mrb[0].mxu0
    %v5380 = vadd.f32 %v5312, %v5379
    %v5381 = vpop.f32.mrb[0].mxu0
    %5382 = vmatprep.mubr.f32.mxu0 0.0
    %5383 = vmatmul.mubr.f32.gmra.mrb[0].mxu0 %v3541
    %v5384 = vpop.f32.mrb[0].mxu0
    %v5385 = vadd.f32 %v5312, %v5384
    %v5386 = vpop.f32.mrb[0].mxu0
    %5387 = vdwg.mxu0
    %v5389 = vsel %vm523, %v5210, 0
    %v5392 = vsel %vm523, %v5215, 0
    %v5395 = vsel %vm523, %v5295, 0
    %v5398 = vsel %vm523, %v5300, 0
    %5400 = vmatprep.subr.mxu0 0.0
    %5401 = vmatpush1.xpose.msra.mxu0 %v5395
    %5402 = vmatprep.subr.mxu0 0.0
    %5403 = vmatpush1.xpose.msra.mxu0 %v5398
    %5404 = vmatprep.subr.mxu0 0.0
    %5405 = vmatpush1.xpose.msra.mxu0 0.0
    %5406 = vmatprep.subr.mxu0 0.0
    %5407 = vmatpush1.xpose.msra.mxu0 0.0
    %5408 = vmatprep.subr.mxu0 0.0
    %5409 = vmatpush1.xpose.msra.mxu0 0.0
    %5410 = vmatprep.subr.mxu0 0.0
    %5411 = vmatpush1.xpose.msra.mxu0 0.0
    %5412 = vmatprep.subr.mxu0 0.0
    %5413 = vmatpush1.xpose.msra.mxu0 0.0
    %5414 = vmatprep.subr.mxu0 0.0
    %5415 = vmatpush1.xpose.msra.mxu0 0.0
    %5416 = vmatprep.subr.mxu0 0.0
    %5417 = vmatpush1.xpose.msra.mxu0 0.0
    %5418 = vmatprep.subr.mxu0 0.0
    %5419 = vmatpush1.xpose.msra.mxu0 0.0
    %5420 = vmatprep.subr.mxu0 0.0
    %5421 = vmatpush1.xpose.msra.mxu0 0.0
    %5422 = vmatprep.subr.mxu0 0.0
    %5423 = vmatpush1.xpose.msra.mxu0 0.0
    %5424 = vmatprep.subr.mxu0 0.0
    %5425 = vmatpush1.xpose.msra.mxu0 0.0
    %5426 = vmatprep.subr.mxu0 0.0
    %5427 = vmatpush1.xpose.msra.mxu0 0.0
    %5428 = vmatprep.subr.mxu0 0.0
    %5429 = vmatpush1.xpose.msra.mxu0 0.0
    %5430 = vmatprep.subr.mxu0 0.0
    %5431 = vmatpush1.xpose.msra.mxu0 0.0
    %5432 = vmatprep.subr.mxu0 0.0
    %5433 = vmatpush1.xpose.msra.mxu0 0.0
    %5434 = vmatprep.subr.mxu0 0.0
    %5435 = vmatpush1.xpose.msra.mxu0 0.0
    %5436 = vmatprep.subr.mxu0 0.0
    %5437 = vmatpush1.xpose.msra.mxu0 0.0
    %5438 = vmatprep.subr.mxu0 0.0
    %5439 = vmatpush1.xpose.msra.mxu0 0.0
    %5440 = vmatprep.subr.mxu0 0.0
    %5441 = vmatpush1.xpose.msra.mxu0 0.0
    %5442 = vmatprep.subr.mxu0 0.0
    %5443 = vmatpush1.xpose.msra.mxu0 0.0
    %5444 = vmatprep.subr.mxu0 0.0
    %5445 = vmatpush1.xpose.msra.mxu0 0.0
    %5446 = vmatprep.subr.mxu0 0.0
    %5447 = vmatpush1.xpose.msra.mxu0 0.0
    %5448 = vmatprep.subr.mxu0 0.0
    %5449 = vmatpush1.xpose.msra.mxu0 0.0
    %5450 = vmatprep.subr.mxu0 0.0
    %5451 = vmatpush1.xpose.msra.mxu0 0.0
    %5452 = vmatprep.subr.mxu0 0.0
    %5453 = vmatpush1.xpose.msra.mxu0 0.0
    %5454 = vmatprep.subr.mxu0 0.0
    %5455 = vmatpush1.xpose.msra.mxu0 0.0
    %5456 = vmatprep.subr.mxu0 0.0
    %5457 = vmatpush1.xpose.msra.mxu0 0.0
    %5458 = vmatprep.subr.mxu0 0.0
    %5459 = vmatpush1.xpose.msra.mxu0 0.0
    %5460 = vmatprep.subr.mxu0 0.0
    %5461 = vmatpush1.xpose.msra.mxu0 0.0
    %5462 = vmatprep.subr.mxu0 0.0
    %5463 = vmatpush1.xpose.msra.mxu0 0.0
    %5464 = vmatprep.mubr.f32.mxu0 0.0
    %5465 = vmatmul.mubr.f32.gmra.mrb[0].mxu0 %v5389
    %v5466 = vpop.f32.mrb[0].mxu0
    %v5467 = vadd.f32 0.0, %v5466
    %v5468 = vpop.f32.mrb[0].mxu0
    %5469 = vmatprep.mubr.f32.mxu0 0.0
    %5470 = vmatmul.mubr.f32.gmra.mrb[0].mxu0 %v5392
    %v5471 = vpop.f32.mrb[0].mxu0
    %v5472 = vadd.f32 0.0, %v5471
    %v5473 = vpop.f32.mrb[0].mxu0
    %5474 = vdwg.mxu0
    %v5475 = vmul.f32 %v5467, 0.35355338
    %v5476 = vmul.f32 %v5472, 0.35355338
    %v5477 = vadd.f32 %v5475, %v3478
    %v5478 = vadd.f32 %v5476, %v3479
    %v5479 = vsel %vm3879, %v5477, -inf
    %5480 = vmax.xlane.f32.xlu0 %v5479
    %v5481 = vpop.xlane.xlu0 %5480
    %v5482 = vsel %vm3879, %v5478, -inf
    %5483 = vmax.xlane.f32.xlu0 %v5482
    %v5484 = vpop.xlane.xlu0 %5483
    %v5485 = vsub.f32 %v5477, %v5481
    %v5486 = vsub.f32 %v5478, %v5484
    %v5487 = vmul.f32 %v5485, 1.442695
    %v5488 = vpow.pop %v5487
    %v5489 = vmul.f32 %v5486, 1.442695
    %v5490 = vpow.pop %v5489
    %v5491 = vsel %vm3879, %v5488, 0.0
    %5492 = vadd.xlane.f32.xlu0 %v5491
    %v5493 = vpop.xlane.xlu0 %5492
    %v5494 = vsel %vm3879, %v5490, 0.0
    %5495 = vadd.xlane.f32.xlu0 %v5494
    %v5496 = vpop.xlane.xlu0 %5495
    %v5497 = vrcp.pop %v5493
    %v5498 = vrcp.pop %v5496
    %v5499 = vmul.f32 %v5488, %v5497
    %v5500 = vmul.f32 %v5490, %v5498
    %v5502 = vsel %vm3879, %v5499, 0
    %v5505 = vsel %vm3879, %v5500, 0
    %5507 = vmatprep.subr.mxu0 0.0
    %5508 = vmatpush1.msra.mxu0 %v5380
    %5509 = vmatprep.subr.mxu0 0.0
    %5510 = vmatpush1.msra.mxu0 %v5385
    %5511 = vmatprep.subr.mxu0 0.0
    %5512 = vmatpush1.msra.mxu0 0.0
    %5513 = vmatprep.subr.mxu0 0.0
    %5514 = vmatpush1.msra.mxu0 0.0
    %5515 = vmatprep.subr.mxu0 0.0
    %5516 = vmatpush1.msra.mxu0 0.0
    %5517 = vmatprep.subr.mxu0 0.0
    %5518 = vmatpush1.msra.mxu0 0.0
    %5519 = vmatprep.subr.mxu0 0.0
    %5520 = vmatpush1.msra.mxu0 0.0
    %5521 = vmatprep.subr.mxu0 0.0
    %5522 = vmatpush1.msra.mxu0 0.0
    %5523 = vmatprep.subr.mxu0 0.0
    %5524 = vmatpush1.msra.mxu0 0.0
    %5525 = vmatprep.subr.mxu0 0.0
    %5526 = vmatpush1.msra.mxu0 0.0
    %5527 = vmatprep.subr.mxu0 0.0
    %5528 = vmatpush1.msra.mxu0 0.0
    %5529 = vmatprep.subr.mxu0 0.0
    %5530 = vmatpush1.msra.mxu0 0.0
    %5531 = vmatprep.subr.mxu0 0.0
    %5532 = vmatpush1.msra.mxu0 0.0
    %5533 = vmatprep.subr.mxu0 0.0
    %5534 = vmatpush1.msra.mxu0 0.0
    %5535 = vmatprep.subr.mxu0 0.0
    %5536 = vmatpush1.msra.mxu0 0.0
    %5537 = vmatprep.subr.mxu0 0.0
    %5538 = vmatpush1.msra.mxu0 0.0
    %5539 = vmatprep.subr.mxu0 0.0
    %5540 = vmatpush1.msra.mxu0 0.0
    %5541 = vmatprep.subr.mxu0 0.0
    %5542 = vmatpush1.msra.mxu0 0.0
    %5543 = vmatprep.subr.mxu0 0.0
    %5544 = vmatpush1.msra.mxu0 0.0
    %5545 = vmatprep.subr.mxu0 0.0
    %5546 = vmatpush1.msra.mxu0 0.0
    %5547 = vmatprep.subr.mxu0 0.0
    %5548 = vmatpush1.msra.mxu0 0.0
    %5549 = vmatprep.subr.mxu0 0.0
    %5550 = vmatpush1.msra.mxu0 0.0
    %5551 = vmatprep.subr.mxu0 0.0
    %5552 = vmatpush1.msra.mxu0 0.0
    %5553 = vmatprep.subr.mxu0 0.0
    %5554 = vmatpush1.msra.mxu0 0.0
    %5555 = vmatprep.subr.mxu0 0.0
    %5556 = vmatpush1.msra.mxu0 0.0
    %5557 = vmatprep.subr.mxu0 0.0
    %5558 = vmatpush1.msra.mxu0 0.0
    %5559 = vmatprep.subr.mxu0 0.0
    %5560 = vmatpush1.msra.mxu0 0.0
    %5561 = vmatprep.subr.mxu0 0.0
    %5562 = vmatpush1.msra.mxu0 0.0
    %5563 = vmatprep.subr.mxu0 0.0
    %5564 = vmatpush1.msra.mxu0 0.0
    %5565 = vmatprep.subr.mxu0 0.0
    %5566 = vmatpush1.msra.mxu0 0.0
    %5567 = vmatprep.subr.mxu0 0.0
    %5568 = vmatpush1.msra.mxu0 0.0
    %5569 = vmatprep.subr.mxu0 0.0
    %5570 = vmatpush1.msra.mxu0 0.0
    %5571 = vmatprep.mubr.f32.mxu0 0.0
    %5572 = vmatmul.mubr.f32.gmra.mrb[0].mxu0 %v5502
    %v5573 = vpop.f32.mrb[0].mxu0
    %v5574 = vadd.f32 0.0, %v5573
    %v5575 = vpop.f32.mrb[0].mxu0
    %5576 = vmatprep.mubr.f32.mxu0 0.0
    %5577 = vmatmul.mubr.f32.gmra.mrb[0].mxu0 %v5505
    %v5578 = vpop.f32.mrb[0].mxu0
    %v5579 = vadd.f32 0.0, %v5578
    %v5580 = vpop.f32.mrb[0].mxu0
    %5581 = vdwg.mxu0
    %v5582 = vld [vmem:[%s2 + $0x1f8] sm:$0xff]
    %v5584 = vsel %vm523, %v5574, 0
    %v5587 = vsel %vm523, %v5579, 0
    %5589 = vmatprep.subr.mxu0 0.0
    %5590 = vmatpush1.msra.mxu0 %v5582
    %5591 = vmatprep.subr.mxu0 0.0
    %5592 = vmatpush1.msra.mxu0 0.0
    %5593 = vmatprep.subr.mxu0 0.0
    %5594 = vmatpush1.msra.mxu0 0.0
    %5595 = vmatprep.subr.mxu0 0.0
    %5596 = vmatpush1.msra.mxu0 0.0
    %5597 = vmatprep.subr.mxu0 0.0
    %5598 = vmatpush1.msra.mxu0 0.0
    %5599 = vmatprep.subr.mxu0 0.0
    %5600 = vmatpush1.msra.mxu0 0.0
    %5601 = vmatprep.subr.mxu0 0.0
    %5602 = vmatpush1.msra.mxu0 0.0
    %5603 = vmatprep.subr.mxu0 0.0
    %5604 = vmatpush1.msra.mxu0 0.0
    %5605 = vmatprep.subr.mxu0 0.0
    %5606 = vmatpush1.msra.mxu0 0.0
    %5607 = vmatprep.subr.mxu0 0.0
    %5608 = vmatpush1.msra.mxu0 0.0
    %5609 = vmatprep.subr.mxu0 0.0
    %5610 = vmatpush1.msra.mxu0 0.0
    %5611 = vmatprep.subr.mxu0 0.0
    %5612 = vmatpush1.msra.mxu0 0.0
    %5613 = vmatprep.subr.mxu0 0.0
    %5614 = vmatpush1.msra.mxu0 0.0
    %5615 = vmatprep.subr.mxu0 0.0
    %5616 = vmatpush1.msra.mxu0 0.0
    %5617 = vmatprep.subr.mxu0 0.0
    %5618 = vmatpush1.msra.mxu0 0.0
    %5619 = vmatprep.subr.mxu0 0.0
    %5620 = vmatpush1.msra.mxu0 0.0
    %5621 = vmatprep.subr.mxu0 0.0
    %5622 = vmatpush1.msra.mxu0 0.0
    %5623 = vmatprep.subr.mxu0 0.0
    %5624 = vmatpush1.msra.mxu0 0.0
    %5625 = vmatprep.subr.mxu0 0.0
    %5626 = vmatpush1.msra.mxu0 0.0
    %5627 = vmatprep.subr.mxu0 0.0
    %5628 = vmatpush1.msra.mxu0 0.0
    %5629 = vmatprep.subr.mxu0 0.0
    %5630 = vmatpush1.msra.mxu0 0.0
    %5631 = vmatprep.subr.mxu0 0.0
    %5632 = vmatpush1.msra.mxu0 0.0
    %5633 = vmatprep.subr.mxu0 0.0
    %5634 = vmatpush1.msra.mxu0 0.0
    %5635 = vmatprep.subr.mxu0 0.0
    %5636 = vmatpush1.msra.mxu0 0.0
    %5637 = vmatprep.subr.mxu0 0.0
    %5638 = vmatpush1.msra.mxu0 0.0
    %5639 = vmatprep.subr.mxu0 0.0
    %5640 = vmatpush1.msra.mxu0 0.0
    %5641 = vmatprep.subr.mxu0 0.0
    %5642 = vmatpush1.msra.mxu0 0.0
    %5643 = vmatprep.subr.mxu0 0.0
    %5644 = vmatpush1.msra.mxu0 0.0
    %5645 = vmatprep.subr.mxu0 0.0
    %5646 = vmatpush1.msra.mxu0 0.0
    %5647 = vmatprep.subr.mxu0 0.0
    %5648 = vmatpush1.msra.mxu0 0.0
    %5649 = vmatprep.subr.mxu0 0.0
    %5650 = vmatpush1.msra.mxu0 0.0
    %5651 = vmatprep.subr.mxu0 0.0
    %5652 = vmatpush1.msra.mxu0 0.0
    %5653 = vmatprep.mubr.f32.mxu0 0.0
    %5654 = vmatmul.mubr.f32.gmra.mrb[0].mxu0 %v5584
    %v5655 = vpop.f32.mrb[0].mxu0
    %v5656 = vadd.f32 0.0, %v5655
    %v5657 = vpop.f32.mrb[0].mxu0
    %5658 = vmatprep.mubr.f32.mxu0 0.0
    %5659 = vmatmul.mubr.f32.gmra.mrb[0].mxu0 %v5587
    %v5660 = vpop.f32.mrb[0].mxu0
    %v5661 = vadd.f32 0.0, %v5660
    %v5662 = vpop.f32.mrb[0].mxu0
    %5663 = vdwg.mxu0
    %v5664 = vadd.f32 %v5131, %v5656
    %v5665 = vadd.f32 %v5132, %v5661
    %v5666 = vld [vmem:[%s2 + $0x208] sm:$0x1]
    %v5667 = vld [vmem:[%s2 + $0x210] sm:$0x1]
    %v5668 = vsel %vm148, %v5664, 0.0
    %5669 = vadd.xlane.f32.xlu0 %v5668
    %v5670 = vpop.xlane.xlu0 %5669
    %v5671 = vsel %vm148, %v5665, 0.0
    %5672 = vadd.xlane.f32.xlu0 %v5671
    %v5673 = vpop.xlane.xlu0 %5672
    %v5674 = vmul.f32 %v5670, %v161
    %v5675 = vmul.f32 %v5673, %v161
    %v5676 = vsub.f32 %v5664, %v5674
    %v5677 = vsub.f32 %v5665, %v5675
    %v5678 = vmul.f32 %v5676, %v5676
    %v5679 = vmul.f32 %v5677, %v5677
    %v5680 = vsel %vm148, %v5678, 0.0
    %5681 = vadd.xlane.f32.xlu0 %v5680
    %v5682 = vpop.xlane.xlu0 %5681
    %v5683 = vsel %vm148, %v5679, 0.0
    %5684 = vadd.xlane.f32.xlu0 %v5683
    %v5685 = vpop.xlane.xlu0 %5684
    %v5686 = vmul.f32 %v5682, %v161
    %v5687 = vmul.f32 %v5685, %v161
    %v5688 = vadd.f32 %v5686, 1e-05
    %v5689 = vadd.f32 %v5687, 1e-05
    %v5690 = vrsqrt.pop %v5688
    %v5691 = vrsqrt.pop %v5689
    %v5692 = vmul.f32 %v5676, %v5690
    %v5693 = vmul.f32 %v5677, %v5691
    %v5694 = vlaneseq
    %v5695 = vshrl.u32 %v5694, 7
    %v5696 = vsub.s32 0, %v5695
    %v5697 = vrot.slane %v5666, %v5696
    %v5698 = vmul.f32 %v5692, %v5697
    %v5699 = vmul.f32 %v5693, %v5697
    %v5700 = vlaneseq
    %v5701 = vshrl.u32 %v5700, 7
    %v5702 = vsub.s32 0, %v5701
    %v5703 = vrot.slane %v5667, %v5702
    %v5704 = vadd.f32 %v5698, %v5703
    %v5705 = vadd.f32 %v5699, %v5703
    %v5706 = vld [vmem:[%s3 + $0x28] sm:$0xff]
    %v5707 = vld [vmem:[%s3 + $0x30] sm:$0xff]
    %v5708 = vld [vmem:[%s3 + $0x38] sm:$0xff]
    %v5709 = vld [vmem:[%s3 + $0x40] sm:$0xff]
    %v5710 = vld [vmem:[%s3 + $0x48] sm:$0x1]
    %v5711 = vlaneseq
    %v5712 = vshrl.u32 %v5711, 7
    %v5713 = vsub.s32 0, %v5712
    %v5714 = vrot.slane %v5710, %v5713
    %v5716 = vsel %vm148, %v5704, 0
    %v5719 = vsel %vm148, %v5705, 0
    %5721 = vmatprep.subr.mxu0 0.0
    %5722 = vmatpush1.msra.mxu0 %v5706
    %5723 = vmatprep.subr.mxu0 0.0
    %5724 = vmatpush1.msra.mxu0 %v5707
    %5725 = vmatprep.subr.mxu0 0.0
    %5726 = vmatpush1.msra.mxu0 %v5708
    %5727 = vmatprep.subr.mxu0 0.0
    %5728 = vmatpush1.msra.mxu0 %v5709
    %5729 = vmatprep.subr.mxu0 0.0
    %5730 = vmatpush1.msra.mxu0 0.0
    %5731 = vmatprep.subr.mxu0 0.0
    %5732 = vmatpush1.msra.mxu0 0.0
    %5733 = vmatprep.subr.mxu0 0.0
    %5734 = vmatpush1.msra.mxu0 0.0
    %5735 = vmatprep.subr.mxu0 0.0
    %5736 = vmatpush1.msra.mxu0 0.0
    %5737 = vmatprep.subr.mxu0 0.0
    %5738 = vmatpush1.msra.mxu0 0.0
    %5739 = vmatprep.subr.mxu0 0.0
    %5740 = vmatpush1.msra.mxu0 0.0
    %5741 = vmatprep.subr.mxu0 0.0
    %5742 = vmatpush1.msra.mxu0 0.0
    %5743 = vmatprep.subr.mxu0 0.0
    %5744 = vmatpush1.msra.mxu0 0.0
    %5745 = vmatprep.subr.mxu0 0.0
    %5746 = vmatpush1.msra.mxu0 0.0
    %5747 = vmatprep.subr.mxu0 0.0
    %5748 = vmatpush1.msra.mxu0 0.0
    %5749 = vmatprep.subr.mxu0 0.0
    %5750 = vmatpush1.msra.mxu0 0.0
    %5751 = vmatprep.subr.mxu0 0.0
    %5752 = vmatpush1.msra.mxu0 0.0
    %5753 = vmatprep.subr.mxu0 0.0
    %5754 = vmatpush1.msra.mxu0 0.0
    %5755 = vmatprep.subr.mxu0 0.0
    %5756 = vmatpush1.msra.mxu0 0.0
    %5757 = vmatprep.subr.mxu0 0.0
    %5758 = vmatpush1.msra.mxu0 0.0
    %5759 = vmatprep.subr.mxu0 0.0
    %5760 = vmatpush1.msra.mxu0 0.0
    %5761 = vmatprep.subr.mxu0 0.0
    %5762 = vmatpush1.msra.mxu0 0.0
    %5763 = vmatprep.subr.mxu0 0.0
    %5764 = vmatpush1.msra.mxu0 0.0
    %5765 = vmatprep.subr.mxu0 0.0
    %5766 = vmatpush1.msra.mxu0 0.0
    %5767 = vmatprep.subr.mxu0 0.0
    %5768 = vmatpush1.msra.mxu0 0.0
    %5769 = vmatprep.subr.mxu0 0.0
    %5770 = vmatpush1.msra.mxu0 0.0
    %5771 = vmatprep.subr.mxu0 0.0
    %5772 = vmatpush1.msra.mxu0 0.0
    %5773 = vmatprep.subr.mxu0 0.0
    %5774 = vmatpush1.msra.mxu0 0.0
    %5775 = vmatprep.subr.mxu0 0.0
    %5776 = vmatpush1.msra.mxu0 0.0
    %5777 = vmatprep.subr.mxu0 0.0
    %5778 = vmatpush1.msra.mxu0 0.0
    %5779 = vmatprep.subr.mxu0 0.0
    %5780 = vmatpush1.msra.mxu0 0.0
    %5781 = vmatprep.subr.mxu0 0.0
    %5782 = vmatpush1.msra.mxu0 0.0
    %5783 = vmatprep.subr.mxu0 0.0
    %5784 = vmatpush1.msra.mxu0 0.0
    %5785 = vmatprep.mubr.f32.mxu0 0.0
    %5786 = vmatmul.mubr.f32.gmra.mrb[0].mxu0 %v5716
    %v5787 = vpop.f32.mrb[0].mxu0
    %v5788 = vadd.f32 %v5714, %v5787
    %v5789 = vpop.f32.mrb[0].mxu0
    %5790 = vmatprep.mubr.f32.mxu0 0.0
    %5791 = vmatmul.mubr.f32.gmra.mrb[0].mxu0 %v5719
    %v5792 = vpop.f32.mrb[0].mxu0
    %v5793 = vadd.f32 %v5714, %v5792
    %v5794 = vpop.f32.mrb[0].mxu0
    %5795 = vdwg.mxu0
    %v5796 = vmul.f32 %v5788, 1.702
    %v5797 = vmul.f32 %v5793, 1.702
    %v5798 = vxor.u32 %v5796, 2147483648
    %v5799 = vxor.u32 %v5797, 2147483648
    %v5800 = vmul.f32 %v5798, 1.442695
    %v5801 = vpow.pop %v5800
    %v5802 = vmul.f32 %v5799, 1.442695
    %v5803 = vpow.pop %v5802
    %v5804 = vadd.f32 %v5801, 1.0
    %v5805 = vadd.f32 %v5803, 1.0
    %v5806 = vrcp.pop %v5804
    %v5807 = vmul.f32 1.0, %v5806
    %v5808 = vrcp.pop %v5805
    %v5809 = vmul.f32 1.0, %v5808
    %v5810 = vmul.f32 %v5788, %v5807
    %v5811 = vmul.f32 %v5793, %v5809
    %v5812 = vld [vmem:[%s2 + $0x218] sm:$0xff]
    %v5813 = vld [vmem:[%s2 + $0x220] sm:$0xff]
    %v5814 = vld [vmem:[%s2 + $0x228] sm:$0xff]
    %v5815 = vld [vmem:[%s2 + $0x230] sm:$0xff]
    %v5816 = vld [vmem:[%s2 + $0x238] sm:$0xff]
    %v5817 = vld [vmem:[%s2 + $0x240] sm:$0xff]
    %v5818 = vld [vmem:[%s2 + $0x248] sm:$0xff]
    %v5819 = vld [vmem:[%s2 + $0x250] sm:$0xff]
    %v5820 = vld [vmem:[%s2 + $0x258] sm:$0xff]
    %v5821 = vld [vmem:[%s2 + $0x260] sm:$0xff]
    %v5822 = vld [vmem:[%s2 + $0x268] sm:$0xff]
    %v5823 = vld [vmem:[%s2 + $0x270] sm:$0xff]
    %v5824 = vld [vmem:[%s2 + $0x278] sm:$0xff]
    %v5825 = vld [vmem:[%s2 + $0x280] sm:$0xff]
    %v5826 = vld [vmem:[%s2 + $0x288] sm:$0xff]
    %v5827 = vld [vmem:[%s2 + $0x290] sm:$0xff]
    %5828 = vmatprep.subr.mxu0 0.0
    %5829 = vmatpush1.msra.mxu0 %v5812
    %5830 = vmatprep.subr.mxu0 0.0
    %5831 = vmatpush1.msra.mxu0 %v5813
    %5832 = vmatprep.subr.mxu0 0.0
    %5833 = vmatpush1.msra.mxu0 %v5814
    %5834 = vmatprep.subr.mxu0 0.0
    %5835 = vmatpush1.msra.mxu0 %v5815
    %5836 = vmatprep.subr.mxu0 0.0
    %5837 = vmatpush1.msra.mxu0 %v5816
    %5838 = vmatprep.subr.mxu0 0.0
    %5839 = vmatpush1.msra.mxu0 %v5817
    %5840 = vmatprep.subr.mxu0 0.0
    %5841 = vmatpush1.msra.mxu0 %v5818
    %5842 = vmatprep.subr.mxu0 0.0
    %5843 = vmatpush1.msra.mxu0 %v5819
    %5844 = vmatprep.subr.mxu0 0.0
    %5845 = vmatpush1.msra.mxu0 %v5820
    %5846 = vmatprep.subr.mxu0 0.0
    %5847 = vmatpush1.msra.mxu0 %v5821
    %5848 = vmatprep.subr.mxu0 0.0
    %5849 = vmatpush1.msra.mxu0 %v5822
    %5850 = vmatprep.subr.mxu0 0.0
    %5851 = vmatpush1.msra.mxu0 %v5823
    %5852 = vmatprep.subr.mxu0 0.0
    %5853 = vmatpush1.msra.mxu0 %v5824
    %5854 = vmatprep.subr.mxu0 0.0
    %5855 = vmatpush1.msra.mxu0 %v5825
    %5856 = vmatprep.subr.mxu0 0.0
    %5857 = vmatpush1.msra.mxu0 %v5826
    %5858 = vmatprep.subr.mxu0 0.0
    %5859 = vmatpush1.msra.mxu0 %v5827
    %5860 = vmatprep.subr.mxu0 0.0
    %5861 = vmatpush1.msra.mxu0 0.0
    %5862 = vmatprep.subr.mxu0 0.0
    %5863 = vmatpush1.msra.mxu0 0.0
    %5864 = vmatprep.subr.mxu0 0.0
    %5865 = vmatpush1.msra.mxu0 0.0
    %5866 = vmatprep.subr.mxu0 0.0
    %5867 = vmatpush1.msra.mxu0 0.0
    %5868 = vmatprep.subr.mxu0 0.0
    %5869 = vmatpush1.msra.mxu0 0.0
    %5870 = vmatprep.subr.mxu0 0.0
    %5871 = vmatpush1.msra.mxu0 0.0
    %5872 = vmatprep.subr.mxu0 0.0
    %5873 = vmatpush1.msra.mxu0 0.0
    %5874 = vmatprep.subr.mxu0 0.0
    %5875 = vmatpush1.msra.mxu0 0.0
    %5876 = vmatprep.subr.mxu0 0.0
    %5877 = vmatpush1.msra.mxu0 0.0
    %5878 = vmatprep.subr.mxu0 0.0
    %5879 = vmatpush1.msra.mxu0 0.0
    %5880 = vmatprep.subr.mxu0 0.0
    %5881 = vmatpush1.msra.mxu0 0.0
    %5882 = vmatprep.subr.mxu0 0.0
    %5883 = vmatpush1.msra.mxu0 0.0
    %5884 = vmatprep.subr.mxu0 0.0
    %5885 = vmatpush1.msra.mxu0 0.0
    %5886 = vmatprep.subr.mxu0 0.0
    %5887 = vmatpush1.msra.mxu0 0.0
    %5888 = vmatprep.subr.mxu0 0.0
    %5889 = vmatpush1.msra.mxu0 0.0
    %5890 = vmatprep.subr.mxu0 0.0
    %5891 = vmatpush1.msra.mxu0 0.0
    %5892 = vmatprep.mubr.f32.mxu0 0.0
    %5893 = vmatmul.mubr.f32.gmra.mrb[0].mxu0 %v5810
    %v5894 = vpop.f32.mrb[0].mxu0
    %v5895 = vadd.f32 0.0, %v5894
    %v5896 = vpop.f32.mrb[0].mxu0
    %5897 = vmatprep.mubr.f32.mxu0 0.0
    %5898 = vmatmul.mubr.f32.gmra.mrb[0].mxu0 %v5811
    %v5899 = vpop.f32.mrb[0].mxu0
    %v5900 = vadd.f32 0.0, %v5899
    %v5901 = vpop.f32.mrb[0].mxu0
    %5902 = vdwg.mxu0
    %v5903 = vadd.f32 %v5664, %v5895
    %v5904 = vadd.f32 %v5665, %v5900
    %v5905 = vld [vmem:[%s2 + $0x298] sm:$0x1]
    %v5906 = vlaneseq
    %v5907 = vshrl.u32 %v5906, 7
    %v5908 = vsub.s32 0, %v5907
    %v5909 = vrot.slane %v5905, %v5908
    %v5910 = vadd.f32 %v5903, %v5909
    %v5911 = vadd.f32 %v5904, %v5909
    %v5912 = vld [vmem:[%s2 + $0x2a0] sm:$0x1]
    %v5913 = vld [vmem:[%s2 + $0x2a8] sm:$0x1]
    %v5914 = vsel %vm148, %v5910, 0.0
    %5915 = vadd.xlane.f32.xlu0 %v5914
    %v5916 = vpop.xlane.xlu0 %5915
    %v5917 = vsel %vm148, %v5911, 0.0
    %5918 = vadd.xlane.f32.xlu0 %v5917
    %v5919 = vpop.xlane.xlu0 %5918
    %v5920 = vmul.f32 %v5916, %v161
    %v5921 = vmul.f32 %v5919, %v161
    %v5922 = vsub.f32 %v5910, %v5920
    %v5923 = vsub.f32 %v5911, %v5921
    %v5924 = vmul.f32 %v5922, %v5922
    %v5925 = vmul.f32 %v5923, %v5923
    %v5926 = vsel %vm148, %v5924, 0.0
    %5927 = vadd.xlane.f32.xlu0 %v5926
    %v5928 = vpop.xlane.xlu0 %5927
    %v5929 = vsel %vm148, %v5925, 0.0
    %5930 = vadd.xlane.f32.xlu0 %v5929
    %v5931 = vpop.xlane.xlu0 %5930
    %v5932 = vmul.f32 %v5928, %v161
    %v5933 = vmul.f32 %v5931, %v161
    %v5934 = vadd.f32 %v5932, 1e-05
    %v5935 = vadd.f32 %v5933, 1e-05
    %v5936 = vrsqrt.pop %v5934
    %v5937 = vrsqrt.pop %v5935
    %v5938 = vmul.f32 %v5922, %v5936
    %v5939 = vmul.f32 %v5923, %v5937
    %v5940 = vlaneseq
    %v5941 = vshrl.u32 %v5940, 7
    %v5942 = vsub.s32 0, %v5941
    %v5943 = vrot.slane %v5912, %v5942
    %v5944 = vmul.f32 %v5938, %v5943
    %v5945 = vmul.f32 %v5939, %v5943
    %v5946 = vlaneseq
    %v5947 = vshrl.u32 %v5946, 7
    %v5948 = vsub.s32 0, %v5947
    %v5949 = vrot.slane %v5913, %v5948
    %v5950 = vadd.f32 %v5944, %v5949
    %v5951 = vadd.f32 %v5945, %v5949
    %v5952 = vld [vmem:[%s2 + $0x2e0] sm:$0x3]
    %v5954 = vsel %vm3879, %v5952, 0
    %5956 = vmatprep.subr.mxu0 0.0
    %5957 = vmatpush1.msra.mxu0 %v5950
    %5958 = vmatprep.subr.mxu0 0.0
    %5959 = vmatpush1.msra.mxu0 %v5951
    %5960 = vmatprep.subr.mxu0 0.0
    %5961 = vmatpush1.msra.mxu0 0.0
    %5962 = vmatprep.subr.mxu0 0.0
    %5963 = vmatpush1.msra.mxu0 0.0
    %5964 = vmatprep.subr.mxu0 0.0
    %5965 = vmatpush1.msra.mxu0 0.0
    %5966 = vmatprep.subr.mxu0 0.0
    %5967 = vmatpush1.msra.mxu0 0.0
    %5968 = vmatprep.subr.mxu0 0.0
    %5969 = vmatpush1.msra.mxu0 0.0
    %5970 = vmatprep.subr.mxu0 0.0
    %5971 = vmatpush1.msra.mxu0 0.0
    %5972 = vmatprep.subr.mxu0 0.0
    %5973 = vmatpush1.msra.mxu0 0.0
    %5974 = vmatprep.subr.mxu0 0.0
    %5975 = vmatpush1.msra.mxu0 0.0
    %5976 = vmatprep.subr.mxu0 0.0
    %5977 = vmatpush1.msra.mxu0 0.0
    %5978 = vmatprep.subr.mxu0 0.0
    %5979 = vmatpush1.msra.mxu0 0.0
    %5980 = vmatprep.subr.mxu0 0.0
    %5981 = vmatpush1.msra.mxu0 0.0
    %5982 = vmatprep.subr.mxu0 0.0
    %5983 = vmatpush1.msra.mxu0 0.0
    %5984 = vmatprep.subr.mxu0 0.0
    %5985 = vmatpush1.msra.mxu0 0.0
    %5986 = vmatprep.subr.mxu0 0.0
    %5987 = vmatpush1.msra.mxu0 0.0
    %5988 = vmatprep.subr.mxu0 0.0
    %5989 = vmatpush1.msra.mxu0 0.0
    %5990 = vmatprep.subr.mxu0 0.0
    %5991 = vmatpush1.msra.mxu0 0.0
    %5992 = vmatprep.subr.mxu0 0.0
    %5993 = vmatpush1.msra.mxu0 0.0
    %5994 = vmatprep.subr.mxu0 0.0
    %5995 = vmatpush1.msra.mxu0 0.0
    %5996 = vmatprep.subr.mxu0 0.0
    %5997 = vmatpush1.msra.mxu0 0.0
    %5998 = vmatprep.subr.mxu0 0.0
    %5999 = vmatpush1.msra.mxu0 0.0
    %6000 = vmatprep.subr.mxu0 0.0
    %6001 = vmatpush1.msra.mxu0 0.0
    %6002 = vmatprep.subr.mxu0 0.0
    %6003 = vmatpush1.msra.mxu0 0.0
    %6004 = vmatprep.subr.mxu0 0.0
    %6005 = vmatpush1.msra.mxu0 0.0
    %6006 = vmatprep.subr.mxu0 0.0
    %6007 = vmatpush1.msra.mxu0 0.0
    %6008 = vmatprep.subr.mxu0 0.0
    %6009 = vmatpush1.msra.mxu0 0.0
    %6010 = vmatprep.subr.mxu0 0.0
    %6011 = vmatpush1.msra.mxu0 0.0
    %6012 = vmatprep.subr.mxu0 0.0
    %6013 = vmatpush1.msra.mxu0 0.0
    %6014 = vmatprep.subr.mxu0 0.0
    %6015 = vmatpush1.msra.mxu0 0.0
    %6016 = vmatprep.subr.mxu0 0.0
    %6017 = vmatpush1.msra.mxu0 0.0
    %6018 = vmatprep.subr.mxu0 0.0
    %6019 = vmatpush1.msra.mxu0 0.0
    %6020 = vmatprep.mubr.f32.mxu0 0.0
    %6021 = vmatmul.mubr.f32.gmra.mrb[0].mxu0 %v5954
    %v6022 = vpop.f32.mrb[0].mxu0
    %v6023 = vadd.f32 0.0, %v6022
    %v6024 = vpop.f32.mrb[0].mxu0
    %6025 = vdwg.mxu0
    %v6026 = vld [vmem:[%s2 + $0x2b0] sm:$0xff]
    %v6027 = vld [vmem:[%s2 + $0x2b8] sm:$0xff]
    %v6028 = vld [vmem:[%s2 + $0x2c0] sm:$0xff]
    %v6029 = vld [vmem:[%s2 + $0x2c8] sm:$0xff]
    %v6031 = vsel %vm148, %v6023, 0
    %6033 = vmatprep.subr.mxu0 0.0
    %6034 = vmatpush1.msra.mxu0 %v6026
    %6035 = vmatprep.subr.mxu0 0.0
    %6036 = vmatpush1.msra.mxu0 %v6027
    %6037 = vmatprep.subr.mxu0 0.0
    %6038 = vmatpush1.msra.mxu0 %v6028
    %6039 = vmatprep.subr.mxu0 0.0
    %6040 = vmatpush1.msra.mxu0 %v6029
    %6041 = vmatprep.subr.mxu0 0.0
    %6042 = vmatpush1.msra.mxu0 0.0
    %6043 = vmatprep.subr.mxu0 0.0
    %6044 = vmatpush1.msra.mxu0 0.0
    %6045 = vmatprep.subr.mxu0 0.0
    %6046 = vmatpush1.msra.mxu0 0.0
    %6047 = vmatprep.subr.mxu0 0.0
    %6048 = vmatpush1.msra.mxu0 0.0
    %6049 = vmatprep.subr.mxu0 0.0
    %6050 = vmatpush1.msra.mxu0 0.0
    %6051 = vmatprep.subr.mxu0 0.0
    %6052 = vmatpush1.msra.mxu0 0.0
    %6053 = vmatprep.subr.mxu0 0.0
    %6054 = vmatpush1.msra.mxu0 0.0
    %6055 = vmatprep.subr.mxu0 0.0
    %6056 = vmatpush1.msra.mxu0 0.0
    %6057 = vmatprep.subr.mxu0 0.0
    %6058 = vmatpush1.msra.mxu0 0.0
    %6059 = vmatprep.subr.mxu0 0.0
    %6060 = vmatpush1.msra.mxu0 0.0
    %6061 = vmatprep.subr.mxu0 0.0
    %6062 = vmatpush1.msra.mxu0 0.0
    %6063 = vmatprep.subr.mxu0 0.0
    %6064 = vmatpush1.msra.mxu0 0.0
    %6065 = vmatprep.subr.mxu0 0.0
    %6066 = vmatpush1.msra.mxu0 0.0
    %6067 = vmatprep.subr.mxu0 0.0
    %6068 = vmatpush1.msra.mxu0 0.0
    %6069 = vmatprep.subr.mxu0 0.0
    %6070 = vmatpush1.msra.mxu0 0.0
    %6071 = vmatprep.subr.mxu0 0.0
    %6072 = vmatpush1.msra.mxu0 0.0
    %6073 = vmatprep.subr.mxu0 0.0
    %6074 = vmatpush1.msra.mxu0 0.0
    %6075 = vmatprep.subr.mxu0 0.0
    %6076 = vmatpush1.msra.mxu0 0.0
    %6077 = vmatprep.subr.mxu0 0.0
    %6078 = vmatpush1.msra.mxu0 0.0
    %6079 = vmatprep.subr.mxu0 0.0
    %6080 = vmatpush1.msra.mxu0 0.0
    %6081 = vmatprep.subr.mxu0 0.0
    %6082 = vmatpush1.msra.mxu0 0.0
    %6083 = vmatprep.subr.mxu0 0.0
    %6084 = vmatpush1.msra.mxu0 0.0
    %6085 = vmatprep.subr.mxu0 0.0
    %6086 = vmatpush1.msra.mxu0 0.0
    %6087 = vmatprep.subr.mxu0 0.0
    %6088 = vmatpush1.msra.mxu0 0.0
    %6089 = vmatprep.subr.mxu0 0.0
    %6090 = vmatpush1.msra.mxu0 0.0
    %6091 = vmatprep.subr.mxu0 0.0
    %6092 = vmatpush1.msra.mxu0 0.0
    %6093 = vmatprep.subr.mxu0 0.0
    %6094 = vmatpush1.msra.mxu0 0.0
    %6095 = vmatprep.subr.mxu0 0.0
    %6096 = vmatpush1.msra.mxu0 0.0
    %6097 = vmatprep.mubr.f32.mxu0 0.0
    %6098 = vmatmul.mubr.f32.gmra.mrb[0].mxu0 %v6031
    %v6099 = vpop.f32.mrb[0].mxu0
    %v6100 = vadd.f32 0.0, %v6099
    %v6101 = vpop.f32.mrb[0].mxu0
    %6102 = vdwg.mxu0
    %v6103 = vmul.f32 %v6100, %v6100
    %v6104 = vsel %vm3363, %v6103, 0.0
    %6105 = vadd.xlane.f32.xlu0 %v6104
    %v6106 = vpop.xlane.xlu0 %6105
    %v6107 = vadd.f32 %v6106, 1e-12
    %v6108 = vrsqrt.pop %v6107
    %v6109 = vmul.f32 %v6100, %v6108
    %v6110 = vld [vmem:[%s2 + $0x2e8] sm:$0xff]
    %v6111 = vld [vmem:[%s2 + $0x2f0] sm:$0xff]
    %v6112 = vld [vmem:[%s2 + $0x2f8] sm:$0xff]
    %v6113 = vld [vmem:[%s2 + $0x300] sm:$0xff]
    %v6114 = vld [vmem:[%s2 + $0x308] sm:$0xff]
    %v6115 = vld [vmem:[%s2 + $0x310] sm:$0xff]
    %v6116 = vld [vmem:[%s2 + $0x318] sm:$0xff]
    %v6117 = vld [vmem:[%s2 + $0x320] sm:$0xff]
    %v6119 = vsel %vm148, %v3369, 0
    %6121 = vmatprep.subr.mxu0 0.0
    %6122 = vmatpush1.msra.mxu0 %v6114
    %6123 = vmatprep.subr.mxu0 0.0
    %6124 = vmatpush1.msra.mxu0 %v6115
    %6125 = vmatprep.subr.mxu0 0.0
    %6126 = vmatpush1.msra.mxu0 %v6116
    %6127 = vmatprep.subr.mxu0 0.0
    %6128 = vmatpush1.msra.mxu0 %v6117
    %6129 = vmatprep.subr.mxu0 0.0
    %6130 = vmatpush1.msra.mxu0 0.0
    %6131 = vmatprep.subr.mxu0 0.0
    %6132 = vmatpush1.msra.mxu0 0.0
    %6133 = vmatprep.subr.mxu0 0.0
    %6134 = vmatpush1.msra.mxu0 0.0
    %6135 = vmatprep.subr.mxu0 0.0
    %6136 = vmatpush1.msra.mxu0 0.0
    %6137 = vmatprep.subr.mxu0 0.0
    %6138 = vmatpush1.msra.mxu0 0.0
    %6139 = vmatprep.subr.mxu0 0.0
    %6140 = vmatpush1.msra.mxu0 0.0
    %6141 = vmatprep.subr.mxu0 0.0
    %6142 = vmatpush1.msra.mxu0 0.0
    %6143 = vmatprep.subr.mxu0 0.0
    %6144 = vmatpush1.msra.mxu0 0.0
    %6145 = vmatprep.subr.mxu0 0.0
    %6146 = vmatpush1.msra.mxu0 0.0
    %6147 = vmatprep.subr.mxu0 0.0
    %6148 = vmatpush1.msra.mxu0 0.0
    %6149 = vmatprep.subr.mxu0 0.0
    %6150 = vmatpush1.msra.mxu0 0.0
    %6151 = vmatprep.subr.mxu0 0.0
    %6152 = vmatpush1.msra.mxu0 0.0
    %6153 = vmatprep.subr.mxu0 0.0
    %6154 = vmatpush1.msra.mxu0 0.0
    %6155 = vmatprep.subr.mxu0 0.0
    %6156 = vmatpush1.msra.mxu0 0.0
    %6157 = vmatprep.subr.mxu0 0.0
    %6158 = vmatpush1.msra.mxu0 0.0
    %6159 = vmatprep.subr.mxu0 0.0
    %6160 = vmatpush1.msra.mxu0 0.0
    %6161 = vmatprep.subr.mxu0 0.0
    %6162 = vmatpush1.msra.mxu0 0.0
    %6163 = vmatprep.subr.mxu0 0.0
    %6164 = vmatpush1.msra.mxu0 0.0
    %6165 = vmatprep.subr.mxu0 0.0
    %6166 = vmatpush1.msra.mxu0 0.0
    %6167 = vmatprep.subr.mxu0 0.0
    %6168 = vmatpush1.msra.mxu0 0.0
    %6169 = vmatprep.subr.mxu0 0.0
    %6170 = vmatpush1.msra.mxu0 0.0
    %6171 = vmatprep.subr.mxu0 0.0
    %6172 = vmatpush1.msra.mxu0 0.0
    %6173 = vmatprep.subr.mxu0 0.0
    %6174 = vmatpush1.msra.mxu0 0.0
    %6175 = vmatprep.subr.mxu0 0.0
    %6176 = vmatpush1.msra.mxu0 0.0
    %6177 = vmatprep.subr.mxu0 0.0
    %6178 = vmatpush1.msra.mxu0 0.0
    %6179 = vmatprep.subr.mxu0 0.0
    %6180 = vmatpush1.msra.mxu0 0.0
    %6181 = vmatprep.subr.mxu0 0.0
    %6182 = vmatpush1.msra.mxu0 0.0
    %6183 = vmatprep.subr.mxu0 0.0
    %6184 = vmatpush1.msra.mxu0 0.0
    %6185 = vmatprep.mubr.f32.mxu0 0.0
    %6186 = vmatmul.mubr.f32.gmra.mrb[0].mxu0 %v6119
    %v6187 = vpop.f32.mrb[0].mxu0
    %v6188 = vadd.f32 0.0, %v6187
    %v6189 = vpop.f32.mrb[0].mxu0
    %6190 = vdwg.mxu0
    %v6192 = vsel %vm148, %v6109, 0
    %6194 = vmatprep.subr.mxu0 0.0
    %6195 = vmatpush1.msra.mxu0 %v6110
    %6196 = vmatprep.subr.mxu0 0.0
    %6197 = vmatpush1.msra.mxu0 %v6111
    %6198 = vmatprep.subr.mxu0 0.0
    %6199 = vmatpush1.msra.mxu0 %v6112
    %6200 = vmatprep.subr.mxu0 0.0
    %6201 = vmatpush1.msra.mxu0 %v6113
    %6202 = vmatprep.subr.mxu0 0.0
    %6203 = vmatpush1.msra.mxu0 0.0
    %6204 = vmatprep.subr.mxu0 0.0
    %6205 = vmatpush1.msra.mxu0 0.0
    %6206 = vmatprep.subr.mxu0 0.0
    %6207 = vmatpush1.msra.mxu0 0.0
    %6208 = vmatprep.subr.mxu0 0.0
    %6209 = vmatpush1.msra.mxu0 0.0
    %6210 = vmatprep.subr.mxu0 0.0
    %6211 = vmatpush1.msra.mxu0 0.0
    %6212 = vmatprep.subr.mxu0 0.0
    %6213 = vmatpush1.msra.mxu0 0.0
    %6214 = vmatprep.subr.mxu0 0.0
    %6215 = vmatpush1.msra.mxu0 0.0
    %6216 = vmatprep.subr.mxu0 0.0
    %6217 = vmatpush1.msra.mxu0 0.0
    %6218 = vmatprep.subr.mxu0 0.0
    %6219 = vmatpush1.msra.mxu0 0.0
    %6220 = vmatprep.subr.mxu0 0.0
    %6221 = vmatpush1.msra.mxu0 0.0
    %6222 = vmatprep.subr.mxu0 0.0
    %6223 = vmatpush1.msra.mxu0 0.0
    %6224 = vmatprep.subr.mxu0 0.0
    %6225 = vmatpush1.msra.mxu0 0.0
    %6226 = vmatprep.subr.mxu0 0.0
    %6227 = vmatpush1.msra.mxu0 0.0
    %6228 = vmatprep.subr.mxu0 0.0
    %6229 = vmatpush1.msra.mxu0 0.0
    %6230 = vmatprep.subr.mxu0 0.0
    %6231 = vmatpush1.msra.mxu0 0.0
    %6232 = vmatprep.subr.mxu0 0.0
    %6233 = vmatpush1.msra.mxu0 0.0
    %6234 = vmatprep.subr.mxu0 0.0
    %6235 = vmatpush1.msra.mxu0 0.0
    %6236 = vmatprep.subr.mxu0 0.0
    %6237 = vmatpush1.msra.mxu0 0.0
    %6238 = vmatprep.subr.mxu0 0.0
    %6239 = vmatpush1.msra.mxu0 0.0
    %6240 = vmatprep.subr.mxu0 0.0
    %6241 = vmatpush1.msra.mxu0 0.0
    %6242 = vmatprep.subr.mxu0 0.0
    %6243 = vmatpush1.msra.mxu0 0.0
    %6244 = vmatprep.subr.mxu0 0.0
    %6245 = vmatpush1.msra.mxu0 0.0
    %6246 = vmatprep.subr.mxu0 0.0
    %6247 = vmatpush1.msra.mxu0 0.0
    %6248 = vmatprep.subr.mxu0 0.0
    %6249 = vmatpush1.msra.mxu0 0.0
    %6250 = vmatprep.subr.mxu0 0.0
    %6251 = vmatpush1.msra.mxu0 0.0
    %6252 = vmatprep.subr.mxu0 0.0
    %6253 = vmatpush1.msra.mxu0 0.0
    %6254 = vmatprep.subr.mxu0 0.0
    %6255 = vmatpush1.msra.mxu0 0.0
    %6256 = vmatprep.subr.mxu0 0.0
    %6257 = vmatpush1.msra.mxu0 0.0
    %6258 = vmatprep.mubr.f32.mxu0 0.0
    %6259 = vmatmul.mubr.f32.gmra.mrb[0].mxu0 %v6192
    %v6260 = vpop.f32.mrb[0].mxu0
    %v6261 = vadd.f32 %v6188, %v6260
    %v6262 = vpop.f32.mrb[0].mxu0
    %6263 = vdwg.mxu0
    %v6264 = vld [vmem:[%s2 + $0x328] sm:$0x1]
    %v6265 = vlaneseq
    %v6266 = vshrl.u32 %v6265, 7
    %v6267 = vsub.s32 0, %v6266
    %v6268 = vrot.slane %v6264, %v6267
    %v6269 = vadd.f32 %v6261, %v6268
    %vm6270 = vcmask 123904
    %6271 = vst.msk [vmem:[#allocation2] sm:$0x3] %vm6270, %v6269
    // Predicated region
    $region22: #{clip_vln_forward.1} parent=1 // pred_check
      _
    $region23: #{clip_vln_forward.1} parent=1 // pred_check_branch
      %6273 = sbr.rel (0) target = $region25
    $region24: #{clip_vln_forward.1} parent=1 // pred_region
      %s6275 = ssub.s32 32, 32
      %6276 = vsyncadd [#allocation3], %s6275
      %s6278 = sshll.u32 [#allocation2], 4
      %s6279 = int_to_ptr.vmem [resolvable:$true] %s6278
      %6281 = dma.vmem_to_hbm [thread:$0]  %s6279, 32, %s5, [#allocation3]
    $region25: #{clip_vln_forward.1} parent=1 // pred_fallthru
      _
    // Predicated region
    $region26: #{clip_vln_forward.1} parent=1 // pred_check
      _
    $region27: #{clip_vln_forward.1} parent=1 // pred_check_branch
      %6283 = sbr.rel (0) target = $region29
    $region28: #{clip_vln_forward.1} parent=1 // pred_region
      %6284 = dma.done [#allocation3], 32
    $region29: #{clip_vln_forward.1} parent=1 // pred_fallthru
      _
    %6285 = vsyncpa [#allocation3], 1

</llo_original>
